<compile_context>
chip_gen: v6e
topology: v6e:2x2x1
jax: 0.10.0
libtpu: 0.0.40
codegen_flags: <defaults>
</compile_context>

<pallas_src>
import jax
import jax.numpy as jnp
from jax.experimental import pallas as pl
from jax.experimental.pallas import tpu as pltpu

PAD = 0

# model hyper-parameters (small, consistent with the SEASS module structure)
T_SRC = 8      # source length
T_TGT = 8      # target length (decoder consumes T_TGT - 1 steps: tgt[:-1])
BATCH = 16     # sentences per call (fills >= 8 f32 sublanes per block)
E = 16         # word_vec_size
H = 16         # encoder hidden size per direction
HH = 2 * H     # enc_rnn_size (bidirectional)
D = 32         # dec_rnn_size
A = 32         # att_vec_size
VOCAB = 50
TA = T_SRC * A     # 256: lane-dense attention-energy width
THH = T_SRC * HH   # 256: lane-dense context width

# the packed-operand layout below relies on these (true for this config)
assert HH == D == A == 2 * E and E == H

LANE = 128


def _detect_batch_blocks():
    """grid=(1,) on single-TC chips (v5e/v6e); 2-way batch split only on v7x."""
    try:
        kind = jax.devices()[0].device_kind.lower()
    except Exception:
        kind = ""
    if ("v7" in kind) or ("7x" in kind):
        # TODO(synk): if the Mosaic dump shows "parallel" not sharding across the
        #             two v7x TensorCores, switch to pltpu.CORE_PARALLEL here.
        return 2, ("parallel",)
    return 1, ("arbitrary",)


NBLK, DIM_SEMANTICS = _detect_batch_blocks()
BB = BATCH // NBLK
assert BATCH % NBLK == 0 and BB % 8 == 0


# ------------- packed-operand layout (static; shared by packer & kernel) -----
W32_ORDER = [                       # row count = 2E == HH == D == 32
    ('wih_ef', 6 * H),              # fused bidir encoder input projection
    ('whh_ef', 6 * H),              # fused bidir encoder recurrent
    ('whh_d', 3 * D),               # decoder GRU recurrent
    ('hq_w', TA + D),               # [tile(q_w, T) | ro_wh]   (decoder h-side fused)
    ('sel_wbt', THH),               # tile(sel_wb, T)          (selective gate, sent side)
]
W16_ORDER = [                       # row count = E == H == 16
    ('dec_in_w', 4 * D),            # [wih_de | ro_wemb]       (decoder emb-side fused)
    ('init_w', D),                  # DecInit
]
W256_ORDER = [                      # row count = T*HH == T*A == 256
    ('sel_wt_bd', THH),             # blockdiag_T(sel_wt)      (selective gate, outs side)
    ('pre_w_bd', TA),               # blockdiag_T(pre_w)       (attention linear_pre)
    ('v_rep', THH),                 # blockdiag_T(v ⊗ 1_HH)    (attention energy, replicated)
    ('ctx_w_t', 4 * D),             # vstack_T([ro_wctx | wih_dc]) (decoder ctx-side fused)
]
BIAS_ORDER = [                      # row count = 1
    ('bih_ef', 6 * H), ('bhh_ef', 6 * H), ('bhh_d', 3 * D),
    ('sel_bt', THH), ('init_b', D), ('pre_bt', TA), ('dec_in_b', 4 * D),
]


def _padded_layout(order):
    """Column offsets; every piece starts 128-lane aligned (clean VMEM window loads)."""
    offs, cur = {}, 0
    for name, width in order:
        offs[name] = (cur, cur + width)
        cur += -(-width // LANE) * LANE
    return offs, cur


W32_OFF, W32_COLS = _padded_layout(W32_ORDER)
W16_OFF, W16_COLS = _padded_layout(W16_ORDER)
W256_OFF, W256_COLS = _padded_layout(W256_ORDER)
BIAS_OFF, BIAS_COLS = _padded_layout(BIAS_ORDER)


def make_seass_kernel(T, TT, B):
    f32 = jnp.float32

    def view(ref, offs, name):
        s, e = offs[name]
        return ref[:, s:e]

    def kernel(src_both_ref, tgt_emb_ref, att_bias_ref,
               w32_ref, w16_ref, w256_ref, bias_ref,
               g_out_ref, enc_scr):
        # ---- one-time views into the packed weight / bias operands ----------
        wih_ef = view(w32_ref, W32_OFF, 'wih_ef')        # (2E, 6H)
        whh_ef = view(w32_ref, W32_OFF, 'whh_ef')        # (2H, 6H)
        whh_d = view(w32_ref, W32_OFF, 'whh_d')          # (D, 3D)
        hq_w = view(w32_ref, W32_OFF, 'hq_w')            # (D, T*A + D)
        sel_wbt = view(w32_ref, W32_OFF, 'sel_wbt')      # (HH, T*HH)
        dec_in_w = view(w16_ref, W16_OFF, 'dec_in_w')    # (E, 4D)
        init_w = view(w16_ref, W16_OFF, 'init_w')        # (H, D)
        sel_wt_bd = view(w256_ref, W256_OFF, 'sel_wt_bd')
        pre_w_bd = view(w256_ref, W256_OFF, 'pre_w_bd')
        v_rep = view(w256_ref, W256_OFF, 'v_rep')
        ctx_w_t = view(w256_ref, W256_OFF, 'ctx_w_t')
        bih_ef = view(bias_ref, BIAS_OFF, 'bih_ef')
        bhh_ef = view(bias_ref, BIAS_OFF, 'bhh_ef')
        bhh_d = view(bias_ref, BIAS_OFF, 'bhh_d')
        sel_bt = view(bias_ref, BIAS_OFF, 'sel_bt')
        init_b = view(bias_ref, BIAS_OFF, 'init_b')
        pre_bt = view(bias_ref, BIAS_OFF, 'pre_bt')
        dec_in_b = view(bias_ref, BIAS_OFF, 'dec_in_b')

        # ================= Encoder: fused bidirectional GRU ==================
        # Hoisted input projection: one matmul covers both directions and all T
        # timesteps (src_both[t] = [emb(t) | emb(T-1-t)]).
        src_flat = src_both_ref[...].reshape(T * B, 2 * E)
        gi_enc = (jnp.dot(src_flat, wih_ef, preferred_element_type=f32)
                  + bih_ef).reshape(T, B, 6 * H)

        h = jnp.zeros((B, HH), f32)                      # packed state [h_fwd | h_bwd]
        for t in range(T):                               # fully unrolled, static indices
            gi = gi_enc[t]                               # (B, 6H)
            gh = jnp.dot(h, whh_ef, preferred_element_type=f32) + bhh_ef
            r = jax.nn.sigmoid(gi[:, :HH] + gh[:, :HH])
            z = jax.nn.sigmoid(gi[:, HH:2 * HH] + gh[:, HH:2 * HH])
            n = jnp.tanh(gi[:, 2 * HH:] + r * gh[:, 2 * HH:])
            h = (1.0 - z) * n + z * h                    # (B, 2H)
            # b-major, lane-dense encoder outputs: outs[b, t*HH + :] = [h_f(t) | h_b(t)]
            enc_scr[:, t * HH: t * HH + H] = h[:, :H]
            enc_scr[:, (T - 1 - t) * HH + H: (T - 1 - t) * HH + HH] = h[:, H:]

        outs2 = enc_scr[...]                             # (B, T*HH)
        sent = h                                         # [h_fwd_last | h_bwd_last]
        hb_last = h[:, H:]                               # enc_hidden[1]

        # ================= Selective gate (lane-dense, no transposes) ========
        sent_proj = jnp.dot(sent, sel_wbt, preferred_element_type=f32) + sel_bt
        sel = jax.nn.sigmoid(
            jnp.dot(outs2, sel_wt_bd, preferred_element_type=f32) + sent_proj)
        ctx2 = outs2 * sel                               # (B, T*HH)

        # ================= DecInit: tanh(Linear(backward last hidden)) =======
        dec_h0 = jnp.tanh(jnp.dot(hb_last, init_w, preferred_element_type=f32)
                          + init_b)                      # (B, D)

        # ====== Attention precompute: linear_pre(context), lane-dense ========
        pre2 = jnp.dot(ctx2, pre_w_bd, preferred_element_type=f32) + pre_bt   # (B, T*A)

        # ====== Decoder emb-side projections hoisted: [GRU gi | readout] =====
        tgt_flat = tgt_emb_ref[...].reshape(TT * B, E)
        dec_in = (jnp.dot(tgt_flat, dec_in_w, preferred_element_type=f32)
                  + dec_in_b).reshape(TT, B, 4 * D)      # (TT, B, 3D + D)

        att_bias = att_bias_ref[...]                     # (B, T*HH) additive -1e6 mask

        # ================= Decoder loop (fully unrolled) ======================
        h = dec_h0
        ctx_gi = jnp.zeros((B, 3 * D), f32)              # init_att == 0 -> zero gi term
        for t in range(TT):
            # GRUCell on [emb_t ; cur_ctx]: emb part precomputed, ctx part carried
            gi = dec_in[t][:, :3 * D] + ctx_gi
            gh = jnp.dot(h, whh_d, preferred_element_type=f32) + bhh_d
            r = jax.nn.sigmoid(gi[:, :D] + gh[:, :D])
            z = jax.nn.sigmoid(gi[:, D:2 * D] + gh[:, D:2 * D])
            n = jnp.tanh(gi[:, 2 * D:] + r * gh[:, 2 * D:])
            h = (1.0 - z) * n + z * h                    # (B, D)

            # fused h-side matmul: [query tiled over source | readout h-term]
            hproj = jnp.dot(h, hq_w, preferred_element_type=f32)       # (B, T*A + D)
            tmp = jnp.tanh(pre2 + hproj[:, :TA])                       # (B, T*A) dense
            # energies replicated HH-wide per source position -> full-lane softmax
            e_rep = jnp.dot(tmp, v_rep, preferred_element_type=f32) + att_bias
            m = jnp.max(e_rep, axis=-1, keepdims=True)
            p = jnp.exp(e_rep - m)
            denom = jnp.sum(p, axis=-1, keepdims=True)                  # = HH * sum_t exp
            score_rep = p * (float(HH) * pl.reciprocal(denom, approx=True))
            # fused ctx-side matmul: [readout ctx-term | next step's GRU ctx-term]
            ctx_proj = jnp.dot(score_rep * ctx2, ctx_w_t,
                               preferred_element_type=f32)              # (B, 4D)

            # fused readout + Maxout(pool=2) (columns pre-reordered even|odd)
            ro = dec_in[t][:, 3 * D:] + hproj[:, TA:] + ctx_proj[:, :D]
            g_out_ref[t] = jnp.maximum(ro[:, :D // 2], ro[:, D // 2:])
            ctx_gi = ctx_proj[:, D:]

    return kernel


def _fuse_bidir_gru(wih_f, whh_f, bih_f, bhh_f, wih_b, whh_b, bih_b, bhh_b):
    """Pack the two direction GRUs into one block-diagonal cell.

    Fused gate column layout: [r_f r_b | z_f z_b | n_f n_b], so the packed state
    [h_f | h_b] updates with exactly the same math as two independent GRUs.
    """
    E_ = wih_f.shape[0]
    H_ = wih_f.shape[1] // 3
    HH_ = 2 * H_
    wih = jnp.zeros((2 * E_, 6 * H_), jnp.float32)
    whh = jnp.zeros((HH_, 6 * H_), jnp.float32)
    bih_parts, bhh_parts = [], []
    for g in range(3):
        cg = slice(g * H_, (g + 1) * H_)          # per-direction gate columns
        of = slice(g * HH_, g * HH_ + H_)         # fused fwd columns
        ob = slice(g * HH_ + H_, (g + 1) * HH_)   # fused bwd columns
        wih = wih.at[:E_, of].set(wih_f[:, cg])
        wih = wih.at[E_:, ob].set(wih_b[:, cg])
        whh = whh.at[:H_, of].set(whh_f[:, cg])
        whh = whh.at[H_:, ob].set(whh_b[:, cg])
        bih_parts += [bih_f[:, cg], bih_b[:, cg]]
        bhh_parts += [bhh_f[:, cg], bhh_b[:, cg]]
    bih = jnp.concatenate(bih_parts, axis=1)
    bhh = jnp.concatenate(bhh_parts, axis=1)
    return wih, bih, whh, bhh


def _pack(order, offs, total, pieces, rows):
    out = jnp.zeros((rows, total), jnp.float32)
    for name, width in order:
        m = pieces[name].astype(jnp.float32)
        assert m.shape == (rows, width), (name, m.shape, (rows, width))
        s, _ = offs[name]
        out = out.at[:, s:s + width].set(m)
    return out


def pack_params(params):
    """One-time structural re-packing of the raw parameters (hoisted out of the
    per-call path).  Every transform is a mathematically exact reshuffle of the
    original parameterization."""
    f32 = jnp.float32
    eye_t = jnp.eye(T_SRC, dtype=f32)

    wih_ef, bih_ef, whh_ef, bhh_ef = _fuse_bidir_gru(
        params['wih_f'], params['whh_f'], params['bih_f'], params['bhh_f'],
        params['wih_b'], params['whh_b'], params['bih_b'], params['bhh_b'])

    sel_wt, sel_wb = params['sel_w'][:HH], params['sel_w'][HH:]
    wih_de, wih_dc = params['wih_d'][:E], params['wih_d'][E:]

    # maxout(pool=2): even/odd column split == torch view(B, D//2, 2).max(-1)
    ro_w = jnp.concatenate([params['ro_w'][:, 0::2], params['ro_w'][:, 1::2]], axis=1)
    ro_b = jnp.concatenate([params['ro_b'][:, 0::2], params['ro_b'][:, 1::2]], axis=1)
    ro_wemb, ro_wh, ro_wctx = ro_w[:E], ro_w[E:E + D], ro_w[E + D:]

    w32 = {
        'wih_ef': wih_ef,
        'whh_ef': whh_ef,
        'whh_d': params['whh_d'],
        'hq_w': jnp.concatenate([jnp.tile(params['q_w'], (1, T_SRC)), ro_wh], axis=1),
        'sel_wbt': jnp.tile(sel_wb, (1, T_SRC)),
    }
    w16 = {
        'dec_in_w': jnp.concatenate([wih_de, ro_wemb], axis=1),
        'init_w': params['init_w'],
    }
    v_rep_block = params['v_w'].T @ jnp.ones((1, HH), f32)        # (A, HH), v replicated
    ctx_w = jnp.concatenate([ro_wctx, wih_dc], axis=1)            # (HH, 4D)
    w256 = {
        'sel_wt_bd': jnp.kron(eye_t, sel_wt),
        'pre_w_bd': jnp.kron(eye_t, params['pre_w']),
        'v_rep': jnp.kron(eye_t, v_rep_block),
        'ctx_w_t': jnp.tile(ctx_w, (T_SRC, 1)),
    }
    biases = {
        'bih_ef': bih_ef, 'bhh_ef': bhh_ef, 'bhh_d': params['bhh_d'],
        'sel_bt': jnp.tile(params['sel_b'], (1, T_SRC)),
        'init_b': params['init_b'],
        'pre_bt': jnp.tile(params['pre_b'], (1, T_SRC)),
        'dec_in_b': jnp.concatenate([params['bih_d'], ro_b], axis=1),
    }
    return {
        'enc_emb': params['enc_emb'],
        'dec_emb': params['dec_emb'],
        'w32': _pack(W32_ORDER, W32_OFF, W32_COLS, w32, 2 * E),
        'w16': _pack(W16_ORDER, W16_OFF, W16_COLS, w16, E),
        'w256': _pack(W256_ORDER, W256_OFF, W256_COLS, w256, THH),
        'bias': _pack(BIAS_ORDER, BIAS_OFF, BIAS_COLS, biases, 1),
    }


def init_params(key):
    ks = jax.random.split(key, 24)

    def w(k, shape, scale=0.1):
        return (scale * jax.random.normal(k, shape)).astype(jnp.float32)

    p = {}
    p['enc_emb'] = w(ks[0], (VOCAB, E)).at[PAD].set(0.0)   # padding_idx=PAD
    p['dec_emb'] = w(ks[1], (VOCAB, E)).at[PAD].set(0.0)
    # encoder bidirectional GRU (stored transposed vs PyTorch: (in, 3H))
    p['wih_f'] = w(ks[2], (E, 3 * H)); p['whh_f'] = w(ks[3], (H, 3 * H))
    p['bih_f'] = w(ks[4], (1, 3 * H)); p['bhh_f'] = w(ks[5], (1, 3 * H))
    p['wih_b'] = w(ks[6], (E, 3 * H)); p['whh_b'] = w(ks[7], (H, 3 * H))
    p['bih_b'] = w(ks[8], (1, 3 * H)); p['bhh_b'] = w(ks[9], (1, 3 * H))
    # selective gate: Linear(2*enc_rnn_size -> enc_rnn_size)
    p['sel_w'] = w(ks[10], (2 * HH, HH)); p['sel_b'] = w(ks[11], (1, HH))
    # DecInit: Linear(H -> D) + tanh
    p['init_w'] = w(ks[12], (H, D)); p['init_b'] = w(ks[13], (1, D))
    # decoder GRUCell: input = word_vec + enc_rnn_size
    p['wih_d'] = w(ks[14], (E + HH, 3 * D)); p['whh_d'] = w(ks[15], (D, 3 * D))
    p['bih_d'] = w(ks[16], (1, 3 * D)); p['bhh_d'] = w(ks[17], (1, 3 * D))
    # ConcatAttention
    p['pre_w'] = w(ks[18], (HH, A)); p['pre_b'] = w(ks[19], (1, A))
    p['q_w'] = w(ks[20], (D, A)); p['v_w'] = w(ks[21], (1, A))
    # readout: Linear(E + D + 2H -> D), maxout(pool=2) applied on its output
    p['ro_w'] = w(ks[22], (E + D + HH, D)); p['ro_b'] = w(ks[23], (1, D))
    return p


@jax.jit
def nmt_forward(src_tokens, tgt_tokens, packed):
    f32 = jnp.float32
    # --- glue: embedding gathers, mask, source time-reversal (data-dependent) ---
    src_emb = packed['enc_emb'][src_tokens]                     # (T, B, E)
    tgt_emb = packed['dec_emb'][tgt_tokens[:-1]]                # (TT, B, E)
    # fwd + time-reversed source embeddings packed on lanes -> the fused bi-GRU
    # input projection is a single in-kernel matmul
    src_both = jnp.concatenate([src_emb, src_emb[::-1]], axis=-1)        # (T, B, 2E)
    # additive PAD mask, pre-replicated to the lane-dense (B, T*HH) score layout
    att_bias = jnp.repeat((src_tokens == PAD).astype(f32).T * (-1e6), HH, axis=1)

    T, Bsz, _ = src_both.shape
    TT = tgt_emb.shape[0]
    assert T == T_SRC and TT == T_TGT - 1 and Bsz % BB == 0

    kernel = make_seass_kernel(T, TT, BB)

    def bblk1(shape):   # batch-blocked on dim 1
        return pl.BlockSpec((shape[0], BB) + tuple(shape[2:]), lambda i: (0, i, 0))

    def full(arr):      # replicated weight / bias operand
        return pl.BlockSpec(arr.shape, lambda i: (0,) * arr.ndim)

    inputs = (src_both, tgt_emb, att_bias,
              packed['w32'], packed['w16'], packed['w256'], packed['bias'])
    in_specs = [bblk1(src_both.shape), bblk1(tgt_emb.shape),
                pl.BlockSpec((BB, THH), lambda i: (i, 0)),
                full(packed['w32']), full(packed['w16']),
                full(packed['w256']), full(packed['bias'])]

    return pl.pallas_call(
        kernel,
        out_shape=jax.ShapeDtypeStruct((TT, Bsz, D // 2), f32),
        grid=(NBLK,),
        in_specs=in_specs,
        out_specs=pl.BlockSpec((TT, BB, D // 2), lambda i: (0, i, 0)),
        scratch_shapes=[pltpu.VMEM((BB, THH), f32)],   # b-major encoder outputs
        compiler_params=pltpu.CompilerParams(
            dimension_semantics=DIM_SEMANTICS),
    )(*inputs)


if __name__ == "__main__":
    key = jax.random.PRNGKey(0)
    pkey, skey, tkey = jax.random.split(key, 3)
    params = init_params(pkey)
    packed = pack_params(params)   # one-time structural packing, outside the call path

    # tokens in [1, VOCAB) -> no PAD, so all source lengths == T_SRC (see TODO above)
    src_tokens = jax.random.randint(skey, (T_SRC, BATCH), 1, VOCAB, dtype=jnp.int32)
    tgt_tokens = jax.random.randint(tkey, (T_TGT, BATCH), 1, VOCAB, dtype=jnp.int32)

    g_out = nmt_forward(src_tokens, tgt_tokens, packed)
    jax.block_until_ready(g_out)

    assert g_out.shape == (T_TGT - 1, BATCH, D // 2), g_out.shape
    assert bool(jnp.all(jnp.isfinite(g_out)))
    print("KERNEL_OK")
</pallas_src>

<mosaic_0001>
module attributes {stable_mosaic.version = 11 : i64} {
  func.func @kernel(%arg0: i32, %arg1: memref<8x16x32xf32, #tpu.memory_space<vmem>>, %arg2: memref<7x16x16xf32, #tpu.memory_space<vmem>>, %arg3: memref<16x256xf32, #tpu.memory_space<vmem>>, %arg4: memref<32x1024xf32, #tpu.memory_space<vmem>>, %arg5: memref<16x256xf32, #tpu.memory_space<vmem>>, %arg6: memref<256x896xf32, #tpu.memory_space<vmem>>, %arg7: memref<1x1152xf32, #tpu.memory_space<vmem>>, %arg8: memref<7x16x16xf32, #tpu.memory_space<vmem>>, %arg9: memref<16x256xf32, #tpu.memory_space<vmem>>) attributes {dimension_semantics = [#tpu.dimension_semantics<arbitrary>], iteration_bounds = array<i64: 1>, scalar_prefetch = 0 : i64, scratch_operands = 1 : i64, tpu.core_type = #tpu.core_type<tc>, window_params = [{transform_indices = @transform_0, window_bounds = array<i64: 8, 16, 32>}, {transform_indices = @transform_1, window_bounds = array<i64: 7, 16, 16>}, {transform_indices = @transform_2, window_bounds = array<i64: 16, 256>}, {pipeline_mode = #tpu.pipeline_mode<synchronous>, transform_indices = @transform_3, window_bounds = array<i64: 32, 1024>}, {pipeline_mode = #tpu.pipeline_mode<synchronous>, transform_indices = @transform_4, window_bounds = array<i64: 16, 256>}, {pipeline_mode = #tpu.pipeline_mode<synchronous>, transform_indices = @transform_5, window_bounds = array<i64: 256, 896>}, {pipeline_mode = #tpu.pipeline_mode<synchronous>, transform_indices = @transform_6, window_bounds = array<i64: 1, 1152>}, {transform_indices = @transform_7, window_bounds = array<i64: 7, 16, 16>}]} {
    %c0 = arith.constant 0 : index
    %c0_0 = arith.constant 0 : index
    %0 = vector.load %arg4[%c0, %c0_0] : memref<32x1024xf32, #tpu.memory_space<vmem>>, vector<32x96xf32>
    %c0_1 = arith.constant 0 : index
    %c128 = arith.constant 128 : index
    %1 = vector.load %arg4[%c0_1, %c128] : memref<32x1024xf32, #tpu.memory_space<vmem>>, vector<32x96xf32>
    %c0_2 = arith.constant 0 : index
    %c256 = arith.constant 256 : index
    %2 = vector.load %arg4[%c0_2, %c256] : memref<32x1024xf32, #tpu.memory_space<vmem>>, vector<32x96xf32>
    %c0_3 = arith.constant 0 : index
    %c384 = arith.constant 384 : index
    %3 = vector.load %arg4[%c0_3, %c384] : memref<32x1024xf32, #tpu.memory_space<vmem>>, vector<32x288xf32>
    %c0_4 = arith.constant 0 : index
    %c768 = arith.constant 768 : index
    %4 = vector.load %arg4[%c0_4, %c768] : memref<32x1024xf32, #tpu.memory_space<vmem>>, vector<32x256xf32>
    %c0_5 = arith.constant 0 : index
    %c0_6 = arith.constant 0 : index
    %5 = vector.load %arg5[%c0_5, %c0_6] : memref<16x256xf32, #tpu.memory_space<vmem>>, vector<16x128xf32>
    %c0_7 = arith.constant 0 : index
    %c128_8 = arith.constant 128 : index
    %6 = vector.load %arg5[%c0_7, %c128_8] : memref<16x256xf32, #tpu.memory_space<vmem>>, vector<16x32xf32>
    %c0_9 = arith.constant 0 : index
    %c0_10 = arith.constant 0 : index
    %7 = vector.load %arg6[%c0_9, %c0_10] : memref<256x896xf32, #tpu.memory_space<vmem>>, vector<256x256xf32>
    %c0_11 = arith.constant 0 : index
    %c256_12 = arith.constant 256 : index
    %8 = vector.load %arg6[%c0_11, %c256_12] : memref<256x896xf32, #tpu.memory_space<vmem>>, vector<256x256xf32>
    %c0_13 = arith.constant 0 : index
    %c512 = arith.constant 512 : index
    %9 = vector.load %arg6[%c0_13, %c512] : memref<256x896xf32, #tpu.memory_space<vmem>>, vector<256x256xf32>
    %c0_14 = arith.constant 0 : index
    %c768_15 = arith.constant 768 : index
    %10 = vector.load %arg6[%c0_14, %c768_15] : memref<256x896xf32, #tpu.memory_space<vmem>>, vector<256x128xf32>
    %c0_16 = arith.constant 0 : index
    %c0_17 = arith.constant 0 : index
    %11 = vector.load %arg7[%c0_16, %c0_17] : memref<1x1152xf32, #tpu.memory_space<vmem>>, vector<1x96xf32>
    %c0_18 = arith.constant 0 : index
    %c128_19 = arith.constant 128 : index
    %12 = vector.load %arg7[%c0_18, %c128_19] : memref<1x1152xf32, #tpu.memory_space<vmem>>, vector<1x96xf32>
    %c0_20 = arith.constant 0 : index
    %c256_21 = arith.constant 256 : index
    %13 = vector.load %arg7[%c0_20, %c256_21] : memref<1x1152xf32, #tpu.memory_space<vmem>>, vector<1x96xf32>
    %c0_22 = arith.constant 0 : index
    %c384_23 = arith.constant 384 : index
    %14 = vector.load %arg7[%c0_22, %c384_23] : memref<1x1152xf32, #tpu.memory_space<vmem>>, vector<1x256xf32>
    %c0_24 = arith.constant 0 : index
    %c640 = arith.constant 640 : index
    %15 = vector.load %arg7[%c0_24, %c640] : memref<1x1152xf32, #tpu.memory_space<vmem>>, vector<1x32xf32>
    %c0_25 = arith.constant 0 : index
    %c768_26 = arith.constant 768 : index
    %16 = vector.load %arg7[%c0_25, %c768_26] : memref<1x1152xf32, #tpu.memory_space<vmem>>, vector<1x256xf32>
    %c0_27 = arith.constant 0 : index
    %c1024 = arith.constant 1024 : index
    %17 = vector.load %arg7[%c0_27, %c1024] : memref<1x1152xf32, #tpu.memory_space<vmem>>, vector<1x128xf32>
    %c0_28 = arith.constant 0 : index
    %c0_29 = arith.constant 0 : index
    %c0_30 = arith.constant 0 : index
    %18 = vector.load %arg1[%c0_28, %c0_29, %c0_30] : memref<8x16x32xf32, #tpu.memory_space<vmem>>, vector<8x16x32xf32>
    %19 = vector.shape_cast %18 : vector<8x16x32xf32> to vector<128x32xf32>
    %cst = arith.constant dense<0.000000e+00> : vector<128x96xf32>
    %20 = tpu.matmul %19, %0, %cst {dimension_numbers = #tpu.dot_dimension_numbers<[1], [0], [0], [1], [0, 0, 1, 1], [], []>} : vector<128x32xf32>, vector<32x96xf32>, vector<128x96xf32> -> vector<128x96xf32>
    %21 = vector.broadcast %11 : vector<1x96xf32> to vector<128x96xf32>
    %22 = arith.addf %20, %21 : vector<128x96xf32>
    %23 = vector.shape_cast %22 : vector<128x96xf32> to vector<8x16x96xf32>
    %cst_31 = arith.constant 0.000000e+00 : f32
    %24 = vector.broadcast %cst_31 : f32 to vector<16x32xf32>
    %25 = vector.extract_strided_slice %23 {offsets = [0, 0, 0], sizes = [1, 16, 96], strides = [1, 1, 1]} : vector<8x16x96xf32> to vector<1x16x96xf32>
    %26 = vector.shape_cast %25 : vector<1x16x96xf32> to vector<16x96xf32>
    %cst_32 = arith.constant dense<0.000000e+00> : vector<16x96xf32>
    %27 = tpu.matmul %24, %1, %cst_32 {dimension_numbers = #tpu.dot_dimension_numbers<[1], [0], [0], [1], [0, 0, 1, 1], [], []>} : vector<16x32xf32>, vector<32x96xf32>, vector<16x96xf32> -> vector<16x96xf32>
    %28 = vector.broadcast %12 : vector<1x96xf32> to vector<16x96xf32>
    %29 = arith.addf %27, %28 : vector<16x96xf32>
    %30 = vector.extract_strided_slice %26 {offsets = [0, 0], sizes = [16, 32], strides = [1, 1]} : vector<16x96xf32> to vector<16x32xf32>
    %31 = vector.extract_strided_slice %29 {offsets = [0, 0], sizes = [16, 32], strides = [1, 1]} : vector<16x96xf32> to vector<16x32xf32>
    %32 = arith.addf %30, %31 : vector<16x32xf32>
    %33 = arith.negf %32 : vector<16x32xf32>
    %34 = math.exp %33 : vector<16x32xf32>
    %cst_33 = arith.constant 1.000000e+00 : f32
    %35 = vector.broadcast %cst_33 : f32 to vector<16x32xf32>
    %36 = arith.addf %35, %34 : vector<16x32xf32>
    %37 = arith.divf %35, %36 : vector<16x32xf32>
    %38 = vector.extract_strided_slice %26 {offsets = [0, 32], sizes = [16, 32], strides = [1, 1]} : vector<16x96xf32> to vector<16x32xf32>
    %39 = vector.extract_strided_slice %29 {offsets = [0, 32], sizes = [16, 32], strides = [1, 1]} : vector<16x96xf32> to vector<16x32xf32>
    %40 = arith.addf %38, %39 : vector<16x32xf32>
    %41 = arith.negf %40 : vector<16x32xf32>
    %42 = math.exp %41 : vector<16x32xf32>
    %cst_34 = arith.constant 1.000000e+00 : f32
    %43 = vector.broadcast %cst_34 : f32 to vector<16x32xf32>
    %44 = arith.addf %43, %42 : vector<16x32xf32>
    %45 = arith.divf %43, %44 : vector<16x32xf32>
    %46 = vector.extract_strided_slice %26 {offsets = [0, 64], sizes = [16, 32], strides = [1, 1]} : vector<16x96xf32> to vector<16x32xf32>
    %47 = vector.extract_strided_slice %29 {offsets = [0, 64], sizes = [16, 32], strides = [1, 1]} : vector<16x96xf32> to vector<16x32xf32>
    %48 = arith.mulf %37, %47 : vector<16x32xf32>
    %49 = arith.addf %46, %48 : vector<16x32xf32>
    %50 = math.tanh %49 : vector<16x32xf32>
    %cst_35 = arith.constant 1.000000e+00 : f32
    %51 = vector.broadcast %cst_35 : f32 to vector<16x32xf32>
    %52 = arith.subf %51, %45 : vector<16x32xf32>
    %53 = arith.mulf %52, %50 : vector<16x32xf32>
    %54 = arith.mulf %45, %24 : vector<16x32xf32>
    %55 = arith.addf %53, %54 : vector<16x32xf32>
    %56 = vector.extract_strided_slice %55 {offsets = [0, 0], sizes = [16, 16], strides = [1, 1]} : vector<16x32xf32> to vector<16x16xf32>
    %c0_36 = arith.constant 0 : index
    %c0_37 = arith.constant 0 : index
    %57 = vector.load %arg9[%c0_36, %c0_37] : memref<16x256xf32, #tpu.memory_space<vmem>>, vector<16x16xf32>
    tpu.vector_store %arg9[%c0_36, %c0_37], %56 {strides = array<i32>} : memref<16x256xf32, #tpu.memory_space<vmem>>, vector<16x16xf32>,
    %58 = vector.extract_strided_slice %55 {offsets = [0, 16], sizes = [16, 16], strides = [1, 1]} : vector<16x32xf32> to vector<16x16xf32>
    %c0_38 = arith.constant 0 : index
    %c240 = arith.constant 240 : index
    %59 = vector.load %arg9[%c0_38, %c240] : memref<16x256xf32, #tpu.memory_space<vmem>>, vector<16x16xf32>
    tpu.vector_store %arg9[%c0_38, %c240], %58 {strides = array<i32>} : memref<16x256xf32, #tpu.memory_space<vmem>>, vector<16x16xf32>,
    %60 = vector.extract_strided_slice %23 {offsets = [1, 0, 0], sizes = [1, 16, 96], strides = [1, 1, 1]} : vector<8x16x96xf32> to vector<1x16x96xf32>
    %61 = vector.shape_cast %60 : vector<1x16x96xf32> to vector<16x96xf32>
    %cst_39 = arith.constant dense<0.000000e+00> : vector<16x96xf32>
    %62 = tpu.matmul %55, %1, %cst_39 {dimension_numbers = #tpu.dot_dimension_numbers<[1], [0], [0], [1], [0, 0, 1, 1], [], []>} : vector<16x32xf32>, vector<32x96xf32>, vector<16x96xf32> -> vector<16x96xf32>
    %63 = vector.broadcast %12 : vector<1x96xf32> to vector<16x96xf32>
    %64 = arith.addf %62, %63 : vector<16x96xf32>
    %65 = vector.extract_strided_slice %61 {offsets = [0, 0], sizes = [16, 32], strides = [1, 1]} : vector<16x96xf32> to vector<16x32xf32>
    %66 = vector.extract_strided_slice %64 {offsets = [0, 0], sizes = [16, 32], strides = [1, 1]} : vector<16x96xf32> to vector<16x32xf32>
    %67 = arith.addf %65, %66 : vector<16x32xf32>
    %68 = arith.negf %67 : vector<16x32xf32>
    %69 = math.exp %68 : vector<16x32xf32>
    %cst_40 = arith.constant 1.000000e+00 : f32
    %70 = vector.broadcast %cst_40 : f32 to vector<16x32xf32>
    %71 = arith.addf %70, %69 : vector<16x32xf32>
    %72 = arith.divf %70, %71 : vector<16x32xf32>
    %73 = vector.extract_strided_slice %61 {offsets = [0, 32], sizes = [16, 32], strides = [1, 1]} : vector<16x96xf32> to vector<16x32xf32>
    %74 = vector.extract_strided_slice %64 {offsets = [0, 32], sizes = [16, 32], strides = [1, 1]} : vector<16x96xf32> to vector<16x32xf32>
    %75 = arith.addf %73, %74 : vector<16x32xf32>
    %76 = arith.negf %75 : vector<16x32xf32>
    %77 = math.exp %76 : vector<16x32xf32>
    %cst_41 = arith.constant 1.000000e+00 : f32
    %78 = vector.broadcast %cst_41 : f32 to vector<16x32xf32>
    %79 = arith.addf %78, %77 : vector<16x32xf32>
    %80 = arith.divf %78, %79 : vector<16x32xf32>
    %81 = vector.extract_strided_slice %61 {offsets = [0, 64], sizes = [16, 32], strides = [1, 1]} : vector<16x96xf32> to vector<16x32xf32>
    %82 = vector.extract_strided_slice %64 {offsets = [0, 64], sizes = [16, 32], strides = [1, 1]} : vector<16x96xf32> to vector<16x32xf32>
    %83 = arith.mulf %72, %82 : vector<16x32xf32>
    %84 = arith.addf %81, %83 : vector<16x32xf32>
    %85 = math.tanh %84 : vector<16x32xf32>
    %cst_42 = arith.constant 1.000000e+00 : f32
    %86 = vector.broadcast %cst_42 : f32 to vector<16x32xf32>
    %87 = arith.subf %86, %80 : vector<16x32xf32>
    %88 = arith.mulf %87, %85 : vector<16x32xf32>
    %89 = arith.mulf %80, %55 : vector<16x32xf32>
    %90 = arith.addf %88, %89 : vector<16x32xf32>
    %91 = vector.extract_strided_slice %90 {offsets = [0, 0], sizes = [16, 16], strides = [1, 1]} : vector<16x32xf32> to vector<16x16xf32>
    %c0_43 = arith.constant 0 : index
    %c32 = arith.constant 32 : index
    %92 = vector.load %arg9[%c0_43, %c32] : memref<16x256xf32, #tpu.memory_space<vmem>>, vector<16x16xf32>
    tpu.vector_store %arg9[%c0_43, %c32], %91 {strides = array<i32>} : memref<16x256xf32, #tpu.memory_space<vmem>>, vector<16x16xf32>,
    %93 = vector.extract_strided_slice %90 {offsets = [0, 16], sizes = [16, 16], strides = [1, 1]} : vector<16x32xf32> to vector<16x16xf32>
    %c0_44 = arith.constant 0 : index
    %c208 = arith.constant 208 : index
    %94 = vector.load %arg9[%c0_44, %c208] : memref<16x256xf32, #tpu.memory_space<vmem>>, vector<16x16xf32>
    tpu.vector_store %arg9[%c0_44, %c208], %93 {strides = array<i32>} : memref<16x256xf32, #tpu.memory_space<vmem>>, vector<16x16xf32>,
    %95 = vector.extract_strided_slice %23 {offsets = [2, 0, 0], sizes = [1, 16, 96], strides = [1, 1, 1]} : vector<8x16x96xf32> to vector<1x16x96xf32>
    %96 = vector.shape_cast %95 : vector<1x16x96xf32> to vector<16x96xf32>
    %cst_45 = arith.constant dense<0.000000e+00> : vector<16x96xf32>
    %97 = tpu.matmul %90, %1, %cst_45 {dimension_numbers = #tpu.dot_dimension_numbers<[1], [0], [0], [1], [0, 0, 1, 1], [], []>} : vector<16x32xf32>, vector<32x96xf32>, vector<16x96xf32> -> vector<16x96xf32>
    %98 = vector.broadcast %12 : vector<1x96xf32> to vector<16x96xf32>
    %99 = arith.addf %97, %98 : vector<16x96xf32>
    %100 = vector.extract_strided_slice %96 {offsets = [0, 0], sizes = [16, 32], strides = [1, 1]} : vector<16x96xf32> to vector<16x32xf32>
    %101 = vector.extract_strided_slice %99 {offsets = [0, 0], sizes = [16, 32], strides = [1, 1]} : vector<16x96xf32> to vector<16x32xf32>
    %102 = arith.addf %100, %101 : vector<16x32xf32>
    %103 = arith.negf %102 : vector<16x32xf32>
    %104 = math.exp %103 : vector<16x32xf32>
    %cst_46 = arith.constant 1.000000e+00 : f32
    %105 = vector.broadcast %cst_46 : f32 to vector<16x32xf32>
    %106 = arith.addf %105, %104 : vector<16x32xf32>
    %107 = arith.divf %105, %106 : vector<16x32xf32>
    %108 = vector.extract_strided_slice %96 {offsets = [0, 32], sizes = [16, 32], strides = [1, 1]} : vector<16x96xf32> to vector<16x32xf32>
    %109 = vector.extract_strided_slice %99 {offsets = [0, 32], sizes = [16, 32], strides = [1, 1]} : vector<16x96xf32> to vector<16x32xf32>
    %110 = arith.addf %108, %109 : vector<16x32xf32>
    %111 = arith.negf %110 : vector<16x32xf32>
    %112 = math.exp %111 : vector<16x32xf32>
    %cst_47 = arith.constant 1.000000e+00 : f32
    %113 = vector.broadcast %cst_47 : f32 to vector<16x32xf32>
    %114 = arith.addf %113, %112 : vector<16x32xf32>
    %115 = arith.divf %113, %114 : vector<16x32xf32>
    %116 = vector.extract_strided_slice %96 {offsets = [0, 64], sizes = [16, 32], strides = [1, 1]} : vector<16x96xf32> to vector<16x32xf32>
    %117 = vector.extract_strided_slice %99 {offsets = [0, 64], sizes = [16, 32], strides = [1, 1]} : vector<16x96xf32> to vector<16x32xf32>
    %118 = arith.mulf %107, %117 : vector<16x32xf32>
    %119 = arith.addf %116, %118 : vector<16x32xf32>
    %120 = math.tanh %119 : vector<16x32xf32>
    %cst_48 = arith.constant 1.000000e+00 : f32
    %121 = vector.broadcast %cst_48 : f32 to vector<16x32xf32>
    %122 = arith.subf %121, %115 : vector<16x32xf32>
    %123 = arith.mulf %122, %120 : vector<16x32xf32>
    %124 = arith.mulf %115, %90 : vector<16x32xf32>
    %125 = arith.addf %123, %124 : vector<16x32xf32>
    %126 = vector.extract_strided_slice %125 {offsets = [0, 0], sizes = [16, 16], strides = [1, 1]} : vector<16x32xf32> to vector<16x16xf32>
    %c0_49 = arith.constant 0 : index
    %c64 = arith.constant 64 : index
    %127 = vector.load %arg9[%c0_49, %c64] : memref<16x256xf32, #tpu.memory_space<vmem>>, vector<16x16xf32>
    tpu.vector_store %arg9[%c0_49, %c64], %126 {strides = array<i32>} : memref<16x256xf32, #tpu.memory_space<vmem>>, vector<16x16xf32>,
    %128 = vector.extract_strided_slice %125 {offsets = [0, 16], sizes = [16, 16], strides = [1, 1]} : vector<16x32xf32> to vector<16x16xf32>
    %c0_50 = arith.constant 0 : index
    %c176 = arith.constant 176 : index
    %129 = vector.load %arg9[%c0_50, %c176] : memref<16x256xf32, #tpu.memory_space<vmem>>, vector<16x16xf32>
    tpu.vector_store %arg9[%c0_50, %c176], %128 {strides = array<i32>} : memref<16x256xf32, #tpu.memory_space<vmem>>, vector<16x16xf32>,
    %130 = vector.extract_strided_slice %23 {offsets = [3, 0, 0], sizes = [1, 16, 96], strides = [1, 1, 1]} : vector<8x16x96xf32> to vector<1x16x96xf32>
    %131 = vector.shape_cast %130 : vector<1x16x96xf32> to vector<16x96xf32>
    %cst_51 = arith.constant dense<0.000000e+00> : vector<16x96xf32>
    %132 = tpu.matmul %125, %1, %cst_51 {dimension_numbers = #tpu.dot_dimension_numbers<[1], [0], [0], [1], [0, 0, 1, 1], [], []>} : vector<16x32xf32>, vector<32x96xf32>, vector<16x96xf32> -> vector<16x96xf32>
    %133 = vector.broadcast %12 : vector<1x96xf32> to vector<16x96xf32>
    %134 = arith.addf %132, %133 : vector<16x96xf32>
    %135 = vector.extract_strided_slice %131 {offsets = [0, 0], sizes = [16, 32], strides = [1, 1]} : vector<16x96xf32> to vector<16x32xf32>
    %136 = vector.extract_strided_slice %134 {offsets = [0, 0], sizes = [16, 32], strides = [1, 1]} : vector<16x96xf32> to vector<16x32xf32>
    %137 = arith.addf %135, %136 : vector<16x32xf32>
    %138 = arith.negf %137 : vector<16x32xf32>
    %139 = math.exp %138 : vector<16x32xf32>
    %cst_52 = arith.constant 1.000000e+00 : f32
    %140 = vector.broadcast %cst_52 : f32 to vector<16x32xf32>
    %141 = arith.addf %140, %139 : vector<16x32xf32>
    %142 = arith.divf %140, %141 : vector<16x32xf32>
    %143 = vector.extract_strided_slice %131 {offsets = [0, 32], sizes = [16, 32], strides = [1, 1]} : vector<16x96xf32> to vector<16x32xf32>
    %144 = vector.extract_strided_slice %134 {offsets = [0, 32], sizes = [16, 32], strides = [1, 1]} : vector<16x96xf32> to vector<16x32xf32>
    %145 = arith.addf %143, %144 : vector<16x32xf32>
    %146 = arith.negf %145 : vector<16x32xf32>
    %147 = math.exp %146 : vector<16x32xf32>
    %cst_53 = arith.constant 1.000000e+00 : f32
    %148 = vector.broadcast %cst_53 : f32 to vector<16x32xf32>
    %149 = arith.addf %148, %147 : vector<16x32xf32>
    %150 = arith.divf %148, %149 : vector<16x32xf32>
    %151 = vector.extract_strided_slice %131 {offsets = [0, 64], sizes = [16, 32], strides = [1, 1]} : vector<16x96xf32> to vector<16x32xf32>
    %152 = vector.extract_strided_slice %134 {offsets = [0, 64], sizes = [16, 32], strides = [1, 1]} : vector<16x96xf32> to vector<16x32xf32>
    %153 = arith.mulf %142, %152 : vector<16x32xf32>
    %154 = arith.addf %151, %153 : vector<16x32xf32>
    %155 = math.tanh %154 : vector<16x32xf32>
    %cst_54 = arith.constant 1.000000e+00 : f32
    %156 = vector.broadcast %cst_54 : f32 to vector<16x32xf32>
    %157 = arith.subf %156, %150 : vector<16x32xf32>
    %158 = arith.mulf %157, %155 : vector<16x32xf32>
    %159 = arith.mulf %150, %125 : vector<16x32xf32>
    %160 = arith.addf %158, %159 : vector<16x32xf32>
    %161 = vector.extract_strided_slice %160 {offsets = [0, 0], sizes = [16, 16], strides = [1, 1]} : vector<16x32xf32> to vector<16x16xf32>
    %c0_55 = arith.constant 0 : index
    %c96 = arith.constant 96 : index
    %162 = vector.load %arg9[%c0_55, %c96] : memref<16x256xf32, #tpu.memory_space<vmem>>, vector<16x16xf32>
    tpu.vector_store %arg9[%c0_55, %c96], %161 {strides = array<i32>} : memref<16x256xf32, #tpu.memory_space<vmem>>, vector<16x16xf32>,
    %163 = vector.extract_strided_slice %160 {offsets = [0, 16], sizes = [16, 16], strides = [1, 1]} : vector<16x32xf32> to vector<16x16xf32>
    %c0_56 = arith.constant 0 : index
    %c144 = arith.constant 144 : index
    %164 = vector.load %arg9[%c0_56, %c144] : memref<16x256xf32, #tpu.memory_space<vmem>>, vector<16x16xf32>
    tpu.vector_store %arg9[%c0_56, %c144], %163 {strides = array<i32>} : memref<16x256xf32, #tpu.memory_space<vmem>>, vector<16x16xf32>,
    %165 = vector.extract_strided_slice %23 {offsets = [4, 0, 0], sizes = [1, 16, 96], strides = [1, 1, 1]} : vector<8x16x96xf32> to vector<1x16x96xf32>
    %166 = vector.shape_cast %165 : vector<1x16x96xf32> to vector<16x96xf32>
    %cst_57 = arith.constant dense<0.000000e+00> : vector<16x96xf32>
    %167 = tpu.matmul %160, %1, %cst_57 {dimension_numbers = #tpu.dot_dimension_numbers<[1], [0], [0], [1], [0, 0, 1, 1], [], []>} : vector<16x32xf32>, vector<32x96xf32>, vector<16x96xf32> -> vector<16x96xf32>
    %168 = vector.broadcast %12 : vector<1x96xf32> to vector<16x96xf32>
    %169 = arith.addf %167, %168 : vector<16x96xf32>
    %170 = vector.extract_strided_slice %166 {offsets = [0, 0], sizes = [16, 32], strides = [1, 1]} : vector<16x96xf32> to vector<16x32xf32>
    %171 = vector.extract_strided_slice %169 {offsets = [0, 0], sizes = [16, 32], strides = [1, 1]} : vector<16x96xf32> to vector<16x32xf32>
    %172 = arith.addf %170, %171 : vector<16x32xf32>
    %173 = arith.negf %172 : vector<16x32xf32>
    %174 = math.exp %173 : vector<16x32xf32>
    %cst_58 = arith.constant 1.000000e+00 : f32
    %175 = vector.broadcast %cst_58 : f32 to vector<16x32xf32>
    %176 = arith.addf %175, %174 : vector<16x32xf32>
    %177 = arith.divf %175, %176 : vector<16x32xf32>
    %178 = vector.extract_strided_slice %166 {offsets = [0, 32], sizes = [16, 32], strides = [1, 1]} : vector<16x96xf32> to vector<16x32xf32>
    %179 = vector.extract_strided_slice %169 {offsets = [0, 32], sizes = [16, 32], strides = [1, 1]} : vector<16x96xf32> to vector<16x32xf32>
    %180 = arith.addf %178, %179 : vector<16x32xf32>
    %181 = arith.negf %180 : vector<16x32xf32>
    %182 = math.exp %181 : vector<16x32xf32>
    %cst_59 = arith.constant 1.000000e+00 : f32
    %183 = vector.broadcast %cst_59 : f32 to vector<16x32xf32>
    %184 = arith.addf %183, %182 : vector<16x32xf32>
    %185 = arith.divf %183, %184 : vector<16x32xf32>
    %186 = vector.extract_strided_slice %166 {offsets = [0, 64], sizes = [16, 32], strides = [1, 1]} : vector<16x96xf32> to vector<16x32xf32>
    %187 = vector.extract_strided_slice %169 {offsets = [0, 64], sizes = [16, 32], strides = [1, 1]} : vector<16x96xf32> to vector<16x32xf32>
    %188 = arith.mulf %177, %187 : vector<16x32xf32>
    %189 = arith.addf %186, %188 : vector<16x32xf32>
    %190 = math.tanh %189 : vector<16x32xf32>
    %cst_60 = arith.constant 1.000000e+00 : f32
    %191 = vector.broadcast %cst_60 : f32 to vector<16x32xf32>
    %192 = arith.subf %191, %185 : vector<16x32xf32>
    %193 = arith.mulf %192, %190 : vector<16x32xf32>
    %194 = arith.mulf %185, %160 : vector<16x32xf32>
    %195 = arith.addf %193, %194 : vector<16x32xf32>
    %196 = vector.extract_strided_slice %195 {offsets = [0, 0], sizes = [16, 16], strides = [1, 1]} : vector<16x32xf32> to vector<16x16xf32>
    %c0_61 = arith.constant 0 : index
    %c128_62 = arith.constant 128 : index
    %197 = vector.load %arg9[%c0_61, %c128_62] : memref<16x256xf32, #tpu.memory_space<vmem>>, vector<16x16xf32>
    tpu.vector_store %arg9[%c0_61, %c128_62], %196 {strides = array<i32>} : memref<16x256xf32, #tpu.memory_space<vmem>>, vector<16x16xf32>,
    %198 = vector.extract_strided_slice %195 {offsets = [0, 16], sizes = [16, 16], strides = [1, 1]} : vector<16x32xf32> to vector<16x16xf32>
    %c0_63 = arith.constant 0 : index
    %c112 = arith.constant 112 : index
    %199 = vector.load %arg9[%c0_63, %c112] : memref<16x256xf32, #tpu.memory_space<vmem>>, vector<16x16xf32>
    tpu.vector_store %arg9[%c0_63, %c112], %198 {strides = array<i32>} : memref<16x256xf32, #tpu.memory_space<vmem>>, vector<16x16xf32>,
    %200 = vector.extract_strided_slice %23 {offsets = [5, 0, 0], sizes = [1, 16, 96], strides = [1, 1, 1]} : vector<8x16x96xf32> to vector<1x16x96xf32>
    %201 = vector.shape_cast %200 : vector<1x16x96xf32> to vector<16x96xf32>
    %cst_64 = arith.constant dense<0.000000e+00> : vector<16x96xf32>
    %202 = tpu.matmul %195, %1, %cst_64 {dimension_numbers = #tpu.dot_dimension_numbers<[1], [0], [0], [1], [0, 0, 1, 1], [], []>} : vector<16x32xf32>, vector<32x96xf32>, vector<16x96xf32> -> vector<16x96xf32>
    %203 = vector.broadcast %12 : vector<1x96xf32> to vector<16x96xf32>
    %204 = arith.addf %202, %203 : vector<16x96xf32>
    %205 = vector.extract_strided_slice %201 {offsets = [0, 0], sizes = [16, 32], strides = [1, 1]} : vector<16x96xf32> to vector<16x32xf32>
    %206 = vector.extract_strided_slice %204 {offsets = [0, 0], sizes = [16, 32], strides = [1, 1]} : vector<16x96xf32> to vector<16x32xf32>
    %207 = arith.addf %205, %206 : vector<16x32xf32>
    %208 = arith.negf %207 : vector<16x32xf32>
    %209 = math.exp %208 : vector<16x32xf32>
    %cst_65 = arith.constant 1.000000e+00 : f32
    %210 = vector.broadcast %cst_65 : f32 to vector<16x32xf32>
    %211 = arith.addf %210, %209 : vector<16x32xf32>
    %212 = arith.divf %210, %211 : vector<16x32xf32>
    %213 = vector.extract_strided_slice %201 {offsets = [0, 32], sizes = [16, 32], strides = [1, 1]} : vector<16x96xf32> to vector<16x32xf32>
    %214 = vector.extract_strided_slice %204 {offsets = [0, 32], sizes = [16, 32], strides = [1, 1]} : vector<16x96xf32> to vector<16x32xf32>
    %215 = arith.addf %213, %214 : vector<16x32xf32>
    %216 = arith.negf %215 : vector<16x32xf32>
    %217 = math.exp %216 : vector<16x32xf32>
    %cst_66 = arith.constant 1.000000e+00 : f32
    %218 = vector.broadcast %cst_66 : f32 to vector<16x32xf32>
    %219 = arith.addf %218, %217 : vector<16x32xf32>
    %220 = arith.divf %218, %219 : vector<16x32xf32>
    %221 = vector.extract_strided_slice %201 {offsets = [0, 64], sizes = [16, 32], strides = [1, 1]} : vector<16x96xf32> to vector<16x32xf32>
    %222 = vector.extract_strided_slice %204 {offsets = [0, 64], sizes = [16, 32], strides = [1, 1]} : vector<16x96xf32> to vector<16x32xf32>
    %223 = arith.mulf %212, %222 : vector<16x32xf32>
    %224 = arith.addf %221, %223 : vector<16x32xf32>
    %225 = math.tanh %224 : vector<16x32xf32>
    %cst_67 = arith.constant 1.000000e+00 : f32
    %226 = vector.broadcast %cst_67 : f32 to vector<16x32xf32>
    %227 = arith.subf %226, %220 : vector<16x32xf32>
    %228 = arith.mulf %227, %225 : vector<16x32xf32>
    %229 = arith.mulf %220, %195 : vector<16x32xf32>
    %230 = arith.addf %228, %229 : vector<16x32xf32>
    %231 = vector.extract_strided_slice %230 {offsets = [0, 0], sizes = [16, 16], strides = [1, 1]} : vector<16x32xf32> to vector<16x16xf32>
    %c0_68 = arith.constant 0 : index
    %c160 = arith.constant 160 : index
    %232 = vector.load %arg9[%c0_68, %c160] : memref<16x256xf32, #tpu.memory_space<vmem>>, vector<16x16xf32>
    tpu.vector_store %arg9[%c0_68, %c160], %231 {strides = array<i32>} : memref<16x256xf32, #tpu.memory_space<vmem>>, vector<16x16xf32>,
    %233 = vector.extract_strided_slice %230 {offsets = [0, 16], sizes = [16, 16], strides = [1, 1]} : vector<16x32xf32> to vector<16x16xf32>
    %c0_69 = arith.constant 0 : index
    %c80 = arith.constant 80 : index
    %234 = vector.load %arg9[%c0_69, %c80] : memref<16x256xf32, #tpu.memory_space<vmem>>, vector<16x16xf32>
    tpu.vector_store %arg9[%c0_69, %c80], %233 {strides = array<i32>} : memref<16x256xf32, #tpu.memory_space<vmem>>, vector<16x16xf32>,
    %235 = vector.extract_strided_slice %23 {offsets = [6, 0, 0], sizes = [1, 16, 96], strides = [1, 1, 1]} : vector<8x16x96xf32> to vector<1x16x96xf32>
    %236 = vector.shape_cast %235 : vector<1x16x96xf32> to vector<16x96xf32>
    %cst_70 = arith.constant dense<0.000000e+00> : vector<16x96xf32>
    %237 = tpu.matmul %230, %1, %cst_70 {dimension_numbers = #tpu.dot_dimension_numbers<[1], [0], [0], [1], [0, 0, 1, 1], [], []>} : vector<16x32xf32>, vector<32x96xf32>, vector<16x96xf32> -> vector<16x96xf32>
    %238 = vector.broadcast %12 : vector<1x96xf32> to vector<16x96xf32>
    %239 = arith.addf %237, %238 : vector<16x96xf32>
    %240 = vector.extract_strided_slice %236 {offsets = [0, 0], sizes = [16, 32], strides = [1, 1]} : vector<16x96xf32> to vector<16x32xf32>
    %241 = vector.extract_strided_slice %239 {offsets = [0, 0], sizes = [16, 32], strides = [1, 1]} : vector<16x96xf32> to vector<16x32xf32>
    %242 = arith.addf %240, %241 : vector<16x32xf32>
    %243 = arith.negf %242 : vector<16x32xf32>
    %244 = math.exp %243 : vector<16x32xf32>
    %cst_71 = arith.constant 1.000000e+00 : f32
    %245 = vector.broadcast %cst_71 : f32 to vector<16x32xf32>
    %246 = arith.addf %245, %244 : vector<16x32xf32>
    %247 = arith.divf %245, %246 : vector<16x32xf32>
    %248 = vector.extract_strided_slice %236 {offsets = [0, 32], sizes = [16, 32], strides = [1, 1]} : vector<16x96xf32> to vector<16x32xf32>
    %249 = vector.extract_strided_slice %239 {offsets = [0, 32], sizes = [16, 32], strides = [1, 1]} : vector<16x96xf32> to vector<16x32xf32>
    %250 = arith.addf %248, %249 : vector<16x32xf32>
    %251 = arith.negf %250 : vector<16x32xf32>
    %252 = math.exp %251 : vector<16x32xf32>
    %cst_72 = arith.constant 1.000000e+00 : f32
    %253 = vector.broadcast %cst_72 : f32 to vector<16x32xf32>
    %254 = arith.addf %253, %252 : vector<16x32xf32>
    %255 = arith.divf %253, %254 : vector<16x32xf32>
    %256 = vector.extract_strided_slice %236 {offsets = [0, 64], sizes = [16, 32], strides = [1, 1]} : vector<16x96xf32> to vector<16x32xf32>
    %257 = vector.extract_strided_slice %239 {offsets = [0, 64], sizes = [16, 32], strides = [1, 1]} : vector<16x96xf32> to vector<16x32xf32>
    %258 = arith.mulf %247, %257 : vector<16x32xf32>
    %259 = arith.addf %256, %258 : vector<16x32xf32>
    %260 = math.tanh %259 : vector<16x32xf32>
    %cst_73 = arith.constant 1.000000e+00 : f32
    %261 = vector.broadcast %cst_73 : f32 to vector<16x32xf32>
    %262 = arith.subf %261, %255 : vector<16x32xf32>
    %263 = arith.mulf %262, %260 : vector<16x32xf32>
    %264 = arith.mulf %255, %230 : vector<16x32xf32>
    %265 = arith.addf %263, %264 : vector<16x32xf32>
    %266 = vector.extract_strided_slice %265 {offsets = [0, 0], sizes = [16, 16], strides = [1, 1]} : vector<16x32xf32> to vector<16x16xf32>
    %c0_74 = arith.constant 0 : index
    %c192 = arith.constant 192 : index
    %267 = vector.load %arg9[%c0_74, %c192] : memref<16x256xf32, #tpu.memory_space<vmem>>, vector<16x16xf32>
    tpu.vector_store %arg9[%c0_74, %c192], %266 {strides = array<i32>} : memref<16x256xf32, #tpu.memory_space<vmem>>, vector<16x16xf32>,
    %268 = vector.extract_strided_slice %265 {offsets = [0, 16], sizes = [16, 16], strides = [1, 1]} : vector<16x32xf32> to vector<16x16xf32>
    %c0_75 = arith.constant 0 : index
    %c48 = arith.constant 48 : index
    %269 = vector.load %arg9[%c0_75, %c48] : memref<16x256xf32, #tpu.memory_space<vmem>>, vector<16x16xf32>
    tpu.vector_store %arg9[%c0_75, %c48], %268 {strides = array<i32>} : memref<16x256xf32, #tpu.memory_space<vmem>>, vector<16x16xf32>,
    %270 = vector.extract_strided_slice %23 {offsets = [7, 0, 0], sizes = [1, 16, 96], strides = [1, 1, 1]} : vector<8x16x96xf32> to vector<1x16x96xf32>
    %271 = vector.shape_cast %270 : vector<1x16x96xf32> to vector<16x96xf32>
    %cst_76 = arith.constant dense<0.000000e+00> : vector<16x96xf32>
    %272 = tpu.matmul %265, %1, %cst_76 {dimension_numbers = #tpu.dot_dimension_numbers<[1], [0], [0], [1], [0, 0, 1, 1], [], []>} : vector<16x32xf32>, vector<32x96xf32>, vector<16x96xf32> -> vector<16x96xf32>
    %273 = vector.broadcast %12 : vector<1x96xf32> to vector<16x96xf32>
    %274 = arith.addf %272, %273 : vector<16x96xf32>
    %275 = vector.extract_strided_slice %271 {offsets = [0, 0], sizes = [16, 32], strides = [1, 1]} : vector<16x96xf32> to vector<16x32xf32>
    %276 = vector.extract_strided_slice %274 {offsets = [0, 0], sizes = [16, 32], strides = [1, 1]} : vector<16x96xf32> to vector<16x32xf32>
    %277 = arith.addf %275, %276 : vector<16x32xf32>
    %278 = arith.negf %277 : vector<16x32xf32>
    %279 = math.exp %278 : vector<16x32xf32>
    %cst_77 = arith.constant 1.000000e+00 : f32
    %280 = vector.broadcast %cst_77 : f32 to vector<16x32xf32>
    %281 = arith.addf %280, %279 : vector<16x32xf32>
    %282 = arith.divf %280, %281 : vector<16x32xf32>
    %283 = vector.extract_strided_slice %271 {offsets = [0, 32], sizes = [16, 32], strides = [1, 1]} : vector<16x96xf32> to vector<16x32xf32>
    %284 = vector.extract_strided_slice %274 {offsets = [0, 32], sizes = [16, 32], strides = [1, 1]} : vector<16x96xf32> to vector<16x32xf32>
    %285 = arith.addf %283, %284 : vector<16x32xf32>
    %286 = arith.negf %285 : vector<16x32xf32>
    %287 = math.exp %286 : vector<16x32xf32>
    %cst_78 = arith.constant 1.000000e+00 : f32
    %288 = vector.broadcast %cst_78 : f32 to vector<16x32xf32>
    %289 = arith.addf %288, %287 : vector<16x32xf32>
    %290 = arith.divf %288, %289 : vector<16x32xf32>
    %291 = vector.extract_strided_slice %271 {offsets = [0, 64], sizes = [16, 32], strides = [1, 1]} : vector<16x96xf32> to vector<16x32xf32>
    %292 = vector.extract_strided_slice %274 {offsets = [0, 64], sizes = [16, 32], strides = [1, 1]} : vector<16x96xf32> to vector<16x32xf32>
    %293 = arith.mulf %282, %292 : vector<16x32xf32>
    %294 = arith.addf %291, %293 : vector<16x32xf32>
    %295 = math.tanh %294 : vector<16x32xf32>
    %cst_79 = arith.constant 1.000000e+00 : f32
    %296 = vector.broadcast %cst_79 : f32 to vector<16x32xf32>
    %297 = arith.subf %296, %290 : vector<16x32xf32>
    %298 = arith.mulf %297, %295 : vector<16x32xf32>
    %299 = arith.mulf %290, %265 : vector<16x32xf32>
    %300 = arith.addf %298, %299 : vector<16x32xf32>
    %301 = vector.extract_strided_slice %300 {offsets = [0, 0], sizes = [16, 16], strides = [1, 1]} : vector<16x32xf32> to vector<16x16xf32>
    %c0_80 = arith.constant 0 : index
    %c224 = arith.constant 224 : index
    %302 = vector.load %arg9[%c0_80, %c224] : memref<16x256xf32, #tpu.memory_space<vmem>>, vector<16x16xf32>
    tpu.vector_store %arg9[%c0_80, %c224], %301 {strides = array<i32>} : memref<16x256xf32, #tpu.memory_space<vmem>>, vector<16x16xf32>,
    %303 = vector.extract_strided_slice %300 {offsets = [0, 16], sizes = [16, 16], strides = [1, 1]} : vector<16x32xf32> to vector<16x16xf32>
    %c0_81 = arith.constant 0 : index
    %c16 = arith.constant 16 : index
    %304 = vector.load %arg9[%c0_81, %c16] : memref<16x256xf32, #tpu.memory_space<vmem>>, vector<16x16xf32>
    tpu.vector_store %arg9[%c0_81, %c16], %303 {strides = array<i32>} : memref<16x256xf32, #tpu.memory_space<vmem>>, vector<16x16xf32>,
    %c0_82 = arith.constant 0 : index
    %c0_83 = arith.constant 0 : index
    %305 = vector.load %arg9[%c0_82, %c0_83] : memref<16x256xf32, #tpu.memory_space<vmem>>, vector<16x256xf32>
    %306 = vector.extract_strided_slice %300 {offsets = [0, 16], sizes = [16, 16], strides = [1, 1]} : vector<16x32xf32> to vector<16x16xf32>
    %cst_84 = arith.constant dense<0.000000e+00> : vector<16x256xf32>
    %307 = tpu.matmul %300, %4, %cst_84 {dimension_numbers = #tpu.dot_dimension_numbers<[1], [0], [0], [1], [0, 0, 1, 1], [], []>} : vector<16x32xf32>, vector<32x256xf32>, vector<16x256xf32> -> vector<16x256xf32>
    %308 = vector.broadcast %14 : vector<1x256xf32> to vector<16x256xf32>
    %309 = arith.addf %307, %308 : vector<16x256xf32>
    %cst_85 = arith.constant dense<0.000000e+00> : vector<16x256xf32>
    %310 = tpu.matmul %305, %7, %cst_85 {dimension_numbers = #tpu.dot_dimension_numbers<[1], [0], [0], [1], [0, 0, 1, 1], [], []>} : vector<16x256xf32>, vector<256x256xf32>, vector<16x256xf32> -> vector<16x256xf32>
    %311 = arith.addf %310, %309 : vector<16x256xf32>
    %312 = arith.negf %311 : vector<16x256xf32>
    %313 = math.exp %312 : vector<16x256xf32>
    %cst_86 = arith.constant 1.000000e+00 : f32
    %314 = vector.broadcast %cst_86 : f32 to vector<16x256xf32>
    %315 = arith.addf %314, %313 : vector<16x256xf32>
    %316 = arith.divf %314, %315 : vector<16x256xf32>
    %317 = arith.mulf %305, %316 : vector<16x256xf32>
    %cst_87 = arith.constant dense<0.000000e+00> : vector<16x32xf32>
    %318 = tpu.matmul %306, %6, %cst_87 {dimension_numbers = #tpu.dot_dimension_numbers<[1], [0], [0], [1], [0, 0, 1, 1], [], []>} : vector<16x16xf32>, vector<16x32xf32>, vector<16x32xf32> -> vector<16x32xf32>
    %319 = vector.broadcast %15 : vector<1x32xf32> to vector<16x32xf32>
    %320 = arith.addf %318, %319 : vector<16x32xf32>
    %321 = math.tanh %320 : vector<16x32xf32>
    %cst_88 = arith.constant dense<0.000000e+00> : vector<16x256xf32>
    %322 = tpu.matmul %317, %8, %cst_88 {dimension_numbers = #tpu.dot_dimension_numbers<[1], [0], [0], [1], [0, 0, 1, 1], [], []>} : vector<16x256xf32>, vector<256x256xf32>, vector<16x256xf32> -> vector<16x256xf32>
    %323 = vector.broadcast %16 : vector<1x256xf32> to vector<16x256xf32>
    %324 = arith.addf %322, %323 : vector<16x256xf32>
    %c0_89 = arith.constant 0 : index
    %c0_90 = arith.constant 0 : index
    %c0_91 = arith.constant 0 : index
    %325 = vector.load %arg2[%c0_89, %c0_90, %c0_91] : memref<7x16x16xf32, #tpu.memory_space<vmem>>, vector<7x16x16xf32>
    %326 = vector.shape_cast %325 : vector<7x16x16xf32> to vector<112x16xf32>
    %cst_92 = arith.constant dense<0.000000e+00> : vector<112x128xf32>
    %327 = tpu.matmul %326, %5, %cst_92 {dimension_numbers = #tpu.dot_dimension_numbers<[1], [0], [0], [1], [0, 0, 1, 1], [], []>} : vector<112x16xf32>, vector<16x128xf32>, vector<112x128xf32> -> vector<112x128xf32>
    %328 = vector.broadcast %17 : vector<1x128xf32> to vector<112x128xf32>
    %329 = arith.addf %327, %328 : vector<112x128xf32>
    %330 = vector.shape_cast %329 : vector<112x128xf32> to vector<7x16x128xf32>
    %c0_93 = arith.constant 0 : index
    %c0_94 = arith.constant 0 : index
    %331 = vector.load %arg3[%c0_93, %c0_94] : memref<16x256xf32, #tpu.memory_space<vmem>>, vector<16x256xf32>
    %cst_95 = arith.constant 0.000000e+00 : f32
    %332 = vector.broadcast %cst_95 : f32 to vector<16x96xf32>
    %333 = vector.extract_strided_slice %330 {offsets = [0, 0, 0], sizes = [1, 16, 128], strides = [1, 1, 1]} : vector<7x16x128xf32> to vector<1x16x128xf32>
    %334 = vector.shape_cast %333 : vector<1x16x128xf32> to vector<16x128xf32>
    %335 = vector.extract_strided_slice %334 {offsets = [0, 0], sizes = [16, 96], strides = [1, 1]} : vector<16x128xf32> to vector<16x96xf32>
    %336 = arith.addf %335, %332 : vector<16x96xf32>
    %cst_96 = arith.constant dense<0.000000e+00> : vector<16x96xf32>
    %337 = tpu.matmul %321, %2, %cst_96 {dimension_numbers = #tpu.dot_dimension_numbers<[1], [0], [0], [1], [0, 0, 1, 1], [], []>} : vector<16x32xf32>, vector<32x96xf32>, vector<16x96xf32> -> vector<16x96xf32>
    %338 = vector.broadcast %13 : vector<1x96xf32> to vector<16x96xf32>
    %339 = arith.addf %337, %338 : vector<16x96xf32>
    %340 = vector.extract_strided_slice %336 {offsets = [0, 0], sizes = [16, 32], strides = [1, 1]} : vector<16x96xf32> to vector<16x32xf32>
    %341 = vector.extract_strided_slice %339 {offsets = [0, 0], sizes = [16, 32], strides = [1, 1]} : vector<16x96xf32> to vector<16x32xf32>
    %342 = arith.addf %340, %341 : vector<16x32xf32>
    %343 = arith.negf %342 : vector<16x32xf32>
    %344 = math.exp %343 : vector<16x32xf32>
    %cst_97 = arith.constant 1.000000e+00 : f32
    %345 = vector.broadcast %cst_97 : f32 to vector<16x32xf32>
    %346 = arith.addf %345, %344 : vector<16x32xf32>
    %347 = arith.divf %345, %346 : vector<16x32xf32>
    %348 = vector.extract_strided_slice %336 {offsets = [0, 32], sizes = [16, 32], strides = [1, 1]} : vector<16x96xf32> to vector<16x32xf32>
    %349 = vector.extract_strided_slice %339 {offsets = [0, 32], sizes = [16, 32], strides = [1, 1]} : vector<16x96xf32> to vector<16x32xf32>
    %350 = arith.addf %348, %349 : vector<16x32xf32>
    %351 = arith.negf %350 : vector<16x32xf32>
    %352 = math.exp %351 : vector<16x32xf32>
    %cst_98 = arith.constant 1.000000e+00 : f32
    %353 = vector.broadcast %cst_98 : f32 to vector<16x32xf32>
    %354 = arith.addf %353, %352 : vector<16x32xf32>
    %355 = arith.divf %353, %354 : vector<16x32xf32>
    %356 = vector.extract_strided_slice %336 {offsets = [0, 64], sizes = [16, 32], strides = [1, 1]} : vector<16x96xf32> to vector<16x32xf32>
    %357 = vector.extract_strided_slice %339 {offsets = [0, 64], sizes = [16, 32], strides = [1, 1]} : vector<16x96xf32> to vector<16x32xf32>
    %358 = arith.mulf %347, %357 : vector<16x32xf32>
    %359 = arith.addf %356, %358 : vector<16x32xf32>
    %360 = math.tanh %359 : vector<16x32xf32>
    %cst_99 = arith.constant 1.000000e+00 : f32
    %361 = vector.broadcast %cst_99 : f32 to vector<16x32xf32>
    %362 = arith.subf %361, %355 : vector<16x32xf32>
    %363 = arith.mulf %362, %360 : vector<16x32xf32>
    %364 = arith.mulf %355, %321 : vector<16x32xf32>
    %365 = arith.addf %363, %364 : vector<16x32xf32>
    %cst_100 = arith.constant dense<0.000000e+00> : vector<16x288xf32>
    %366 = tpu.matmul %365, %3, %cst_100 {dimension_numbers = #tpu.dot_dimension_numbers<[1], [0], [0], [1], [0, 0, 1, 1], [], []>} : vector<16x32xf32>, vector<32x288xf32>, vector<16x288xf32> -> vector<16x288xf32>
    %367 = vector.extract_strided_slice %366 {offsets = [0, 0], sizes = [16, 256], strides = [1, 1]} : vector<16x288xf32> to vector<16x256xf32>
    %368 = arith.addf %324, %367 : vector<16x256xf32>
    %369 = math.tanh %368 : vector<16x256xf32>
    %cst_101 = arith.constant dense<0.000000e+00> : vector<16x256xf32>
    %370 = tpu.matmul %369, %9, %cst_101 {dimension_numbers = #tpu.dot_dimension_numbers<[1], [0], [0], [1], [0, 0, 1, 1], [], []>} : vector<16x256xf32>, vector<256x256xf32>, vector<16x256xf32> -> vector<16x256xf32>
    %371 = arith.addf %370, %331 : vector<16x256xf32>
    %cst_102 = arith.constant dense<0xFF800000> : vector<16xf32>
    %372 = vector.multi_reduction <maximumf>, %371, %cst_102 [1] : vector<16x256xf32> to vector<16xf32>
    %373 = vector.shape_cast %372 : vector<16xf32> to vector<16x1xf32>
    %374 = vector.broadcast %373 : vector<16x1xf32> to vector<16x256xf32>
    %375 = arith.subf %371, %374 : vector<16x256xf32>
    %376 = math.exp %375 : vector<16x256xf32>
    %cst_103 = arith.constant dense<0.000000e+00> : vector<16xf32>
    %377 = vector.multi_reduction <add>, %376, %cst_103 [1] : vector<16x256xf32> to vector<16xf32>
    %378 = vector.shape_cast %377 : vector<16xf32> to vector<16x1xf32>
    %379 = tpu.reciprocal %378 {approx = true} : vector<16x1xf32> -> vector<16x1xf32>
    %cst_104 = arith.constant 3.200000e+01 : f32
    %380 = vector.broadcast %cst_104 : f32 to vector<16x1xf32>
    %381 = arith.mulf %380, %379 : vector<16x1xf32>
    %382 = vector.broadcast %381 : vector<16x1xf32> to vector<16x256xf32>
    %383 = arith.mulf %376, %382 : vector<16x256xf32>
    %384 = arith.mulf %383, %317 : vector<16x256xf32>
    %cst_105 = arith.constant dense<0.000000e+00> : vector<16x128xf32>
    %385 = tpu.matmul %384, %10, %cst_105 {dimension_numbers = #tpu.dot_dimension_numbers<[1], [0], [0], [1], [0, 0, 1, 1], [], []>} : vector<16x256xf32>, vector<256x128xf32>, vector<16x128xf32> -> vector<16x128xf32>
    %386 = vector.extract_strided_slice %330 {offsets = [0, 0, 0], sizes = [1, 16, 128], strides = [1, 1, 1]} : vector<7x16x128xf32> to vector<1x16x128xf32>
    %387 = vector.shape_cast %386 : vector<1x16x128xf32> to vector<16x128xf32>
    %388 = vector.extract_strided_slice %387 {offsets = [0, 96], sizes = [16, 32], strides = [1, 1]} : vector<16x128xf32> to vector<16x32xf32>
    %389 = vector.extract_strided_slice %366 {offsets = [0, 256], sizes = [16, 32], strides = [1, 1]} : vector<16x288xf32> to vector<16x32xf32>
    %390 = arith.addf %388, %389 : vector<16x32xf32>
    %391 = vector.extract_strided_slice %385 {offsets = [0, 0], sizes = [16, 32], strides = [1, 1]} : vector<16x128xf32> to vector<16x32xf32>
    %392 = arith.addf %390, %391 : vector<16x32xf32>
    %393 = vector.extract_strided_slice %392 {offsets = [0, 0], sizes = [16, 16], strides = [1, 1]} : vector<16x32xf32> to vector<16x16xf32>
    %394 = vector.extract_strided_slice %392 {offsets = [0, 16], sizes = [16, 16], strides = [1, 1]} : vector<16x32xf32> to vector<16x16xf32>
    %395 = arith.maximumf %393, %394 : vector<16x16xf32>
    %c0_106 = arith.constant 0 : index
    %c0_107 = arith.constant 0 : index
    %c0_108 = arith.constant 0 : index
    %396 = vector.load %arg8[%c0_106, %c0_107, %c0_108] : memref<7x16x16xf32, #tpu.memory_space<vmem>>, vector<1x16x16xf32>
    %397 = vector.shape_cast %396 : vector<1x16x16xf32> to vector<16x16xf32>
    %398 = vector.shape_cast %395 : vector<16x16xf32> to vector<1x16x16xf32>
    tpu.vector_store %arg8[%c0_106, %c0_107, %c0_108], %398 {strides = array<i32>} : memref<7x16x16xf32, #tpu.memory_space<vmem>>, vector<1x16x16xf32>,
    %399 = vector.extract_strided_slice %385 {offsets = [0, 32], sizes = [16, 96], strides = [1, 1]} : vector<16x128xf32> to vector<16x96xf32>
    %400 = vector.extract_strided_slice %330 {offsets = [1, 0, 0], sizes = [1, 16, 128], strides = [1, 1, 1]} : vector<7x16x128xf32> to vector<1x16x128xf32>
    %401 = vector.shape_cast %400 : vector<1x16x128xf32> to vector<16x128xf32>
    %402 = vector.extract_strided_slice %401 {offsets = [0, 0], sizes = [16, 96], strides = [1, 1]} : vector<16x128xf32> to vector<16x96xf32>
    %403 = arith.addf %402, %399 : vector<16x96xf32>
    %cst_109 = arith.constant dense<0.000000e+00> : vector<16x96xf32>
    %404 = tpu.matmul %365, %2, %cst_109 {dimension_numbers = #tpu.dot_dimension_numbers<[1], [0], [0], [1], [0, 0, 1, 1], [], []>} : vector<16x32xf32>, vector<32x96xf32>, vector<16x96xf32> -> vector<16x96xf32>
    %405 = vector.broadcast %13 : vector<1x96xf32> to vector<16x96xf32>
    %406 = arith.addf %404, %405 : vector<16x96xf32>
    %407 = vector.extract_strided_slice %403 {offsets = [0, 0], sizes = [16, 32], strides = [1, 1]} : vector<16x96xf32> to vector<16x32xf32>
    %408 = vector.extract_strided_slice %406 {offsets = [0, 0], sizes = [16, 32], strides = [1, 1]} : vector<16x96xf32> to vector<16x32xf32>
    %409 = arith.addf %407, %408 : vector<16x32xf32>
    %410 = arith.negf %409 : vector<16x32xf32>
    %411 = math.exp %410 : vector<16x32xf32>
    %cst_110 = arith.constant 1.000000e+00 : f32
    %412 = vector.broadcast %cst_110 : f32 to vector<16x32xf32>
    %413 = arith.addf %412, %411 : vector<16x32xf32>
    %414 = arith.divf %412, %413 : vector<16x32xf32>
    %415 = vector.extract_strided_slice %403 {offsets = [0, 32], sizes = [16, 32], strides = [1, 1]} : vector<16x96xf32> to vector<16x32xf32>
    %416 = vector.extract_strided_slice %406 {offsets = [0, 32], sizes = [16, 32], strides = [1, 1]} : vector<16x96xf32> to vector<16x32xf32>
    %417 = arith.addf %415, %416 : vector<16x32xf32>
    %418 = arith.negf %417 : vector<16x32xf32>
    %419 = math.exp %418 : vector<16x32xf32>
    %cst_111 = arith.constant 1.000000e+00 : f32
    %420 = vector.broadcast %cst_111 : f32 to vector<16x32xf32>
    %421 = arith.addf %420, %419 : vector<16x32xf32>
    %422 = arith.divf %420, %421 : vector<16x32xf32>
    %423 = vector.extract_strided_slice %403 {offsets = [0, 64], sizes = [16, 32], strides = [1, 1]} : vector<16x96xf32> to vector<16x32xf32>
    %424 = vector.extract_strided_slice %406 {offsets = [0, 64], sizes = [16, 32], strides = [1, 1]} : vector<16x96xf32> to vector<16x32xf32>
    %425 = arith.mulf %414, %424 : vector<16x32xf32>
    %426 = arith.addf %423, %425 : vector<16x32xf32>
    %427 = math.tanh %426 : vector<16x32xf32>
    %cst_112 = arith.constant 1.000000e+00 : f32
    %428 = vector.broadcast %cst_112 : f32 to vector<16x32xf32>
    %429 = arith.subf %428, %422 : vector<16x32xf32>
    %430 = arith.mulf %429, %427 : vector<16x32xf32>
    %431 = arith.mulf %422, %365 : vector<16x32xf32>
    %432 = arith.addf %430, %431 : vector<16x32xf32>
    %cst_113 = arith.constant dense<0.000000e+00> : vector<16x288xf32>
    %433 = tpu.matmul %432, %3, %cst_113 {dimension_numbers = #tpu.dot_dimension_numbers<[1], [0], [0], [1], [0, 0, 1, 1], [], []>} : vector<16x32xf32>, vector<32x288xf32>, vector<16x288xf32> -> vector<16x288xf32>
    %434 = vector.extract_strided_slice %433 {offsets = [0, 0], sizes = [16, 256], strides = [1, 1]} : vector<16x288xf32> to vector<16x256xf32>
    %435 = arith.addf %324, %434 : vector<16x256xf32>
    %436 = math.tanh %435 : vector<16x256xf32>
    %cst_114 = arith.constant dense<0.000000e+00> : vector<16x256xf32>
    %437 = tpu.matmul %436, %9, %cst_114 {dimension_numbers = #tpu.dot_dimension_numbers<[1], [0], [0], [1], [0, 0, 1, 1], [], []>} : vector<16x256xf32>, vector<256x256xf32>, vector<16x256xf32> -> vector<16x256xf32>
    %438 = arith.addf %437, %331 : vector<16x256xf32>
    %cst_115 = arith.constant dense<0xFF800000> : vector<16xf32>
    %439 = vector.multi_reduction <maximumf>, %438, %cst_115 [1] : vector<16x256xf32> to vector<16xf32>
    %440 = vector.shape_cast %439 : vector<16xf32> to vector<16x1xf32>
    %441 = vector.broadcast %440 : vector<16x1xf32> to vector<16x256xf32>
    %442 = arith.subf %438, %441 : vector<16x256xf32>
    %443 = math.exp %442 : vector<16x256xf32>
    %cst_116 = arith.constant dense<0.000000e+00> : vector<16xf32>
    %444 = vector.multi_reduction <add>, %443, %cst_116 [1] : vector<16x256xf32> to vector<16xf32>
    %445 = vector.shape_cast %444 : vector<16xf32> to vector<16x1xf32>
    %446 = tpu.reciprocal %445 {approx = true} : vector<16x1xf32> -> vector<16x1xf32>
    %cst_117 = arith.constant 3.200000e+01 : f32
    %447 = vector.broadcast %cst_117 : f32 to vector<16x1xf32>
    %448 = arith.mulf %447, %446 : vector<16x1xf32>
    %449 = vector.broadcast %448 : vector<16x1xf32> to vector<16x256xf32>
    %450 = arith.mulf %443, %449 : vector<16x256xf32>
    %451 = arith.mulf %450, %317 : vector<16x256xf32>
    %cst_118 = arith.constant dense<0.000000e+00> : vector<16x128xf32>
    %452 = tpu.matmul %451, %10, %cst_118 {dimension_numbers = #tpu.dot_dimension_numbers<[1], [0], [0], [1], [0, 0, 1, 1], [], []>} : vector<16x256xf32>, vector<256x128xf32>, vector<16x128xf32> -> vector<16x128xf32>
    %453 = vector.extract_strided_slice %330 {offsets = [1, 0, 0], sizes = [1, 16, 128], strides = [1, 1, 1]} : vector<7x16x128xf32> to vector<1x16x128xf32>
    %454 = vector.shape_cast %453 : vector<1x16x128xf32> to vector<16x128xf32>
    %455 = vector.extract_strided_slice %454 {offsets = [0, 96], sizes = [16, 32], strides = [1, 1]} : vector<16x128xf32> to vector<16x32xf32>
    %456 = vector.extract_strided_slice %433 {offsets = [0, 256], sizes = [16, 32], strides = [1, 1]} : vector<16x288xf32> to vector<16x32xf32>
    %457 = arith.addf %455, %456 : vector<16x32xf32>
    %458 = vector.extract_strided_slice %452 {offsets = [0, 0], sizes = [16, 32], strides = [1, 1]} : vector<16x128xf32> to vector<16x32xf32>
    %459 = arith.addf %457, %458 : vector<16x32xf32>
    %460 = vector.extract_strided_slice %459 {offsets = [0, 0], sizes = [16, 16], strides = [1, 1]} : vector<16x32xf32> to vector<16x16xf32>
    %461 = vector.extract_strided_slice %459 {offsets = [0, 16], sizes = [16, 16], strides = [1, 1]} : vector<16x32xf32> to vector<16x16xf32>
    %462 = arith.maximumf %460, %461 : vector<16x16xf32>
    %c1 = arith.constant 1 : index
    %c0_119 = arith.constant 0 : index
    %c0_120 = arith.constant 0 : index
    %463 = vector.load %arg8[%c1, %c0_119, %c0_120] : memref<7x16x16xf32, #tpu.memory_space<vmem>>, vector<1x16x16xf32>
    %464 = vector.shape_cast %463 : vector<1x16x16xf32> to vector<16x16xf32>
    %465 = vector.shape_cast %462 : vector<16x16xf32> to vector<1x16x16xf32>
    tpu.vector_store %arg8[%c1, %c0_119, %c0_120], %465 {strides = array<i32>} : memref<7x16x16xf32, #tpu.memory_space<vmem>>, vector<1x16x16xf32>,
    %466 = vector.extract_strided_slice %452 {offsets = [0, 32], sizes = [16, 96], strides = [1, 1]} : vector<16x128xf32> to vector<16x96xf32>
    %467 = vector.extract_strided_slice %330 {offsets = [2, 0, 0], sizes = [1, 16, 128], strides = [1, 1, 1]} : vector<7x16x128xf32> to vector<1x16x128xf32>
    %468 = vector.shape_cast %467 : vector<1x16x128xf32> to vector<16x128xf32>
    %469 = vector.extract_strided_slice %468 {offsets = [0, 0], sizes = [16, 96], strides = [1, 1]} : vector<16x128xf32> to vector<16x96xf32>
    %470 = arith.addf %469, %466 : vector<16x96xf32>
    %cst_121 = arith.constant dense<0.000000e+00> : vector<16x96xf32>
    %471 = tpu.matmul %432, %2, %cst_121 {dimension_numbers = #tpu.dot_dimension_numbers<[1], [0], [0], [1], [0, 0, 1, 1], [], []>} : vector<16x32xf32>, vector<32x96xf32>, vector<16x96xf32> -> vector<16x96xf32>
    %472 = vector.broadcast %13 : vector<1x96xf32> to vector<16x96xf32>
    %473 = arith.addf %471, %472 : vector<16x96xf32>
    %474 = vector.extract_strided_slice %470 {offsets = [0, 0], sizes = [16, 32], strides = [1, 1]} : vector<16x96xf32> to vector<16x32xf32>
    %475 = vector.extract_strided_slice %473 {offsets = [0, 0], sizes = [16, 32], strides = [1, 1]} : vector<16x96xf32> to vector<16x32xf32>
    %476 = arith.addf %474, %475 : vector<16x32xf32>
    %477 = arith.negf %476 : vector<16x32xf32>
    %478 = math.exp %477 : vector<16x32xf32>
    %cst_122 = arith.constant 1.000000e+00 : f32
    %479 = vector.broadcast %cst_122 : f32 to vector<16x32xf32>
    %480 = arith.addf %479, %478 : vector<16x32xf32>
    %481 = arith.divf %479, %480 : vector<16x32xf32>
    %482 = vector.extract_strided_slice %470 {offsets = [0, 32], sizes = [16, 32], strides = [1, 1]} : vector<16x96xf32> to vector<16x32xf32>
    %483 = vector.extract_strided_slice %473 {offsets = [0, 32], sizes = [16, 32], strides = [1, 1]} : vector<16x96xf32> to vector<16x32xf32>
    %484 = arith.addf %482, %483 : vector<16x32xf32>
    %485 = arith.negf %484 : vector<16x32xf32>
    %486 = math.exp %485 : vector<16x32xf32>
    %cst_123 = arith.constant 1.000000e+00 : f32
    %487 = vector.broadcast %cst_123 : f32 to vector<16x32xf32>
    %488 = arith.addf %487, %486 : vector<16x32xf32>
    %489 = arith.divf %487, %488 : vector<16x32xf32>
    %490 = vector.extract_strided_slice %470 {offsets = [0, 64], sizes = [16, 32], strides = [1, 1]} : vector<16x96xf32> to vector<16x32xf32>
    %491 = vector.extract_strided_slice %473 {offsets = [0, 64], sizes = [16, 32], strides = [1, 1]} : vector<16x96xf32> to vector<16x32xf32>
    %492 = arith.mulf %481, %491 : vector<16x32xf32>
    %493 = arith.addf %490, %492 : vector<16x32xf32>
    %494 = math.tanh %493 : vector<16x32xf32>
    %cst_124 = arith.constant 1.000000e+00 : f32
    %495 = vector.broadcast %cst_124 : f32 to vector<16x32xf32>
    %496 = arith.subf %495, %489 : vector<16x32xf32>
    %497 = arith.mulf %496, %494 : vector<16x32xf32>
    %498 = arith.mulf %489, %432 : vector<16x32xf32>
    %499 = arith.addf %497, %498 : vector<16x32xf32>
    %cst_125 = arith.constant dense<0.000000e+00> : vector<16x288xf32>
    %500 = tpu.matmul %499, %3, %cst_125 {dimension_numbers = #tpu.dot_dimension_numbers<[1], [0], [0], [1], [0, 0, 1, 1], [], []>} : vector<16x32xf32>, vector<32x288xf32>, vector<16x288xf32> -> vector<16x288xf32>
    %501 = vector.extract_strided_slice %500 {offsets = [0, 0], sizes = [16, 256], strides = [1, 1]} : vector<16x288xf32> to vector<16x256xf32>
    %502 = arith.addf %324, %501 : vector<16x256xf32>
    %503 = math.tanh %502 : vector<16x256xf32>
    %cst_126 = arith.constant dense<0.000000e+00> : vector<16x256xf32>
    %504 = tpu.matmul %503, %9, %cst_126 {dimension_numbers = #tpu.dot_dimension_numbers<[1], [0], [0], [1], [0, 0, 1, 1], [], []>} : vector<16x256xf32>, vector<256x256xf32>, vector<16x256xf32> -> vector<16x256xf32>
    %505 = arith.addf %504, %331 : vector<16x256xf32>
    %cst_127 = arith.constant dense<0xFF800000> : vector<16xf32>
    %506 = vector.multi_reduction <maximumf>, %505, %cst_127 [1] : vector<16x256xf32> to vector<16xf32>
    %507 = vector.shape_cast %506 : vector<16xf32> to vector<16x1xf32>
    %508 = vector.broadcast %507 : vector<16x1xf32> to vector<16x256xf32>
    %509 = arith.subf %505, %508 : vector<16x256xf32>
    %510 = math.exp %509 : vector<16x256xf32>
    %cst_128 = arith.constant dense<0.000000e+00> : vector<16xf32>
    %511 = vector.multi_reduction <add>, %510, %cst_128 [1] : vector<16x256xf32> to vector<16xf32>
    %512 = vector.shape_cast %511 : vector<16xf32> to vector<16x1xf32>
    %513 = tpu.reciprocal %512 {approx = true} : vector<16x1xf32> -> vector<16x1xf32>
    %cst_129 = arith.constant 3.200000e+01 : f32
    %514 = vector.broadcast %cst_129 : f32 to vector<16x1xf32>
    %515 = arith.mulf %514, %513 : vector<16x1xf32>
    %516 = vector.broadcast %515 : vector<16x1xf32> to vector<16x256xf32>
    %517 = arith.mulf %510, %516 : vector<16x256xf32>
    %518 = arith.mulf %517, %317 : vector<16x256xf32>
    %cst_130 = arith.constant dense<0.000000e+00> : vector<16x128xf32>
    %519 = tpu.matmul %518, %10, %cst_130 {dimension_numbers = #tpu.dot_dimension_numbers<[1], [0], [0], [1], [0, 0, 1, 1], [], []>} : vector<16x256xf32>, vector<256x128xf32>, vector<16x128xf32> -> vector<16x128xf32>
    %520 = vector.extract_strided_slice %330 {offsets = [2, 0, 0], sizes = [1, 16, 128], strides = [1, 1, 1]} : vector<7x16x128xf32> to vector<1x16x128xf32>
    %521 = vector.shape_cast %520 : vector<1x16x128xf32> to vector<16x128xf32>
    %522 = vector.extract_strided_slice %521 {offsets = [0, 96], sizes = [16, 32], strides = [1, 1]} : vector<16x128xf32> to vector<16x32xf32>
    %523 = vector.extract_strided_slice %500 {offsets = [0, 256], sizes = [16, 32], strides = [1, 1]} : vector<16x288xf32> to vector<16x32xf32>
    %524 = arith.addf %522, %523 : vector<16x32xf32>
    %525 = vector.extract_strided_slice %519 {offsets = [0, 0], sizes = [16, 32], strides = [1, 1]} : vector<16x128xf32> to vector<16x32xf32>
    %526 = arith.addf %524, %525 : vector<16x32xf32>
    %527 = vector.extract_strided_slice %526 {offsets = [0, 0], sizes = [16, 16], strides = [1, 1]} : vector<16x32xf32> to vector<16x16xf32>
    %528 = vector.extract_strided_slice %526 {offsets = [0, 16], sizes = [16, 16], strides = [1, 1]} : vector<16x32xf32> to vector<16x16xf32>
    %529 = arith.maximumf %527, %528 : vector<16x16xf32>
    %c2 = arith.constant 2 : index
    %c0_131 = arith.constant 0 : index
    %c0_132 = arith.constant 0 : index
    %530 = vector.load %arg8[%c2, %c0_131, %c0_132] : memref<7x16x16xf32, #tpu.memory_space<vmem>>, vector<1x16x16xf32>
    %531 = vector.shape_cast %530 : vector<1x16x16xf32> to vector<16x16xf32>
    %532 = vector.shape_cast %529 : vector<16x16xf32> to vector<1x16x16xf32>
    tpu.vector_store %arg8[%c2, %c0_131, %c0_132], %532 {strides = array<i32>} : memref<7x16x16xf32, #tpu.memory_space<vmem>>, vector<1x16x16xf32>,
    %533 = vector.extract_strided_slice %519 {offsets = [0, 32], sizes = [16, 96], strides = [1, 1]} : vector<16x128xf32> to vector<16x96xf32>
    %534 = vector.extract_strided_slice %330 {offsets = [3, 0, 0], sizes = [1, 16, 128], strides = [1, 1, 1]} : vector<7x16x128xf32> to vector<1x16x128xf32>
    %535 = vector.shape_cast %534 : vector<1x16x128xf32> to vector<16x128xf32>
    %536 = vector.extract_strided_slice %535 {offsets = [0, 0], sizes = [16, 96], strides = [1, 1]} : vector<16x128xf32> to vector<16x96xf32>
    %537 = arith.addf %536, %533 : vector<16x96xf32>
    %cst_133 = arith.constant dense<0.000000e+00> : vector<16x96xf32>
    %538 = tpu.matmul %499, %2, %cst_133 {dimension_numbers = #tpu.dot_dimension_numbers<[1], [0], [0], [1], [0, 0, 1, 1], [], []>} : vector<16x32xf32>, vector<32x96xf32>, vector<16x96xf32> -> vector<16x96xf32>
    %539 = vector.broadcast %13 : vector<1x96xf32> to vector<16x96xf32>
    %540 = arith.addf %538, %539 : vector<16x96xf32>
    %541 = vector.extract_strided_slice %537 {offsets = [0, 0], sizes = [16, 32], strides = [1, 1]} : vector<16x96xf32> to vector<16x32xf32>
    %542 = vector.extract_strided_slice %540 {offsets = [0, 0], sizes = [16, 32], strides = [1, 1]} : vector<16x96xf32> to vector<16x32xf32>
    %543 = arith.addf %541, %542 : vector<16x32xf32>
    %544 = arith.negf %543 : vector<16x32xf32>
    %545 = math.exp %544 : vector<16x32xf32>
    %cst_134 = arith.constant 1.000000e+00 : f32
    %546 = vector.broadcast %cst_134 : f32 to vector<16x32xf32>
    %547 = arith.addf %546, %545 : vector<16x32xf32>
    %548 = arith.divf %546, %547 : vector<16x32xf32>
    %549 = vector.extract_strided_slice %537 {offsets = [0, 32], sizes = [16, 32], strides = [1, 1]} : vector<16x96xf32> to vector<16x32xf32>
    %550 = vector.extract_strided_slice %540 {offsets = [0, 32], sizes = [16, 32], strides = [1, 1]} : vector<16x96xf32> to vector<16x32xf32>
    %551 = arith.addf %549, %550 : vector<16x32xf32>
    %552 = arith.negf %551 : vector<16x32xf32>
    %553 = math.exp %552 : vector<16x32xf32>
    %cst_135 = arith.constant 1.000000e+00 : f32
    %554 = vector.broadcast %cst_135 : f32 to vector<16x32xf32>
    %555 = arith.addf %554, %553 : vector<16x32xf32>
    %556 = arith.divf %554, %555 : vector<16x32xf32>
    %557 = vector.extract_strided_slice %537 {offsets = [0, 64], sizes = [16, 32], strides = [1, 1]} : vector<16x96xf32> to vector<16x32xf32>
    %558 = vector.extract_strided_slice %540 {offsets = [0, 64], sizes = [16, 32], strides = [1, 1]} : vector<16x96xf32> to vector<16x32xf32>
    %559 = arith.mulf %548, %558 : vector<16x32xf32>
    %560 = arith.addf %557, %559 : vector<16x32xf32>
    %561 = math.tanh %560 : vector<16x32xf32>
    %cst_136 = arith.constant 1.000000e+00 : f32
    %562 = vector.broadcast %cst_136 : f32 to vector<16x32xf32>
    %563 = arith.subf %562, %556 : vector<16x32xf32>
    %564 = arith.mulf %563, %561 : vector<16x32xf32>
    %565 = arith.mulf %556, %499 : vector<16x32xf32>
    %566 = arith.addf %564, %565 : vector<16x32xf32>
    %cst_137 = arith.constant dense<0.000000e+00> : vector<16x288xf32>
    %567 = tpu.matmul %566, %3, %cst_137 {dimension_numbers = #tpu.dot_dimension_numbers<[1], [0], [0], [1], [0, 0, 1, 1], [], []>} : vector<16x32xf32>, vector<32x288xf32>, vector<16x288xf32> -> vector<16x288xf32>
    %568 = vector.extract_strided_slice %567 {offsets = [0, 0], sizes = [16, 256], strides = [1, 1]} : vector<16x288xf32> to vector<16x256xf32>
    %569 = arith.addf %324, %568 : vector<16x256xf32>
    %570 = math.tanh %569 : vector<16x256xf32>
    %cst_138 = arith.constant dense<0.000000e+00> : vector<16x256xf32>
    %571 = tpu.matmul %570, %9, %cst_138 {dimension_numbers = #tpu.dot_dimension_numbers<[1], [0], [0], [1], [0, 0, 1, 1], [], []>} : vector<16x256xf32>, vector<256x256xf32>, vector<16x256xf32> -> vector<16x256xf32>
    %572 = arith.addf %571, %331 : vector<16x256xf32>
    %cst_139 = arith.constant dense<0xFF800000> : vector<16xf32>
    %573 = vector.multi_reduction <maximumf>, %572, %cst_139 [1] : vector<16x256xf32> to vector<16xf32>
    %574 = vector.shape_cast %573 : vector<16xf32> to vector<16x1xf32>
    %575 = vector.broadcast %574 : vector<16x1xf32> to vector<16x256xf32>
    %576 = arith.subf %572, %575 : vector<16x256xf32>
    %577 = math.exp %576 : vector<16x256xf32>
    %cst_140 = arith.constant dense<0.000000e+00> : vector<16xf32>
    %578 = vector.multi_reduction <add>, %577, %cst_140 [1] : vector<16x256xf32> to vector<16xf32>
    %579 = vector.shape_cast %578 : vector<16xf32> to vector<16x1xf32>
    %580 = tpu.reciprocal %579 {approx = true} : vector<16x1xf32> -> vector<16x1xf32>
    %cst_141 = arith.constant 3.200000e+01 : f32
    %581 = vector.broadcast %cst_141 : f32 to vector<16x1xf32>
    %582 = arith.mulf %581, %580 : vector<16x1xf32>
    %583 = vector.broadcast %582 : vector<16x1xf32> to vector<16x256xf32>
    %584 = arith.mulf %577, %583 : vector<16x256xf32>
    %585 = arith.mulf %584, %317 : vector<16x256xf32>
    %cst_142 = arith.constant dense<0.000000e+00> : vector<16x128xf32>
    %586 = tpu.matmul %585, %10, %cst_142 {dimension_numbers = #tpu.dot_dimension_numbers<[1], [0], [0], [1], [0, 0, 1, 1], [], []>} : vector<16x256xf32>, vector<256x128xf32>, vector<16x128xf32> -> vector<16x128xf32>
    %587 = vector.extract_strided_slice %330 {offsets = [3, 0, 0], sizes = [1, 16, 128], strides = [1, 1, 1]} : vector<7x16x128xf32> to vector<1x16x128xf32>
    %588 = vector.shape_cast %587 : vector<1x16x128xf32> to vector<16x128xf32>
    %589 = vector.extract_strided_slice %588 {offsets = [0, 96], sizes = [16, 32], strides = [1, 1]} : vector<16x128xf32> to vector<16x32xf32>
    %590 = vector.extract_strided_slice %567 {offsets = [0, 256], sizes = [16, 32], strides = [1, 1]} : vector<16x288xf32> to vector<16x32xf32>
    %591 = arith.addf %589, %590 : vector<16x32xf32>
    %592 = vector.extract_strided_slice %586 {offsets = [0, 0], sizes = [16, 32], strides = [1, 1]} : vector<16x128xf32> to vector<16x32xf32>
    %593 = arith.addf %591, %592 : vector<16x32xf32>
    %594 = vector.extract_strided_slice %593 {offsets = [0, 0], sizes = [16, 16], strides = [1, 1]} : vector<16x32xf32> to vector<16x16xf32>
    %595 = vector.extract_strided_slice %593 {offsets = [0, 16], sizes = [16, 16], strides = [1, 1]} : vector<16x32xf32> to vector<16x16xf32>
    %596 = arith.maximumf %594, %595 : vector<16x16xf32>
    %c3 = arith.constant 3 : index
    %c0_143 = arith.constant 0 : index
    %c0_144 = arith.constant 0 : index
    %597 = vector.load %arg8[%c3, %c0_143, %c0_144] : memref<7x16x16xf32, #tpu.memory_space<vmem>>, vector<1x16x16xf32>
    %598 = vector.shape_cast %597 : vector<1x16x16xf32> to vector<16x16xf32>
    %599 = vector.shape_cast %596 : vector<16x16xf32> to vector<1x16x16xf32>
    tpu.vector_store %arg8[%c3, %c0_143, %c0_144], %599 {strides = array<i32>} : memref<7x16x16xf32, #tpu.memory_space<vmem>>, vector<1x16x16xf32>,
    %600 = vector.extract_strided_slice %586 {offsets = [0, 32], sizes = [16, 96], strides = [1, 1]} : vector<16x128xf32> to vector<16x96xf32>
    %601 = vector.extract_strided_slice %330 {offsets = [4, 0, 0], sizes = [1, 16, 128], strides = [1, 1, 1]} : vector<7x16x128xf32> to vector<1x16x128xf32>
    %602 = vector.shape_cast %601 : vector<1x16x128xf32> to vector<16x128xf32>
    %603 = vector.extract_strided_slice %602 {offsets = [0, 0], sizes = [16, 96], strides = [1, 1]} : vector<16x128xf32> to vector<16x96xf32>
    %604 = arith.addf %603, %600 : vector<16x96xf32>
    %cst_145 = arith.constant dense<0.000000e+00> : vector<16x96xf32>
    %605 = tpu.matmul %566, %2, %cst_145 {dimension_numbers = #tpu.dot_dimension_numbers<[1], [0], [0], [1], [0, 0, 1, 1], [], []>} : vector<16x32xf32>, vector<32x96xf32>, vector<16x96xf32> -> vector<16x96xf32>
    %606 = vector.broadcast %13 : vector<1x96xf32> to vector<16x96xf32>
    %607 = arith.addf %605, %606 : vector<16x96xf32>
    %608 = vector.extract_strided_slice %604 {offsets = [0, 0], sizes = [16, 32], strides = [1, 1]} : vector<16x96xf32> to vector<16x32xf32>
    %609 = vector.extract_strided_slice %607 {offsets = [0, 0], sizes = [16, 32], strides = [1, 1]} : vector<16x96xf32> to vector<16x32xf32>
    %610 = arith.addf %608, %609 : vector<16x32xf32>
    %611 = arith.negf %610 : vector<16x32xf32>
    %612 = math.exp %611 : vector<16x32xf32>
    %cst_146 = arith.constant 1.000000e+00 : f32
    %613 = vector.broadcast %cst_146 : f32 to vector<16x32xf32>
    %614 = arith.addf %613, %612 : vector<16x32xf32>
    %615 = arith.divf %613, %614 : vector<16x32xf32>
    %616 = vector.extract_strided_slice %604 {offsets = [0, 32], sizes = [16, 32], strides = [1, 1]} : vector<16x96xf32> to vector<16x32xf32>
    %617 = vector.extract_strided_slice %607 {offsets = [0, 32], sizes = [16, 32], strides = [1, 1]} : vector<16x96xf32> to vector<16x32xf32>
    %618 = arith.addf %616, %617 : vector<16x32xf32>
    %619 = arith.negf %618 : vector<16x32xf32>
    %620 = math.exp %619 : vector<16x32xf32>
    %cst_147 = arith.constant 1.000000e+00 : f32
    %621 = vector.broadcast %cst_147 : f32 to vector<16x32xf32>
    %622 = arith.addf %621, %620 : vector<16x32xf32>
    %623 = arith.divf %621, %622 : vector<16x32xf32>
    %624 = vector.extract_strided_slice %604 {offsets = [0, 64], sizes = [16, 32], strides = [1, 1]} : vector<16x96xf32> to vector<16x32xf32>
    %625 = vector.extract_strided_slice %607 {offsets = [0, 64], sizes = [16, 32], strides = [1, 1]} : vector<16x96xf32> to vector<16x32xf32>
    %626 = arith.mulf %615, %625 : vector<16x32xf32>
    %627 = arith.addf %624, %626 : vector<16x32xf32>
    %628 = math.tanh %627 : vector<16x32xf32>
    %cst_148 = arith.constant 1.000000e+00 : f32
    %629 = vector.broadcast %cst_148 : f32 to vector<16x32xf32>
    %630 = arith.subf %629, %623 : vector<16x32xf32>
    %631 = arith.mulf %630, %628 : vector<16x32xf32>
    %632 = arith.mulf %623, %566 : vector<16x32xf32>
    %633 = arith.addf %631, %632 : vector<16x32xf32>
    %cst_149 = arith.constant dense<0.000000e+00> : vector<16x288xf32>
    %634 = tpu.matmul %633, %3, %cst_149 {dimension_numbers = #tpu.dot_dimension_numbers<[1], [0], [0], [1], [0, 0, 1, 1], [], []>} : vector<16x32xf32>, vector<32x288xf32>, vector<16x288xf32> -> vector<16x288xf32>
    %635 = vector.extract_strided_slice %634 {offsets = [0, 0], sizes = [16, 256], strides = [1, 1]} : vector<16x288xf32> to vector<16x256xf32>
    %636 = arith.addf %324, %635 : vector<16x256xf32>
    %637 = math.tanh %636 : vector<16x256xf32>
    %cst_150 = arith.constant dense<0.000000e+00> : vector<16x256xf32>
    %638 = tpu.matmul %637, %9, %cst_150 {dimension_numbers = #tpu.dot_dimension_numbers<[1], [0], [0], [1], [0, 0, 1, 1], [], []>} : vector<16x256xf32>, vector<256x256xf32>, vector<16x256xf32> -> vector<16x256xf32>
    %639 = arith.addf %638, %331 : vector<16x256xf32>
    %cst_151 = arith.constant dense<0xFF800000> : vector<16xf32>
    %640 = vector.multi_reduction <maximumf>, %639, %cst_151 [1] : vector<16x256xf32> to vector<16xf32>
    %641 = vector.shape_cast %640 : vector<16xf32> to vector<16x1xf32>
    %642 = vector.broadcast %641 : vector<16x1xf32> to vector<16x256xf32>
    %643 = arith.subf %639, %642 : vector<16x256xf32>
    %644 = math.exp %643 : vector<16x256xf32>
    %cst_152 = arith.constant dense<0.000000e+00> : vector<16xf32>
    %645 = vector.multi_reduction <add>, %644, %cst_152 [1] : vector<16x256xf32> to vector<16xf32>
    %646 = vector.shape_cast %645 : vector<16xf32> to vector<16x1xf32>
    %647 = tpu.reciprocal %646 {approx = true} : vector<16x1xf32> -> vector<16x1xf32>
    %cst_153 = arith.constant 3.200000e+01 : f32
    %648 = vector.broadcast %cst_153 : f32 to vector<16x1xf32>
    %649 = arith.mulf %648, %647 : vector<16x1xf32>
    %650 = vector.broadcast %649 : vector<16x1xf32> to vector<16x256xf32>
    %651 = arith.mulf %644, %650 : vector<16x256xf32>
    %652 = arith.mulf %651, %317 : vector<16x256xf32>
    %cst_154 = arith.constant dense<0.000000e+00> : vector<16x128xf32>
    %653 = tpu.matmul %652, %10, %cst_154 {dimension_numbers = #tpu.dot_dimension_numbers<[1], [0], [0], [1], [0, 0, 1, 1], [], []>} : vector<16x256xf32>, vector<256x128xf32>, vector<16x128xf32> -> vector<16x128xf32>
    %654 = vector.extract_strided_slice %330 {offsets = [4, 0, 0], sizes = [1, 16, 128], strides = [1, 1, 1]} : vector<7x16x128xf32> to vector<1x16x128xf32>
    %655 = vector.shape_cast %654 : vector<1x16x128xf32> to vector<16x128xf32>
    %656 = vector.extract_strided_slice %655 {offsets = [0, 96], sizes = [16, 32], strides = [1, 1]} : vector<16x128xf32> to vector<16x32xf32>
    %657 = vector.extract_strided_slice %634 {offsets = [0, 256], sizes = [16, 32], strides = [1, 1]} : vector<16x288xf32> to vector<16x32xf32>
    %658 = arith.addf %656, %657 : vector<16x32xf32>
    %659 = vector.extract_strided_slice %653 {offsets = [0, 0], sizes = [16, 32], strides = [1, 1]} : vector<16x128xf32> to vector<16x32xf32>
    %660 = arith.addf %658, %659 : vector<16x32xf32>
    %661 = vector.extract_strided_slice %660 {offsets = [0, 0], sizes = [16, 16], strides = [1, 1]} : vector<16x32xf32> to vector<16x16xf32>
    %662 = vector.extract_strided_slice %660 {offsets = [0, 16], sizes = [16, 16], strides = [1, 1]} : vector<16x32xf32> to vector<16x16xf32>
    %663 = arith.maximumf %661, %662 : vector<16x16xf32>
    %c4 = arith.constant 4 : index
    %c0_155 = arith.constant 0 : index
    %c0_156 = arith.constant 0 : index
    %664 = vector.load %arg8[%c4, %c0_155, %c0_156] : memref<7x16x16xf32, #tpu.memory_space<vmem>>, vector<1x16x16xf32>
    %665 = vector.shape_cast %664 : vector<1x16x16xf32> to vector<16x16xf32>
    %666 = vector.shape_cast %663 : vector<16x16xf32> to vector<1x16x16xf32>
    tpu.vector_store %arg8[%c4, %c0_155, %c0_156], %666 {strides = array<i32>} : memref<7x16x16xf32, #tpu.memory_space<vmem>>, vector<1x16x16xf32>,
    %667 = vector.extract_strided_slice %653 {offsets = [0, 32], sizes = [16, 96], strides = [1, 1]} : vector<16x128xf32> to vector<16x96xf32>
    %668 = vector.extract_strided_slice %330 {offsets = [5, 0, 0], sizes = [1, 16, 128], strides = [1, 1, 1]} : vector<7x16x128xf32> to vector<1x16x128xf32>
    %669 = vector.shape_cast %668 : vector<1x16x128xf32> to vector<16x128xf32>
    %670 = vector.extract_strided_slice %669 {offsets = [0, 0], sizes = [16, 96], strides = [1, 1]} : vector<16x128xf32> to vector<16x96xf32>
    %671 = arith.addf %670, %667 : vector<16x96xf32>
    %cst_157 = arith.constant dense<0.000000e+00> : vector<16x96xf32>
    %672 = tpu.matmul %633, %2, %cst_157 {dimension_numbers = #tpu.dot_dimension_numbers<[1], [0], [0], [1], [0, 0, 1, 1], [], []>} : vector<16x32xf32>, vector<32x96xf32>, vector<16x96xf32> -> vector<16x96xf32>
    %673 = vector.broadcast %13 : vector<1x96xf32> to vector<16x96xf32>
    %674 = arith.addf %672, %673 : vector<16x96xf32>
    %675 = vector.extract_strided_slice %671 {offsets = [0, 0], sizes = [16, 32], strides = [1, 1]} : vector<16x96xf32> to vector<16x32xf32>
    %676 = vector.extract_strided_slice %674 {offsets = [0, 0], sizes = [16, 32], strides = [1, 1]} : vector<16x96xf32> to vector<16x32xf32>
    %677 = arith.addf %675, %676 : vector<16x32xf32>
    %678 = arith.negf %677 : vector<16x32xf32>
    %679 = math.exp %678 : vector<16x32xf32>
    %cst_158 = arith.constant 1.000000e+00 : f32
    %680 = vector.broadcast %cst_158 : f32 to vector<16x32xf32>
    %681 = arith.addf %680, %679 : vector<16x32xf32>
    %682 = arith.divf %680, %681 : vector<16x32xf32>
    %683 = vector.extract_strided_slice %671 {offsets = [0, 32], sizes = [16, 32], strides = [1, 1]} : vector<16x96xf32> to vector<16x32xf32>
    %684 = vector.extract_strided_slice %674 {offsets = [0, 32], sizes = [16, 32], strides = [1, 1]} : vector<16x96xf32> to vector<16x32xf32>
    %685 = arith.addf %683, %684 : vector<16x32xf32>
    %686 = arith.negf %685 : vector<16x32xf32>
    %687 = math.exp %686 : vector<16x32xf32>
    %cst_159 = arith.constant 1.000000e+00 : f32
    %688 = vector.broadcast %cst_159 : f32 to vector<16x32xf32>
    %689 = arith.addf %688, %687 : vector<16x32xf32>
    %690 = arith.divf %688, %689 : vector<16x32xf32>
    %691 = vector.extract_strided_slice %671 {offsets = [0, 64], sizes = [16, 32], strides = [1, 1]} : vector<16x96xf32> to vector<16x32xf32>
    %692 = vector.extract_strided_slice %674 {offsets = [0, 64], sizes = [16, 32], strides = [1, 1]} : vector<16x96xf32> to vector<16x32xf32>
    %693 = arith.mulf %682, %692 : vector<16x32xf32>
    %694 = arith.addf %691, %693 : vector<16x32xf32>
    %695 = math.tanh %694 : vector<16x32xf32>
    %cst_160 = arith.constant 1.000000e+00 : f32
    %696 = vector.broadcast %cst_160 : f32 to vector<16x32xf32>
    %697 = arith.subf %696, %690 : vector<16x32xf32>
    %698 = arith.mulf %697, %695 : vector<16x32xf32>
    %699 = arith.mulf %690, %633 : vector<16x32xf32>
    %700 = arith.addf %698, %699 : vector<16x32xf32>
    %cst_161 = arith.constant dense<0.000000e+00> : vector<16x288xf32>
    %701 = tpu.matmul %700, %3, %cst_161 {dimension_numbers = #tpu.dot_dimension_numbers<[1], [0], [0], [1], [0, 0, 1, 1], [], []>} : vector<16x32xf32>, vector<32x288xf32>, vector<16x288xf32> -> vector<16x288xf32>
    %702 = vector.extract_strided_slice %701 {offsets = [0, 0], sizes = [16, 256], strides = [1, 1]} : vector<16x288xf32> to vector<16x256xf32>
    %703 = arith.addf %324, %702 : vector<16x256xf32>
    %704 = math.tanh %703 : vector<16x256xf32>
    %cst_162 = arith.constant dense<0.000000e+00> : vector<16x256xf32>
    %705 = tpu.matmul %704, %9, %cst_162 {dimension_numbers = #tpu.dot_dimension_numbers<[1], [0], [0], [1], [0, 0, 1, 1], [], []>} : vector<16x256xf32>, vector<256x256xf32>, vector<16x256xf32> -> vector<16x256xf32>
    %706 = arith.addf %705, %331 : vector<16x256xf32>
    %cst_163 = arith.constant dense<0xFF800000> : vector<16xf32>
    %707 = vector.multi_reduction <maximumf>, %706, %cst_163 [1] : vector<16x256xf32> to vector<16xf32>
    %708 = vector.shape_cast %707 : vector<16xf32> to vector<16x1xf32>
    %709 = vector.broadcast %708 : vector<16x1xf32> to vector<16x256xf32>
    %710 = arith.subf %706, %709 : vector<16x256xf32>
    %711 = math.exp %710 : vector<16x256xf32>
    %cst_164 = arith.constant dense<0.000000e+00> : vector<16xf32>
    %712 = vector.multi_reduction <add>, %711, %cst_164 [1] : vector<16x256xf32> to vector<16xf32>
    %713 = vector.shape_cast %712 : vector<16xf32> to vector<16x1xf32>
    %714 = tpu.reciprocal %713 {approx = true} : vector<16x1xf32> -> vector<16x1xf32>
    %cst_165 = arith.constant 3.200000e+01 : f32
    %715 = vector.broadcast %cst_165 : f32 to vector<16x1xf32>
    %716 = arith.mulf %715, %714 : vector<16x1xf32>
    %717 = vector.broadcast %716 : vector<16x1xf32> to vector<16x256xf32>
    %718 = arith.mulf %711, %717 : vector<16x256xf32>
    %719 = arith.mulf %718, %317 : vector<16x256xf32>
    %cst_166 = arith.constant dense<0.000000e+00> : vector<16x128xf32>
    %720 = tpu.matmul %719, %10, %cst_166 {dimension_numbers = #tpu.dot_dimension_numbers<[1], [0], [0], [1], [0, 0, 1, 1], [], []>} : vector<16x256xf32>, vector<256x128xf32>, vector<16x128xf32> -> vector<16x128xf32>
    %721 = vector.extract_strided_slice %330 {offsets = [5, 0, 0], sizes = [1, 16, 128], strides = [1, 1, 1]} : vector<7x16x128xf32> to vector<1x16x128xf32>
    %722 = vector.shape_cast %721 : vector<1x16x128xf32> to vector<16x128xf32>
    %723 = vector.extract_strided_slice %722 {offsets = [0, 96], sizes = [16, 32], strides = [1, 1]} : vector<16x128xf32> to vector<16x32xf32>
    %724 = vector.extract_strided_slice %701 {offsets = [0, 256], sizes = [16, 32], strides = [1, 1]} : vector<16x288xf32> to vector<16x32xf32>
    %725 = arith.addf %723, %724 : vector<16x32xf32>
    %726 = vector.extract_strided_slice %720 {offsets = [0, 0], sizes = [16, 32], strides = [1, 1]} : vector<16x128xf32> to vector<16x32xf32>
    %727 = arith.addf %725, %726 : vector<16x32xf32>
    %728 = vector.extract_strided_slice %727 {offsets = [0, 0], sizes = [16, 16], strides = [1, 1]} : vector<16x32xf32> to vector<16x16xf32>
    %729 = vector.extract_strided_slice %727 {offsets = [0, 16], sizes = [16, 16], strides = [1, 1]} : vector<16x32xf32> to vector<16x16xf32>
    %730 = arith.maximumf %728, %729 : vector<16x16xf32>
    %c5 = arith.constant 5 : index
    %c0_167 = arith.constant 0 : index
    %c0_168 = arith.constant 0 : index
    %731 = vector.load %arg8[%c5, %c0_167, %c0_168] : memref<7x16x16xf32, #tpu.memory_space<vmem>>, vector<1x16x16xf32>
    %732 = vector.shape_cast %731 : vector<1x16x16xf32> to vector<16x16xf32>
    %733 = vector.shape_cast %730 : vector<16x16xf32> to vector<1x16x16xf32>
    tpu.vector_store %arg8[%c5, %c0_167, %c0_168], %733 {strides = array<i32>} : memref<7x16x16xf32, #tpu.memory_space<vmem>>, vector<1x16x16xf32>,
    %734 = vector.extract_strided_slice %720 {offsets = [0, 32], sizes = [16, 96], strides = [1, 1]} : vector<16x128xf32> to vector<16x96xf32>
    %735 = vector.extract_strided_slice %330 {offsets = [6, 0, 0], sizes = [1, 16, 128], strides = [1, 1, 1]} : vector<7x16x128xf32> to vector<1x16x128xf32>
    %736 = vector.shape_cast %735 : vector<1x16x128xf32> to vector<16x128xf32>
    %737 = vector.extract_strided_slice %736 {offsets = [0, 0], sizes = [16, 96], strides = [1, 1]} : vector<16x128xf32> to vector<16x96xf32>
    %738 = arith.addf %737, %734 : vector<16x96xf32>
    %cst_169 = arith.constant dense<0.000000e+00> : vector<16x96xf32>
    %739 = tpu.matmul %700, %2, %cst_169 {dimension_numbers = #tpu.dot_dimension_numbers<[1], [0], [0], [1], [0, 0, 1, 1], [], []>} : vector<16x32xf32>, vector<32x96xf32>, vector<16x96xf32> -> vector<16x96xf32>
    %740 = vector.broadcast %13 : vector<1x96xf32> to vector<16x96xf32>
    %741 = arith.addf %739, %740 : vector<16x96xf32>
    %742 = vector.extract_strided_slice %738 {offsets = [0, 0], sizes = [16, 32], strides = [1, 1]} : vector<16x96xf32> to vector<16x32xf32>
    %743 = vector.extract_strided_slice %741 {offsets = [0, 0], sizes = [16, 32], strides = [1, 1]} : vector<16x96xf32> to vector<16x32xf32>
    %744 = arith.addf %742, %743 : vector<16x32xf32>
    %745 = arith.negf %744 : vector<16x32xf32>
    %746 = math.exp %745 : vector<16x32xf32>
    %cst_170 = arith.constant 1.000000e+00 : f32
    %747 = vector.broadcast %cst_170 : f32 to vector<16x32xf32>
    %748 = arith.addf %747, %746 : vector<16x32xf32>
    %749 = arith.divf %747, %748 : vector<16x32xf32>
    %750 = vector.extract_strided_slice %738 {offsets = [0, 32], sizes = [16, 32], strides = [1, 1]} : vector<16x96xf32> to vector<16x32xf32>
    %751 = vector.extract_strided_slice %741 {offsets = [0, 32], sizes = [16, 32], strides = [1, 1]} : vector<16x96xf32> to vector<16x32xf32>
    %752 = arith.addf %750, %751 : vector<16x32xf32>
    %753 = arith.negf %752 : vector<16x32xf32>
    %754 = math.exp %753 : vector<16x32xf32>
    %cst_171 = arith.constant 1.000000e+00 : f32
    %755 = vector.broadcast %cst_171 : f32 to vector<16x32xf32>
    %756 = arith.addf %755, %754 : vector<16x32xf32>
    %757 = arith.divf %755, %756 : vector<16x32xf32>
    %758 = vector.extract_strided_slice %738 {offsets = [0, 64], sizes = [16, 32], strides = [1, 1]} : vector<16x96xf32> to vector<16x32xf32>
    %759 = vector.extract_strided_slice %741 {offsets = [0, 64], sizes = [16, 32], strides = [1, 1]} : vector<16x96xf32> to vector<16x32xf32>
    %760 = arith.mulf %749, %759 : vector<16x32xf32>
    %761 = arith.addf %758, %760 : vector<16x32xf32>
    %762 = math.tanh %761 : vector<16x32xf32>
    %cst_172 = arith.constant 1.000000e+00 : f32
    %763 = vector.broadcast %cst_172 : f32 to vector<16x32xf32>
    %764 = arith.subf %763, %757 : vector<16x32xf32>
    %765 = arith.mulf %764, %762 : vector<16x32xf32>
    %766 = arith.mulf %757, %700 : vector<16x32xf32>
    %767 = arith.addf %765, %766 : vector<16x32xf32>
    %cst_173 = arith.constant dense<0.000000e+00> : vector<16x288xf32>
    %768 = tpu.matmul %767, %3, %cst_173 {dimension_numbers = #tpu.dot_dimension_numbers<[1], [0], [0], [1], [0, 0, 1, 1], [], []>} : vector<16x32xf32>, vector<32x288xf32>, vector<16x288xf32> -> vector<16x288xf32>
    %769 = vector.extract_strided_slice %768 {offsets = [0, 0], sizes = [16, 256], strides = [1, 1]} : vector<16x288xf32> to vector<16x256xf32>
    %770 = arith.addf %324, %769 : vector<16x256xf32>
    %771 = math.tanh %770 : vector<16x256xf32>
    %cst_174 = arith.constant dense<0.000000e+00> : vector<16x256xf32>
    %772 = tpu.matmul %771, %9, %cst_174 {dimension_numbers = #tpu.dot_dimension_numbers<[1], [0], [0], [1], [0, 0, 1, 1], [], []>} : vector<16x256xf32>, vector<256x256xf32>, vector<16x256xf32> -> vector<16x256xf32>
    %773 = arith.addf %772, %331 : vector<16x256xf32>
    %cst_175 = arith.constant dense<0xFF800000> : vector<16xf32>
    %774 = vector.multi_reduction <maximumf>, %773, %cst_175 [1] : vector<16x256xf32> to vector<16xf32>
    %775 = vector.shape_cast %774 : vector<16xf32> to vector<16x1xf32>
    %776 = vector.broadcast %775 : vector<16x1xf32> to vector<16x256xf32>
    %777 = arith.subf %773, %776 : vector<16x256xf32>
    %778 = math.exp %777 : vector<16x256xf32>
    %cst_176 = arith.constant dense<0.000000e+00> : vector<16xf32>
    %779 = vector.multi_reduction <add>, %778, %cst_176 [1] : vector<16x256xf32> to vector<16xf32>
    %780 = vector.shape_cast %779 : vector<16xf32> to vector<16x1xf32>
    %781 = tpu.reciprocal %780 {approx = true} : vector<16x1xf32> -> vector<16x1xf32>
    %cst_177 = arith.constant 3.200000e+01 : f32
    %782 = vector.broadcast %cst_177 : f32 to vector<16x1xf32>
    %783 = arith.mulf %782, %781 : vector<16x1xf32>
    %784 = vector.broadcast %783 : vector<16x1xf32> to vector<16x256xf32>
    %785 = arith.mulf %778, %784 : vector<16x256xf32>
    %786 = arith.mulf %785, %317 : vector<16x256xf32>
    %cst_178 = arith.constant dense<0.000000e+00> : vector<16x128xf32>
    %787 = tpu.matmul %786, %10, %cst_178 {dimension_numbers = #tpu.dot_dimension_numbers<[1], [0], [0], [1], [0, 0, 1, 1], [], []>} : vector<16x256xf32>, vector<256x128xf32>, vector<16x128xf32> -> vector<16x128xf32>
    %788 = vector.extract_strided_slice %330 {offsets = [6, 0, 0], sizes = [1, 16, 128], strides = [1, 1, 1]} : vector<7x16x128xf32> to vector<1x16x128xf32>
    %789 = vector.shape_cast %788 : vector<1x16x128xf32> to vector<16x128xf32>
    %790 = vector.extract_strided_slice %789 {offsets = [0, 96], sizes = [16, 32], strides = [1, 1]} : vector<16x128xf32> to vector<16x32xf32>
    %791 = vector.extract_strided_slice %768 {offsets = [0, 256], sizes = [16, 32], strides = [1, 1]} : vector<16x288xf32> to vector<16x32xf32>
    %792 = arith.addf %790, %791 : vector<16x32xf32>
    %793 = vector.extract_strided_slice %787 {offsets = [0, 0], sizes = [16, 32], strides = [1, 1]} : vector<16x128xf32> to vector<16x32xf32>
    %794 = arith.addf %792, %793 : vector<16x32xf32>
    %795 = vector.extract_strided_slice %794 {offsets = [0, 0], sizes = [16, 16], strides = [1, 1]} : vector<16x32xf32> to vector<16x16xf32>
    %796 = vector.extract_strided_slice %794 {offsets = [0, 16], sizes = [16, 16], strides = [1, 1]} : vector<16x32xf32> to vector<16x16xf32>
    %797 = arith.maximumf %795, %796 : vector<16x16xf32>
    %c6 = arith.constant 6 : index
    %c0_179 = arith.constant 0 : index
    %c0_180 = arith.constant 0 : index
    %798 = vector.load %arg8[%c6, %c0_179, %c0_180] : memref<7x16x16xf32, #tpu.memory_space<vmem>>, vector<1x16x16xf32>
    %799 = vector.shape_cast %798 : vector<1x16x16xf32> to vector<16x16xf32>
    %800 = vector.shape_cast %797 : vector<16x16xf32> to vector<1x16x16xf32>
    tpu.vector_store %arg8[%c6, %c0_179, %c0_180], %800 {strides = array<i32>} : memref<7x16x16xf32, #tpu.memory_space<vmem>>, vector<1x16x16xf32>,
    return
  }
  func.func @transform_0(%arg0: i32) -> (i32, i32, i32) {
    %c0_i32 = arith.constant 0 : i32
    %c0_i32_0 = arith.constant 0 : i32
    %c0_i32_1 = arith.constant 0 : i32
    return %c0_i32, %arg0, %c0_i32_0 : i32, i32, i32
  }
  func.func @transform_1(%arg0: i32) -> (i32, i32, i32) {
    %c0_i32 = arith.constant 0 : i32
    %c0_i32_0 = arith.constant 0 : i32
    %c0_i32_1 = arith.constant 0 : i32
    return %c0_i32, %arg0, %c0_i32_0 : i32, i32, i32
  }
  func.func @transform_2(%arg0: i32) -> (i32, i32) {
    %c0_i32 = arith.constant 0 : i32
    %c0_i32_0 = arith.constant 0 : i32
    return %arg0, %c0_i32 : i32, i32
  }
  func.func @transform_3(%arg0: i32) -> (i32, i32) {
    %c0_i32 = arith.constant 0 : i32
    %c0_i32_0 = arith.constant 0 : i32
    %c0_i32_1 = arith.constant 0 : i32
    return %c0_i32, %c0_i32_0 : i32, i32
  }
  func.func @transform_4(%arg0: i32) -> (i32, i32) {
    %c0_i32 = arith.constant 0 : i32
    %c0_i32_0 = arith.constant 0 : i32
    %c0_i32_1 = arith.constant 0 : i32
    return %c0_i32, %c0_i32_0 : i32, i32
  }
  func.func @transform_5(%arg0: i32) -> (i32, i32) {
    %c0_i32 = arith.constant 0 : i32
    %c0_i32_0 = arith.constant 0 : i32
    %c0_i32_1 = arith.constant 0 : i32
    return %c0_i32, %c0_i32_0 : i32, i32
  }
  func.func @transform_6(%arg0: i32) -> (i32, i32) {
    %c0_i32 = arith.constant 0 : i32
    %c0_i32_0 = arith.constant 0 : i32
    %c0_i32_1 = arith.constant 0 : i32
    return %c0_i32, %c0_i32_0 : i32, i32
  }
  func.func @transform_7(%arg0: i32) -> (i32, i32, i32) {
    %c0_i32 = arith.constant 0 : i32
    %c0_i32_0 = arith.constant 0 : i32
    %c0_i32_1 = arith.constant 0 : i32
    return %c0_i32, %arg0, %c0_i32_0 : i32, i32, i32
  }
}

</mosaic_0001>

<llo_original>
// kernel: nmt_forward.1
$region0: #{nmt_forward.1}
  #allocation0 [shape = 'u32[]', space=smem, size = 0x4, offset = 0x4, fixed_abs, tag = 'smem constant byte address 0x4 - core index']
  #allocation1 [shape = 'u32[144,128]{1,0:T(1,128)}', space=vmem, size = 0x12000, scoped, tag = 'internal scratch']
  #allocation2 [shape = 'f32[16,256]{1,0:T(8,128)}', space=vmem, size = 0x4000, scoped, tag = 'scratch operand']
  %s0 = inlined_call_operand.vmem [shape: f32[8,16,32], index: 0, kind: input, shape index: {}]
  %s1 = inlined_call_operand.vmem [shape: f32[7,16,16], index: 1, kind: input, shape index: {}]
  %s2 = inlined_call_operand.vmem [shape: f32[16,256], index: 2, kind: input, shape index: {}]
  %s3 = inlined_call_operand.vmem [shape: f32[32,1024], index: 3, kind: input, shape index: {}]
  %s4 = inlined_call_operand.vmem [shape: f32[16,256], index: 4, kind: input, shape index: {}]
  %s5 = inlined_call_operand.vmem [shape: f32[256,896], index: 5, kind: input, shape index: {}]
  %s6 = inlined_call_operand.vmem [shape: f32[1,1152], index: 6, kind: input, shape index: {}]
  %s7 = inlined_call_operand.hbm [shape: f32[7,16,16], index: 7, kind: output, shape index: {}]
  %s8 = sld [smem:[#allocation0]]
  $region38: #{nmt_forward.1} parent=0
    _
  %s10 = ssub.s32 1, %s8
  %s11 = scalar_select 0, %s10, %s8
  $region1: #{nmt_forward.1} parent=0
    #allocation3 [shape = 'u8[57344]{0}', space=vmem, size = 0xe000, scoped, tag = 'output window, operand 0, single buffered']
    #allocation4 [shape = 's32[1]{0}', space=sflag, size = 0x4, scoped, tag = 'scoped memory for nmt_forward.1']
    %12 = vsyncpa [#allocation4], 0
    // Predicated region
    $region2: #{nmt_forward.1} parent=1 // pred_check
      _
    $region3: #{nmt_forward.1} parent=1 // pred_check_branch
      %14 = sbr.rel (0) target = $region5
    $region4: #{nmt_forward.1} parent=1 // pred_region
      _
    $region5: #{nmt_forward.1} parent=1 // pred_fallthru
      _
    // Predicated region
    $region6: #{nmt_forward.1} parent=1 // pred_check
      _
    $region7: #{nmt_forward.1} parent=1 // pred_check_branch
      %16 = sbr.rel (0) target = $region9
    $region8: #{nmt_forward.1} parent=1 // pred_region
      _
    $region9: #{nmt_forward.1} parent=1 // pred_fallthru
      _
    // Predicated region
    $region10: #{nmt_forward.1} parent=1 // pred_check
      _
    $region11: #{nmt_forward.1} parent=1 // pred_check_branch
      %18 = sbr.rel (0) target = $region13
    $region12: #{nmt_forward.1} parent=1 // pred_region
      _
    $region13: #{nmt_forward.1} parent=1 // pred_fallthru
      _
    // Predicated region
    $region14: #{nmt_forward.1} parent=1 // pred_check
      _
    $region15: #{nmt_forward.1} parent=1 // pred_check_branch
      %20 = sbr.rel (0) target = $region17
    $region16: #{nmt_forward.1} parent=1 // pred_region
      _
    $region17: #{nmt_forward.1} parent=1 // pred_fallthru
      _
    // Predicated region
    $region18: #{nmt_forward.1} parent=1 // pred_check
      _
    $region19: #{nmt_forward.1} parent=1 // pred_check_branch
      %22 = sbr.rel (0) target = $region21
    $region20: #{nmt_forward.1} parent=1 // pred_region
      _
    $region21: #{nmt_forward.1} parent=1 // pred_fallthru
      _
    // Predicated region
    $region22: #{nmt_forward.1} parent=1 // pred_check
      _
    $region23: #{nmt_forward.1} parent=1 // pred_check_branch
      %24 = sbr.rel (0) target = $region25
    $region24: #{nmt_forward.1} parent=1 // pred_region
      _
    $region25: #{nmt_forward.1} parent=1 // pred_fallthru
      _
    // Predicated region
    $region26: #{nmt_forward.1} parent=1 // pred_check
      _
    $region27: #{nmt_forward.1} parent=1 // pred_check_branch
      %26 = sbr.rel (0) target = $region29
    $region28: #{nmt_forward.1} parent=1 // pred_region
      _
    $region29: #{nmt_forward.1} parent=1 // pred_fallthru
      _
    %v27 = vld [vmem:[%s3] sm:$0xff]
    %v28 = vld [vmem:[%s3 + $0x40] sm:$0xff]
    %v29 = vld [vmem:[%s3 + $0x80] sm:$0xff]
    %v30 = vld [vmem:[%s3 + $0xc0] sm:$0xff]
    %v31 = vld [vmem:[%s3 + $0x8] sm:$0xff]
    %v32 = vld [vmem:[%s3 + $0x48] sm:$0xff]
    %v33 = vld [vmem:[%s3 + $0x88] sm:$0xff]
    %v34 = vld [vmem:[%s3 + $0xc8] sm:$0xff]
    %v35 = vld [vmem:[%s3 + $0x10] sm:$0xff]
    %v36 = vld [vmem:[%s3 + $0x50] sm:$0xff]
    %v37 = vld [vmem:[%s3 + $0x90] sm:$0xff]
    %v38 = vld [vmem:[%s3 + $0xd0] sm:$0xff]
    %v39 = vld [vmem:[%s3 + $0x18] sm:$0xff]
    %v40 = vld [vmem:[%s3 + $0x20] sm:$0xff]
    %v41 = vld [vmem:[%s3 + $0x28] sm:$0xff]
    %v42 = vld [vmem:[%s3 + $0x58] sm:$0xff]
    %v43 = vld [vmem:[%s3 + $0x60] sm:$0xff]
    %v44 = vld [vmem:[%s3 + $0x68] sm:$0xff]
    %v45 = vld [vmem:[%s3 + $0x98] sm:$0xff]
    %v46 = vld [vmem:[%s3 + $0xa0] sm:$0xff]
    %v47 = vld [vmem:[%s3 + $0xa8] sm:$0xff]
    %v48 = vld [vmem:[%s3 + $0xd8] sm:$0xff]
    %v49 = vld [vmem:[%s3 + $0xe0] sm:$0xff]
    %v50 = vld [vmem:[%s3 + $0xe8] sm:$0xff]
    %v51 = vld [vmem:[%s3 + $0x30] sm:$0xff]
    %v52 = vld [vmem:[%s3 + $0x38] sm:$0xff]
    %v53 = vld [vmem:[%s3 + $0x70] sm:$0xff]
    %v54 = vld [vmem:[%s3 + $0x78] sm:$0xff]
    %v55 = vld [vmem:[%s3 + $0xb0] sm:$0xff]
    %v56 = vld [vmem:[%s3 + $0xb8] sm:$0xff]
    %v57 = vld [vmem:[%s3 + $0xf0] sm:$0xff]
    %v58 = vld [vmem:[%s3 + $0xf8] sm:$0xff]
    %v59 = vld [vmem:[%s4] sm:$0xff]
    %v60 = vld [vmem:[%s4 + $0x10] sm:$0xff]
    %v61 = vld [vmem:[%s4 + $0x8] sm:$0xff]
    %v62 = vld [vmem:[%s4 + $0x18] sm:$0xff]
    %v63 = vld [vmem:[%s5] sm:$0xff]
    %v64 = vld [vmem:[%s5 + $0x8] sm:$0xff]
    %v65 = vld [vmem:[%s5 + $0x38] sm:$0xff]
    %v66 = vld [vmem:[%s5 + $0x40] sm:$0xff]
    %v67 = vld [vmem:[%s5 + $0x70] sm:$0xff]
    %v68 = vld [vmem:[%s5 + $0x78] sm:$0xff]
    %v69 = vld [vmem:[%s5 + $0xa8] sm:$0xff]
    %v70 = vld [vmem:[%s5 + $0xb0] sm:$0xff]
    %v71 = vld [vmem:[%s5 + $0xe0] sm:$0xff]
    %v72 = vld [vmem:[%s5 + $0xe8] sm:$0xff]
    %v73 = vld [vmem:[%s5 + $0x118] sm:$0xff]
    %v74 = vld [vmem:[%s5 + $0x120] sm:$0xff]
    %v75 = vld [vmem:[%s5 + $0x150] sm:$0xff]
    %v76 = vld [vmem:[%s5 + $0x158] sm:$0xff]
    %v77 = vld [vmem:[%s5 + $0x188] sm:$0xff]
    %v78 = vld [vmem:[%s5 + $0x190] sm:$0xff]
    %v79 = vld [vmem:[%s5 + $0x1c0] sm:$0xff]
    %v80 = vld [vmem:[%s5 + $0x1c8] sm:$0xff]
    %v81 = vld [vmem:[%s5 + $0x1f8] sm:$0xff]
    %v82 = vld [vmem:[%s5 + $0x200] sm:$0xff]
    %v83 = vld [vmem:[%s5 + $0x230] sm:$0xff]
    %v84 = vld [vmem:[%s5 + $0x238] sm:$0xff]
    %v85 = vld [vmem:[%s5 + $0x268] sm:$0xff]
    %v86 = vld [vmem:[%s5 + $0x270] sm:$0xff]
    %v87 = vld [vmem:[%s5 + $0x2a0] sm:$0xff]
    %v88 = vld [vmem:[%s5 + $0x2a8] sm:$0xff]
    %v89 = vld [vmem:[%s5 + $0x2d8] sm:$0xff]
    %v90 = vld [vmem:[%s5 + $0x2e0] sm:$0xff]
    %v91 = vld [vmem:[%s5 + $0x310] sm:$0xff]
    %v92 = vld [vmem:[%s5 + $0x318] sm:$0xff]
    %v93 = vld [vmem:[%s5 + $0x348] sm:$0xff]
    %v94 = vld [vmem:[%s5 + $0x350] sm:$0xff]
    %v95 = vld [vmem:[%s5 + $0x380] sm:$0xff]
    %v96 = vld [vmem:[%s5 + $0x388] sm:$0xff]
    %v97 = vld [vmem:[%s5 + $0x3b8] sm:$0xff]
    %v98 = vld [vmem:[%s5 + $0x3c0] sm:$0xff]
    %v99 = vld [vmem:[%s5 + $0x3f0] sm:$0xff]
    %v100 = vld [vmem:[%s5 + $0x3f8] sm:$0xff]
    %v101 = vld [vmem:[%s5 + $0x428] sm:$0xff]
    %v102 = vld [vmem:[%s5 + $0x430] sm:$0xff]
    %v103 = vld [vmem:[%s5 + $0x460] sm:$0xff]
    %v104 = vld [vmem:[%s5 + $0x468] sm:$0xff]
    %v105 = vld [vmem:[%s5 + $0x498] sm:$0xff]
    %v106 = vld [vmem:[%s5 + $0x4a0] sm:$0xff]
    %v107 = vld [vmem:[%s5 + $0x4d0] sm:$0xff]
    %v108 = vld [vmem:[%s5 + $0x4d8] sm:$0xff]
    %v109 = vld [vmem:[%s5 + $0x508] sm:$0xff]
    %v110 = vld [vmem:[%s5 + $0x510] sm:$0xff]
    %v111 = vld [vmem:[%s5 + $0x540] sm:$0xff]
    %v112 = vld [vmem:[%s5 + $0x548] sm:$0xff]
    %v113 = vld [vmem:[%s5 + $0x578] sm:$0xff]
    %v114 = vld [vmem:[%s5 + $0x580] sm:$0xff]
    %v115 = vld [vmem:[%s5 + $0x5b0] sm:$0xff]
    %v116 = vld [vmem:[%s5 + $0x5b8] sm:$0xff]
    %v117 = vld [vmem:[%s5 + $0x5e8] sm:$0xff]
    %v118 = vld [vmem:[%s5 + $0x5f0] sm:$0xff]
    %v119 = vld [vmem:[%s5 + $0x620] sm:$0xff]
    %v120 = vld [vmem:[%s5 + $0x628] sm:$0xff]
    %v121 = vld [vmem:[%s5 + $0x658] sm:$0xff]
    %v122 = vld [vmem:[%s5 + $0x660] sm:$0xff]
    %v123 = vld [vmem:[%s5 + $0x690] sm:$0xff]
    %v124 = vld [vmem:[%s5 + $0x698] sm:$0xff]
    %v125 = vld [vmem:[%s5 + $0x6c8] sm:$0xff]
    %v126 = vld [vmem:[%s5 + $0x6d0] sm:$0xff]
    %v127 = vld [vmem:[%s5 + $0x10] sm:$0xff]
    %v128 = vld [vmem:[%s5 + $0x18] sm:$0xff]
    %v129 = vld [vmem:[%s5 + $0x48] sm:$0xff]
    %v130 = vld [vmem:[%s5 + $0x50] sm:$0xff]
    %v131 = vld [vmem:[%s5 + $0x80] sm:$0xff]
    %v132 = vld [vmem:[%s5 + $0x88] sm:$0xff]
    %v133 = vld [vmem:[%s5 + $0xb8] sm:$0xff]
    %v134 = vld [vmem:[%s5 + $0xc0] sm:$0xff]
    %v135 = vld [vmem:[%s5 + $0xf0] sm:$0xff]
    %v136 = vld [vmem:[%s5 + $0xf8] sm:$0xff]
    %v137 = vld [vmem:[%s5 + $0x128] sm:$0xff]
    %v138 = vld [vmem:[%s5 + $0x130] sm:$0xff]
    %v139 = vld [vmem:[%s5 + $0x160] sm:$0xff]
    %v140 = vld [vmem:[%s5 + $0x168] sm:$0xff]
    %v141 = vld [vmem:[%s5 + $0x198] sm:$0xff]
    %v142 = vld [vmem:[%s5 + $0x1a0] sm:$0xff]
    %v143 = vld [vmem:[%s5 + $0x1d0] sm:$0xff]
    %v144 = vld [vmem:[%s5 + $0x1d8] sm:$0xff]
    %v145 = vld [vmem:[%s5 + $0x208] sm:$0xff]
    %v146 = vld [vmem:[%s5 + $0x210] sm:$0xff]
    %v147 = vld [vmem:[%s5 + $0x240] sm:$0xff]
    %v148 = vld [vmem:[%s5 + $0x248] sm:$0xff]
    %v149 = vld [vmem:[%s5 + $0x278] sm:$0xff]
    %v150 = vld [vmem:[%s5 + $0x280] sm:$0xff]
    %v151 = vld [vmem:[%s5 + $0x2b0] sm:$0xff]
    %v152 = vld [vmem:[%s5 + $0x2b8] sm:$0xff]
    %v153 = vld [vmem:[%s5 + $0x2e8] sm:$0xff]
    %v154 = vld [vmem:[%s5 + $0x2f0] sm:$0xff]
    %v155 = vld [vmem:[%s5 + $0x320] sm:$0xff]
    %v156 = vld [vmem:[%s5 + $0x328] sm:$0xff]
    %v157 = vld [vmem:[%s5 + $0x358] sm:$0xff]
    %v158 = vld [vmem:[%s5 + $0x360] sm:$0xff]
    %v159 = vld [vmem:[%s5 + $0x390] sm:$0xff]
    %v160 = vld [vmem:[%s5 + $0x398] sm:$0xff]
    %v161 = vld [vmem:[%s5 + $0x3c8] sm:$0xff]
    %v162 = vld [vmem:[%s5 + $0x3d0] sm:$0xff]
    %v163 = vld [vmem:[%s5 + $0x400] sm:$0xff]
    %v164 = vld [vmem:[%s5 + $0x408] sm:$0xff]
    %v165 = vld [vmem:[%s5 + $0x438] sm:$0xff]
    %v166 = vld [vmem:[%s5 + $0x440] sm:$0xff]
    %v167 = vld [vmem:[%s5 + $0x470] sm:$0xff]
    %v168 = vld [vmem:[%s5 + $0x478] sm:$0xff]
    %v169 = vld [vmem:[%s5 + $0x4a8] sm:$0xff]
    %v170 = vld [vmem:[%s5 + $0x4b0] sm:$0xff]
    %v171 = vld [vmem:[%s5 + $0x4e0] sm:$0xff]
    %v172 = vld [vmem:[%s5 + $0x4e8] sm:$0xff]
    %v173 = vld [vmem:[%s5 + $0x518] sm:$0xff]
    %v174 = vld [vmem:[%s5 + $0x520] sm:$0xff]
    %v175 = vld [vmem:[%s5 + $0x550] sm:$0xff]
    %v176 = vld [vmem:[%s5 + $0x558] sm:$0xff]
    %v177 = vld [vmem:[%s5 + $0x588] sm:$0xff]
    %v178 = vld [vmem:[%s5 + $0x590] sm:$0xff]
    %v179 = vld [vmem:[%s5 + $0x5c0] sm:$0xff]
    %v180 = vld [vmem:[%s5 + $0x5c8] sm:$0xff]
    %v181 = vld [vmem:[%s5 + $0x5f8] sm:$0xff]
    %v182 = vld [vmem:[%s5 + $0x600] sm:$0xff]
    %v183 = vld [vmem:[%s5 + $0x630] sm:$0xff]
    %v184 = vld [vmem:[%s5 + $0x638] sm:$0xff]
    %v185 = vld [vmem:[%s5 + $0x668] sm:$0xff]
    %v186 = vld [vmem:[%s5 + $0x670] sm:$0xff]
    %v187 = vld [vmem:[%s5 + $0x6a0] sm:$0xff]
    %v188 = vld [vmem:[%s5 + $0x6a8] sm:$0xff]
    %v189 = vld [vmem:[%s5 + $0x6d8] sm:$0xff]
    %v190 = vld [vmem:[%s5 + $0x6e0] sm:$0xff]
    %v191 = vld [vmem:[%s5 + $0x20] sm:$0xff]
    %v192 = vld [vmem:[%s5 + $0x28] sm:$0xff]
    %v193 = vld [vmem:[%s5 + $0x58] sm:$0xff]
    %v194 = vld [vmem:[%s5 + $0x60] sm:$0xff]
    %v195 = vld [vmem:[%s5 + $0x90] sm:$0xff]
    %v196 = vld [vmem:[%s5 + $0x98] sm:$0xff]
    %v197 = vld [vmem:[%s5 + $0xc8] sm:$0xff]
    %v198 = vld [vmem:[%s5 + $0xd0] sm:$0xff]
    %v199 = vld [vmem:[%s5 + $0x100] sm:$0xff]
    %v200 = vld [vmem:[%s5 + $0x108] sm:$0xff]
    %v201 = vld [vmem:[%s5 + $0x138] sm:$0xff]
    %v202 = vld [vmem:[%s5 + $0x140] sm:$0xff]
    %v203 = vld [vmem:[%s5 + $0x170] sm:$0xff]
    %v204 = vld [vmem:[%s5 + $0x178] sm:$0xff]
    %v205 = vld [vmem:[%s5 + $0x1a8] sm:$0xff]
    %v206 = vld [vmem:[%s5 + $0x1b0] sm:$0xff]
    %v207 = vld [vmem:[%s5 + $0x1e0] sm:$0xff]
    %v208 = vld [vmem:[%s5 + $0x1e8] sm:$0xff]
    %v209 = vld [vmem:[%s5 + $0x218] sm:$0xff]
    %v210 = vld [vmem:[%s5 + $0x220] sm:$0xff]
    %v211 = vld [vmem:[%s5 + $0x250] sm:$0xff]
    %v212 = vld [vmem:[%s5 + $0x258] sm:$0xff]
    %v213 = vld [vmem:[%s5 + $0x288] sm:$0xff]
    %v214 = vld [vmem:[%s5 + $0x290] sm:$0xff]
    %v215 = vld [vmem:[%s5 + $0x2c0] sm:$0xff]
    %v216 = vld [vmem:[%s5 + $0x2c8] sm:$0xff]
    %v217 = vld [vmem:[%s5 + $0x2f8] sm:$0xff]
    %v218 = vld [vmem:[%s5 + $0x300] sm:$0xff]
    %v219 = vld [vmem:[%s5 + $0x330] sm:$0xff]
    %v220 = vld [vmem:[%s5 + $0x338] sm:$0xff]
    %v221 = vld [vmem:[%s5 + $0x368] sm:$0xff]
    %v222 = vld [vmem:[%s5 + $0x370] sm:$0xff]
    %v223 = vld [vmem:[%s5 + $0x3a0] sm:$0xff]
    %v224 = vld [vmem:[%s5 + $0x3a8] sm:$0xff]
    %v225 = vld [vmem:[%s5 + $0x3d8] sm:$0xff]
    %v226 = vld [vmem:[%s5 + $0x3e0] sm:$0xff]
    %v227 = vld [vmem:[%s5 + $0x410] sm:$0xff]
    %v228 = vld [vmem:[%s5 + $0x418] sm:$0xff]
    %v229 = vld [vmem:[%s5 + $0x448] sm:$0xff]
    %v230 = vld [vmem:[%s5 + $0x450] sm:$0xff]
    %v231 = vld [vmem:[%s5 + $0x480] sm:$0xff]
    %v232 = vld [vmem:[%s5 + $0x488] sm:$0xff]
    %v233 = vld [vmem:[%s5 + $0x4b8] sm:$0xff]
    %v234 = vld [vmem:[%s5 + $0x4c0] sm:$0xff]
    %v235 = vld [vmem:[%s5 + $0x4f0] sm:$0xff]
    %v236 = vld [vmem:[%s5 + $0x4f8] sm:$0xff]
    %v237 = vld [vmem:[%s5 + $0x528] sm:$0xff]
    %v238 = vld [vmem:[%s5 + $0x530] sm:$0xff]
    %v239 = vld [vmem:[%s5 + $0x560] sm:$0xff]
    %v240 = vld [vmem:[%s5 + $0x568] sm:$0xff]
    %v241 = vld [vmem:[%s5 + $0x598] sm:$0xff]
    %v242 = vld [vmem:[%s5 + $0x5a0] sm:$0xff]
    %v243 = vld [vmem:[%s5 + $0x5d0] sm:$0xff]
    %v244 = vld [vmem:[%s5 + $0x5d8] sm:$0xff]
    %v245 = vld [vmem:[%s5 + $0x608] sm:$0xff]
    %v246 = vld [vmem:[%s5 + $0x610] sm:$0xff]
    %v247 = vld [vmem:[%s5 + $0x640] sm:$0xff]
    %v248 = vld [vmem:[%s5 + $0x648] sm:$0xff]
    %v249 = vld [vmem:[%s5 + $0x678] sm:$0xff]
    %v250 = vld [vmem:[%s5 + $0x680] sm:$0xff]
    %v251 = vld [vmem:[%s5 + $0x6b0] sm:$0xff]
    %v252 = vld [vmem:[%s5 + $0x6b8] sm:$0xff]
    %v253 = vld [vmem:[%s5 + $0x6e8] sm:$0xff]
    %v254 = vld [vmem:[%s5 + $0x6f0] sm:$0xff]
    %v255 = vld [vmem:[%s5 + $0x30] sm:$0xff]
    %v256 = vld [vmem:[%s5 + $0x68] sm:$0xff]
    %v257 = vld [vmem:[%s5 + $0xa0] sm:$0xff]
    %v258 = vld [vmem:[%s5 + $0xd8] sm:$0xff]
    %v259 = vld [vmem:[%s5 + $0x110] sm:$0xff]
    %v260 = vld [vmem:[%s5 + $0x148] sm:$0xff]
    %v261 = vld [vmem:[%s5 + $0x180] sm:$0xff]
    %v262 = vld [vmem:[%s5 + $0x1b8] sm:$0xff]
    %v263 = vld [vmem:[%s5 + $0x1f0] sm:$0xff]
    %v264 = vld [vmem:[%s5 + $0x228] sm:$0xff]
    %v265 = vld [vmem:[%s5 + $0x260] sm:$0xff]
    %v266 = vld [vmem:[%s5 + $0x298] sm:$0xff]
    %v267 = vld [vmem:[%s5 + $0x2d0] sm:$0xff]
    %v268 = vld [vmem:[%s5 + $0x308] sm:$0xff]
    %v269 = vld [vmem:[%s5 + $0x340] sm:$0xff]
    %v270 = vld [vmem:[%s5 + $0x378] sm:$0xff]
    %v271 = vld [vmem:[%s5 + $0x3b0] sm:$0xff]
    %v272 = vld [vmem:[%s5 + $0x3e8] sm:$0xff]
    %v273 = vld [vmem:[%s5 + $0x420] sm:$0xff]
    %v274 = vld [vmem:[%s5 + $0x458] sm:$0xff]
    %v275 = vld [vmem:[%s5 + $0x490] sm:$0xff]
    %v276 = vld [vmem:[%s5 + $0x4c8] sm:$0xff]
    %v277 = vld [vmem:[%s5 + $0x500] sm:$0xff]
    %v278 = vld [vmem:[%s5 + $0x538] sm:$0xff]
    %v279 = vld [vmem:[%s5 + $0x570] sm:$0xff]
    %v280 = vld [vmem:[%s5 + $0x5a8] sm:$0xff]
    %v281 = vld [vmem:[%s5 + $0x5e0] sm:$0xff]
    %v282 = vld [vmem:[%s5 + $0x618] sm:$0xff]
    %v283 = vld [vmem:[%s5 + $0x650] sm:$0xff]
    %v284 = vld [vmem:[%s5 + $0x688] sm:$0xff]
    %v285 = vld [vmem:[%s5 + $0x6c0] sm:$0xff]
    %v286 = vld [vmem:[%s5 + $0x6f8] sm:$0xff]
    %v287 = vld [vmem:[%s6] sm:$0x1]
    %v288 = vld [vmem:[%s6 + $0x1] sm:$0x1]
    %v289 = vld [vmem:[%s6 + $0x2] sm:$0x1]
    %v290 = vld [vmem:[%s6 + $0x3] sm:$0x3]
    %v291 = vld [vmem:[%s6 + $0x5] sm:$0x1]
    %v292 = vld [vmem:[%s6 + $0x6] sm:$0x3]
    %v293 = vld [vmem:[%s6 + $0x8] sm:$0x1]
    %v294 = vld [vmem:[%s0] sm:$0xff]
    %v295 = vld [vmem:[%s0 + $0x8] sm:$0xff]
    %v296 = vld [vmem:[%s0 + $0x10] sm:$0xff]
    %v297 = vld [vmem:[%s0 + $0x18] sm:$0xff]
    %v298 = vld [vmem:[%s0 + $0x20] sm:$0xff]
    %v299 = vld [vmem:[%s0 + $0x28] sm:$0xff]
    %v300 = vld [vmem:[%s0 + $0x30] sm:$0xff]
    %v301 = vld [vmem:[%s0 + $0x38] sm:$0xff]
    %v302 = vld [vmem:[%s0 + $0x40] sm:$0xff]
    %v303 = vld [vmem:[%s0 + $0x48] sm:$0xff]
    %v304 = vld [vmem:[%s0 + $0x50] sm:$0xff]
    %v305 = vld [vmem:[%s0 + $0x58] sm:$0xff]
    %v306 = vld [vmem:[%s0 + $0x60] sm:$0xff]
    %v307 = vld [vmem:[%s0 + $0x68] sm:$0xff]
    %v308 = vld [vmem:[%s0 + $0x70] sm:$0xff]
    %v309 = vld [vmem:[%s0 + $0x78] sm:$0xff]
    %v311 = vlaneseq
    %v312 = vshrl.u32 %v311, 7
    %v313 = vsub.s32 0, %v312
    %v314 = vrot.slane %v287, %v313
    %vm316 = vcmask 261120
    %v318 = vsel %vm316, %v294, 0
    %v321 = vsel %vm316, %v295, 0
    %v324 = vsel %vm316, %v296, 0
    %v327 = vsel %vm316, %v297, 0
    %v330 = vsel %vm316, %v298, 0
    %v333 = vsel %vm316, %v299, 0
    %v336 = vsel %vm316, %v300, 0
    %v339 = vsel %vm316, %v301, 0
    %v342 = vsel %vm316, %v302, 0
    %v345 = vsel %vm316, %v303, 0
    %v348 = vsel %vm316, %v304, 0
    %v351 = vsel %vm316, %v305, 0
    %v354 = vsel %vm316, %v306, 0
    %v357 = vsel %vm316, %v307, 0
    %v360 = vsel %vm316, %v308, 0
    %v363 = vsel %vm316, %v309, 0
    %365 = vmatprep.subr.mxu0 0.0
    %366 = vmatpush1.msra.mxu0 0.0
    %367 = vmatprep.subr.mxu0 0.0
    %368 = vmatpush1.msra.mxu0 0.0
    %369 = vmatprep.subr.mxu0 0.0
    %370 = vmatpush1.msra.mxu0 0.0
    %371 = vmatprep.subr.mxu0 0.0
    %372 = vmatpush1.msra.mxu0 0.0
    %373 = vmatprep.subr.mxu0 0.0
    %374 = vmatpush1.msra.mxu0 0.0
    %375 = vmatprep.subr.mxu0 0.0
    %376 = vmatpush1.msra.mxu0 0.0
    %377 = vmatprep.subr.mxu0 0.0
    %378 = vmatpush1.msra.mxu0 0.0
    %379 = vmatprep.subr.mxu0 0.0
    %380 = vmatpush1.msra.mxu0 0.0
    %381 = vmatprep.subr.mxu0 0.0
    %382 = vmatpush1.msra.mxu0 0.0
    %383 = vmatprep.subr.mxu0 0.0
    %384 = vmatpush1.msra.mxu0 0.0
    %385 = vmatprep.subr.mxu0 0.0
    %386 = vmatpush1.msra.mxu0 0.0
    %387 = vmatprep.subr.mxu0 0.0
    %388 = vmatpush1.msra.mxu0 0.0
    %389 = vmatprep.subr.mxu0 0.0
    %390 = vmatpush1.msra.mxu0 %v30
    %391 = vmatprep.subr.mxu0 0.0
    %392 = vmatpush1.msra.mxu0 %v29
    %393 = vmatprep.subr.mxu0 0.0
    %394 = vmatpush1.msra.mxu0 %v28
    %395 = vmatprep.subr.mxu0 0.0
    %396 = vmatpush1.msra.mxu0 %v27
    %397 = vmatprep.subr.mxu0 0.0
    %398 = vmatpush2.msra.mxu0 0.0
    %399 = vmatprep.subr.mxu0 0.0
    %400 = vmatpush2.msra.mxu0 0.0
    %401 = vmatprep.subr.mxu0 0.0
    %402 = vmatpush2.msra.mxu0 0.0
    %403 = vmatprep.subr.mxu0 0.0
    %404 = vmatpush2.msra.mxu0 0.0
    %405 = vmatprep.subr.mxu0 0.0
    %406 = vmatpush2.msra.mxu0 0.0
    %407 = vmatprep.subr.mxu0 0.0
    %408 = vmatpush2.msra.mxu0 0.0
    %409 = vmatprep.subr.mxu0 0.0
    %410 = vmatpush2.msra.mxu0 0.0
    %411 = vmatprep.subr.mxu0 0.0
    %412 = vmatpush2.msra.mxu0 0.0
    %413 = vmatprep.subr.mxu0 0.0
    %414 = vmatpush2.msra.mxu0 0.0
    %415 = vmatprep.subr.mxu0 0.0
    %416 = vmatpush2.msra.mxu0 0.0
    %417 = vmatprep.subr.mxu0 0.0
    %418 = vmatpush2.msra.mxu0 0.0
    %419 = vmatprep.subr.mxu0 0.0
    %420 = vmatpush2.msra.mxu0 0.0
    %421 = vmatprep.subr.mxu0 0.0
    %422 = vmatpush2.msra.mxu0 0.0
    %423 = vmatprep.subr.mxu0 0.0
    %424 = vmatpush2.msra.mxu0 0.0
    %425 = vmatprep.subr.mxu0 0.0
    %426 = vmatpush2.msra.mxu0 0.0
    %427 = vmatprep.subr.mxu0 0.0
    %428 = vmatpush2.msra.mxu0 0.0
    %429 = vmatprep.mubr.f32.mxu0 0.0
    %430 = vmatmul.mubr.f32.gmra.mxu0 %v318
    %v431 = vpop.f32.mrf.mxu0
    %v432 = vadd.f32 %v314, %v431
    %v433 = vpop.f32.mrf.mxu0
    %434 = vmatprep.mubr.f32.mxu0 0.0
    %435 = vmatmul.mubr.f32.gmra.mxu0 %v321
    %v436 = vpop.f32.mrf.mxu0
    %v437 = vadd.f32 %v314, %v436
    %v438 = vpop.f32.mrf.mxu0
    %439 = vmatprep.mubr.f32.mxu0 0.0
    %440 = vmatmul.mubr.f32.gmra.mxu0 %v324
    %v441 = vpop.f32.mrf.mxu0
    %v442 = vadd.f32 %v314, %v441
    %v443 = vpop.f32.mrf.mxu0
    %444 = vmatprep.mubr.f32.mxu0 0.0
    %445 = vmatmul.mubr.f32.gmra.mxu0 %v327
    %v446 = vpop.f32.mrf.mxu0
    %v447 = vadd.f32 %v314, %v446
    %v448 = vpop.f32.mrf.mxu0
    %449 = vmatprep.mubr.f32.mxu0 0.0
    %450 = vmatmul.mubr.f32.gmra.mxu0 %v330
    %v451 = vpop.f32.mrf.mxu0
    %v452 = vadd.f32 %v314, %v451
    %v453 = vpop.f32.mrf.mxu0
    %454 = vmatprep.mubr.f32.mxu0 0.0
    %455 = vmatmul.mubr.f32.gmra.mxu0 %v333
    %v456 = vpop.f32.mrf.mxu0
    %v457 = vadd.f32 %v314, %v456
    %v458 = vpop.f32.mrf.mxu0
    %459 = vmatprep.mubr.f32.mxu0 0.0
    %460 = vmatmul.mubr.f32.gmra.mxu0 %v336
    %v461 = vpop.f32.mrf.mxu0
    %v462 = vadd.f32 %v314, %v461
    %v463 = vpop.f32.mrf.mxu0
    %464 = vmatprep.mubr.f32.mxu0 0.0
    %465 = vmatmul.mubr.f32.gmra.mxu0 %v339
    %v466 = vpop.f32.mrf.mxu0
    %v467 = vadd.f32 %v314, %v466
    %v468 = vpop.f32.mrf.mxu0
    %469 = vmatprep.mubr.f32.mxu0 0.0
    %470 = vmatmul.mubr.f32.gmra.mxu0 %v342
    %v471 = vpop.f32.mrf.mxu0
    %v472 = vadd.f32 %v314, %v471
    %v473 = vpop.f32.mrf.mxu0
    %474 = vmatprep.mubr.f32.mxu0 0.0
    %475 = vmatmul.mubr.f32.gmra.mxu0 %v345
    %v476 = vpop.f32.mrf.mxu0
    %v477 = vadd.f32 %v314, %v476
    %v478 = vpop.f32.mrf.mxu0
    %479 = vmatprep.mubr.f32.mxu0 0.0
    %480 = vmatmul.mubr.f32.gmra.mxu0 %v348
    %v481 = vpop.f32.mrf.mxu0
    %v482 = vadd.f32 %v314, %v481
    %v483 = vpop.f32.mrf.mxu0
    %484 = vmatprep.mubr.f32.mxu0 0.0
    %485 = vmatmul.mubr.f32.gmra.mxu0 %v351
    %v486 = vpop.f32.mrf.mxu0
    %v487 = vadd.f32 %v314, %v486
    %v488 = vpop.f32.mrf.mxu0
    %489 = vmatprep.mubr.f32.mxu0 0.0
    %490 = vmatmul.mubr.f32.gmra.mxu0 %v354
    %v491 = vpop.f32.mrf.mxu0
    %v492 = vadd.f32 %v314, %v491
    %v493 = vpop.f32.mrf.mxu0
    %494 = vmatprep.mubr.f32.mxu0 0.0
    %495 = vmatmul.mubr.f32.gmra.mxu0 %v357
    %v496 = vpop.f32.mrf.mxu0
    %v497 = vadd.f32 %v314, %v496
    %v498 = vpop.f32.mrf.mxu0
    %499 = vmatprep.mubr.f32.mxu0 0.0
    %500 = vmatmul.mubr.f32.gmra.mxu0 %v360
    %v501 = vpop.f32.mrf.mxu0
    %v502 = vadd.f32 %v314, %v501
    %v503 = vpop.f32.mrf.mxu0
    %504 = vmatprep.mubr.f32.mxu0 0.0
    %505 = vmatmul.mubr.f32.gmra.mxu0 %v363
    %v506 = vpop.f32.mrf.mxu0
    %v507 = vadd.f32 %v314, %v506
    %v508 = vpop.f32.mrf.mxu0
    %509 = vdwg.mxu0
    %v511 = vlaneseq
    %v512 = vshrl.u32 %v511, 7
    %v513 = vsub.s32 0, %v512
    %v514 = vrot.slane %v288, %v513
    %v517 = vsel %vm316, 0.0, 0
    %519 = vmatprep.subr.mxu0 0.0
    %520 = vmatpush1.msra.mxu0 0.0
    %521 = vmatprep.subr.mxu0 0.0
    %522 = vmatpush1.msra.mxu0 0.0
    %523 = vmatprep.subr.mxu0 0.0
    %524 = vmatpush1.msra.mxu0 0.0
    %525 = vmatprep.subr.mxu0 0.0
    %526 = vmatpush1.msra.mxu0 0.0
    %527 = vmatprep.subr.mxu0 0.0
    %528 = vmatpush1.msra.mxu0 0.0
    %529 = vmatprep.subr.mxu0 0.0
    %530 = vmatpush1.msra.mxu0 0.0
    %531 = vmatprep.subr.mxu0 0.0
    %532 = vmatpush1.msra.mxu0 0.0
    %533 = vmatprep.subr.mxu0 0.0
    %534 = vmatpush1.msra.mxu0 0.0
    %535 = vmatprep.subr.mxu0 0.0
    %536 = vmatpush1.msra.mxu0 0.0
    %537 = vmatprep.subr.mxu0 0.0
    %538 = vmatpush1.msra.mxu0 0.0
    %539 = vmatprep.subr.mxu0 0.0
    %540 = vmatpush1.msra.mxu0 0.0
    %541 = vmatprep.subr.mxu0 0.0
    %542 = vmatpush1.msra.mxu0 0.0
    %543 = vmatprep.subr.mxu0 0.0
    %544 = vmatpush1.msra.mxu0 %v34
    %545 = vmatprep.subr.mxu0 0.0
    %546 = vmatpush1.msra.mxu0 %v33
    %547 = vmatprep.subr.mxu0 0.0
    %548 = vmatpush1.msra.mxu0 %v32
    %549 = vmatprep.subr.mxu0 0.0
    %550 = vmatpush1.msra.mxu0 %v31
    %551 = vmatprep.subr.mxu0 0.0
    %552 = vmatpush2.msra.mxu0 0.0
    %553 = vmatprep.subr.mxu0 0.0
    %554 = vmatpush2.msra.mxu0 0.0
    %555 = vmatprep.subr.mxu0 0.0
    %556 = vmatpush2.msra.mxu0 0.0
    %557 = vmatprep.subr.mxu0 0.0
    %558 = vmatpush2.msra.mxu0 0.0
    %559 = vmatprep.subr.mxu0 0.0
    %560 = vmatpush2.msra.mxu0 0.0
    %561 = vmatprep.subr.mxu0 0.0
    %562 = vmatpush2.msra.mxu0 0.0
    %563 = vmatprep.subr.mxu0 0.0
    %564 = vmatpush2.msra.mxu0 0.0
    %565 = vmatprep.subr.mxu0 0.0
    %566 = vmatpush2.msra.mxu0 0.0
    %567 = vmatprep.subr.mxu0 0.0
    %568 = vmatpush2.msra.mxu0 0.0
    %569 = vmatprep.subr.mxu0 0.0
    %570 = vmatpush2.msra.mxu0 0.0
    %571 = vmatprep.subr.mxu0 0.0
    %572 = vmatpush2.msra.mxu0 0.0
    %573 = vmatprep.subr.mxu0 0.0
    %574 = vmatpush2.msra.mxu0 0.0
    %575 = vmatprep.subr.mxu0 0.0
    %576 = vmatpush2.msra.mxu0 0.0
    %577 = vmatprep.subr.mxu0 0.0
    %578 = vmatpush2.msra.mxu0 0.0
    %579 = vmatprep.subr.mxu0 0.0
    %580 = vmatpush2.msra.mxu0 0.0
    %581 = vmatprep.subr.mxu0 0.0
    %582 = vmatpush2.msra.mxu0 0.0
    %583 = vmatprep.mubr.f32.mxu0 0.0
    %584 = vmatmul.mubr.f32.gmra.mxu0 %v517
    %v585 = vpop.f32.mrf.mxu0
    %v586 = vadd.f32 %v514, %v585
    %v587 = vpop.f32.mrf.mxu0
    %588 = vmatprep.mubr.f32.mxu0 0.0
    %589 = vmatmul.mubr.f32.gmra.mxu0 %v517
    %v590 = vpop.f32.mrf.mxu0
    %v591 = vadd.f32 %v514, %v590
    %v592 = vpop.f32.mrf.mxu0
    %593 = vdwg.mxu0
    %v594 = vadd.f32 %v432, %v586
    %v595 = vadd.f32 %v437, %v591
    %v596 = vxor.u32 %v594, 2147483648
    %v597 = vxor.u32 %v595, 2147483648
    %v598 = vmul.f32 %v596, 1.442695
    %v599 = vpow.pop %v598
    %v600 = vmul.f32 %v597, 1.442695
    %v601 = vpow.pop %v600
    %v602 = vadd.f32 %v599, 1.0
    %v603 = vadd.f32 %v601, 1.0
    %v604 = vrcp.pop %v602
    %v605 = vmul.f32 1.0, %v604
    %v606 = vrcp.pop %v603
    %v607 = vmul.f32 1.0, %v606
    %610 = vrot.lane.b32.xlu0 %v586, 64
    %v611 = vpop.permute.xlu0 %610
    %612 = vrot.lane.b32.xlu0 %v591, 64
    %v613 = vpop.permute.xlu0 %612
    %v616 = vmul.f32 %v605, %v611
    %v617 = vmul.f32 %v607, %v613
    %620 = vrot.lane.b32.xlu0 %v616, 64
    %v621 = vpop.permute.xlu0 %620
    %622 = vrot.lane.b32.xlu0 %v617, 64
    %v623 = vpop.permute.xlu0 %622
    %v626 = vadd.f32 %v432, %v621
    %v627 = vadd.f32 %v437, %v623
    %v628 = vtanh.pop %v626
    %v629 = vtanh.pop %v627
    %v630 = vsub.f32 1.0, %v605
    %v631 = vsub.f32 1.0, %v607
    %634 = vrot.lane.b32.xlu0 %v628, 96
    %v635 = vpop.permute.xlu0 %634
    %636 = vrot.lane.b32.xlu0 %v629, 96
    %v637 = vpop.permute.xlu0 %636
    %v640 = vmul.f32 %v630, %v635
    %v641 = vmul.f32 %v631, %v637
    %v642 = vmul.f32 %v605, 0.0
    %v643 = vmul.f32 %v607, 0.0
    %v644 = vadd.f32 %v640, %v642
    %v645 = vadd.f32 %v641, %v643
    %648 = vrot.lane.b32.xlu0 %v644, 96
    %v649 = vpop.permute.xlu0 %648
    %650 = vrot.lane.b32.xlu0 %v645, 96
    %v651 = vpop.permute.xlu0 %650
    %vm654 = vcmask 130048
    %655 = vst.msk [vmem:[#allocation2] sm:$0xff] %vm654, %v649
    %656 = vst.msk [vmem:[#allocation2 + $0x10] sm:$0xff] %vm654, %v651
    %657 = vrot.lane.b32.xlu0 %v644, 64
    %v658 = vpop.permute.xlu0 %657
    %659 = vrot.lane.b32.xlu0 %v645, 64
    %v660 = vpop.permute.xlu0 %659
    %vm663 = vcmask 1048448
    %664 = vst.msk [vmem:[#allocation2 + $0x8] sm:$0xff] %vm663, %v658
    %665 = vst.msk [vmem:[#allocation2 + $0x18] sm:$0xff] %vm663, %v660
    %v666 = vsel %vm316, %v649, 0
    %v668 = vsel %vm316, %v651, 0
    %670 = vmatprep.subr.mxu0 0.0
    %671 = vmatpush1.msra.mxu0 0.0
    %672 = vmatprep.subr.mxu0 0.0
    %673 = vmatpush1.msra.mxu0 0.0
    %674 = vmatprep.subr.mxu0 0.0
    %675 = vmatpush1.msra.mxu0 0.0
    %676 = vmatprep.subr.mxu0 0.0
    %677 = vmatpush1.msra.mxu0 0.0
    %678 = vmatprep.subr.mxu0 0.0
    %679 = vmatpush1.msra.mxu0 0.0
    %680 = vmatprep.subr.mxu0 0.0
    %681 = vmatpush1.msra.mxu0 0.0
    %682 = vmatprep.subr.mxu0 0.0
    %683 = vmatpush1.msra.mxu0 0.0
    %684 = vmatprep.subr.mxu0 0.0
    %685 = vmatpush1.msra.mxu0 0.0
    %686 = vmatprep.subr.mxu0 0.0
    %687 = vmatpush1.msra.mxu0 0.0
    %688 = vmatprep.subr.mxu0 0.0
    %689 = vmatpush1.msra.mxu0 0.0
    %690 = vmatprep.subr.mxu0 0.0
    %691 = vmatpush1.msra.mxu0 0.0
    %692 = vmatprep.subr.mxu0 0.0
    %693 = vmatpush1.msra.mxu0 0.0
    %694 = vmatprep.subr.mxu0 0.0
    %695 = vmatpush1.msra.mxu0 %v34
    %696 = vmatprep.subr.mxu0 0.0
    %697 = vmatpush1.msra.mxu0 %v33
    %698 = vmatprep.subr.mxu0 0.0
    %699 = vmatpush1.msra.mxu0 %v32
    %700 = vmatprep.subr.mxu0 0.0
    %701 = vmatpush1.msra.mxu0 %v31
    %702 = vmatprep.subr.mxu0 0.0
    %703 = vmatpush2.msra.mxu0 0.0
    %704 = vmatprep.subr.mxu0 0.0
    %705 = vmatpush2.msra.mxu0 0.0
    %706 = vmatprep.subr.mxu0 0.0
    %707 = vmatpush2.msra.mxu0 0.0
    %708 = vmatprep.subr.mxu0 0.0
    %709 = vmatpush2.msra.mxu0 0.0
    %710 = vmatprep.subr.mxu0 0.0
    %711 = vmatpush2.msra.mxu0 0.0
    %712 = vmatprep.subr.mxu0 0.0
    %713 = vmatpush2.msra.mxu0 0.0
    %714 = vmatprep.subr.mxu0 0.0
    %715 = vmatpush2.msra.mxu0 0.0
    %716 = vmatprep.subr.mxu0 0.0
    %717 = vmatpush2.msra.mxu0 0.0
    %718 = vmatprep.subr.mxu0 0.0
    %719 = vmatpush2.msra.mxu0 0.0
    %720 = vmatprep.subr.mxu0 0.0
    %721 = vmatpush2.msra.mxu0 0.0
    %722 = vmatprep.subr.mxu0 0.0
    %723 = vmatpush2.msra.mxu0 0.0
    %724 = vmatprep.subr.mxu0 0.0
    %725 = vmatpush2.msra.mxu0 0.0
    %726 = vmatprep.subr.mxu0 0.0
    %727 = vmatpush2.msra.mxu0 0.0
    %728 = vmatprep.subr.mxu0 0.0
    %729 = vmatpush2.msra.mxu0 0.0
    %730 = vmatprep.subr.mxu0 0.0
    %731 = vmatpush2.msra.mxu0 0.0
    %732 = vmatprep.subr.mxu0 0.0
    %733 = vmatpush2.msra.mxu0 0.0
    %734 = vmatprep.mubr.f32.mxu0 0.0
    %735 = vmatmul.mubr.f32.gmra.mxu0 %v666
    %v736 = vpop.f32.mrf.mxu0
    %v737 = vadd.f32 %v514, %v736
    %v738 = vpop.f32.mrf.mxu0
    %739 = vmatprep.mubr.f32.mxu0 0.0
    %740 = vmatmul.mubr.f32.gmra.mxu0 %v668
    %v741 = vpop.f32.mrf.mxu0
    %v742 = vadd.f32 %v514, %v741
    %v743 = vpop.f32.mrf.mxu0
    %744 = vdwg.mxu0
    %v745 = vadd.f32 %v442, %v737
    %v746 = vadd.f32 %v447, %v742
    %v747 = vxor.u32 %v745, 2147483648
    %v748 = vxor.u32 %v746, 2147483648
    %v749 = vmul.f32 %v747, 1.442695
    %v750 = vpow.pop %v749
    %v751 = vmul.f32 %v748, 1.442695
    %v752 = vpow.pop %v751
    %v753 = vadd.f32 %v750, 1.0
    %v754 = vadd.f32 %v752, 1.0
    %v755 = vrcp.pop %v753
    %v756 = vmul.f32 1.0, %v755
    %v757 = vrcp.pop %v754
    %v758 = vmul.f32 1.0, %v757
    %761 = vrot.lane.b32.xlu0 %v737, 64
    %v762 = vpop.permute.xlu0 %761
    %763 = vrot.lane.b32.xlu0 %v742, 64
    %v764 = vpop.permute.xlu0 %763
    %v767 = vmul.f32 %v756, %v762
    %v768 = vmul.f32 %v758, %v764
    %771 = vrot.lane.b32.xlu0 %v767, 64
    %v772 = vpop.permute.xlu0 %771
    %773 = vrot.lane.b32.xlu0 %v768, 64
    %v774 = vpop.permute.xlu0 %773
    %v777 = vadd.f32 %v442, %v772
    %v778 = vadd.f32 %v447, %v774
    %v779 = vtanh.pop %v777
    %v780 = vtanh.pop %v778
    %v781 = vsub.f32 1.0, %v756
    %v782 = vsub.f32 1.0, %v758
    %785 = vrot.lane.b32.xlu0 %v779, 96
    %v786 = vpop.permute.xlu0 %785
    %787 = vrot.lane.b32.xlu0 %v780, 96
    %v788 = vpop.permute.xlu0 %787
    %v791 = vmul.f32 %v781, %v786
    %v792 = vmul.f32 %v782, %v788
    %v793 = vmul.f32 %v756, %v644
    %v794 = vmul.f32 %v758, %v645
    %v795 = vadd.f32 %v791, %v793
    %v796 = vadd.f32 %v792, %v794
    %vm797 = vcmask 392448
    %798 = vst.msk [vmem:[#allocation2] sm:$0xff] %vm797, %v795
    %799 = vst.msk [vmem:[#allocation2 + $0x10] sm:$0xff] %vm797, %v796
    %802 = vrot.lane.b32.xlu0 %v795, 32
    %v803 = vpop.permute.xlu0 %802
    %804 = vrot.lane.b32.xlu0 %v796, 32
    %v805 = vpop.permute.xlu0 %804
    %vm808 = vcmask 786048
    %809 = vst.msk [vmem:[#allocation2 + $0x8] sm:$0xff] %vm808, %v803
    %810 = vst.msk [vmem:[#allocation2 + $0x18] sm:$0xff] %vm808, %v805
    %811 = vrot.lane.b32.xlu0 %v795, 96
    %v812 = vpop.permute.xlu0 %811
    %813 = vrot.lane.b32.xlu0 %v796, 96
    %v814 = vpop.permute.xlu0 %813
    %v815 = vsel %vm316, %v812, 0
    %v817 = vsel %vm316, %v814, 0
    %819 = vmatprep.subr.mxu0 0.0
    %820 = vmatpush1.msra.mxu0 0.0
    %821 = vmatprep.subr.mxu0 0.0
    %822 = vmatpush1.msra.mxu0 0.0
    %823 = vmatprep.subr.mxu0 0.0
    %824 = vmatpush1.msra.mxu0 0.0
    %825 = vmatprep.subr.mxu0 0.0
    %826 = vmatpush1.msra.mxu0 0.0
    %827 = vmatprep.subr.mxu0 0.0
    %828 = vmatpush1.msra.mxu0 0.0
    %829 = vmatprep.subr.mxu0 0.0
    %830 = vmatpush1.msra.mxu0 0.0
    %831 = vmatprep.subr.mxu0 0.0
    %832 = vmatpush1.msra.mxu0 0.0
    %833 = vmatprep.subr.mxu0 0.0
    %834 = vmatpush1.msra.mxu0 0.0
    %835 = vmatprep.subr.mxu0 0.0
    %836 = vmatpush1.msra.mxu0 0.0
    %837 = vmatprep.subr.mxu0 0.0
    %838 = vmatpush1.msra.mxu0 0.0
    %839 = vmatprep.subr.mxu0 0.0
    %840 = vmatpush1.msra.mxu0 0.0
    %841 = vmatprep.subr.mxu0 0.0
    %842 = vmatpush1.msra.mxu0 0.0
    %843 = vmatprep.subr.mxu0 0.0
    %844 = vmatpush1.msra.mxu0 %v34
    %845 = vmatprep.subr.mxu0 0.0
    %846 = vmatpush1.msra.mxu0 %v33
    %847 = vmatprep.subr.mxu0 0.0
    %848 = vmatpush1.msra.mxu0 %v32
    %849 = vmatprep.subr.mxu0 0.0
    %850 = vmatpush1.msra.mxu0 %v31
    %851 = vmatprep.subr.mxu0 0.0
    %852 = vmatpush2.msra.mxu0 0.0
    %853 = vmatprep.subr.mxu0 0.0
    %854 = vmatpush2.msra.mxu0 0.0
    %855 = vmatprep.subr.mxu0 0.0
    %856 = vmatpush2.msra.mxu0 0.0
    %857 = vmatprep.subr.mxu0 0.0
    %858 = vmatpush2.msra.mxu0 0.0
    %859 = vmatprep.subr.mxu0 0.0
    %860 = vmatpush2.msra.mxu0 0.0
    %861 = vmatprep.subr.mxu0 0.0
    %862 = vmatpush2.msra.mxu0 0.0
    %863 = vmatprep.subr.mxu0 0.0
    %864 = vmatpush2.msra.mxu0 0.0
    %865 = vmatprep.subr.mxu0 0.0
    %866 = vmatpush2.msra.mxu0 0.0
    %867 = vmatprep.subr.mxu0 0.0
    %868 = vmatpush2.msra.mxu0 0.0
    %869 = vmatprep.subr.mxu0 0.0
    %870 = vmatpush2.msra.mxu0 0.0
    %871 = vmatprep.subr.mxu0 0.0
    %872 = vmatpush2.msra.mxu0 0.0
    %873 = vmatprep.subr.mxu0 0.0
    %874 = vmatpush2.msra.mxu0 0.0
    %875 = vmatprep.subr.mxu0 0.0
    %876 = vmatpush2.msra.mxu0 0.0
    %877 = vmatprep.subr.mxu0 0.0
    %878 = vmatpush2.msra.mxu0 0.0
    %879 = vmatprep.subr.mxu0 0.0
    %880 = vmatpush2.msra.mxu0 0.0
    %881 = vmatprep.subr.mxu0 0.0
    %882 = vmatpush2.msra.mxu0 0.0
    %883 = vmatprep.mubr.f32.mxu0 0.0
    %884 = vmatmul.mubr.f32.gmra.mxu0 %v815
    %v885 = vpop.f32.mrf.mxu0
    %v886 = vadd.f32 %v514, %v885
    %v887 = vpop.f32.mrf.mxu0
    %888 = vmatprep.mubr.f32.mxu0 0.0
    %889 = vmatmul.mubr.f32.gmra.mxu0 %v817
    %v890 = vpop.f32.mrf.mxu0
    %v891 = vadd.f32 %v514, %v890
    %v892 = vpop.f32.mrf.mxu0
    %893 = vdwg.mxu0
    %v894 = vadd.f32 %v452, %v886
    %v895 = vadd.f32 %v457, %v891
    %v896 = vxor.u32 %v894, 2147483648
    %v897 = vxor.u32 %v895, 2147483648
    %v898 = vmul.f32 %v896, 1.442695
    %v899 = vpow.pop %v898
    %v900 = vmul.f32 %v897, 1.442695
    %v901 = vpow.pop %v900
    %v902 = vadd.f32 %v899, 1.0
    %v903 = vadd.f32 %v901, 1.0
    %v904 = vrcp.pop %v902
    %v905 = vmul.f32 1.0, %v904
    %v906 = vrcp.pop %v903
    %v907 = vmul.f32 1.0, %v906
    %910 = vrot.lane.b32.xlu0 %v886, 64
    %v911 = vpop.permute.xlu0 %910
    %912 = vrot.lane.b32.xlu0 %v891, 64
    %v913 = vpop.permute.xlu0 %912
    %v916 = vmul.f32 %v905, %v911
    %v917 = vmul.f32 %v907, %v913
    %920 = vrot.lane.b32.xlu0 %v916, 64
    %v921 = vpop.permute.xlu0 %920
    %922 = vrot.lane.b32.xlu0 %v917, 64
    %v923 = vpop.permute.xlu0 %922
    %v926 = vadd.f32 %v452, %v921
    %v927 = vadd.f32 %v457, %v923
    %v928 = vtanh.pop %v926
    %v929 = vtanh.pop %v927
    %v930 = vsub.f32 1.0, %v905
    %v931 = vsub.f32 1.0, %v907
    %934 = vrot.lane.b32.xlu0 %v928, 96
    %v935 = vpop.permute.xlu0 %934
    %936 = vrot.lane.b32.xlu0 %v929, 96
    %v937 = vpop.permute.xlu0 %936
    %v940 = vmul.f32 %v930, %v935
    %v941 = vmul.f32 %v931, %v937
    %v942 = vmul.f32 %v905, %v795
    %v943 = vmul.f32 %v907, %v796
    %v944 = vadd.f32 %v940, %v942
    %v945 = vadd.f32 %v941, %v943
    %948 = vrot.lane.b32.xlu0 %v944, 32
    %v949 = vpop.permute.xlu0 %948
    %950 = vrot.lane.b32.xlu0 %v945, 32
    %v951 = vpop.permute.xlu0 %950
    %vm954 = vcmask 654848
    %955 = vst.msk [vmem:[#allocation2] sm:$0xff] %vm954, %v949
    %956 = vst.msk [vmem:[#allocation2 + $0x10] sm:$0xff] %vm954, %v951
    %vm957 = vcmask 523648
    %958 = vst.msk [vmem:[#allocation2 + $0x8] sm:$0xff] %vm957, %v944
    %959 = vst.msk [vmem:[#allocation2 + $0x18] sm:$0xff] %vm957, %v945
    %960 = vrot.lane.b32.xlu0 %v944, 96
    %v961 = vpop.permute.xlu0 %960
    %962 = vrot.lane.b32.xlu0 %v945, 96
    %v963 = vpop.permute.xlu0 %962
    %v964 = vsel %vm316, %v961, 0
    %v966 = vsel %vm316, %v963, 0
    %968 = vmatprep.subr.mxu0 0.0
    %969 = vmatpush1.msra.mxu0 0.0
    %970 = vmatprep.subr.mxu0 0.0
    %971 = vmatpush1.msra.mxu0 0.0
    %972 = vmatprep.subr.mxu0 0.0
    %973 = vmatpush1.msra.mxu0 0.0
    %974 = vmatprep.subr.mxu0 0.0
    %975 = vmatpush1.msra.mxu0 0.0
    %976 = vmatprep.subr.mxu0 0.0
    %977 = vmatpush1.msra.mxu0 0.0
    %978 = vmatprep.subr.mxu0 0.0
    %979 = vmatpush1.msra.mxu0 0.0
    %980 = vmatprep.subr.mxu0 0.0
    %981 = vmatpush1.msra.mxu0 0.0
    %982 = vmatprep.subr.mxu0 0.0
    %983 = vmatpush1.msra.mxu0 0.0
    %984 = vmatprep.subr.mxu0 0.0
    %985 = vmatpush1.msra.mxu0 0.0
    %986 = vmatprep.subr.mxu0 0.0
    %987 = vmatpush1.msra.mxu0 0.0
    %988 = vmatprep.subr.mxu0 0.0
    %989 = vmatpush1.msra.mxu0 0.0
    %990 = vmatprep.subr.mxu0 0.0
    %991 = vmatpush1.msra.mxu0 0.0
    %992 = vmatprep.subr.mxu0 0.0
    %993 = vmatpush1.msra.mxu0 %v34
    %994 = vmatprep.subr.mxu0 0.0
    %995 = vmatpush1.msra.mxu0 %v33
    %996 = vmatprep.subr.mxu0 0.0
    %997 = vmatpush1.msra.mxu0 %v32
    %998 = vmatprep.subr.mxu0 0.0
    %999 = vmatpush1.msra.mxu0 %v31
    %1000 = vmatprep.subr.mxu0 0.0
    %1001 = vmatpush2.msra.mxu0 0.0
    %1002 = vmatprep.subr.mxu0 0.0
    %1003 = vmatpush2.msra.mxu0 0.0
    %1004 = vmatprep.subr.mxu0 0.0
    %1005 = vmatpush2.msra.mxu0 0.0
    %1006 = vmatprep.subr.mxu0 0.0
    %1007 = vmatpush2.msra.mxu0 0.0
    %1008 = vmatprep.subr.mxu0 0.0
    %1009 = vmatpush2.msra.mxu0 0.0
    %1010 = vmatprep.subr.mxu0 0.0
    %1011 = vmatpush2.msra.mxu0 0.0
    %1012 = vmatprep.subr.mxu0 0.0
    %1013 = vmatpush2.msra.mxu0 0.0
    %1014 = vmatprep.subr.mxu0 0.0
    %1015 = vmatpush2.msra.mxu0 0.0
    %1016 = vmatprep.subr.mxu0 0.0
    %1017 = vmatpush2.msra.mxu0 0.0
    %1018 = vmatprep.subr.mxu0 0.0
    %1019 = vmatpush2.msra.mxu0 0.0
    %1020 = vmatprep.subr.mxu0 0.0
    %1021 = vmatpush2.msra.mxu0 0.0
    %1022 = vmatprep.subr.mxu0 0.0
    %1023 = vmatpush2.msra.mxu0 0.0
    %1024 = vmatprep.subr.mxu0 0.0
    %1025 = vmatpush2.msra.mxu0 0.0
    %1026 = vmatprep.subr.mxu0 0.0
    %1027 = vmatpush2.msra.mxu0 0.0
    %1028 = vmatprep.subr.mxu0 0.0
    %1029 = vmatpush2.msra.mxu0 0.0
    %1030 = vmatprep.subr.mxu0 0.0
    %1031 = vmatpush2.msra.mxu0 0.0
    %1032 = vmatprep.mubr.f32.mxu0 0.0
    %1033 = vmatmul.mubr.f32.gmra.mxu0 %v964
    %v1034 = vpop.f32.mrf.mxu0
    %v1035 = vadd.f32 %v514, %v1034
    %v1036 = vpop.f32.mrf.mxu0
    %1037 = vmatprep.mubr.f32.mxu0 0.0
    %1038 = vmatmul.mubr.f32.gmra.mxu0 %v966
    %v1039 = vpop.f32.mrf.mxu0
    %v1040 = vadd.f32 %v514, %v1039
    %v1041 = vpop.f32.mrf.mxu0
    %1042 = vdwg.mxu0
    %v1043 = vadd.f32 %v462, %v1035
    %v1044 = vadd.f32 %v467, %v1040
    %v1045 = vxor.u32 %v1043, 2147483648
    %v1046 = vxor.u32 %v1044, 2147483648
    %v1047 = vmul.f32 %v1045, 1.442695
    %v1048 = vpow.pop %v1047
    %v1049 = vmul.f32 %v1046, 1.442695
    %v1050 = vpow.pop %v1049
    %v1051 = vadd.f32 %v1048, 1.0
    %v1052 = vadd.f32 %v1050, 1.0
    %v1053 = vrcp.pop %v1051
    %v1054 = vmul.f32 1.0, %v1053
    %v1055 = vrcp.pop %v1052
    %v1056 = vmul.f32 1.0, %v1055
    %1059 = vrot.lane.b32.xlu0 %v1035, 64
    %v1060 = vpop.permute.xlu0 %1059
    %1061 = vrot.lane.b32.xlu0 %v1040, 64
    %v1062 = vpop.permute.xlu0 %1061
    %v1065 = vmul.f32 %v1054, %v1060
    %v1066 = vmul.f32 %v1056, %v1062
    %1069 = vrot.lane.b32.xlu0 %v1065, 64
    %v1070 = vpop.permute.xlu0 %1069
    %1071 = vrot.lane.b32.xlu0 %v1066, 64
    %v1072 = vpop.permute.xlu0 %1071
    %v1075 = vadd.f32 %v462, %v1070
    %v1076 = vadd.f32 %v467, %v1072
    %v1077 = vtanh.pop %v1075
    %v1078 = vtanh.pop %v1076
    %v1079 = vsub.f32 1.0, %v1054
    %v1080 = vsub.f32 1.0, %v1056
    %1083 = vrot.lane.b32.xlu0 %v1077, 96
    %v1084 = vpop.permute.xlu0 %1083
    %1085 = vrot.lane.b32.xlu0 %v1078, 96
    %v1086 = vpop.permute.xlu0 %1085
    %v1089 = vmul.f32 %v1079, %v1084
    %v1090 = vmul.f32 %v1080, %v1086
    %v1091 = vmul.f32 %v1054, %v944
    %v1092 = vmul.f32 %v1056, %v945
    %v1093 = vadd.f32 %v1089, %v1091
    %v1094 = vadd.f32 %v1090, %v1092
    %1097 = vrot.lane.b32.xlu0 %v1093, 64
    %v1098 = vpop.permute.xlu0 %1097
    %1099 = vrot.lane.b32.xlu0 %v1094, 64
    %v1100 = vpop.permute.xlu0 %1099
    %vm1103 = vcmask 917248
    %1104 = vst.msk [vmem:[#allocation2] sm:$0xff] %vm1103, %v1098
    %1105 = vst.msk [vmem:[#allocation2 + $0x10] sm:$0xff] %vm1103, %v1100
    %1106 = vrot.lane.b32.xlu0 %v1093, 96
    %v1107 = vpop.permute.xlu0 %1106
    %1108 = vrot.lane.b32.xlu0 %v1094, 96
    %v1109 = vpop.permute.xlu0 %1108
    %vm1112 = vcmask 261248
    %1113 = vst.msk [vmem:[#allocation2 + $0x8] sm:$0xff] %vm1112, %v1107
    %1114 = vst.msk [vmem:[#allocation2 + $0x18] sm:$0xff] %vm1112, %v1109
    %v1115 = vsel %vm316, %v1107, 0
    %v1117 = vsel %vm316, %v1109, 0
    %1119 = vmatprep.subr.mxu0 0.0
    %1120 = vmatpush1.msra.mxu0 0.0
    %1121 = vmatprep.subr.mxu0 0.0
    %1122 = vmatpush1.msra.mxu0 0.0
    %1123 = vmatprep.subr.mxu0 0.0
    %1124 = vmatpush1.msra.mxu0 0.0
    %1125 = vmatprep.subr.mxu0 0.0
    %1126 = vmatpush1.msra.mxu0 0.0
    %1127 = vmatprep.subr.mxu0 0.0
    %1128 = vmatpush1.msra.mxu0 0.0
    %1129 = vmatprep.subr.mxu0 0.0
    %1130 = vmatpush1.msra.mxu0 0.0
    %1131 = vmatprep.subr.mxu0 0.0
    %1132 = vmatpush1.msra.mxu0 0.0
    %1133 = vmatprep.subr.mxu0 0.0
    %1134 = vmatpush1.msra.mxu0 0.0
    %1135 = vmatprep.subr.mxu0 0.0
    %1136 = vmatpush1.msra.mxu0 0.0
    %1137 = vmatprep.subr.mxu0 0.0
    %1138 = vmatpush1.msra.mxu0 0.0
    %1139 = vmatprep.subr.mxu0 0.0
    %1140 = vmatpush1.msra.mxu0 0.0
    %1141 = vmatprep.subr.mxu0 0.0
    %1142 = vmatpush1.msra.mxu0 0.0
    %1143 = vmatprep.subr.mxu0 0.0
    %1144 = vmatpush1.msra.mxu0 %v34
    %1145 = vmatprep.subr.mxu0 0.0
    %1146 = vmatpush1.msra.mxu0 %v33
    %1147 = vmatprep.subr.mxu0 0.0
    %1148 = vmatpush1.msra.mxu0 %v32
    %1149 = vmatprep.subr.mxu0 0.0
    %1150 = vmatpush1.msra.mxu0 %v31
    %1151 = vmatprep.subr.mxu0 0.0
    %1152 = vmatpush2.msra.mxu0 0.0
    %1153 = vmatprep.subr.mxu0 0.0
    %1154 = vmatpush2.msra.mxu0 0.0
    %1155 = vmatprep.subr.mxu0 0.0
    %1156 = vmatpush2.msra.mxu0 0.0
    %1157 = vmatprep.subr.mxu0 0.0
    %1158 = vmatpush2.msra.mxu0 0.0
    %1159 = vmatprep.subr.mxu0 0.0
    %1160 = vmatpush2.msra.mxu0 0.0
    %1161 = vmatprep.subr.mxu0 0.0
    %1162 = vmatpush2.msra.mxu0 0.0
    %1163 = vmatprep.subr.mxu0 0.0
    %1164 = vmatpush2.msra.mxu0 0.0
    %1165 = vmatprep.subr.mxu0 0.0
    %1166 = vmatpush2.msra.mxu0 0.0
    %1167 = vmatprep.subr.mxu0 0.0
    %1168 = vmatpush2.msra.mxu0 0.0
    %1169 = vmatprep.subr.mxu0 0.0
    %1170 = vmatpush2.msra.mxu0 0.0
    %1171 = vmatprep.subr.mxu0 0.0
    %1172 = vmatpush2.msra.mxu0 0.0
    %1173 = vmatprep.subr.mxu0 0.0
    %1174 = vmatpush2.msra.mxu0 0.0
    %1175 = vmatprep.subr.mxu0 0.0
    %1176 = vmatpush2.msra.mxu0 0.0
    %1177 = vmatprep.subr.mxu0 0.0
    %1178 = vmatpush2.msra.mxu0 0.0
    %1179 = vmatprep.subr.mxu0 0.0
    %1180 = vmatpush2.msra.mxu0 0.0
    %1181 = vmatprep.subr.mxu0 0.0
    %1182 = vmatpush2.msra.mxu0 0.0
    %1183 = vmatprep.mubr.f32.mxu0 0.0
    %1184 = vmatmul.mubr.f32.gmra.mxu0 %v1115
    %v1185 = vpop.f32.mrf.mxu0
    %v1186 = vadd.f32 %v514, %v1185
    %v1187 = vpop.f32.mrf.mxu0
    %1188 = vmatprep.mubr.f32.mxu0 0.0
    %1189 = vmatmul.mubr.f32.gmra.mxu0 %v1117
    %v1190 = vpop.f32.mrf.mxu0
    %v1191 = vadd.f32 %v514, %v1190
    %v1192 = vpop.f32.mrf.mxu0
    %1193 = vdwg.mxu0
    %v1194 = vadd.f32 %v472, %v1186
    %v1195 = vadd.f32 %v477, %v1191
    %v1196 = vxor.u32 %v1194, 2147483648
    %v1197 = vxor.u32 %v1195, 2147483648
    %v1198 = vmul.f32 %v1196, 1.442695
    %v1199 = vpow.pop %v1198
    %v1200 = vmul.f32 %v1197, 1.442695
    %v1201 = vpow.pop %v1200
    %v1202 = vadd.f32 %v1199, 1.0
    %v1203 = vadd.f32 %v1201, 1.0
    %v1204 = vrcp.pop %v1202
    %v1205 = vmul.f32 1.0, %v1204
    %v1206 = vrcp.pop %v1203
    %v1207 = vmul.f32 1.0, %v1206
    %1210 = vrot.lane.b32.xlu0 %v1186, 64
    %v1211 = vpop.permute.xlu0 %1210
    %1212 = vrot.lane.b32.xlu0 %v1191, 64
    %v1213 = vpop.permute.xlu0 %1212
    %v1216 = vmul.f32 %v1205, %v1211
    %v1217 = vmul.f32 %v1207, %v1213
    %1220 = vrot.lane.b32.xlu0 %v1216, 64
    %v1221 = vpop.permute.xlu0 %1220
    %1222 = vrot.lane.b32.xlu0 %v1217, 64
    %v1223 = vpop.permute.xlu0 %1222
    %v1226 = vadd.f32 %v472, %v1221
    %v1227 = vadd.f32 %v477, %v1223
    %v1228 = vtanh.pop %v1226
    %v1229 = vtanh.pop %v1227
    %v1230 = vsub.f32 1.0, %v1205
    %v1231 = vsub.f32 1.0, %v1207
    %1234 = vrot.lane.b32.xlu0 %v1228, 96
    %v1235 = vpop.permute.xlu0 %1234
    %1236 = vrot.lane.b32.xlu0 %v1229, 96
    %v1237 = vpop.permute.xlu0 %1236
    %v1240 = vmul.f32 %v1230, %v1235
    %v1241 = vmul.f32 %v1231, %v1237
    %v1242 = vmul.f32 %v1205, %v1093
    %v1243 = vmul.f32 %v1207, %v1094
    %v1244 = vadd.f32 %v1240, %v1242
    %v1245 = vadd.f32 %v1241, %v1243
    %1248 = vrot.lane.b32.xlu0 %v1244, 96
    %v1249 = vpop.permute.xlu0 %1248
    %1250 = vrot.lane.b32.xlu0 %v1245, 96
    %v1251 = vpop.permute.xlu0 %1250
    %1254 = vst.msk [vmem:[#allocation2 + $0x8] sm:$0xff] %vm654, %v1249
    %1255 = vst.msk [vmem:[#allocation2 + $0x18] sm:$0xff] %vm654, %v1251
    %1256 = vrot.lane.b32.xlu0 %v1244, 64
    %v1257 = vpop.permute.xlu0 %1256
    %1258 = vrot.lane.b32.xlu0 %v1245, 64
    %v1259 = vpop.permute.xlu0 %1258
    %1262 = vst.msk [vmem:[#allocation2] sm:$0xff] %vm663, %v1257
    %1263 = vst.msk [vmem:[#allocation2 + $0x10] sm:$0xff] %vm663, %v1259
    %v1264 = vsel %vm316, %v1249, 0
    %v1266 = vsel %vm316, %v1251, 0
    %1268 = vmatprep.subr.mxu0 0.0
    %1269 = vmatpush1.msra.mxu0 0.0
    %1270 = vmatprep.subr.mxu0 0.0
    %1271 = vmatpush1.msra.mxu0 0.0
    %1272 = vmatprep.subr.mxu0 0.0
    %1273 = vmatpush1.msra.mxu0 0.0
    %1274 = vmatprep.subr.mxu0 0.0
    %1275 = vmatpush1.msra.mxu0 0.0
    %1276 = vmatprep.subr.mxu0 0.0
    %1277 = vmatpush1.msra.mxu0 0.0
    %1278 = vmatprep.subr.mxu0 0.0
    %1279 = vmatpush1.msra.mxu0 0.0
    %1280 = vmatprep.subr.mxu0 0.0
    %1281 = vmatpush1.msra.mxu0 0.0
    %1282 = vmatprep.subr.mxu0 0.0
    %1283 = vmatpush1.msra.mxu0 0.0
    %1284 = vmatprep.subr.mxu0 0.0
    %1285 = vmatpush1.msra.mxu0 0.0
    %1286 = vmatprep.subr.mxu0 0.0
    %1287 = vmatpush1.msra.mxu0 0.0
    %1288 = vmatprep.subr.mxu0 0.0
    %1289 = vmatpush1.msra.mxu0 0.0
    %1290 = vmatprep.subr.mxu0 0.0
    %1291 = vmatpush1.msra.mxu0 0.0
    %1292 = vmatprep.subr.mxu0 0.0
    %1293 = vmatpush1.msra.mxu0 %v34
    %1294 = vmatprep.subr.mxu0 0.0
    %1295 = vmatpush1.msra.mxu0 %v33
    %1296 = vmatprep.subr.mxu0 0.0
    %1297 = vmatpush1.msra.mxu0 %v32
    %1298 = vmatprep.subr.mxu0 0.0
    %1299 = vmatpush1.msra.mxu0 %v31
    %1300 = vmatprep.subr.mxu0 0.0
    %1301 = vmatpush2.msra.mxu0 0.0
    %1302 = vmatprep.subr.mxu0 0.0
    %1303 = vmatpush2.msra.mxu0 0.0
    %1304 = vmatprep.subr.mxu0 0.0
    %1305 = vmatpush2.msra.mxu0 0.0
    %1306 = vmatprep.subr.mxu0 0.0
    %1307 = vmatpush2.msra.mxu0 0.0
    %1308 = vmatprep.subr.mxu0 0.0
    %1309 = vmatpush2.msra.mxu0 0.0
    %1310 = vmatprep.subr.mxu0 0.0
    %1311 = vmatpush2.msra.mxu0 0.0
    %1312 = vmatprep.subr.mxu0 0.0
    %1313 = vmatpush2.msra.mxu0 0.0
    %1314 = vmatprep.subr.mxu0 0.0
    %1315 = vmatpush2.msra.mxu0 0.0
    %1316 = vmatprep.subr.mxu0 0.0
    %1317 = vmatpush2.msra.mxu0 0.0
    %1318 = vmatprep.subr.mxu0 0.0
    %1319 = vmatpush2.msra.mxu0 0.0
    %1320 = vmatprep.subr.mxu0 0.0
    %1321 = vmatpush2.msra.mxu0 0.0
    %1322 = vmatprep.subr.mxu0 0.0
    %1323 = vmatpush2.msra.mxu0 0.0
    %1324 = vmatprep.subr.mxu0 0.0
    %1325 = vmatpush2.msra.mxu0 0.0
    %1326 = vmatprep.subr.mxu0 0.0
    %1327 = vmatpush2.msra.mxu0 0.0
    %1328 = vmatprep.subr.mxu0 0.0
    %1329 = vmatpush2.msra.mxu0 0.0
    %1330 = vmatprep.subr.mxu0 0.0
    %1331 = vmatpush2.msra.mxu0 0.0
    %1332 = vmatprep.mubr.f32.mxu0 0.0
    %1333 = vmatmul.mubr.f32.gmra.mxu0 %v1264
    %v1334 = vpop.f32.mrf.mxu0
    %v1335 = vadd.f32 %v514, %v1334
    %v1336 = vpop.f32.mrf.mxu0
    %1337 = vmatprep.mubr.f32.mxu0 0.0
    %1338 = vmatmul.mubr.f32.gmra.mxu0 %v1266
    %v1339 = vpop.f32.mrf.mxu0
    %v1340 = vadd.f32 %v514, %v1339
    %v1341 = vpop.f32.mrf.mxu0
    %1342 = vdwg.mxu0
    %v1343 = vadd.f32 %v482, %v1335
    %v1344 = vadd.f32 %v487, %v1340
    %v1345 = vxor.u32 %v1343, 2147483648
    %v1346 = vxor.u32 %v1344, 2147483648
    %v1347 = vmul.f32 %v1345, 1.442695
    %v1348 = vpow.pop %v1347
    %v1349 = vmul.f32 %v1346, 1.442695
    %v1350 = vpow.pop %v1349
    %v1351 = vadd.f32 %v1348, 1.0
    %v1352 = vadd.f32 %v1350, 1.0
    %v1353 = vrcp.pop %v1351
    %v1354 = vmul.f32 1.0, %v1353
    %v1355 = vrcp.pop %v1352
    %v1356 = vmul.f32 1.0, %v1355
    %1359 = vrot.lane.b32.xlu0 %v1335, 64
    %v1360 = vpop.permute.xlu0 %1359
    %1361 = vrot.lane.b32.xlu0 %v1340, 64
    %v1362 = vpop.permute.xlu0 %1361
    %v1365 = vmul.f32 %v1354, %v1360
    %v1366 = vmul.f32 %v1356, %v1362
    %1369 = vrot.lane.b32.xlu0 %v1365, 64
    %v1370 = vpop.permute.xlu0 %1369
    %1371 = vrot.lane.b32.xlu0 %v1366, 64
    %v1372 = vpop.permute.xlu0 %1371
    %v1375 = vadd.f32 %v482, %v1370
    %v1376 = vadd.f32 %v487, %v1372
    %v1377 = vtanh.pop %v1375
    %v1378 = vtanh.pop %v1376
    %v1379 = vsub.f32 1.0, %v1354
    %v1380 = vsub.f32 1.0, %v1356
    %1383 = vrot.lane.b32.xlu0 %v1377, 96
    %v1384 = vpop.permute.xlu0 %1383
    %1385 = vrot.lane.b32.xlu0 %v1378, 96
    %v1386 = vpop.permute.xlu0 %1385
    %v1389 = vmul.f32 %v1379, %v1384
    %v1390 = vmul.f32 %v1380, %v1386
    %v1391 = vmul.f32 %v1354, %v1244
    %v1392 = vmul.f32 %v1356, %v1245
    %v1393 = vadd.f32 %v1389, %v1391
    %v1394 = vadd.f32 %v1390, %v1392
    %1395 = vst.msk [vmem:[#allocation2 + $0x8] sm:$0xff] %vm797, %v1393
    %1396 = vst.msk [vmem:[#allocation2 + $0x18] sm:$0xff] %vm797, %v1394
    %1399 = vrot.lane.b32.xlu0 %v1393, 32
    %v1400 = vpop.permute.xlu0 %1399
    %1401 = vrot.lane.b32.xlu0 %v1394, 32
    %v1402 = vpop.permute.xlu0 %1401
    %1405 = vst.msk [vmem:[#allocation2] sm:$0xff] %vm808, %v1400
    %1406 = vst.msk [vmem:[#allocation2 + $0x10] sm:$0xff] %vm808, %v1402
    %1407 = vrot.lane.b32.xlu0 %v1393, 96
    %v1408 = vpop.permute.xlu0 %1407
    %1409 = vrot.lane.b32.xlu0 %v1394, 96
    %v1410 = vpop.permute.xlu0 %1409
    %v1411 = vsel %vm316, %v1408, 0
    %v1413 = vsel %vm316, %v1410, 0
    %1415 = vmatprep.subr.mxu0 0.0
    %1416 = vmatpush1.msra.mxu0 0.0
    %1417 = vmatprep.subr.mxu0 0.0
    %1418 = vmatpush1.msra.mxu0 0.0
    %1419 = vmatprep.subr.mxu0 0.0
    %1420 = vmatpush1.msra.mxu0 0.0
    %1421 = vmatprep.subr.mxu0 0.0
    %1422 = vmatpush1.msra.mxu0 0.0
    %1423 = vmatprep.subr.mxu0 0.0
    %1424 = vmatpush1.msra.mxu0 0.0
    %1425 = vmatprep.subr.mxu0 0.0
    %1426 = vmatpush1.msra.mxu0 0.0
    %1427 = vmatprep.subr.mxu0 0.0
    %1428 = vmatpush1.msra.mxu0 0.0
    %1429 = vmatprep.subr.mxu0 0.0
    %1430 = vmatpush1.msra.mxu0 0.0
    %1431 = vmatprep.subr.mxu0 0.0
    %1432 = vmatpush1.msra.mxu0 0.0
    %1433 = vmatprep.subr.mxu0 0.0
    %1434 = vmatpush1.msra.mxu0 0.0
    %1435 = vmatprep.subr.mxu0 0.0
    %1436 = vmatpush1.msra.mxu0 0.0
    %1437 = vmatprep.subr.mxu0 0.0
    %1438 = vmatpush1.msra.mxu0 0.0
    %1439 = vmatprep.subr.mxu0 0.0
    %1440 = vmatpush1.msra.mxu0 %v34
    %1441 = vmatprep.subr.mxu0 0.0
    %1442 = vmatpush1.msra.mxu0 %v33
    %1443 = vmatprep.subr.mxu0 0.0
    %1444 = vmatpush1.msra.mxu0 %v32
    %1445 = vmatprep.subr.mxu0 0.0
    %1446 = vmatpush1.msra.mxu0 %v31
    %1447 = vmatprep.subr.mxu0 0.0
    %1448 = vmatpush2.msra.mxu0 0.0
    %1449 = vmatprep.subr.mxu0 0.0
    %1450 = vmatpush2.msra.mxu0 0.0
    %1451 = vmatprep.subr.mxu0 0.0
    %1452 = vmatpush2.msra.mxu0 0.0
    %1453 = vmatprep.subr.mxu0 0.0
    %1454 = vmatpush2.msra.mxu0 0.0
    %1455 = vmatprep.subr.mxu0 0.0
    %1456 = vmatpush2.msra.mxu0 0.0
    %1457 = vmatprep.subr.mxu0 0.0
    %1458 = vmatpush2.msra.mxu0 0.0
    %1459 = vmatprep.subr.mxu0 0.0
    %1460 = vmatpush2.msra.mxu0 0.0
    %1461 = vmatprep.subr.mxu0 0.0
    %1462 = vmatpush2.msra.mxu0 0.0
    %1463 = vmatprep.subr.mxu0 0.0
    %1464 = vmatpush2.msra.mxu0 0.0
    %1465 = vmatprep.subr.mxu0 0.0
    %1466 = vmatpush2.msra.mxu0 0.0
    %1467 = vmatprep.subr.mxu0 0.0
    %1468 = vmatpush2.msra.mxu0 0.0
    %1469 = vmatprep.subr.mxu0 0.0
    %1470 = vmatpush2.msra.mxu0 0.0
    %1471 = vmatprep.subr.mxu0 0.0
    %1472 = vmatpush2.msra.mxu0 0.0
    %1473 = vmatprep.subr.mxu0 0.0
    %1474 = vmatpush2.msra.mxu0 0.0
    %1475 = vmatprep.subr.mxu0 0.0
    %1476 = vmatpush2.msra.mxu0 0.0
    %1477 = vmatprep.subr.mxu0 0.0
    %1478 = vmatpush2.msra.mxu0 0.0
    %1479 = vmatprep.mubr.f32.mxu0 0.0
    %1480 = vmatmul.mubr.f32.gmra.mxu0 %v1411
    %v1481 = vpop.f32.mrf.mxu0
    %v1482 = vadd.f32 %v514, %v1481
    %v1483 = vpop.f32.mrf.mxu0
    %1484 = vmatprep.mubr.f32.mxu0 0.0
    %1485 = vmatmul.mubr.f32.gmra.mxu0 %v1413
    %v1486 = vpop.f32.mrf.mxu0
    %v1487 = vadd.f32 %v514, %v1486
    %v1488 = vpop.f32.mrf.mxu0
    %1489 = vdwg.mxu0
    %v1490 = vadd.f32 %v492, %v1482
    %v1491 = vadd.f32 %v497, %v1487
    %v1492 = vxor.u32 %v1490, 2147483648
    %v1493 = vxor.u32 %v1491, 2147483648
    %v1494 = vmul.f32 %v1492, 1.442695
    %v1495 = vpow.pop %v1494
    %v1496 = vmul.f32 %v1493, 1.442695
    %v1497 = vpow.pop %v1496
    %v1498 = vadd.f32 %v1495, 1.0
    %v1499 = vadd.f32 %v1497, 1.0
    %v1500 = vrcp.pop %v1498
    %v1501 = vmul.f32 1.0, %v1500
    %v1502 = vrcp.pop %v1499
    %v1503 = vmul.f32 1.0, %v1502
    %1506 = vrot.lane.b32.xlu0 %v1482, 64
    %v1507 = vpop.permute.xlu0 %1506
    %1508 = vrot.lane.b32.xlu0 %v1487, 64
    %v1509 = vpop.permute.xlu0 %1508
    %v1512 = vmul.f32 %v1501, %v1507
    %v1513 = vmul.f32 %v1503, %v1509
    %1516 = vrot.lane.b32.xlu0 %v1512, 64
    %v1517 = vpop.permute.xlu0 %1516
    %1518 = vrot.lane.b32.xlu0 %v1513, 64
    %v1519 = vpop.permute.xlu0 %1518
    %v1522 = vadd.f32 %v492, %v1517
    %v1523 = vadd.f32 %v497, %v1519
    %v1524 = vtanh.pop %v1522
    %v1525 = vtanh.pop %v1523
    %v1526 = vsub.f32 1.0, %v1501
    %v1527 = vsub.f32 1.0, %v1503
    %1530 = vrot.lane.b32.xlu0 %v1524, 96
    %v1531 = vpop.permute.xlu0 %1530
    %1532 = vrot.lane.b32.xlu0 %v1525, 96
    %v1533 = vpop.permute.xlu0 %1532
    %v1536 = vmul.f32 %v1526, %v1531
    %v1537 = vmul.f32 %v1527, %v1533
    %v1538 = vmul.f32 %v1501, %v1393
    %v1539 = vmul.f32 %v1503, %v1394
    %v1540 = vadd.f32 %v1536, %v1538
    %v1541 = vadd.f32 %v1537, %v1539
    %1544 = vrot.lane.b32.xlu0 %v1540, 32
    %v1545 = vpop.permute.xlu0 %1544
    %1546 = vrot.lane.b32.xlu0 %v1541, 32
    %v1547 = vpop.permute.xlu0 %1546
    %1550 = vst.msk [vmem:[#allocation2 + $0x8] sm:$0xff] %vm954, %v1545
    %1551 = vst.msk [vmem:[#allocation2 + $0x18] sm:$0xff] %vm954, %v1547
    %1552 = vst.msk [vmem:[#allocation2] sm:$0xff] %vm957, %v1540
    %1553 = vst.msk [vmem:[#allocation2 + $0x10] sm:$0xff] %vm957, %v1541
    %1554 = vrot.lane.b32.xlu0 %v1540, 96
    %v1555 = vpop.permute.xlu0 %1554
    %1556 = vrot.lane.b32.xlu0 %v1541, 96
    %v1557 = vpop.permute.xlu0 %1556
    %v1558 = vsel %vm316, %v1555, 0
    %v1560 = vsel %vm316, %v1557, 0
    %1562 = vmatprep.subr.mxu0 0.0
    %1563 = vmatpush1.msra.mxu0 0.0
    %1564 = vmatprep.subr.mxu0 0.0
    %1565 = vmatpush1.msra.mxu0 0.0
    %1566 = vmatprep.subr.mxu0 0.0
    %1567 = vmatpush1.msra.mxu0 0.0
    %1568 = vmatprep.subr.mxu0 0.0
    %1569 = vmatpush1.msra.mxu0 0.0
    %1570 = vmatprep.subr.mxu0 0.0
    %1571 = vmatpush1.msra.mxu0 0.0
    %1572 = vmatprep.subr.mxu0 0.0
    %1573 = vmatpush1.msra.mxu0 0.0
    %1574 = vmatprep.subr.mxu0 0.0
    %1575 = vmatpush1.msra.mxu0 0.0
    %1576 = vmatprep.subr.mxu0 0.0
    %1577 = vmatpush1.msra.mxu0 0.0
    %1578 = vmatprep.subr.mxu0 0.0
    %1579 = vmatpush1.msra.mxu0 0.0
    %1580 = vmatprep.subr.mxu0 0.0
    %1581 = vmatpush1.msra.mxu0 0.0
    %1582 = vmatprep.subr.mxu0 0.0
    %1583 = vmatpush1.msra.mxu0 0.0
    %1584 = vmatprep.subr.mxu0 0.0
    %1585 = vmatpush1.msra.mxu0 0.0
    %1586 = vmatprep.subr.mxu0 0.0
    %1587 = vmatpush1.msra.mxu0 %v34
    %1588 = vmatprep.subr.mxu0 0.0
    %1589 = vmatpush1.msra.mxu0 %v33
    %1590 = vmatprep.subr.mxu0 0.0
    %1591 = vmatpush1.msra.mxu0 %v32
    %1592 = vmatprep.subr.mxu0 0.0
    %1593 = vmatpush1.msra.mxu0 %v31
    %1594 = vmatprep.subr.mxu0 0.0
    %1595 = vmatpush2.msra.mxu0 0.0
    %1596 = vmatprep.subr.mxu0 0.0
    %1597 = vmatpush2.msra.mxu0 0.0
    %1598 = vmatprep.subr.mxu0 0.0
    %1599 = vmatpush2.msra.mxu0 0.0
    %1600 = vmatprep.subr.mxu0 0.0
    %1601 = vmatpush2.msra.mxu0 0.0
    %1602 = vmatprep.subr.mxu0 0.0
    %1603 = vmatpush2.msra.mxu0 0.0
    %1604 = vmatprep.subr.mxu0 0.0
    %1605 = vmatpush2.msra.mxu0 0.0
    %1606 = vmatprep.subr.mxu0 0.0
    %1607 = vmatpush2.msra.mxu0 0.0
    %1608 = vmatprep.subr.mxu0 0.0
    %1609 = vmatpush2.msra.mxu0 0.0
    %1610 = vmatprep.subr.mxu0 0.0
    %1611 = vmatpush2.msra.mxu0 0.0
    %1612 = vmatprep.subr.mxu0 0.0
    %1613 = vmatpush2.msra.mxu0 0.0
    %1614 = vmatprep.subr.mxu0 0.0
    %1615 = vmatpush2.msra.mxu0 0.0
    %1616 = vmatprep.subr.mxu0 0.0
    %1617 = vmatpush2.msra.mxu0 0.0
    %1618 = vmatprep.subr.mxu0 0.0
    %1619 = vmatpush2.msra.mxu0 0.0
    %1620 = vmatprep.subr.mxu0 0.0
    %1621 = vmatpush2.msra.mxu0 0.0
    %1622 = vmatprep.subr.mxu0 0.0
    %1623 = vmatpush2.msra.mxu0 0.0
    %1624 = vmatprep.subr.mxu0 0.0
    %1625 = vmatpush2.msra.mxu0 0.0
    %1626 = vmatprep.mubr.f32.mxu0 0.0
    %1627 = vmatmul.mubr.f32.gmra.mxu0 %v1558
    %v1628 = vpop.f32.mrf.mxu0
    %v1629 = vadd.f32 %v514, %v1628
    %v1630 = vpop.f32.mrf.mxu0
    %1631 = vmatprep.mubr.f32.mxu0 0.0
    %1632 = vmatmul.mubr.f32.gmra.mxu0 %v1560
    %v1633 = vpop.f32.mrf.mxu0
    %v1634 = vadd.f32 %v514, %v1633
    %v1635 = vpop.f32.mrf.mxu0
    %1636 = vdwg.mxu0
    %v1637 = vadd.f32 %v502, %v1629
    %v1638 = vadd.f32 %v507, %v1634
    %v1639 = vxor.u32 %v1637, 2147483648
    %v1640 = vxor.u32 %v1638, 2147483648
    %v1641 = vmul.f32 %v1639, 1.442695
    %v1642 = vpow.pop %v1641
    %v1643 = vmul.f32 %v1640, 1.442695
    %v1644 = vpow.pop %v1643
    %v1645 = vadd.f32 %v1642, 1.0
    %v1646 = vadd.f32 %v1644, 1.0
    %v1647 = vrcp.pop %v1645
    %v1648 = vmul.f32 1.0, %v1647
    %v1649 = vrcp.pop %v1646
    %v1650 = vmul.f32 1.0, %v1649
    %1653 = vrot.lane.b32.xlu0 %v1629, 64
    %v1654 = vpop.permute.xlu0 %1653
    %1655 = vrot.lane.b32.xlu0 %v1634, 64
    %v1656 = vpop.permute.xlu0 %1655
    %v1659 = vmul.f32 %v1648, %v1654
    %v1660 = vmul.f32 %v1650, %v1656
    %1663 = vrot.lane.b32.xlu0 %v1659, 64
    %v1664 = vpop.permute.xlu0 %1663
    %1665 = vrot.lane.b32.xlu0 %v1660, 64
    %v1666 = vpop.permute.xlu0 %1665
    %v1669 = vadd.f32 %v502, %v1664
    %v1670 = vadd.f32 %v507, %v1666
    %v1671 = vtanh.pop %v1669
    %v1672 = vtanh.pop %v1670
    %v1673 = vsub.f32 1.0, %v1648
    %v1674 = vsub.f32 1.0, %v1650
    %1677 = vrot.lane.b32.xlu0 %v1671, 96
    %v1678 = vpop.permute.xlu0 %1677
    %1679 = vrot.lane.b32.xlu0 %v1672, 96
    %v1680 = vpop.permute.xlu0 %1679
    %v1683 = vmul.f32 %v1673, %v1678
    %v1684 = vmul.f32 %v1674, %v1680
    %v1685 = vmul.f32 %v1648, %v1540
    %v1686 = vmul.f32 %v1650, %v1541
    %v1687 = vadd.f32 %v1683, %v1685
    %v1688 = vadd.f32 %v1684, %v1686
    %1691 = vrot.lane.b32.xlu0 %v1687, 64
    %v1692 = vpop.permute.xlu0 %1691
    %1693 = vrot.lane.b32.xlu0 %v1688, 64
    %v1694 = vpop.permute.xlu0 %1693
    %1697 = vst.msk [vmem:[#allocation2 + $0x8] sm:$0xff] %vm1103, %v1692
    %1698 = vst.msk [vmem:[#allocation2 + $0x18] sm:$0xff] %vm1103, %v1694
    %1699 = vrot.lane.b32.xlu0 %v1687, 96
    %v1700 = vpop.permute.xlu0 %1699
    %1701 = vrot.lane.b32.xlu0 %v1688, 96
    %v1702 = vpop.permute.xlu0 %1701
    %1705 = vst.msk [vmem:[#allocation2] sm:$0xff] %vm1112, %v1700
    %1706 = vst.msk [vmem:[#allocation2 + $0x10] sm:$0xff] %vm1112, %v1702
    %v1707 = vld [vmem:[#allocation2] sm:$0xff]
    %v1708 = vld [vmem:[#allocation2 + $0x8] sm:$0xff]
    %v1709 = vld [vmem:[#allocation2 + $0x10] sm:$0xff]
    %v1710 = vld [vmem:[#allocation2 + $0x18] sm:$0xff]
    %v1712 = vlaneseq
    %v1713 = vshrl.u32 %v1712, 7
    %v1714 = vsub.s32 0, %v1713
    %v1715 = vrot.slane %v290, %v1714
    %v1716 = vlaneseq
    %v1717 = vshrl.u32 %v1716, 7
    %v1718 = vsub.s32 1, %v1717
    %v1719 = vrot.slane %v290, %v1718
    %v1722 = vsel %vm316, %v1700, 0
    %v1724 = vsel %vm316, %v1702, 0
    %1726 = vmatprep.subr.mxu0 0.0
    %1727 = vmatpush1.msra.mxu0 0.0
    %1728 = vmatprep.subr.mxu0 0.0
    %1729 = vmatpush1.msra.mxu0 0.0
    %1730 = vmatprep.subr.mxu0 0.0
    %1731 = vmatpush1.msra.mxu0 0.0
    %1732 = vmatprep.subr.mxu0 0.0
    %1733 = vmatpush1.msra.mxu0 0.0
    %1734 = vmatprep.subr.mxu0 0.0
    %1735 = vmatpush1.msra.mxu0 0.0
    %1736 = vmatprep.subr.mxu0 0.0
    %1737 = vmatpush1.msra.mxu0 0.0
    %1738 = vmatprep.subr.mxu0 0.0
    %1739 = vmatpush1.msra.mxu0 0.0
    %1740 = vmatprep.subr.mxu0 0.0
    %1741 = vmatpush1.msra.mxu0 0.0
    %1742 = vmatprep.subr.mxu0 0.0
    %1743 = vmatpush1.msra.mxu0 0.0
    %1744 = vmatprep.subr.mxu0 0.0
    %1745 = vmatpush1.msra.mxu0 0.0
    %1746 = vmatprep.subr.mxu0 0.0
    %1747 = vmatpush1.msra.mxu0 0.0
    %1748 = vmatprep.subr.mxu0 0.0
    %1749 = vmatpush1.msra.mxu0 0.0
    %1750 = vmatprep.subr.mxu0 %v58
    %1751 = vmatpush1.msra.mxu0 %v57
    %1752 = vmatprep.subr.mxu0 %v56
    %1753 = vmatpush1.msra.mxu0 %v55
    %1754 = vmatprep.subr.mxu0 %v54
    %1755 = vmatpush1.msra.mxu0 %v53
    %1756 = vmatprep.subr.mxu0 %v52
    %1757 = vmatpush1.msra.mxu0 %v51
    %1758 = vmatprep.subr.mxu0 0.0
    %1759 = vmatpush2.msra.mxu0 0.0
    %1760 = vmatprep.subr.mxu0 0.0
    %1761 = vmatpush2.msra.mxu0 0.0
    %1762 = vmatprep.subr.mxu0 0.0
    %1763 = vmatpush2.msra.mxu0 0.0
    %1764 = vmatprep.subr.mxu0 0.0
    %1765 = vmatpush2.msra.mxu0 0.0
    %1766 = vmatprep.subr.mxu0 0.0
    %1767 = vmatpush2.msra.mxu0 0.0
    %1768 = vmatprep.subr.mxu0 0.0
    %1769 = vmatpush2.msra.mxu0 0.0
    %1770 = vmatprep.subr.mxu0 0.0
    %1771 = vmatpush2.msra.mxu0 0.0
    %1772 = vmatprep.subr.mxu0 0.0
    %1773 = vmatpush2.msra.mxu0 0.0
    %1774 = vmatprep.subr.mxu0 0.0
    %1775 = vmatpush2.msra.mxu0 0.0
    %1776 = vmatprep.subr.mxu0 0.0
    %1777 = vmatpush2.msra.mxu0 0.0
    %1778 = vmatprep.subr.mxu0 0.0
    %1779 = vmatpush2.msra.mxu0 0.0
    %1780 = vmatprep.subr.mxu0 0.0
    %1781 = vmatpush2.msra.mxu0 0.0
    %1782 = vmatprep.subr.mxu0 0.0
    %1783 = vmatpush2.msra.mxu0 0.0
    %1784 = vmatprep.subr.mxu0 0.0
    %1785 = vmatpush2.msra.mxu0 0.0
    %1786 = vmatprep.subr.mxu0 0.0
    %1787 = vmatpush2.msra.mxu0 0.0
    %1788 = vmatprep.subr.mxu0 0.0
    %1789 = vmatpush2.msra.mxu0 0.0
    %1790 = vmatprep.mubr.f32.mxu0 0.0
    %1791 = vmatmul.mubr.f32.gmra.mxu0 %v1722
    %v1792 = vpop.f32.mrf.mxu0
    %v1793 = vadd.f32 %v1715, %v1792
    %v1794 = vpop.f32.mrf.mxu0
    %v1795 = vadd.f32 %v1719, %v1794
    %1796 = vmatprep.mubr.f32.mxu0 0.0
    %1797 = vmatmul.mubr.f32.gmra.mxu0 %v1724
    %v1798 = vpop.f32.mrf.mxu0
    %v1799 = vadd.f32 %v1715, %v1798
    %v1800 = vpop.f32.mrf.mxu0
    %v1801 = vadd.f32 %v1719, %v1800
    %1802 = vdwg.mxu0
    %1803 = vmatprep.subr.mxu0 %v94
    %1804 = vmatpush1.msra.mxu0 %v93
    %1805 = vmatprep.subr.mxu0 %v92
    %1806 = vmatpush1.msra.mxu0 %v91
    %1807 = vmatprep.subr.mxu0 %v90
    %1808 = vmatpush1.msra.mxu0 %v89
    %1809 = vmatprep.subr.mxu0 %v88
    %1810 = vmatpush1.msra.mxu0 %v87
    %1811 = vmatprep.subr.mxu0 %v86
    %1812 = vmatpush1.msra.mxu0 %v85
    %1813 = vmatprep.subr.mxu0 %v84
    %1814 = vmatpush1.msra.mxu0 %v83
    %1815 = vmatprep.subr.mxu0 %v82
    %1816 = vmatpush1.msra.mxu0 %v81
    %1817 = vmatprep.subr.mxu0 %v80
    %1818 = vmatpush1.msra.mxu0 %v79
    %1819 = vmatprep.subr.mxu0 %v78
    %1820 = vmatpush1.msra.mxu0 %v77
    %1821 = vmatprep.subr.mxu0 %v76
    %1822 = vmatpush1.msra.mxu0 %v75
    %1823 = vmatprep.subr.mxu0 %v74
    %1824 = vmatpush1.msra.mxu0 %v73
    %1825 = vmatprep.subr.mxu0 %v72
    %1826 = vmatpush1.msra.mxu0 %v71
    %1827 = vmatprep.subr.mxu0 %v70
    %1828 = vmatpush1.msra.mxu0 %v69
    %1829 = vmatprep.subr.mxu0 %v68
    %1830 = vmatpush1.msra.mxu0 %v67
    %1831 = vmatprep.subr.mxu0 %v66
    %1832 = vmatpush1.msra.mxu0 %v65
    %1833 = vmatprep.subr.mxu0 %v64
    %1834 = vmatpush1.msra.mxu0 %v63
    %1835 = vmatprep.subr.mxu0 %v126
    %1836 = vmatpush2.msra.mxu0 %v125
    %1837 = vmatprep.subr.mxu0 %v124
    %1838 = vmatpush2.msra.mxu0 %v123
    %1839 = vmatprep.subr.mxu0 %v122
    %1840 = vmatpush2.msra.mxu0 %v121
    %1841 = vmatprep.subr.mxu0 %v120
    %1842 = vmatpush2.msra.mxu0 %v119
    %1843 = vmatprep.subr.mxu0 %v118
    %1844 = vmatpush2.msra.mxu0 %v117
    %1845 = vmatprep.subr.mxu0 %v116
    %1846 = vmatpush2.msra.mxu0 %v115
    %1847 = vmatprep.subr.mxu0 %v114
    %1848 = vmatpush2.msra.mxu0 %v113
    %1849 = vmatprep.subr.mxu0 %v112
    %1850 = vmatpush2.msra.mxu0 %v111
    %1851 = vmatprep.subr.mxu0 %v110
    %1852 = vmatpush2.msra.mxu0 %v109
    %1853 = vmatprep.subr.mxu0 %v108
    %1854 = vmatpush2.msra.mxu0 %v107
    %1855 = vmatprep.subr.mxu0 %v106
    %1856 = vmatpush2.msra.mxu0 %v105
    %1857 = vmatprep.subr.mxu0 %v104
    %1858 = vmatpush2.msra.mxu0 %v103
    %1859 = vmatprep.subr.mxu0 %v102
    %1860 = vmatpush2.msra.mxu0 %v101
    %1861 = vmatprep.subr.mxu0 %v100
    %1862 = vmatpush2.msra.mxu0 %v99
    %1863 = vmatprep.subr.mxu0 %v98
    %1864 = vmatpush2.msra.mxu0 %v97
    %1865 = vmatprep.subr.mxu0 %v96
    %1866 = vmatpush2.msra.mxu0 %v95
    %1867 = vmatprep.mubr.f32.mxu0 %v1708
    %1868 = vmatmul.mubr.f32.gmra.mxu0 %v1707
    %v1869 = vpop.f32.mrf.mxu0
    %v1870 = vadd.f32 %v1793, %v1869
    %v1871 = vpop.f32.mrf.mxu0
    %v1872 = vadd.f32 %v1795, %v1871
    %1873 = vmatprep.mubr.f32.mxu0 %v1710
    %1874 = vmatmul.mubr.f32.gmra.mxu0 %v1709
    %v1875 = vpop.f32.mrf.mxu0
    %v1876 = vadd.f32 %v1799, %v1875
    %v1877 = vpop.f32.mrf.mxu0
    %v1878 = vadd.f32 %v1801, %v1877
    %1879 = vdwg.mxu0
    %v1880 = vxor.u32 %v1870, 2147483648
    %v1881 = vxor.u32 %v1872, 2147483648
    %v1882 = vxor.u32 %v1876, 2147483648
    %v1883 = vxor.u32 %v1878, 2147483648
    %v1884 = vmul.f32 %v1880, 1.442695
    %v1885 = vpow.pop %v1884
    %v1886 = vmul.f32 %v1881, 1.442695
    %v1887 = vpow.pop %v1886
    %v1888 = vmul.f32 %v1882, 1.442695
    %v1889 = vpow.pop %v1888
    %v1890 = vmul.f32 %v1883, 1.442695
    %v1891 = vpow.pop %v1890
    %v1892 = vadd.f32 %v1885, 1.0
    %v1893 = vadd.f32 %v1887, 1.0
    %v1894 = vadd.f32 %v1889, 1.0
    %v1895 = vadd.f32 %v1891, 1.0
    %v1896 = vrcp.pop %v1892
    %v1897 = vmul.f32 1.0, %v1896
    %v1898 = vrcp.pop %v1893
    %v1899 = vmul.f32 1.0, %v1898
    %v1900 = vrcp.pop %v1894
    %v1901 = vmul.f32 1.0, %v1900
    %v1902 = vrcp.pop %v1895
    %v1903 = vmul.f32 1.0, %v1902
    %v1904 = vmul.f32 %v1707, %v1897
    %v1905 = vmul.f32 %v1708, %v1899
    %v1906 = vmul.f32 %v1709, %v1901
    %v1907 = vmul.f32 %v1710, %v1903
    %v1909 = vlaneseq
    %v1910 = vshrl.u32 %v1909, 7
    %v1911 = vsub.s32 0, %v1910
    %v1912 = vrot.slane %v291, %v1911
    %1914 = vrot.lane.b32.xlu0 %v1687, 80
    %v1915 = vpop.permute.xlu0 %1914
    %1916 = vrot.lane.b32.xlu0 %v1688, 80
    %v1917 = vpop.permute.xlu0 %1916
    %v1918 = vsel %vm654, %v1915, 0
    %v1920 = vsel %vm654, %v1917, 0
    %1922 = vmatprep.subr.mxu0 0.0
    %1923 = vmatpush1.msra.mxu0 0.0
    %1924 = vmatprep.subr.mxu0 0.0
    %1925 = vmatpush1.msra.mxu0 0.0
    %1926 = vmatprep.subr.mxu0 0.0
    %1927 = vmatpush1.msra.mxu0 0.0
    %1928 = vmatprep.subr.mxu0 0.0
    %1929 = vmatpush1.msra.mxu0 0.0
    %1930 = vmatprep.subr.mxu0 0.0
    %1931 = vmatpush1.msra.mxu0 0.0
    %1932 = vmatprep.subr.mxu0 0.0
    %1933 = vmatpush1.msra.mxu0 0.0
    %1934 = vmatprep.subr.mxu0 0.0
    %1935 = vmatpush1.msra.mxu0 0.0
    %1936 = vmatprep.subr.mxu0 0.0
    %1937 = vmatpush1.msra.mxu0 0.0
    %1938 = vmatprep.subr.mxu0 0.0
    %1939 = vmatpush1.msra.mxu0 0.0
    %1940 = vmatprep.subr.mxu0 0.0
    %1941 = vmatpush1.msra.mxu0 0.0
    %1942 = vmatprep.subr.mxu0 0.0
    %1943 = vmatpush1.msra.mxu0 0.0
    %1944 = vmatprep.subr.mxu0 0.0
    %1945 = vmatpush1.msra.mxu0 0.0
    %1946 = vmatprep.subr.mxu0 0.0
    %1947 = vmatpush1.msra.mxu0 0.0
    %1948 = vmatprep.subr.mxu0 0.0
    %1949 = vmatpush1.msra.mxu0 0.0
    %1950 = vmatprep.subr.mxu0 0.0
    %1951 = vmatpush1.msra.mxu0 %v62
    %1952 = vmatprep.subr.mxu0 0.0
    %1953 = vmatpush1.msra.mxu0 %v61
    %1954 = vmatprep.subr.mxu0 0.0
    %1955 = vmatpush2.msra.mxu0 0.0
    %1956 = vmatprep.subr.mxu0 0.0
    %1957 = vmatpush2.msra.mxu0 0.0
    %1958 = vmatprep.subr.mxu0 0.0
    %1959 = vmatpush2.msra.mxu0 0.0
    %1960 = vmatprep.subr.mxu0 0.0
    %1961 = vmatpush2.msra.mxu0 0.0
    %1962 = vmatprep.subr.mxu0 0.0
    %1963 = vmatpush2.msra.mxu0 0.0
    %1964 = vmatprep.subr.mxu0 0.0
    %1965 = vmatpush2.msra.mxu0 0.0
    %1966 = vmatprep.subr.mxu0 0.0
    %1967 = vmatpush2.msra.mxu0 0.0
    %1968 = vmatprep.subr.mxu0 0.0
    %1969 = vmatpush2.msra.mxu0 0.0
    %1970 = vmatprep.subr.mxu0 0.0
    %1971 = vmatpush2.msra.mxu0 0.0
    %1972 = vmatprep.subr.mxu0 0.0
    %1973 = vmatpush2.msra.mxu0 0.0
    %1974 = vmatprep.subr.mxu0 0.0
    %1975 = vmatpush2.msra.mxu0 0.0
    %1976 = vmatprep.subr.mxu0 0.0
    %1977 = vmatpush2.msra.mxu0 0.0
    %1978 = vmatprep.subr.mxu0 0.0
    %1979 = vmatpush2.msra.mxu0 0.0
    %1980 = vmatprep.subr.mxu0 0.0
    %1981 = vmatpush2.msra.mxu0 0.0
    %1982 = vmatprep.subr.mxu0 0.0
    %1983 = vmatpush2.msra.mxu0 0.0
    %1984 = vmatprep.subr.mxu0 0.0
    %1985 = vmatpush2.msra.mxu0 0.0
    %1986 = vmatprep.mubr.f32.mxu0 0.0
    %1987 = vmatmul.mubr.f32.gmra.mxu0 %v1918
    %v1988 = vpop.f32.mrf.mxu0
    %v1989 = vadd.f32 %v1912, %v1988
    %v1990 = vpop.f32.mrf.mxu0
    %1991 = vmatprep.mubr.f32.mxu0 0.0
    %1992 = vmatmul.mubr.f32.gmra.mxu0 %v1920
    %v1993 = vpop.f32.mrf.mxu0
    %v1994 = vadd.f32 %v1912, %v1993
    %v1995 = vpop.f32.mrf.mxu0
    %1996 = vdwg.mxu0
    %v1997 = vtanh.pop %v1989
    %v1998 = vtanh.pop %v1994
    %v2000 = vlaneseq
    %v2001 = vshrl.u32 %v2000, 7
    %v2002 = vsub.s32 0, %v2001
    %v2003 = vrot.slane %v292, %v2002
    %v2004 = vlaneseq
    %v2005 = vshrl.u32 %v2004, 7
    %v2006 = vsub.s32 1, %v2005
    %v2007 = vrot.slane %v292, %v2006
    %2010 = vmatprep.subr.mxu0 %v158
    %2011 = vmatpush1.msra.mxu0 %v157
    %2012 = vmatprep.subr.mxu0 %v156
    %2013 = vmatpush1.msra.mxu0 %v155
    %2014 = vmatprep.subr.mxu0 %v154
    %2015 = vmatpush1.msra.mxu0 %v153
    %2016 = vmatprep.subr.mxu0 %v152
    %2017 = vmatpush1.msra.mxu0 %v151
    %2018 = vmatprep.subr.mxu0 %v150
    %2019 = vmatpush1.msra.mxu0 %v149
    %2020 = vmatprep.subr.mxu0 %v148
    %2021 = vmatpush1.msra.mxu0 %v147
    %2022 = vmatprep.subr.mxu0 %v146
    %2023 = vmatpush1.msra.mxu0 %v145
    %2024 = vmatprep.subr.mxu0 %v144
    %2025 = vmatpush1.msra.mxu0 %v143
    %2026 = vmatprep.subr.mxu0 %v142
    %2027 = vmatpush1.msra.mxu0 %v141
    %2028 = vmatprep.subr.mxu0 %v140
    %2029 = vmatpush1.msra.mxu0 %v139
    %2030 = vmatprep.subr.mxu0 %v138
    %2031 = vmatpush1.msra.mxu0 %v137
    %2032 = vmatprep.subr.mxu0 %v136
    %2033 = vmatpush1.msra.mxu0 %v135
    %2034 = vmatprep.subr.mxu0 %v134
    %2035 = vmatpush1.msra.mxu0 %v133
    %2036 = vmatprep.subr.mxu0 %v132
    %2037 = vmatpush1.msra.mxu0 %v131
    %2038 = vmatprep.subr.mxu0 %v130
    %2039 = vmatpush1.msra.mxu0 %v129
    %2040 = vmatprep.subr.mxu0 %v128
    %2041 = vmatpush1.msra.mxu0 %v127
    %2042 = vmatprep.subr.mxu0 %v190
    %2043 = vmatpush2.msra.mxu0 %v189
    %2044 = vmatprep.subr.mxu0 %v188
    %2045 = vmatpush2.msra.mxu0 %v187
    %2046 = vmatprep.subr.mxu0 %v186
    %2047 = vmatpush2.msra.mxu0 %v185
    %2048 = vmatprep.subr.mxu0 %v184
    %2049 = vmatpush2.msra.mxu0 %v183
    %2050 = vmatprep.subr.mxu0 %v182
    %2051 = vmatpush2.msra.mxu0 %v181
    %2052 = vmatprep.subr.mxu0 %v180
    %2053 = vmatpush2.msra.mxu0 %v179
    %2054 = vmatprep.subr.mxu0 %v178
    %2055 = vmatpush2.msra.mxu0 %v177
    %2056 = vmatprep.subr.mxu0 %v176
    %2057 = vmatpush2.msra.mxu0 %v175
    %2058 = vmatprep.subr.mxu0 %v174
    %2059 = vmatpush2.msra.mxu0 %v173
    %2060 = vmatprep.subr.mxu0 %v172
    %2061 = vmatpush2.msra.mxu0 %v171
    %2062 = vmatprep.subr.mxu0 %v170
    %2063 = vmatpush2.msra.mxu0 %v169
    %2064 = vmatprep.subr.mxu0 %v168
    %2065 = vmatpush2.msra.mxu0 %v167
    %2066 = vmatprep.subr.mxu0 %v166
    %2067 = vmatpush2.msra.mxu0 %v165
    %2068 = vmatprep.subr.mxu0 %v164
    %2069 = vmatpush2.msra.mxu0 %v163
    %2070 = vmatprep.subr.mxu0 %v162
    %2071 = vmatpush2.msra.mxu0 %v161
    %2072 = vmatprep.subr.mxu0 %v160
    %2073 = vmatpush2.msra.mxu0 %v159
    %2074 = vmatprep.mubr.f32.mxu0 %v1905
    %2075 = vmatmul.mubr.f32.gmra.mxu0 %v1904
    %v2076 = vpop.f32.mrf.mxu0
    %v2077 = vadd.f32 %v2003, %v2076
    %v2078 = vpop.f32.mrf.mxu0
    %v2079 = vadd.f32 %v2007, %v2078
    %2080 = vmatprep.mubr.f32.mxu0 %v1907
    %2081 = vmatmul.mubr.f32.gmra.mxu0 %v1906
    %v2082 = vpop.f32.mrf.mxu0
    %v2083 = vadd.f32 %v2003, %v2082
    %v2084 = vpop.f32.mrf.mxu0
    %v2085 = vadd.f32 %v2007, %v2084
    %2086 = vdwg.mxu0
    %v2087 = vld [vmem:[%s1] sm:$0xff]
    %v2088 = vld [vmem:[%s1 + $0x8] sm:$0xff]
    %v2089 = vld [vmem:[%s1 + $0x10] sm:$0xff]
    %v2090 = vld [vmem:[%s1 + $0x18] sm:$0xff]
    %v2091 = vld [vmem:[%s1 + $0x20] sm:$0xff]
    %v2092 = vld [vmem:[%s1 + $0x28] sm:$0xff]
    %v2093 = vld [vmem:[%s1 + $0x30] sm:$0xff]
    %v2094 = vld [vmem:[%s1 + $0x38] sm:$0xff]
    %v2095 = vld [vmem:[%s1 + $0x40] sm:$0xff]
    %v2096 = vld [vmem:[%s1 + $0x48] sm:$0xff]
    %v2097 = vld [vmem:[%s1 + $0x50] sm:$0xff]
    %v2098 = vld [vmem:[%s1 + $0x58] sm:$0xff]
    %v2099 = vld [vmem:[%s1 + $0x60] sm:$0xff]
    %v2100 = vld [vmem:[%s1 + $0x68] sm:$0xff]
    %v2102 = vlaneseq
    %v2103 = vshrl.u32 %v2102, 7
    %v2104 = vsub.s32 0, %v2103
    %v2105 = vrot.slane %v293, %v2104
    %v2108 = vsel %vm654, %v2087, 0
    %v2111 = vsel %vm654, %v2088, 0
    %v2114 = vsel %vm654, %v2089, 0
    %v2117 = vsel %vm654, %v2090, 0
    %v2120 = vsel %vm654, %v2091, 0
    %v2123 = vsel %vm654, %v2092, 0
    %v2126 = vsel %vm654, %v2093, 0
    %v2129 = vsel %vm654, %v2094, 0
    %v2132 = vsel %vm654, %v2095, 0
    %v2135 = vsel %vm654, %v2096, 0
    %v2138 = vsel %vm654, %v2097, 0
    %v2141 = vsel %vm654, %v2098, 0
    %v2144 = vsel %vm654, %v2099, 0
    %v2147 = vsel %vm654, %v2100, 0
    %2149 = vmatprep.subr.mxu0 0.0
    %2150 = vmatpush1.msra.mxu0 0.0
    %2151 = vmatprep.subr.mxu0 0.0
    %2152 = vmatpush1.msra.mxu0 0.0
    %2153 = vmatprep.subr.mxu0 0.0
    %2154 = vmatpush1.msra.mxu0 0.0
    %2155 = vmatprep.subr.mxu0 0.0
    %2156 = vmatpush1.msra.mxu0 0.0
    %2157 = vmatprep.subr.mxu0 0.0
    %2158 = vmatpush1.msra.mxu0 0.0
    %2159 = vmatprep.subr.mxu0 0.0
    %2160 = vmatpush1.msra.mxu0 0.0
    %2161 = vmatprep.subr.mxu0 0.0
    %2162 = vmatpush1.msra.mxu0 0.0
    %2163 = vmatprep.subr.mxu0 0.0
    %2164 = vmatpush1.msra.mxu0 0.0
    %2165 = vmatprep.subr.mxu0 0.0
    %2166 = vmatpush1.msra.mxu0 0.0
    %2167 = vmatprep.subr.mxu0 0.0
    %2168 = vmatpush1.msra.mxu0 0.0
    %2169 = vmatprep.subr.mxu0 0.0
    %2170 = vmatpush1.msra.mxu0 0.0
    %2171 = vmatprep.subr.mxu0 0.0
    %2172 = vmatpush1.msra.mxu0 0.0
    %2173 = vmatprep.subr.mxu0 0.0
    %2174 = vmatpush1.msra.mxu0 0.0
    %2175 = vmatprep.subr.mxu0 0.0
    %2176 = vmatpush1.msra.mxu0 0.0
    %2177 = vmatprep.subr.mxu0 0.0
    %2178 = vmatpush1.msra.mxu0 %v60
    %2179 = vmatprep.subr.mxu0 0.0
    %2180 = vmatpush1.msra.mxu0 %v59
    %2181 = vmatprep.subr.mxu0 0.0
    %2182 = vmatpush2.msra.mxu0 0.0
    %2183 = vmatprep.subr.mxu0 0.0
    %2184 = vmatpush2.msra.mxu0 0.0
    %2185 = vmatprep.subr.mxu0 0.0
    %2186 = vmatpush2.msra.mxu0 0.0
    %2187 = vmatprep.subr.mxu0 0.0
    %2188 = vmatpush2.msra.mxu0 0.0
    %2189 = vmatprep.subr.mxu0 0.0
    %2190 = vmatpush2.msra.mxu0 0.0
    %2191 = vmatprep.subr.mxu0 0.0
    %2192 = vmatpush2.msra.mxu0 0.0
    %2193 = vmatprep.subr.mxu0 0.0
    %2194 = vmatpush2.msra.mxu0 0.0
    %2195 = vmatprep.subr.mxu0 0.0
    %2196 = vmatpush2.msra.mxu0 0.0
    %2197 = vmatprep.subr.mxu0 0.0
    %2198 = vmatpush2.msra.mxu0 0.0
    %2199 = vmatprep.subr.mxu0 0.0
    %2200 = vmatpush2.msra.mxu0 0.0
    %2201 = vmatprep.subr.mxu0 0.0
    %2202 = vmatpush2.msra.mxu0 0.0
    %2203 = vmatprep.subr.mxu0 0.0
    %2204 = vmatpush2.msra.mxu0 0.0
    %2205 = vmatprep.subr.mxu0 0.0
    %2206 = vmatpush2.msra.mxu0 0.0
    %2207 = vmatprep.subr.mxu0 0.0
    %2208 = vmatpush2.msra.mxu0 0.0
    %2209 = vmatprep.subr.mxu0 0.0
    %2210 = vmatpush2.msra.mxu0 0.0
    %2211 = vmatprep.subr.mxu0 0.0
    %2212 = vmatpush2.msra.mxu0 0.0
    %2213 = vmatprep.mubr.f32.mxu0 0.0
    %2214 = vmatmul.mubr.f32.gmra.mxu0 %v2108
    %v2215 = vpop.f32.mrf.mxu0
    %v2216 = vadd.f32 %v2105, %v2215
    %v2217 = vpop.f32.mrf.mxu0
    %2218 = vmatprep.mubr.f32.mxu0 0.0
    %2219 = vmatmul.mubr.f32.gmra.mxu0 %v2111
    %v2220 = vpop.f32.mrf.mxu0
    %v2221 = vadd.f32 %v2105, %v2220
    %v2222 = vpop.f32.mrf.mxu0
    %2223 = vmatprep.mubr.f32.mxu0 0.0
    %2224 = vmatmul.mubr.f32.gmra.mxu0 %v2114
    %v2225 = vpop.f32.mrf.mxu0
    %v2226 = vadd.f32 %v2105, %v2225
    %v2227 = vpop.f32.mrf.mxu0
    %2228 = vmatprep.mubr.f32.mxu0 0.0
    %2229 = vmatmul.mubr.f32.gmra.mxu0 %v2117
    %v2230 = vpop.f32.mrf.mxu0
    %v2231 = vadd.f32 %v2105, %v2230
    %v2232 = vpop.f32.mrf.mxu0
    %2233 = vmatprep.mubr.f32.mxu0 0.0
    %2234 = vmatmul.mubr.f32.gmra.mxu0 %v2120
    %v2235 = vpop.f32.mrf.mxu0
    %v2236 = vadd.f32 %v2105, %v2235
    %v2237 = vpop.f32.mrf.mxu0
    %2238 = vmatprep.mubr.f32.mxu0 0.0
    %2239 = vmatmul.mubr.f32.gmra.mxu0 %v2123
    %v2240 = vpop.f32.mrf.mxu0
    %v2241 = vadd.f32 %v2105, %v2240
    %v2242 = vpop.f32.mrf.mxu0
    %2243 = vmatprep.mubr.f32.mxu0 0.0
    %2244 = vmatmul.mubr.f32.gmra.mxu0 %v2126
    %v2245 = vpop.f32.mrf.mxu0
    %v2246 = vadd.f32 %v2105, %v2245
    %v2247 = vpop.f32.mrf.mxu0
    %2248 = vmatprep.mubr.f32.mxu0 0.0
    %2249 = vmatmul.mubr.f32.gmra.mxu0 %v2129
    %v2250 = vpop.f32.mrf.mxu0
    %v2251 = vadd.f32 %v2105, %v2250
    %v2252 = vpop.f32.mrf.mxu0
    %2253 = vmatprep.mubr.f32.mxu0 0.0
    %2254 = vmatmul.mubr.f32.gmra.mxu0 %v2132
    %v2255 = vpop.f32.mrf.mxu0
    %v2256 = vadd.f32 %v2105, %v2255
    %v2257 = vpop.f32.mrf.mxu0
    %2258 = vmatprep.mubr.f32.mxu0 0.0
    %2259 = vmatmul.mubr.f32.gmra.mxu0 %v2135
    %v2260 = vpop.f32.mrf.mxu0
    %v2261 = vadd.f32 %v2105, %v2260
    %v2262 = vpop.f32.mrf.mxu0
    %2263 = vmatprep.mubr.f32.mxu0 0.0
    %2264 = vmatmul.mubr.f32.gmra.mxu0 %v2138
    %v2265 = vpop.f32.mrf.mxu0
    %v2266 = vadd.f32 %v2105, %v2265
    %v2267 = vpop.f32.mrf.mxu0
    %2268 = vmatprep.mubr.f32.mxu0 0.0
    %2269 = vmatmul.mubr.f32.gmra.mxu0 %v2141
    %v2270 = vpop.f32.mrf.mxu0
    %v2271 = vadd.f32 %v2105, %v2270
    %v2272 = vpop.f32.mrf.mxu0
    %2273 = vmatprep.mubr.f32.mxu0 0.0
    %2274 = vmatmul.mubr.f32.gmra.mxu0 %v2144
    %v2275 = vpop.f32.mrf.mxu0
    %v2276 = vadd.f32 %v2105, %v2275
    %v2277 = vpop.f32.mrf.mxu0
    %2278 = vmatprep.mubr.f32.mxu0 0.0
    %2279 = vmatmul.mubr.f32.gmra.mxu0 %v2147
    %v2280 = vpop.f32.mrf.mxu0
    %v2281 = vadd.f32 %v2105, %v2280
    %v2282 = vpop.f32.mrf.mxu0
    %2283 = vdwg.mxu0
    %v2284 = vld [vmem:[%s2] sm:$0xff]
    %v2285 = vld [vmem:[%s2 + $0x8] sm:$0xff]
    %v2286 = vld [vmem:[%s2 + $0x10] sm:$0xff]
    %v2287 = vld [vmem:[%s2 + $0x18] sm:$0xff]
    %v2288 = vadd.f32 %v2216, 0.0
    %v2289 = vadd.f32 %v2221, 0.0
    %v2291 = vlaneseq
    %v2292 = vshrl.u32 %v2291, 7
    %v2293 = vsub.s32 0, %v2292
    %v2294 = vrot.slane %v289, %v2293
    %v2297 = vsel %vm316, %v1997, 0
    %v2300 = vsel %vm316, %v1998, 0
    %2302 = vmatprep.subr.mxu0 0.0
    %2303 = vmatpush1.msra.mxu0 0.0
    %2304 = vmatprep.subr.mxu0 0.0
    %2305 = vmatpush1.msra.mxu0 0.0
    %2306 = vmatprep.subr.mxu0 0.0
    %2307 = vmatpush1.msra.mxu0 0.0
    %2308 = vmatprep.subr.mxu0 0.0
    %2309 = vmatpush1.msra.mxu0 0.0
    %2310 = vmatprep.subr.mxu0 0.0
    %2311 = vmatpush1.msra.mxu0 0.0
    %2312 = vmatprep.subr.mxu0 0.0
    %2313 = vmatpush1.msra.mxu0 0.0
    %2314 = vmatprep.subr.mxu0 0.0
    %2315 = vmatpush1.msra.mxu0 0.0
    %2316 = vmatprep.subr.mxu0 0.0
    %2317 = vmatpush1.msra.mxu0 0.0
    %2318 = vmatprep.subr.mxu0 0.0
    %2319 = vmatpush1.msra.mxu0 0.0
    %2320 = vmatprep.subr.mxu0 0.0
    %2321 = vmatpush1.msra.mxu0 0.0
    %2322 = vmatprep.subr.mxu0 0.0
    %2323 = vmatpush1.msra.mxu0 0.0
    %2324 = vmatprep.subr.mxu0 0.0
    %2325 = vmatpush1.msra.mxu0 0.0
    %2326 = vmatprep.subr.mxu0 0.0
    %2327 = vmatpush1.msra.mxu0 %v38
    %2328 = vmatprep.subr.mxu0 0.0
    %2329 = vmatpush1.msra.mxu0 %v37
    %2330 = vmatprep.subr.mxu0 0.0
    %2331 = vmatpush1.msra.mxu0 %v36
    %2332 = vmatprep.subr.mxu0 0.0
    %2333 = vmatpush1.msra.mxu0 %v35
    %2334 = vmatprep.subr.mxu0 0.0
    %2335 = vmatpush2.msra.mxu0 0.0
    %2336 = vmatprep.subr.mxu0 0.0
    %2337 = vmatpush2.msra.mxu0 0.0
    %2338 = vmatprep.subr.mxu0 0.0
    %2339 = vmatpush2.msra.mxu0 0.0
    %2340 = vmatprep.subr.mxu0 0.0
    %2341 = vmatpush2.msra.mxu0 0.0
    %2342 = vmatprep.subr.mxu0 0.0
    %2343 = vmatpush2.msra.mxu0 0.0
    %2344 = vmatprep.subr.mxu0 0.0
    %2345 = vmatpush2.msra.mxu0 0.0
    %2346 = vmatprep.subr.mxu0 0.0
    %2347 = vmatpush2.msra.mxu0 0.0
    %2348 = vmatprep.subr.mxu0 0.0
    %2349 = vmatpush2.msra.mxu0 0.0
    %2350 = vmatprep.subr.mxu0 0.0
    %2351 = vmatpush2.msra.mxu0 0.0
    %2352 = vmatprep.subr.mxu0 0.0
    %2353 = vmatpush2.msra.mxu0 0.0
    %2354 = vmatprep.subr.mxu0 0.0
    %2355 = vmatpush2.msra.mxu0 0.0
    %2356 = vmatprep.subr.mxu0 0.0
    %2357 = vmatpush2.msra.mxu0 0.0
    %2358 = vmatprep.subr.mxu0 0.0
    %2359 = vmatpush2.msra.mxu0 0.0
    %2360 = vmatprep.subr.mxu0 0.0
    %2361 = vmatpush2.msra.mxu0 0.0
    %2362 = vmatprep.subr.mxu0 0.0
    %2363 = vmatpush2.msra.mxu0 0.0
    %2364 = vmatprep.subr.mxu0 0.0
    %2365 = vmatpush2.msra.mxu0 0.0
    %2366 = vmatprep.mubr.f32.mxu0 0.0
    %2367 = vmatmul.mubr.f32.gmra.mxu0 %v2297
    %v2368 = vpop.f32.mrf.mxu0
    %v2369 = vadd.f32 %v2294, %v2368
    %v2370 = vpop.f32.mrf.mxu0
    %2371 = vmatprep.mubr.f32.mxu0 0.0
    %2372 = vmatmul.mubr.f32.gmra.mxu0 %v2300
    %v2373 = vpop.f32.mrf.mxu0
    %v2374 = vadd.f32 %v2294, %v2373
    %v2375 = vpop.f32.mrf.mxu0
    %2376 = vdwg.mxu0
    %v2377 = vadd.f32 %v2288, %v2369
    %v2378 = vadd.f32 %v2289, %v2374
    %v2379 = vxor.u32 %v2377, 2147483648
    %v2380 = vxor.u32 %v2378, 2147483648
    %v2381 = vmul.f32 %v2379, 1.442695
    %v2382 = vpow.pop %v2381
    %v2383 = vmul.f32 %v2380, 1.442695
    %v2384 = vpow.pop %v2383
    %v2385 = vadd.f32 %v2382, 1.0
    %v2386 = vadd.f32 %v2384, 1.0
    %v2387 = vrcp.pop %v2385
    %v2388 = vmul.f32 1.0, %v2387
    %v2389 = vrcp.pop %v2386
    %v2390 = vmul.f32 1.0, %v2389
    %2393 = vrot.lane.b32.xlu0 %v2369, 64
    %v2394 = vpop.permute.xlu0 %2393
    %2395 = vrot.lane.b32.xlu0 %v2374, 64
    %v2396 = vpop.permute.xlu0 %2395
    %v2399 = vmul.f32 %v2388, %v2394
    %v2400 = vmul.f32 %v2390, %v2396
    %2403 = vrot.lane.b32.xlu0 %v2399, 64
    %v2404 = vpop.permute.xlu0 %2403
    %2405 = vrot.lane.b32.xlu0 %v2400, 64
    %v2406 = vpop.permute.xlu0 %2405
    %v2409 = vadd.f32 %v2288, %v2404
    %v2410 = vadd.f32 %v2289, %v2406
    %v2411 = vtanh.pop %v2409
    %v2412 = vtanh.pop %v2410
    %v2413 = vsub.f32 1.0, %v2388
    %v2414 = vsub.f32 1.0, %v2390
    %2417 = vrot.lane.b32.xlu0 %v2411, 96
    %v2418 = vpop.permute.xlu0 %2417
    %2419 = vrot.lane.b32.xlu0 %v2412, 96
    %v2420 = vpop.permute.xlu0 %2419
    %v2423 = vmul.f32 %v2413, %v2418
    %v2424 = vmul.f32 %v2414, %v2420
    %2425 = vrot.lane.b32.xlu0 %v1997, 32
    %v2426 = vpop.permute.xlu0 %2425
    %2427 = vrot.lane.b32.xlu0 %v1998, 32
    %v2428 = vpop.permute.xlu0 %2427
    %v2431 = vmul.f32 %v2388, %v2426
    %v2432 = vmul.f32 %v2390, %v2428
    %v2433 = vadd.f32 %v2423, %v2431
    %v2434 = vadd.f32 %v2424, %v2432
    %2437 = vrot.lane.b32.xlu0 %v2433, 96
    %v2438 = vpop.permute.xlu0 %2437
    %2439 = vrot.lane.b32.xlu0 %v2434, 96
    %v2440 = vpop.permute.xlu0 %2439
    %v2441 = vsel %vm316, %v2438, 0
    %v2443 = vsel %vm316, %v2440, 0
    %2445 = vmatprep.subr.mxu0 0.0
    %2446 = vmatpush1.msra.mxu0 0.0
    %2447 = vmatprep.subr.mxu0 0.0
    %2448 = vmatpush1.msra.mxu0 0.0
    %2449 = vmatprep.subr.mxu0 0.0
    %2450 = vmatpush1.msra.mxu0 0.0
    %2451 = vmatprep.subr.mxu0 0.0
    %2452 = vmatpush1.msra.mxu0 0.0
    %2453 = vmatprep.subr.mxu0 0.0
    %2454 = vmatpush1.msra.mxu0 0.0
    %2455 = vmatprep.subr.mxu0 0.0
    %2456 = vmatpush1.msra.mxu0 0.0
    %2457 = vmatprep.subr.mxu0 0.0
    %2458 = vmatpush1.msra.mxu0 0.0
    %2459 = vmatprep.subr.mxu0 0.0
    %2460 = vmatpush1.msra.mxu0 0.0
    %2461 = vmatprep.subr.mxu0 0.0
    %2462 = vmatpush1.msra.mxu0 0.0
    %2463 = vmatprep.subr.mxu0 0.0
    %2464 = vmatpush1.msra.mxu0 0.0
    %2465 = vmatprep.subr.mxu0 0.0
    %2466 = vmatpush1.msra.mxu0 0.0
    %2467 = vmatprep.subr.mxu0 0.0
    %2468 = vmatpush1.msra.mxu0 0.0
    %2469 = vmatprep.subr.mxu0 %v49
    %2470 = vmatpush1.msra.mxu0 %v48
    %2471 = vmatprep.subr.mxu0 %v46
    %2472 = vmatpush1.msra.mxu0 %v45
    %2473 = vmatprep.subr.mxu0 %v43
    %2474 = vmatpush1.msra.mxu0 %v42
    %2475 = vmatprep.subr.mxu0 %v40
    %2476 = vmatpush1.msra.mxu0 %v39
    %2477 = vmatprep.subr.mxu0 0.0
    %2478 = vmatpush2.msra.mxu0 0.0
    %2479 = vmatprep.subr.mxu0 0.0
    %2480 = vmatpush2.msra.mxu0 0.0
    %2481 = vmatprep.subr.mxu0 0.0
    %2482 = vmatpush2.msra.mxu0 0.0
    %2483 = vmatprep.subr.mxu0 0.0
    %2484 = vmatpush2.msra.mxu0 0.0
    %2485 = vmatprep.subr.mxu0 0.0
    %2486 = vmatpush2.msra.mxu0 0.0
    %2487 = vmatprep.subr.mxu0 0.0
    %2488 = vmatpush2.msra.mxu0 0.0
    %2489 = vmatprep.subr.mxu0 0.0
    %2490 = vmatpush2.msra.mxu0 0.0
    %2491 = vmatprep.subr.mxu0 0.0
    %2492 = vmatpush2.msra.mxu0 0.0
    %2493 = vmatprep.subr.mxu0 0.0
    %2494 = vmatpush2.msra.mxu0 0.0
    %2495 = vmatprep.subr.mxu0 0.0
    %2496 = vmatpush2.msra.mxu0 0.0
    %2497 = vmatprep.subr.mxu0 0.0
    %2498 = vmatpush2.msra.mxu0 0.0
    %2499 = vmatprep.subr.mxu0 0.0
    %2500 = vmatpush2.msra.mxu0 0.0
    %2501 = vmatprep.subr.mxu0 0.0
    %2502 = vmatpush2.msra.mxu0 0.0
    %2503 = vmatprep.subr.mxu0 0.0
    %2504 = vmatpush2.msra.mxu0 0.0
    %2505 = vmatprep.subr.mxu0 0.0
    %2506 = vmatpush2.msra.mxu0 0.0
    %2507 = vmatprep.subr.mxu0 0.0
    %2508 = vmatpush2.msra.mxu0 0.0
    %2509 = vmatprep.mubr.f32.mxu0 0.0
    %2510 = vmatmul.mubr.f32.gmra.mxu0 %v2441
    %v2511 = vpop.f32.mrf.mxu0
    %v2512 = vadd.f32 0.0, %v2511
    %v2513 = vpop.f32.mrf.mxu0
    %v2514 = vadd.f32 0.0, %v2513
    %2515 = vmatprep.mubr.f32.mxu0 0.0
    %2516 = vmatmul.mubr.f32.gmra.mxu0 %v2443
    %v2517 = vpop.f32.mrf.mxu0
    %v2518 = vadd.f32 0.0, %v2517
    %v2519 = vpop.f32.mrf.mxu0
    %v2520 = vadd.f32 0.0, %v2519
    %2521 = vdwg.mxu0
    %2522 = vmatprep.subr.mxu0 0.0
    %2523 = vmatpush1.msra.mxu0 0.0
    %2524 = vmatprep.subr.mxu0 0.0
    %2525 = vmatpush1.msra.mxu0 0.0
    %2526 = vmatprep.subr.mxu0 0.0
    %2527 = vmatpush1.msra.mxu0 0.0
    %2528 = vmatprep.subr.mxu0 0.0
    %2529 = vmatpush1.msra.mxu0 0.0
    %2530 = vmatprep.subr.mxu0 0.0
    %2531 = vmatpush1.msra.mxu0 0.0
    %2532 = vmatprep.subr.mxu0 0.0
    %2533 = vmatpush1.msra.mxu0 0.0
    %2534 = vmatprep.subr.mxu0 0.0
    %2535 = vmatpush1.msra.mxu0 0.0
    %2536 = vmatprep.subr.mxu0 0.0
    %2537 = vmatpush1.msra.mxu0 0.0
    %2538 = vmatprep.subr.mxu0 0.0
    %2539 = vmatpush1.msra.mxu0 0.0
    %2540 = vmatprep.subr.mxu0 0.0
    %2541 = vmatpush1.msra.mxu0 0.0
    %2542 = vmatprep.subr.mxu0 0.0
    %2543 = vmatpush1.msra.mxu0 0.0
    %2544 = vmatprep.subr.mxu0 0.0
    %2545 = vmatpush1.msra.mxu0 0.0
    %2546 = vmatprep.subr.mxu0 0.0
    %2547 = vmatpush1.msra.mxu0 %v50
    %2548 = vmatprep.subr.mxu0 0.0
    %2549 = vmatpush1.msra.mxu0 %v47
    %2550 = vmatprep.subr.mxu0 0.0
    %2551 = vmatpush1.msra.mxu0 %v44
    %2552 = vmatprep.subr.mxu0 0.0
    %2553 = vmatpush1.msra.mxu0 %v41
    %2554 = vmatprep.subr.mxu0 0.0
    %2555 = vmatpush2.msra.mxu0 0.0
    %2556 = vmatprep.subr.mxu0 0.0
    %2557 = vmatpush2.msra.mxu0 0.0
    %2558 = vmatprep.subr.mxu0 0.0
    %2559 = vmatpush2.msra.mxu0 0.0
    %2560 = vmatprep.subr.mxu0 0.0
    %2561 = vmatpush2.msra.mxu0 0.0
    %2562 = vmatprep.subr.mxu0 0.0
    %2563 = vmatpush2.msra.mxu0 0.0
    %2564 = vmatprep.subr.mxu0 0.0
    %2565 = vmatpush2.msra.mxu0 0.0
    %2566 = vmatprep.subr.mxu0 0.0
    %2567 = vmatpush2.msra.mxu0 0.0
    %2568 = vmatprep.subr.mxu0 0.0
    %2569 = vmatpush2.msra.mxu0 0.0
    %2570 = vmatprep.subr.mxu0 0.0
    %2571 = vmatpush2.msra.mxu0 0.0
    %2572 = vmatprep.subr.mxu0 0.0
    %2573 = vmatpush2.msra.mxu0 0.0
    %2574 = vmatprep.subr.mxu0 0.0
    %2575 = vmatpush2.msra.mxu0 0.0
    %2576 = vmatprep.subr.mxu0 0.0
    %2577 = vmatpush2.msra.mxu0 0.0
    %2578 = vmatprep.subr.mxu0 0.0
    %2579 = vmatpush2.msra.mxu0 0.0
    %2580 = vmatprep.subr.mxu0 0.0
    %2581 = vmatpush2.msra.mxu0 0.0
    %2582 = vmatprep.subr.mxu0 0.0
    %2583 = vmatpush2.msra.mxu0 0.0
    %2584 = vmatprep.subr.mxu0 0.0
    %2585 = vmatpush2.msra.mxu0 0.0
    %2586 = vmatprep.mubr.f32.mxu0 0.0
    %2587 = vmatmul.mubr.f32.gmra.mxu0 %v2441
    %v2588 = vpop.f32.mrf.mxu0
    %v2589 = vadd.f32 0.0, %v2588
    %v2590 = vpop.f32.mrf.mxu0
    %2591 = vmatprep.mubr.f32.mxu0 0.0
    %2592 = vmatmul.mubr.f32.gmra.mxu0 %v2443
    %v2593 = vpop.f32.mrf.mxu0
    %v2594 = vadd.f32 0.0, %v2593
    %v2595 = vpop.f32.mrf.mxu0
    %2596 = vdwg.mxu0
    %v2597 = vadd.f32 %v2077, %v2512
    %v2598 = vadd.f32 %v2079, %v2514
    %v2599 = vadd.f32 %v2083, %v2518
    %v2600 = vadd.f32 %v2085, %v2520
    %v2601 = vtanh.pop %v2597
    %v2602 = vtanh.pop %v2598
    %v2603 = vtanh.pop %v2599
    %v2604 = vtanh.pop %v2600
    %2605 = vmatprep.subr.mxu0 %v222
    %2606 = vmatpush1.msra.mxu0 %v221
    %2607 = vmatprep.subr.mxu0 %v220
    %2608 = vmatpush1.msra.mxu0 %v219
    %2609 = vmatprep.subr.mxu0 %v218
    %2610 = vmatpush1.msra.mxu0 %v217
    %2611 = vmatprep.subr.mxu0 %v216
    %2612 = vmatpush1.msra.mxu0 %v215
    %2613 = vmatprep.subr.mxu0 %v214
    %2614 = vmatpush1.msra.mxu0 %v213
    %2615 = vmatprep.subr.mxu0 %v212
    %2616 = vmatpush1.msra.mxu0 %v211
    %2617 = vmatprep.subr.mxu0 %v210
    %2618 = vmatpush1.msra.mxu0 %v209
    %2619 = vmatprep.subr.mxu0 %v208
    %2620 = vmatpush1.msra.mxu0 %v207
    %2621 = vmatprep.subr.mxu0 %v206
    %2622 = vmatpush1.msra.mxu0 %v205
    %2623 = vmatprep.subr.mxu0 %v204
    %2624 = vmatpush1.msra.mxu0 %v203
    %2625 = vmatprep.subr.mxu0 %v202
    %2626 = vmatpush1.msra.mxu0 %v201
    %2627 = vmatprep.subr.mxu0 %v200
    %2628 = vmatpush1.msra.mxu0 %v199
    %2629 = vmatprep.subr.mxu0 %v198
    %2630 = vmatpush1.msra.mxu0 %v197
    %2631 = vmatprep.subr.mxu0 %v196
    %2632 = vmatpush1.msra.mxu0 %v195
    %2633 = vmatprep.subr.mxu0 %v194
    %2634 = vmatpush1.msra.mxu0 %v193
    %2635 = vmatprep.subr.mxu0 %v192
    %2636 = vmatpush1.msra.mxu0 %v191
    %2637 = vmatprep.subr.mxu0 %v254
    %2638 = vmatpush2.msra.mxu0 %v253
    %2639 = vmatprep.subr.mxu0 %v252
    %2640 = vmatpush2.msra.mxu0 %v251
    %2641 = vmatprep.subr.mxu0 %v250
    %2642 = vmatpush2.msra.mxu0 %v249
    %2643 = vmatprep.subr.mxu0 %v248
    %2644 = vmatpush2.msra.mxu0 %v247
    %2645 = vmatprep.subr.mxu0 %v246
    %2646 = vmatpush2.msra.mxu0 %v245
    %2647 = vmatprep.subr.mxu0 %v244
    %2648 = vmatpush2.msra.mxu0 %v243
    %2649 = vmatprep.subr.mxu0 %v242
    %2650 = vmatpush2.msra.mxu0 %v241
    %2651 = vmatprep.subr.mxu0 %v240
    %2652 = vmatpush2.msra.mxu0 %v239
    %2653 = vmatprep.subr.mxu0 %v238
    %2654 = vmatpush2.msra.mxu0 %v237
    %2655 = vmatprep.subr.mxu0 %v236
    %2656 = vmatpush2.msra.mxu0 %v235
    %2657 = vmatprep.subr.mxu0 %v234
    %2658 = vmatpush2.msra.mxu0 %v233
    %2659 = vmatprep.subr.mxu0 %v232
    %2660 = vmatpush2.msra.mxu0 %v231
    %2661 = vmatprep.subr.mxu0 %v230
    %2662 = vmatpush2.msra.mxu0 %v229
    %2663 = vmatprep.subr.mxu0 %v228
    %2664 = vmatpush2.msra.mxu0 %v227
    %2665 = vmatprep.subr.mxu0 %v226
    %2666 = vmatpush2.msra.mxu0 %v225
    %2667 = vmatprep.subr.mxu0 %v224
    %2668 = vmatpush2.msra.mxu0 %v223
    %2669 = vmatprep.mubr.f32.mxu0 %v2602
    %2670 = vmatmul.mubr.f32.gmra.mxu0 %v2601
    %v2671 = vpop.f32.mrf.mxu0
    %v2672 = vadd.f32 %v2284, %v2671
    %v2673 = vpop.f32.mrf.mxu0
    %v2674 = vadd.f32 %v2285, %v2673
    %2675 = vmatprep.mubr.f32.mxu0 %v2604
    %2676 = vmatmul.mubr.f32.gmra.mxu0 %v2603
    %v2677 = vpop.f32.mrf.mxu0
    %v2678 = vadd.f32 %v2286, %v2677
    %v2679 = vpop.f32.mrf.mxu0
    %v2680 = vadd.f32 %v2287, %v2679
    %2681 = vdwg.mxu0
    %v2682 = vmax.f32 %v2672, %v2674
    %2683 = vmax.xlane.f32.xlu0 %v2682
    %v2684 = vpop.xlane.xlu0 %2683
    %v2685 = vmax.f32 %v2678, %v2680
    %2686 = vmax.xlane.f32.xlu0 %v2685
    %v2687 = vpop.xlane.xlu0 %2686
    %v2688 = vsub.f32 %v2672, %v2684
    %v2689 = vsub.f32 %v2674, %v2684
    %v2690 = vsub.f32 %v2678, %v2687
    %v2691 = vsub.f32 %v2680, %v2687
    %v2692 = vmul.f32 %v2688, 1.442695
    %v2693 = vpow.pop %v2692
    %v2694 = vmul.f32 %v2689, 1.442695
    %v2695 = vpow.pop %v2694
    %v2696 = vmul.f32 %v2690, 1.442695
    %v2697 = vpow.pop %v2696
    %v2698 = vmul.f32 %v2691, 1.442695
    %v2699 = vpow.pop %v2698
    %v2700 = vadd.f32 %v2693, %v2695
    %2701 = vadd.xlane.f32.xlu0 %v2700
    %v2702 = vpop.xlane.xlu0 %2701
    %v2703 = vadd.f32 %v2697, %v2699
    %2704 = vadd.xlane.f32.xlu0 %v2703
    %v2705 = vpop.xlane.xlu0 %2704
    %v2706 = vrcp.pop %v2702
    %v2707 = vrcp.pop %v2705
    %v2708 = vmul.f32 %v2706, 32.0
    %v2709 = vmul.f32 %v2707, 32.0
    %v2710 = vmul.f32 %v2693, %v2708
    %v2711 = vmul.f32 %v2695, %v2708
    %v2712 = vmul.f32 %v2697, %v2709
    %v2713 = vmul.f32 %v2699, %v2709
    %v2714 = vmul.f32 %v2710, %v1904
    %v2715 = vmul.f32 %v2711, %v1905
    %v2716 = vmul.f32 %v2712, %v1906
    %v2717 = vmul.f32 %v2713, %v1907
    %2718 = vmatprep.subr.mxu0 0.0
    %2719 = vmatpush1.msra.mxu0 %v270
    %2720 = vmatprep.subr.mxu0 0.0
    %2721 = vmatpush1.msra.mxu0 %v269
    %2722 = vmatprep.subr.mxu0 0.0
    %2723 = vmatpush1.msra.mxu0 %v268
    %2724 = vmatprep.subr.mxu0 0.0
    %2725 = vmatpush1.msra.mxu0 %v267
    %2726 = vmatprep.subr.mxu0 0.0
    %2727 = vmatpush1.msra.mxu0 %v266
    %2728 = vmatprep.subr.mxu0 0.0
    %2729 = vmatpush1.msra.mxu0 %v265
    %2730 = vmatprep.subr.mxu0 0.0
    %2731 = vmatpush1.msra.mxu0 %v264
    %2732 = vmatprep.subr.mxu0 0.0
    %2733 = vmatpush1.msra.mxu0 %v263
    %2734 = vmatprep.subr.mxu0 0.0
    %2735 = vmatpush1.msra.mxu0 %v262
    %2736 = vmatprep.subr.mxu0 0.0
    %2737 = vmatpush1.msra.mxu0 %v261
    %2738 = vmatprep.subr.mxu0 0.0
    %2739 = vmatpush1.msra.mxu0 %v260
    %2740 = vmatprep.subr.mxu0 0.0
    %2741 = vmatpush1.msra.mxu0 %v259
    %2742 = vmatprep.subr.mxu0 0.0
    %2743 = vmatpush1.msra.mxu0 %v258
    %2744 = vmatprep.subr.mxu0 0.0
    %2745 = vmatpush1.msra.mxu0 %v257
    %2746 = vmatprep.subr.mxu0 0.0
    %2747 = vmatpush1.msra.mxu0 %v256
    %2748 = vmatprep.subr.mxu0 0.0
    %2749 = vmatpush1.msra.mxu0 %v255
    %2750 = vmatprep.subr.mxu0 0.0
    %2751 = vmatpush2.msra.mxu0 %v286
    %2752 = vmatprep.subr.mxu0 0.0
    %2753 = vmatpush2.msra.mxu0 %v285
    %2754 = vmatprep.subr.mxu0 0.0
    %2755 = vmatpush2.msra.mxu0 %v284
    %2756 = vmatprep.subr.mxu0 0.0
    %2757 = vmatpush2.msra.mxu0 %v283
    %2758 = vmatprep.subr.mxu0 0.0
    %2759 = vmatpush2.msra.mxu0 %v282
    %2760 = vmatprep.subr.mxu0 0.0
    %2761 = vmatpush2.msra.mxu0 %v281
    %2762 = vmatprep.subr.mxu0 0.0
    %2763 = vmatpush2.msra.mxu0 %v280
    %2764 = vmatprep.subr.mxu0 0.0
    %2765 = vmatpush2.msra.mxu0 %v279
    %2766 = vmatprep.subr.mxu0 0.0
    %2767 = vmatpush2.msra.mxu0 %v278
    %2768 = vmatprep.subr.mxu0 0.0
    %2769 = vmatpush2.msra.mxu0 %v277
    %2770 = vmatprep.subr.mxu0 0.0
    %2771 = vmatpush2.msra.mxu0 %v276
    %2772 = vmatprep.subr.mxu0 0.0
    %2773 = vmatpush2.msra.mxu0 %v275
    %2774 = vmatprep.subr.mxu0 0.0
    %2775 = vmatpush2.msra.mxu0 %v274
    %2776 = vmatprep.subr.mxu0 0.0
    %2777 = vmatpush2.msra.mxu0 %v273
    %2778 = vmatprep.subr.mxu0 0.0
    %2779 = vmatpush2.msra.mxu0 %v272
    %2780 = vmatprep.subr.mxu0 0.0
    %2781 = vmatpush2.msra.mxu0 %v271
    %2782 = vmatprep.mubr.f32.mxu0 %v2715
    %2783 = vmatmul.mubr.f32.gmra.mxu0 %v2714
    %v2784 = vpop.f32.mrf.mxu0
    %v2785 = vadd.f32 0.0, %v2784
    %v2786 = vpop.f32.mrf.mxu0
    %2787 = vmatprep.mubr.f32.mxu0 %v2717
    %2788 = vmatmul.mubr.f32.gmra.mxu0 %v2716
    %v2789 = vpop.f32.mrf.mxu0
    %v2790 = vadd.f32 0.0, %v2789
    %v2791 = vpop.f32.mrf.mxu0
    %2792 = vdwg.mxu0
    %2795 = vrot.lane.b32.xlu0 %v2589, 96
    %v2796 = vpop.permute.xlu0 %2795
    %2797 = vrot.lane.b32.xlu0 %v2594, 96
    %v2798 = vpop.permute.xlu0 %2797
    %v2801 = vadd.f32 %v2216, %v2796
    %v2802 = vadd.f32 %v2221, %v2798
    %2805 = vrot.lane.b32.xlu0 %v2785, 96
    %v2806 = vpop.permute.xlu0 %2805
    %2807 = vrot.lane.b32.xlu0 %v2790, 96
    %v2808 = vpop.permute.xlu0 %2807
    %v2811 = vadd.f32 %v2801, %v2806
    %v2812 = vadd.f32 %v2802, %v2808
    %2815 = vrot.lane.b32.xlu0 %v2811, 112
    %v2816 = vpop.permute.xlu0 %2815
    %2817 = vrot.lane.b32.xlu0 %v2812, 112
    %v2818 = vpop.permute.xlu0 %2817
    %v2821 = vmax.f32 %v2811, %v2816
    %v2822 = vmax.f32 %v2812, %v2818
    %2825 = vrot.lane.b32.xlu0 %v2821, 32
    %v2826 = vpop.permute.xlu0 %2825
    %2827 = vrot.lane.b32.xlu0 %v2822, 32
    %v2828 = vpop.permute.xlu0 %2827
    %2831 = vst.msk [vmem:[#allocation3] sm:$0xff] %vm654, %v2826
    %2832 = vst.msk [vmem:[#allocation3 + $0x8] sm:$0xff] %vm654, %v2828
    %v2833 = vadd.f32 %v2226, %v2806
    %v2834 = vadd.f32 %v2231, %v2808
    %2835 = vmatprep.subr.mxu0 0.0
    %2836 = vmatpush1.msra.mxu0 0.0
    %2837 = vmatprep.subr.mxu0 0.0
    %2838 = vmatpush1.msra.mxu0 0.0
    %2839 = vmatprep.subr.mxu0 0.0
    %2840 = vmatpush1.msra.mxu0 0.0
    %2841 = vmatprep.subr.mxu0 0.0
    %2842 = vmatpush1.msra.mxu0 0.0
    %2843 = vmatprep.subr.mxu0 0.0
    %2844 = vmatpush1.msra.mxu0 0.0
    %2845 = vmatprep.subr.mxu0 0.0
    %2846 = vmatpush1.msra.mxu0 0.0
    %2847 = vmatprep.subr.mxu0 0.0
    %2848 = vmatpush1.msra.mxu0 0.0
    %2849 = vmatprep.subr.mxu0 0.0
    %2850 = vmatpush1.msra.mxu0 0.0
    %2851 = vmatprep.subr.mxu0 0.0
    %2852 = vmatpush1.msra.mxu0 0.0
    %2853 = vmatprep.subr.mxu0 0.0
    %2854 = vmatpush1.msra.mxu0 0.0
    %2855 = vmatprep.subr.mxu0 0.0
    %2856 = vmatpush1.msra.mxu0 0.0
    %2857 = vmatprep.subr.mxu0 0.0
    %2858 = vmatpush1.msra.mxu0 0.0
    %2859 = vmatprep.subr.mxu0 0.0
    %2860 = vmatpush1.msra.mxu0 %v38
    %2861 = vmatprep.subr.mxu0 0.0
    %2862 = vmatpush1.msra.mxu0 %v37
    %2863 = vmatprep.subr.mxu0 0.0
    %2864 = vmatpush1.msra.mxu0 %v36
    %2865 = vmatprep.subr.mxu0 0.0
    %2866 = vmatpush1.msra.mxu0 %v35
    %2867 = vmatprep.subr.mxu0 0.0
    %2868 = vmatpush2.msra.mxu0 0.0
    %2869 = vmatprep.subr.mxu0 0.0
    %2870 = vmatpush2.msra.mxu0 0.0
    %2871 = vmatprep.subr.mxu0 0.0
    %2872 = vmatpush2.msra.mxu0 0.0
    %2873 = vmatprep.subr.mxu0 0.0
    %2874 = vmatpush2.msra.mxu0 0.0
    %2875 = vmatprep.subr.mxu0 0.0
    %2876 = vmatpush2.msra.mxu0 0.0
    %2877 = vmatprep.subr.mxu0 0.0
    %2878 = vmatpush2.msra.mxu0 0.0
    %2879 = vmatprep.subr.mxu0 0.0
    %2880 = vmatpush2.msra.mxu0 0.0
    %2881 = vmatprep.subr.mxu0 0.0
    %2882 = vmatpush2.msra.mxu0 0.0
    %2883 = vmatprep.subr.mxu0 0.0
    %2884 = vmatpush2.msra.mxu0 0.0
    %2885 = vmatprep.subr.mxu0 0.0
    %2886 = vmatpush2.msra.mxu0 0.0
    %2887 = vmatprep.subr.mxu0 0.0
    %2888 = vmatpush2.msra.mxu0 0.0
    %2889 = vmatprep.subr.mxu0 0.0
    %2890 = vmatpush2.msra.mxu0 0.0
    %2891 = vmatprep.subr.mxu0 0.0
    %2892 = vmatpush2.msra.mxu0 0.0
    %2893 = vmatprep.subr.mxu0 0.0
    %2894 = vmatpush2.msra.mxu0 0.0
    %2895 = vmatprep.subr.mxu0 0.0
    %2896 = vmatpush2.msra.mxu0 0.0
    %2897 = vmatprep.subr.mxu0 0.0
    %2898 = vmatpush2.msra.mxu0 0.0
    %2899 = vmatprep.mubr.f32.mxu0 0.0
    %2900 = vmatmul.mubr.f32.gmra.mxu0 %v2441
    %v2901 = vpop.f32.mrf.mxu0
    %v2902 = vadd.f32 %v2294, %v2901
    %v2903 = vpop.f32.mrf.mxu0
    %2904 = vmatprep.mubr.f32.mxu0 0.0
    %2905 = vmatmul.mubr.f32.gmra.mxu0 %v2443
    %v2906 = vpop.f32.mrf.mxu0
    %v2907 = vadd.f32 %v2294, %v2906
    %v2908 = vpop.f32.mrf.mxu0
    %2909 = vdwg.mxu0
    %v2910 = vadd.f32 %v2833, %v2902
    %v2911 = vadd.f32 %v2834, %v2907
    %v2912 = vxor.u32 %v2910, 2147483648
    %v2913 = vxor.u32 %v2911, 2147483648
    %v2914 = vmul.f32 %v2912, 1.442695
    %v2915 = vpow.pop %v2914
    %v2916 = vmul.f32 %v2913, 1.442695
    %v2917 = vpow.pop %v2916
    %v2918 = vadd.f32 %v2915, 1.0
    %v2919 = vadd.f32 %v2917, 1.0
    %v2920 = vrcp.pop %v2918
    %v2921 = vmul.f32 1.0, %v2920
    %v2922 = vrcp.pop %v2919
    %v2923 = vmul.f32 1.0, %v2922
    %2926 = vrot.lane.b32.xlu0 %v2902, 64
    %v2927 = vpop.permute.xlu0 %2926
    %2928 = vrot.lane.b32.xlu0 %v2907, 64
    %v2929 = vpop.permute.xlu0 %2928
    %v2932 = vmul.f32 %v2921, %v2927
    %v2933 = vmul.f32 %v2923, %v2929
    %2936 = vrot.lane.b32.xlu0 %v2932, 64
    %v2937 = vpop.permute.xlu0 %2936
    %2938 = vrot.lane.b32.xlu0 %v2933, 64
    %v2939 = vpop.permute.xlu0 %2938
    %v2942 = vadd.f32 %v2833, %v2937
    %v2943 = vadd.f32 %v2834, %v2939
    %v2944 = vtanh.pop %v2942
    %v2945 = vtanh.pop %v2943
    %v2946 = vsub.f32 1.0, %v2921
    %v2947 = vsub.f32 1.0, %v2923
    %2950 = vrot.lane.b32.xlu0 %v2944, 96
    %v2951 = vpop.permute.xlu0 %2950
    %2952 = vrot.lane.b32.xlu0 %v2945, 96
    %v2953 = vpop.permute.xlu0 %2952
    %v2956 = vmul.f32 %v2946, %v2951
    %v2957 = vmul.f32 %v2947, %v2953
    %v2958 = vmul.f32 %v2921, %v2433
    %v2959 = vmul.f32 %v2923, %v2434
    %v2960 = vadd.f32 %v2956, %v2958
    %v2961 = vadd.f32 %v2957, %v2959
    %2964 = vrot.lane.b32.xlu0 %v2960, 96
    %v2965 = vpop.permute.xlu0 %2964
    %2966 = vrot.lane.b32.xlu0 %v2961, 96
    %v2967 = vpop.permute.xlu0 %2966
    %v2968 = vsel %vm316, %v2965, 0
    %v2970 = vsel %vm316, %v2967, 0
    %2972 = vmatprep.subr.mxu0 0.0
    %2973 = vmatpush1.msra.mxu0 0.0
    %2974 = vmatprep.subr.mxu0 0.0
    %2975 = vmatpush1.msra.mxu0 0.0
    %2976 = vmatprep.subr.mxu0 0.0
    %2977 = vmatpush1.msra.mxu0 0.0
    %2978 = vmatprep.subr.mxu0 0.0
    %2979 = vmatpush1.msra.mxu0 0.0
    %2980 = vmatprep.subr.mxu0 0.0
    %2981 = vmatpush1.msra.mxu0 0.0
    %2982 = vmatprep.subr.mxu0 0.0
    %2983 = vmatpush1.msra.mxu0 0.0
    %2984 = vmatprep.subr.mxu0 0.0
    %2985 = vmatpush1.msra.mxu0 0.0
    %2986 = vmatprep.subr.mxu0 0.0
    %2987 = vmatpush1.msra.mxu0 0.0
    %2988 = vmatprep.subr.mxu0 0.0
    %2989 = vmatpush1.msra.mxu0 0.0
    %2990 = vmatprep.subr.mxu0 0.0
    %2991 = vmatpush1.msra.mxu0 0.0
    %2992 = vmatprep.subr.mxu0 0.0
    %2993 = vmatpush1.msra.mxu0 0.0
    %2994 = vmatprep.subr.mxu0 0.0
    %2995 = vmatpush1.msra.mxu0 0.0
    %2996 = vmatprep.subr.mxu0 %v49
    %2997 = vmatpush1.msra.mxu0 %v48
    %2998 = vmatprep.subr.mxu0 %v46
    %2999 = vmatpush1.msra.mxu0 %v45
    %3000 = vmatprep.subr.mxu0 %v43
    %3001 = vmatpush1.msra.mxu0 %v42
    %3002 = vmatprep.subr.mxu0 %v40
    %3003 = vmatpush1.msra.mxu0 %v39
    %3004 = vmatprep.subr.mxu0 0.0
    %3005 = vmatpush2.msra.mxu0 0.0
    %3006 = vmatprep.subr.mxu0 0.0
    %3007 = vmatpush2.msra.mxu0 0.0
    %3008 = vmatprep.subr.mxu0 0.0
    %3009 = vmatpush2.msra.mxu0 0.0
    %3010 = vmatprep.subr.mxu0 0.0
    %3011 = vmatpush2.msra.mxu0 0.0
    %3012 = vmatprep.subr.mxu0 0.0
    %3013 = vmatpush2.msra.mxu0 0.0
    %3014 = vmatprep.subr.mxu0 0.0
    %3015 = vmatpush2.msra.mxu0 0.0
    %3016 = vmatprep.subr.mxu0 0.0
    %3017 = vmatpush2.msra.mxu0 0.0
    %3018 = vmatprep.subr.mxu0 0.0
    %3019 = vmatpush2.msra.mxu0 0.0
    %3020 = vmatprep.subr.mxu0 0.0
    %3021 = vmatpush2.msra.mxu0 0.0
    %3022 = vmatprep.subr.mxu0 0.0
    %3023 = vmatpush2.msra.mxu0 0.0
    %3024 = vmatprep.subr.mxu0 0.0
    %3025 = vmatpush2.msra.mxu0 0.0
    %3026 = vmatprep.subr.mxu0 0.0
    %3027 = vmatpush2.msra.mxu0 0.0
    %3028 = vmatprep.subr.mxu0 0.0
    %3029 = vmatpush2.msra.mxu0 0.0
    %3030 = vmatprep.subr.mxu0 0.0
    %3031 = vmatpush2.msra.mxu0 0.0
    %3032 = vmatprep.subr.mxu0 0.0
    %3033 = vmatpush2.msra.mxu0 0.0
    %3034 = vmatprep.subr.mxu0 0.0
    %3035 = vmatpush2.msra.mxu0 0.0
    %3036 = vmatprep.mubr.f32.mxu0 0.0
    %3037 = vmatmul.mubr.f32.gmra.mxu0 %v2968
    %v3038 = vpop.f32.mrf.mxu0
    %v3039 = vadd.f32 0.0, %v3038
    %v3040 = vpop.f32.mrf.mxu0
    %v3041 = vadd.f32 0.0, %v3040
    %3042 = vmatprep.mubr.f32.mxu0 0.0
    %3043 = vmatmul.mubr.f32.gmra.mxu0 %v2970
    %v3044 = vpop.f32.mrf.mxu0
    %v3045 = vadd.f32 0.0, %v3044
    %v3046 = vpop.f32.mrf.mxu0
    %v3047 = vadd.f32 0.0, %v3046
    %3048 = vdwg.mxu0
    %3049 = vmatprep.subr.mxu0 0.0
    %3050 = vmatpush1.msra.mxu0 0.0
    %3051 = vmatprep.subr.mxu0 0.0
    %3052 = vmatpush1.msra.mxu0 0.0
    %3053 = vmatprep.subr.mxu0 0.0
    %3054 = vmatpush1.msra.mxu0 0.0
    %3055 = vmatprep.subr.mxu0 0.0
    %3056 = vmatpush1.msra.mxu0 0.0
    %3057 = vmatprep.subr.mxu0 0.0
    %3058 = vmatpush1.msra.mxu0 0.0
    %3059 = vmatprep.subr.mxu0 0.0
    %3060 = vmatpush1.msra.mxu0 0.0
    %3061 = vmatprep.subr.mxu0 0.0
    %3062 = vmatpush1.msra.mxu0 0.0
    %3063 = vmatprep.subr.mxu0 0.0
    %3064 = vmatpush1.msra.mxu0 0.0
    %3065 = vmatprep.subr.mxu0 0.0
    %3066 = vmatpush1.msra.mxu0 0.0
    %3067 = vmatprep.subr.mxu0 0.0
    %3068 = vmatpush1.msra.mxu0 0.0
    %3069 = vmatprep.subr.mxu0 0.0
    %3070 = vmatpush1.msra.mxu0 0.0
    %3071 = vmatprep.subr.mxu0 0.0
    %3072 = vmatpush1.msra.mxu0 0.0
    %3073 = vmatprep.subr.mxu0 0.0
    %3074 = vmatpush1.msra.mxu0 %v50
    %3075 = vmatprep.subr.mxu0 0.0
    %3076 = vmatpush1.msra.mxu0 %v47
    %3077 = vmatprep.subr.mxu0 0.0
    %3078 = vmatpush1.msra.mxu0 %v44
    %3079 = vmatprep.subr.mxu0 0.0
    %3080 = vmatpush1.msra.mxu0 %v41
    %3081 = vmatprep.subr.mxu0 0.0
    %3082 = vmatpush2.msra.mxu0 0.0
    %3083 = vmatprep.subr.mxu0 0.0
    %3084 = vmatpush2.msra.mxu0 0.0
    %3085 = vmatprep.subr.mxu0 0.0
    %3086 = vmatpush2.msra.mxu0 0.0
    %3087 = vmatprep.subr.mxu0 0.0
    %3088 = vmatpush2.msra.mxu0 0.0
    %3089 = vmatprep.subr.mxu0 0.0
    %3090 = vmatpush2.msra.mxu0 0.0
    %3091 = vmatprep.subr.mxu0 0.0
    %3092 = vmatpush2.msra.mxu0 0.0
    %3093 = vmatprep.subr.mxu0 0.0
    %3094 = vmatpush2.msra.mxu0 0.0
    %3095 = vmatprep.subr.mxu0 0.0
    %3096 = vmatpush2.msra.mxu0 0.0
    %3097 = vmatprep.subr.mxu0 0.0
    %3098 = vmatpush2.msra.mxu0 0.0
    %3099 = vmatprep.subr.mxu0 0.0
    %3100 = vmatpush2.msra.mxu0 0.0
    %3101 = vmatprep.subr.mxu0 0.0
    %3102 = vmatpush2.msra.mxu0 0.0
    %3103 = vmatprep.subr.mxu0 0.0
    %3104 = vmatpush2.msra.mxu0 0.0
    %3105 = vmatprep.subr.mxu0 0.0
    %3106 = vmatpush2.msra.mxu0 0.0
    %3107 = vmatprep.subr.mxu0 0.0
    %3108 = vmatpush2.msra.mxu0 0.0
    %3109 = vmatprep.subr.mxu0 0.0
    %3110 = vmatpush2.msra.mxu0 0.0
    %3111 = vmatprep.subr.mxu0 0.0
    %3112 = vmatpush2.msra.mxu0 0.0
    %3113 = vmatprep.mubr.f32.mxu0 0.0
    %3114 = vmatmul.mubr.f32.gmra.mxu0 %v2968
    %v3115 = vpop.f32.mrf.mxu0
    %v3116 = vadd.f32 0.0, %v3115
    %v3117 = vpop.f32.mrf.mxu0
    %3118 = vmatprep.mubr.f32.mxu0 0.0
    %3119 = vmatmul.mubr.f32.gmra.mxu0 %v2970
    %v3120 = vpop.f32.mrf.mxu0
    %v3121 = vadd.f32 0.0, %v3120
    %v3122 = vpop.f32.mrf.mxu0
    %3123 = vdwg.mxu0
    %v3124 = vadd.f32 %v2077, %v3039
    %v3125 = vadd.f32 %v2079, %v3041
    %v3126 = vadd.f32 %v2083, %v3045
    %v3127 = vadd.f32 %v2085, %v3047
    %v3128 = vtanh.pop %v3124
    %v3129 = vtanh.pop %v3125
    %v3130 = vtanh.pop %v3126
    %v3131 = vtanh.pop %v3127
    %3132 = vmatprep.subr.mxu0 %v222
    %3133 = vmatpush1.msra.mxu0 %v221
    %3134 = vmatprep.subr.mxu0 %v220
    %3135 = vmatpush1.msra.mxu0 %v219
    %3136 = vmatprep.subr.mxu0 %v218
    %3137 = vmatpush1.msra.mxu0 %v217
    %3138 = vmatprep.subr.mxu0 %v216
    %3139 = vmatpush1.msra.mxu0 %v215
    %3140 = vmatprep.subr.mxu0 %v214
    %3141 = vmatpush1.msra.mxu0 %v213
    %3142 = vmatprep.subr.mxu0 %v212
    %3143 = vmatpush1.msra.mxu0 %v211
    %3144 = vmatprep.subr.mxu0 %v210
    %3145 = vmatpush1.msra.mxu0 %v209
    %3146 = vmatprep.subr.mxu0 %v208
    %3147 = vmatpush1.msra.mxu0 %v207
    %3148 = vmatprep.subr.mxu0 %v206
    %3149 = vmatpush1.msra.mxu0 %v205
    %3150 = vmatprep.subr.mxu0 %v204
    %3151 = vmatpush1.msra.mxu0 %v203
    %3152 = vmatprep.subr.mxu0 %v202
    %3153 = vmatpush1.msra.mxu0 %v201
    %3154 = vmatprep.subr.mxu0 %v200
    %3155 = vmatpush1.msra.mxu0 %v199
    %3156 = vmatprep.subr.mxu0 %v198
    %3157 = vmatpush1.msra.mxu0 %v197
    %3158 = vmatprep.subr.mxu0 %v196
    %3159 = vmatpush1.msra.mxu0 %v195
    %3160 = vmatprep.subr.mxu0 %v194
    %3161 = vmatpush1.msra.mxu0 %v193
    %3162 = vmatprep.subr.mxu0 %v192
    %3163 = vmatpush1.msra.mxu0 %v191
    %3164 = vmatprep.subr.mxu0 %v254
    %3165 = vmatpush2.msra.mxu0 %v253
    %3166 = vmatprep.subr.mxu0 %v252
    %3167 = vmatpush2.msra.mxu0 %v251
    %3168 = vmatprep.subr.mxu0 %v250
    %3169 = vmatpush2.msra.mxu0 %v249
    %3170 = vmatprep.subr.mxu0 %v248
    %3171 = vmatpush2.msra.mxu0 %v247
    %3172 = vmatprep.subr.mxu0 %v246
    %3173 = vmatpush2.msra.mxu0 %v245
    %3174 = vmatprep.subr.mxu0 %v244
    %3175 = vmatpush2.msra.mxu0 %v243
    %3176 = vmatprep.subr.mxu0 %v242
    %3177 = vmatpush2.msra.mxu0 %v241
    %3178 = vmatprep.subr.mxu0 %v240
    %3179 = vmatpush2.msra.mxu0 %v239
    %3180 = vmatprep.subr.mxu0 %v238
    %3181 = vmatpush2.msra.mxu0 %v237
    %3182 = vmatprep.subr.mxu0 %v236
    %3183 = vmatpush2.msra.mxu0 %v235
    %3184 = vmatprep.subr.mxu0 %v234
    %3185 = vmatpush2.msra.mxu0 %v233
    %3186 = vmatprep.subr.mxu0 %v232
    %3187 = vmatpush2.msra.mxu0 %v231
    %3188 = vmatprep.subr.mxu0 %v230
    %3189 = vmatpush2.msra.mxu0 %v229
    %3190 = vmatprep.subr.mxu0 %v228
    %3191 = vmatpush2.msra.mxu0 %v227
    %3192 = vmatprep.subr.mxu0 %v226
    %3193 = vmatpush2.msra.mxu0 %v225
    %3194 = vmatprep.subr.mxu0 %v224
    %3195 = vmatpush2.msra.mxu0 %v223
    %3196 = vmatprep.mubr.f32.mxu0 %v3129
    %3197 = vmatmul.mubr.f32.gmra.mxu0 %v3128
    %v3198 = vpop.f32.mrf.mxu0
    %v3199 = vadd.f32 %v2284, %v3198
    %v3200 = vpop.f32.mrf.mxu0
    %v3201 = vadd.f32 %v2285, %v3200
    %3202 = vmatprep.mubr.f32.mxu0 %v3131
    %3203 = vmatmul.mubr.f32.gmra.mxu0 %v3130
    %v3204 = vpop.f32.mrf.mxu0
    %v3205 = vadd.f32 %v2286, %v3204
    %v3206 = vpop.f32.mrf.mxu0
    %v3207 = vadd.f32 %v2287, %v3206
    %3208 = vdwg.mxu0
    %v3209 = vmax.f32 %v3199, %v3201
    %3210 = vmax.xlane.f32.xlu0 %v3209
    %v3211 = vpop.xlane.xlu0 %3210
    %v3212 = vmax.f32 %v3205, %v3207
    %3213 = vmax.xlane.f32.xlu0 %v3212
    %v3214 = vpop.xlane.xlu0 %3213
    %v3215 = vsub.f32 %v3199, %v3211
    %v3216 = vsub.f32 %v3201, %v3211
    %v3217 = vsub.f32 %v3205, %v3214
    %v3218 = vsub.f32 %v3207, %v3214
    %v3219 = vmul.f32 %v3215, 1.442695
    %v3220 = vpow.pop %v3219
    %v3221 = vmul.f32 %v3216, 1.442695
    %v3222 = vpow.pop %v3221
    %v3223 = vmul.f32 %v3217, 1.442695
    %v3224 = vpow.pop %v3223
    %v3225 = vmul.f32 %v3218, 1.442695
    %v3226 = vpow.pop %v3225
    %v3227 = vadd.f32 %v3220, %v3222
    %3228 = vadd.xlane.f32.xlu0 %v3227
    %v3229 = vpop.xlane.xlu0 %3228
    %v3230 = vadd.f32 %v3224, %v3226
    %3231 = vadd.xlane.f32.xlu0 %v3230
    %v3232 = vpop.xlane.xlu0 %3231
    %v3233 = vrcp.pop %v3229
    %v3234 = vrcp.pop %v3232
    %v3235 = vmul.f32 %v3233, 32.0
    %v3236 = vmul.f32 %v3234, 32.0
    %v3237 = vmul.f32 %v3220, %v3235
    %v3238 = vmul.f32 %v3222, %v3235
    %v3239 = vmul.f32 %v3224, %v3236
    %v3240 = vmul.f32 %v3226, %v3236
    %v3241 = vmul.f32 %v3237, %v1904
    %v3242 = vmul.f32 %v3238, %v1905
    %v3243 = vmul.f32 %v3239, %v1906
    %v3244 = vmul.f32 %v3240, %v1907
    %3245 = vmatprep.subr.mxu0 0.0
    %3246 = vmatpush1.msra.mxu0 %v270
    %3247 = vmatprep.subr.mxu0 0.0
    %3248 = vmatpush1.msra.mxu0 %v269
    %3249 = vmatprep.subr.mxu0 0.0
    %3250 = vmatpush1.msra.mxu0 %v268
    %3251 = vmatprep.subr.mxu0 0.0
    %3252 = vmatpush1.msra.mxu0 %v267
    %3253 = vmatprep.subr.mxu0 0.0
    %3254 = vmatpush1.msra.mxu0 %v266
    %3255 = vmatprep.subr.mxu0 0.0
    %3256 = vmatpush1.msra.mxu0 %v265
    %3257 = vmatprep.subr.mxu0 0.0
    %3258 = vmatpush1.msra.mxu0 %v264
    %3259 = vmatprep.subr.mxu0 0.0
    %3260 = vmatpush1.msra.mxu0 %v263
    %3261 = vmatprep.subr.mxu0 0.0
    %3262 = vmatpush1.msra.mxu0 %v262
    %3263 = vmatprep.subr.mxu0 0.0
    %3264 = vmatpush1.msra.mxu0 %v261
    %3265 = vmatprep.subr.mxu0 0.0
    %3266 = vmatpush1.msra.mxu0 %v260
    %3267 = vmatprep.subr.mxu0 0.0
    %3268 = vmatpush1.msra.mxu0 %v259
    %3269 = vmatprep.subr.mxu0 0.0
    %3270 = vmatpush1.msra.mxu0 %v258
    %3271 = vmatprep.subr.mxu0 0.0
    %3272 = vmatpush1.msra.mxu0 %v257
    %3273 = vmatprep.subr.mxu0 0.0
    %3274 = vmatpush1.msra.mxu0 %v256
    %3275 = vmatprep.subr.mxu0 0.0
    %3276 = vmatpush1.msra.mxu0 %v255
    %3277 = vmatprep.subr.mxu0 0.0
    %3278 = vmatpush2.msra.mxu0 %v286
    %3279 = vmatprep.subr.mxu0 0.0
    %3280 = vmatpush2.msra.mxu0 %v285
    %3281 = vmatprep.subr.mxu0 0.0
    %3282 = vmatpush2.msra.mxu0 %v284
    %3283 = vmatprep.subr.mxu0 0.0
    %3284 = vmatpush2.msra.mxu0 %v283
    %3285 = vmatprep.subr.mxu0 0.0
    %3286 = vmatpush2.msra.mxu0 %v282
    %3287 = vmatprep.subr.mxu0 0.0
    %3288 = vmatpush2.msra.mxu0 %v281
    %3289 = vmatprep.subr.mxu0 0.0
    %3290 = vmatpush2.msra.mxu0 %v280
    %3291 = vmatprep.subr.mxu0 0.0
    %3292 = vmatpush2.msra.mxu0 %v279
    %3293 = vmatprep.subr.mxu0 0.0
    %3294 = vmatpush2.msra.mxu0 %v278
    %3295 = vmatprep.subr.mxu0 0.0
    %3296 = vmatpush2.msra.mxu0 %v277
    %3297 = vmatprep.subr.mxu0 0.0
    %3298 = vmatpush2.msra.mxu0 %v276
    %3299 = vmatprep.subr.mxu0 0.0
    %3300 = vmatpush2.msra.mxu0 %v275
    %3301 = vmatprep.subr.mxu0 0.0
    %3302 = vmatpush2.msra.mxu0 %v274
    %3303 = vmatprep.subr.mxu0 0.0
    %3304 = vmatpush2.msra.mxu0 %v273
    %3305 = vmatprep.subr.mxu0 0.0
    %3306 = vmatpush2.msra.mxu0 %v272
    %3307 = vmatprep.subr.mxu0 0.0
    %3308 = vmatpush2.msra.mxu0 %v271
    %3309 = vmatprep.mubr.f32.mxu0 %v3242
    %3310 = vmatmul.mubr.f32.gmra.mxu0 %v3241
    %v3311 = vpop.f32.mrf.mxu0
    %v3312 = vadd.f32 0.0, %v3311
    %v3313 = vpop.f32.mrf.mxu0
    %3314 = vmatprep.mubr.f32.mxu0 %v3244
    %3315 = vmatmul.mubr.f32.gmra.mxu0 %v3243
    %v3316 = vpop.f32.mrf.mxu0
    %v3317 = vadd.f32 0.0, %v3316
    %v3318 = vpop.f32.mrf.mxu0
    %3319 = vdwg.mxu0
    %3322 = vrot.lane.b32.xlu0 %v3116, 96
    %v3323 = vpop.permute.xlu0 %3322
    %3324 = vrot.lane.b32.xlu0 %v3121, 96
    %v3325 = vpop.permute.xlu0 %3324
    %v3328 = vadd.f32 %v2226, %v3323
    %v3329 = vadd.f32 %v2231, %v3325
    %3332 = vrot.lane.b32.xlu0 %v3312, 96
    %v3333 = vpop.permute.xlu0 %3332
    %3334 = vrot.lane.b32.xlu0 %v3317, 96
    %v3335 = vpop.permute.xlu0 %3334
    %v3338 = vadd.f32 %v3328, %v3333
    %v3339 = vadd.f32 %v3329, %v3335
    %3342 = vrot.lane.b32.xlu0 %v3338, 112
    %v3343 = vpop.permute.xlu0 %3342
    %3344 = vrot.lane.b32.xlu0 %v3339, 112
    %v3345 = vpop.permute.xlu0 %3344
    %v3348 = vmax.f32 %v3338, %v3343
    %v3349 = vmax.f32 %v3339, %v3345
    %3352 = vrot.lane.b32.xlu0 %v3348, 32
    %v3353 = vpop.permute.xlu0 %3352
    %3354 = vrot.lane.b32.xlu0 %v3349, 32
    %v3355 = vpop.permute.xlu0 %3354
    %s3358 = scalar_lea.vmem [#allocation3], 16
    %3359 = vst.msk [vmem:[%s3358] sm:$0xff] %vm654, %v3353
    %3360 = vst.msk [vmem:[%s3358 + $0x8] sm:$0xff] %vm654, %v3355
    %v3361 = vadd.f32 %v2236, %v3333
    %v3362 = vadd.f32 %v2241, %v3335
    %3363 = vmatprep.subr.mxu0 0.0
    %3364 = vmatpush1.msra.mxu0 0.0
    %3365 = vmatprep.subr.mxu0 0.0
    %3366 = vmatpush1.msra.mxu0 0.0
    %3367 = vmatprep.subr.mxu0 0.0
    %3368 = vmatpush1.msra.mxu0 0.0
    %3369 = vmatprep.subr.mxu0 0.0
    %3370 = vmatpush1.msra.mxu0 0.0
    %3371 = vmatprep.subr.mxu0 0.0
    %3372 = vmatpush1.msra.mxu0 0.0
    %3373 = vmatprep.subr.mxu0 0.0
    %3374 = vmatpush1.msra.mxu0 0.0
    %3375 = vmatprep.subr.mxu0 0.0
    %3376 = vmatpush1.msra.mxu0 0.0
    %3377 = vmatprep.subr.mxu0 0.0
    %3378 = vmatpush1.msra.mxu0 0.0
    %3379 = vmatprep.subr.mxu0 0.0
    %3380 = vmatpush1.msra.mxu0 0.0
    %3381 = vmatprep.subr.mxu0 0.0
    %3382 = vmatpush1.msra.mxu0 0.0
    %3383 = vmatprep.subr.mxu0 0.0
    %3384 = vmatpush1.msra.mxu0 0.0
    %3385 = vmatprep.subr.mxu0 0.0
    %3386 = vmatpush1.msra.mxu0 0.0
    %3387 = vmatprep.subr.mxu0 0.0
    %3388 = vmatpush1.msra.mxu0 %v38
    %3389 = vmatprep.subr.mxu0 0.0
    %3390 = vmatpush1.msra.mxu0 %v37
    %3391 = vmatprep.subr.mxu0 0.0
    %3392 = vmatpush1.msra.mxu0 %v36
    %3393 = vmatprep.subr.mxu0 0.0
    %3394 = vmatpush1.msra.mxu0 %v35
    %3395 = vmatprep.subr.mxu0 0.0
    %3396 = vmatpush2.msra.mxu0 0.0
    %3397 = vmatprep.subr.mxu0 0.0
    %3398 = vmatpush2.msra.mxu0 0.0
    %3399 = vmatprep.subr.mxu0 0.0
    %3400 = vmatpush2.msra.mxu0 0.0
    %3401 = vmatprep.subr.mxu0 0.0
    %3402 = vmatpush2.msra.mxu0 0.0
    %3403 = vmatprep.subr.mxu0 0.0
    %3404 = vmatpush2.msra.mxu0 0.0
    %3405 = vmatprep.subr.mxu0 0.0
    %3406 = vmatpush2.msra.mxu0 0.0
    %3407 = vmatprep.subr.mxu0 0.0
    %3408 = vmatpush2.msra.mxu0 0.0
    %3409 = vmatprep.subr.mxu0 0.0
    %3410 = vmatpush2.msra.mxu0 0.0
    %3411 = vmatprep.subr.mxu0 0.0
    %3412 = vmatpush2.msra.mxu0 0.0
    %3413 = vmatprep.subr.mxu0 0.0
    %3414 = vmatpush2.msra.mxu0 0.0
    %3415 = vmatprep.subr.mxu0 0.0
    %3416 = vmatpush2.msra.mxu0 0.0
    %3417 = vmatprep.subr.mxu0 0.0
    %3418 = vmatpush2.msra.mxu0 0.0
    %3419 = vmatprep.subr.mxu0 0.0
    %3420 = vmatpush2.msra.mxu0 0.0
    %3421 = vmatprep.subr.mxu0 0.0
    %3422 = vmatpush2.msra.mxu0 0.0
    %3423 = vmatprep.subr.mxu0 0.0
    %3424 = vmatpush2.msra.mxu0 0.0
    %3425 = vmatprep.subr.mxu0 0.0
    %3426 = vmatpush2.msra.mxu0 0.0
    %3427 = vmatprep.mubr.f32.mxu0 0.0
    %3428 = vmatmul.mubr.f32.gmra.mxu0 %v2968
    %v3429 = vpop.f32.mrf.mxu0
    %v3430 = vadd.f32 %v2294, %v3429
    %v3431 = vpop.f32.mrf.mxu0
    %3432 = vmatprep.mubr.f32.mxu0 0.0
    %3433 = vmatmul.mubr.f32.gmra.mxu0 %v2970
    %v3434 = vpop.f32.mrf.mxu0
    %v3435 = vadd.f32 %v2294, %v3434
    %v3436 = vpop.f32.mrf.mxu0
    %3437 = vdwg.mxu0
    %v3438 = vadd.f32 %v3361, %v3430
    %v3439 = vadd.f32 %v3362, %v3435
    %v3440 = vxor.u32 %v3438, 2147483648
    %v3441 = vxor.u32 %v3439, 2147483648
    %v3442 = vmul.f32 %v3440, 1.442695
    %v3443 = vpow.pop %v3442
    %v3444 = vmul.f32 %v3441, 1.442695
    %v3445 = vpow.pop %v3444
    %v3446 = vadd.f32 %v3443, 1.0
    %v3447 = vadd.f32 %v3445, 1.0
    %v3448 = vrcp.pop %v3446
    %v3449 = vmul.f32 1.0, %v3448
    %v3450 = vrcp.pop %v3447
    %v3451 = vmul.f32 1.0, %v3450
    %3454 = vrot.lane.b32.xlu0 %v3430, 64
    %v3455 = vpop.permute.xlu0 %3454
    %3456 = vrot.lane.b32.xlu0 %v3435, 64
    %v3457 = vpop.permute.xlu0 %3456
    %v3460 = vmul.f32 %v3449, %v3455
    %v3461 = vmul.f32 %v3451, %v3457
    %3464 = vrot.lane.b32.xlu0 %v3460, 64
    %v3465 = vpop.permute.xlu0 %3464
    %3466 = vrot.lane.b32.xlu0 %v3461, 64
    %v3467 = vpop.permute.xlu0 %3466
    %v3470 = vadd.f32 %v3361, %v3465
    %v3471 = vadd.f32 %v3362, %v3467
    %v3472 = vtanh.pop %v3470
    %v3473 = vtanh.pop %v3471
    %v3474 = vsub.f32 1.0, %v3449
    %v3475 = vsub.f32 1.0, %v3451
    %3478 = vrot.lane.b32.xlu0 %v3472, 96
    %v3479 = vpop.permute.xlu0 %3478
    %3480 = vrot.lane.b32.xlu0 %v3473, 96
    %v3481 = vpop.permute.xlu0 %3480
    %v3484 = vmul.f32 %v3474, %v3479
    %v3485 = vmul.f32 %v3475, %v3481
    %v3486 = vmul.f32 %v3449, %v2960
    %v3487 = vmul.f32 %v3451, %v2961
    %v3488 = vadd.f32 %v3484, %v3486
    %v3489 = vadd.f32 %v3485, %v3487
    %3492 = vrot.lane.b32.xlu0 %v3488, 96
    %v3493 = vpop.permute.xlu0 %3492
    %3494 = vrot.lane.b32.xlu0 %v3489, 96
    %v3495 = vpop.permute.xlu0 %3494
    %v3496 = vsel %vm316, %v3493, 0
    %v3498 = vsel %vm316, %v3495, 0
    %3500 = vmatprep.subr.mxu0 0.0
    %3501 = vmatpush1.msra.mxu0 0.0
    %3502 = vmatprep.subr.mxu0 0.0
    %3503 = vmatpush1.msra.mxu0 0.0
    %3504 = vmatprep.subr.mxu0 0.0
    %3505 = vmatpush1.msra.mxu0 0.0
    %3506 = vmatprep.subr.mxu0 0.0
    %3507 = vmatpush1.msra.mxu0 0.0
    %3508 = vmatprep.subr.mxu0 0.0
    %3509 = vmatpush1.msra.mxu0 0.0
    %3510 = vmatprep.subr.mxu0 0.0
    %3511 = vmatpush1.msra.mxu0 0.0
    %3512 = vmatprep.subr.mxu0 0.0
    %3513 = vmatpush1.msra.mxu0 0.0
    %3514 = vmatprep.subr.mxu0 0.0
    %3515 = vmatpush1.msra.mxu0 0.0
    %3516 = vmatprep.subr.mxu0 0.0
    %3517 = vmatpush1.msra.mxu0 0.0
    %3518 = vmatprep.subr.mxu0 0.0
    %3519 = vmatpush1.msra.mxu0 0.0
    %3520 = vmatprep.subr.mxu0 0.0
    %3521 = vmatpush1.msra.mxu0 0.0
    %3522 = vmatprep.subr.mxu0 0.0
    %3523 = vmatpush1.msra.mxu0 0.0
    %3524 = vmatprep.subr.mxu0 %v49
    %3525 = vmatpush1.msra.mxu0 %v48
    %3526 = vmatprep.subr.mxu0 %v46
    %3527 = vmatpush1.msra.mxu0 %v45
    %3528 = vmatprep.subr.mxu0 %v43
    %3529 = vmatpush1.msra.mxu0 %v42
    %3530 = vmatprep.subr.mxu0 %v40
    %3531 = vmatpush1.msra.mxu0 %v39
    %3532 = vmatprep.subr.mxu0 0.0
    %3533 = vmatpush2.msra.mxu0 0.0
    %3534 = vmatprep.subr.mxu0 0.0
    %3535 = vmatpush2.msra.mxu0 0.0
    %3536 = vmatprep.subr.mxu0 0.0
    %3537 = vmatpush2.msra.mxu0 0.0
    %3538 = vmatprep.subr.mxu0 0.0
    %3539 = vmatpush2.msra.mxu0 0.0
    %3540 = vmatprep.subr.mxu0 0.0
    %3541 = vmatpush2.msra.mxu0 0.0
    %3542 = vmatprep.subr.mxu0 0.0
    %3543 = vmatpush2.msra.mxu0 0.0
    %3544 = vmatprep.subr.mxu0 0.0
    %3545 = vmatpush2.msra.mxu0 0.0
    %3546 = vmatprep.subr.mxu0 0.0
    %3547 = vmatpush2.msra.mxu0 0.0
    %3548 = vmatprep.subr.mxu0 0.0
    %3549 = vmatpush2.msra.mxu0 0.0
    %3550 = vmatprep.subr.mxu0 0.0
    %3551 = vmatpush2.msra.mxu0 0.0
    %3552 = vmatprep.subr.mxu0 0.0
    %3553 = vmatpush2.msra.mxu0 0.0
    %3554 = vmatprep.subr.mxu0 0.0
    %3555 = vmatpush2.msra.mxu0 0.0
    %3556 = vmatprep.subr.mxu0 0.0
    %3557 = vmatpush2.msra.mxu0 0.0
    %3558 = vmatprep.subr.mxu0 0.0
    %3559 = vmatpush2.msra.mxu0 0.0
    %3560 = vmatprep.subr.mxu0 0.0
    %3561 = vmatpush2.msra.mxu0 0.0
    %3562 = vmatprep.subr.mxu0 0.0
    %3563 = vmatpush2.msra.mxu0 0.0
    %3564 = vmatprep.mubr.f32.mxu0 0.0
    %3565 = vmatmul.mubr.f32.gmra.mxu0 %v3496
    %v3566 = vpop.f32.mrf.mxu0
    %v3567 = vadd.f32 0.0, %v3566
    %v3568 = vpop.f32.mrf.mxu0
    %v3569 = vadd.f32 0.0, %v3568
    %3570 = vmatprep.mubr.f32.mxu0 0.0
    %3571 = vmatmul.mubr.f32.gmra.mxu0 %v3498
    %v3572 = vpop.f32.mrf.mxu0
    %v3573 = vadd.f32 0.0, %v3572
    %v3574 = vpop.f32.mrf.mxu0
    %v3575 = vadd.f32 0.0, %v3574
    %3576 = vdwg.mxu0
    %3577 = vmatprep.subr.mxu0 0.0
    %3578 = vmatpush1.msra.mxu0 0.0
    %3579 = vmatprep.subr.mxu0 0.0
    %3580 = vmatpush1.msra.mxu0 0.0
    %3581 = vmatprep.subr.mxu0 0.0
    %3582 = vmatpush1.msra.mxu0 0.0
    %3583 = vmatprep.subr.mxu0 0.0
    %3584 = vmatpush1.msra.mxu0 0.0
    %3585 = vmatprep.subr.mxu0 0.0
    %3586 = vmatpush1.msra.mxu0 0.0
    %3587 = vmatprep.subr.mxu0 0.0
    %3588 = vmatpush1.msra.mxu0 0.0
    %3589 = vmatprep.subr.mxu0 0.0
    %3590 = vmatpush1.msra.mxu0 0.0
    %3591 = vmatprep.subr.mxu0 0.0
    %3592 = vmatpush1.msra.mxu0 0.0
    %3593 = vmatprep.subr.mxu0 0.0
    %3594 = vmatpush1.msra.mxu0 0.0
    %3595 = vmatprep.subr.mxu0 0.0
    %3596 = vmatpush1.msra.mxu0 0.0
    %3597 = vmatprep.subr.mxu0 0.0
    %3598 = vmatpush1.msra.mxu0 0.0
    %3599 = vmatprep.subr.mxu0 0.0
    %3600 = vmatpush1.msra.mxu0 0.0
    %3601 = vmatprep.subr.mxu0 0.0
    %3602 = vmatpush1.msra.mxu0 %v50
    %3603 = vmatprep.subr.mxu0 0.0
    %3604 = vmatpush1.msra.mxu0 %v47
    %3605 = vmatprep.subr.mxu0 0.0
    %3606 = vmatpush1.msra.mxu0 %v44
    %3607 = vmatprep.subr.mxu0 0.0
    %3608 = vmatpush1.msra.mxu0 %v41
    %3609 = vmatprep.subr.mxu0 0.0
    %3610 = vmatpush2.msra.mxu0 0.0
    %3611 = vmatprep.subr.mxu0 0.0
    %3612 = vmatpush2.msra.mxu0 0.0
    %3613 = vmatprep.subr.mxu0 0.0
    %3614 = vmatpush2.msra.mxu0 0.0
    %3615 = vmatprep.subr.mxu0 0.0
    %3616 = vmatpush2.msra.mxu0 0.0
    %3617 = vmatprep.subr.mxu0 0.0
    %3618 = vmatpush2.msra.mxu0 0.0
    %3619 = vmatprep.subr.mxu0 0.0
    %3620 = vmatpush2.msra.mxu0 0.0
    %3621 = vmatprep.subr.mxu0 0.0
    %3622 = vmatpush2.msra.mxu0 0.0
    %3623 = vmatprep.subr.mxu0 0.0
    %3624 = vmatpush2.msra.mxu0 0.0
    %3625 = vmatprep.subr.mxu0 0.0
    %3626 = vmatpush2.msra.mxu0 0.0
    %3627 = vmatprep.subr.mxu0 0.0
    %3628 = vmatpush2.msra.mxu0 0.0
    %3629 = vmatprep.subr.mxu0 0.0
    %3630 = vmatpush2.msra.mxu0 0.0
    %3631 = vmatprep.subr.mxu0 0.0
    %3632 = vmatpush2.msra.mxu0 0.0
    %3633 = vmatprep.subr.mxu0 0.0
    %3634 = vmatpush2.msra.mxu0 0.0
    %3635 = vmatprep.subr.mxu0 0.0
    %3636 = vmatpush2.msra.mxu0 0.0
    %3637 = vmatprep.subr.mxu0 0.0
    %3638 = vmatpush2.msra.mxu0 0.0
    %3639 = vmatprep.subr.mxu0 0.0
    %3640 = vmatpush2.msra.mxu0 0.0
    %3641 = vmatprep.mubr.f32.mxu0 0.0
    %3642 = vmatmul.mubr.f32.gmra.mxu0 %v3496
    %v3643 = vpop.f32.mrf.mxu0
    %v3644 = vadd.f32 0.0, %v3643
    %v3645 = vpop.f32.mrf.mxu0
    %3646 = vmatprep.mubr.f32.mxu0 0.0
    %3647 = vmatmul.mubr.f32.gmra.mxu0 %v3498
    %v3648 = vpop.f32.mrf.mxu0
    %v3649 = vadd.f32 0.0, %v3648
    %v3650 = vpop.f32.mrf.mxu0
    %3651 = vdwg.mxu0
    %v3652 = vadd.f32 %v2077, %v3567
    %v3653 = vadd.f32 %v2079, %v3569
    %v3654 = vadd.f32 %v2083, %v3573
    %v3655 = vadd.f32 %v2085, %v3575
    %v3656 = vtanh.pop %v3652
    %v3657 = vtanh.pop %v3653
    %v3658 = vtanh.pop %v3654
    %v3659 = vtanh.pop %v3655
    %3660 = vmatprep.subr.mxu0 %v222
    %3661 = vmatpush1.msra.mxu0 %v221
    %3662 = vmatprep.subr.mxu0 %v220
    %3663 = vmatpush1.msra.mxu0 %v219
    %3664 = vmatprep.subr.mxu0 %v218
    %3665 = vmatpush1.msra.mxu0 %v217
    %3666 = vmatprep.subr.mxu0 %v216
    %3667 = vmatpush1.msra.mxu0 %v215
    %3668 = vmatprep.subr.mxu0 %v214
    %3669 = vmatpush1.msra.mxu0 %v213
    %3670 = vmatprep.subr.mxu0 %v212
    %3671 = vmatpush1.msra.mxu0 %v211
    %3672 = vmatprep.subr.mxu0 %v210
    %3673 = vmatpush1.msra.mxu0 %v209
    %3674 = vmatprep.subr.mxu0 %v208
    %3675 = vmatpush1.msra.mxu0 %v207
    %3676 = vmatprep.subr.mxu0 %v206
    %3677 = vmatpush1.msra.mxu0 %v205
    %3678 = vmatprep.subr.mxu0 %v204
    %3679 = vmatpush1.msra.mxu0 %v203
    %3680 = vmatprep.subr.mxu0 %v202
    %3681 = vmatpush1.msra.mxu0 %v201
    %3682 = vmatprep.subr.mxu0 %v200
    %3683 = vmatpush1.msra.mxu0 %v199
    %3684 = vmatprep.subr.mxu0 %v198
    %3685 = vmatpush1.msra.mxu0 %v197
    %3686 = vmatprep.subr.mxu0 %v196
    %3687 = vmatpush1.msra.mxu0 %v195
    %3688 = vmatprep.subr.mxu0 %v194
    %3689 = vmatpush1.msra.mxu0 %v193
    %3690 = vmatprep.subr.mxu0 %v192
    %3691 = vmatpush1.msra.mxu0 %v191
    %3692 = vmatprep.subr.mxu0 %v254
    %3693 = vmatpush2.msra.mxu0 %v253
    %3694 = vmatprep.subr.mxu0 %v252
    %3695 = vmatpush2.msra.mxu0 %v251
    %3696 = vmatprep.subr.mxu0 %v250
    %3697 = vmatpush2.msra.mxu0 %v249
    %3698 = vmatprep.subr.mxu0 %v248
    %3699 = vmatpush2.msra.mxu0 %v247
    %3700 = vmatprep.subr.mxu0 %v246
    %3701 = vmatpush2.msra.mxu0 %v245
    %3702 = vmatprep.subr.mxu0 %v244
    %3703 = vmatpush2.msra.mxu0 %v243
    %3704 = vmatprep.subr.mxu0 %v242
    %3705 = vmatpush2.msra.mxu0 %v241
    %3706 = vmatprep.subr.mxu0 %v240
    %3707 = vmatpush2.msra.mxu0 %v239
    %3708 = vmatprep.subr.mxu0 %v238
    %3709 = vmatpush2.msra.mxu0 %v237
    %3710 = vmatprep.subr.mxu0 %v236
    %3711 = vmatpush2.msra.mxu0 %v235
    %3712 = vmatprep.subr.mxu0 %v234
    %3713 = vmatpush2.msra.mxu0 %v233
    %3714 = vmatprep.subr.mxu0 %v232
    %3715 = vmatpush2.msra.mxu0 %v231
    %3716 = vmatprep.subr.mxu0 %v230
    %3717 = vmatpush2.msra.mxu0 %v229
    %3718 = vmatprep.subr.mxu0 %v228
    %3719 = vmatpush2.msra.mxu0 %v227
    %3720 = vmatprep.subr.mxu0 %v226
    %3721 = vmatpush2.msra.mxu0 %v225
    %3722 = vmatprep.subr.mxu0 %v224
    %3723 = vmatpush2.msra.mxu0 %v223
    %3724 = vmatprep.mubr.f32.mxu0 %v3657
    %3725 = vmatmul.mubr.f32.gmra.mxu0 %v3656
    %v3726 = vpop.f32.mrf.mxu0
    %v3727 = vadd.f32 %v2284, %v3726
    %v3728 = vpop.f32.mrf.mxu0
    %v3729 = vadd.f32 %v2285, %v3728
    %3730 = vmatprep.mubr.f32.mxu0 %v3659
    %3731 = vmatmul.mubr.f32.gmra.mxu0 %v3658
    %v3732 = vpop.f32.mrf.mxu0
    %v3733 = vadd.f32 %v2286, %v3732
    %v3734 = vpop.f32.mrf.mxu0
    %v3735 = vadd.f32 %v2287, %v3734
    %3736 = vdwg.mxu0
    %v3737 = vmax.f32 %v3727, %v3729
    %3738 = vmax.xlane.f32.xlu0 %v3737
    %v3739 = vpop.xlane.xlu0 %3738
    %v3740 = vmax.f32 %v3733, %v3735
    %3741 = vmax.xlane.f32.xlu0 %v3740
    %v3742 = vpop.xlane.xlu0 %3741
    %v3743 = vsub.f32 %v3727, %v3739
    %v3744 = vsub.f32 %v3729, %v3739
    %v3745 = vsub.f32 %v3733, %v3742
    %v3746 = vsub.f32 %v3735, %v3742
    %v3747 = vmul.f32 %v3743, 1.442695
    %v3748 = vpow.pop %v3747
    %v3749 = vmul.f32 %v3744, 1.442695
    %v3750 = vpow.pop %v3749
    %v3751 = vmul.f32 %v3745, 1.442695
    %v3752 = vpow.pop %v3751
    %v3753 = vmul.f32 %v3746, 1.442695
    %v3754 = vpow.pop %v3753
    %v3755 = vadd.f32 %v3748, %v3750
    %3756 = vadd.xlane.f32.xlu0 %v3755
    %v3757 = vpop.xlane.xlu0 %3756
    %v3758 = vadd.f32 %v3752, %v3754
    %3759 = vadd.xlane.f32.xlu0 %v3758
    %v3760 = vpop.xlane.xlu0 %3759
    %v3761 = vrcp.pop %v3757
    %v3762 = vrcp.pop %v3760
    %v3763 = vmul.f32 %v3761, 32.0
    %v3764 = vmul.f32 %v3762, 32.0
    %v3765 = vmul.f32 %v3748, %v3763
    %v3766 = vmul.f32 %v3750, %v3763
    %v3767 = vmul.f32 %v3752, %v3764
    %v3768 = vmul.f32 %v3754, %v3764
    %v3769 = vmul.f32 %v3765, %v1904
    %v3770 = vmul.f32 %v3766, %v1905
    %v3771 = vmul.f32 %v3767, %v1906
    %v3772 = vmul.f32 %v3768, %v1907
    %3773 = vmatprep.subr.mxu0 0.0
    %3774 = vmatpush1.msra.mxu0 %v270
    %3775 = vmatprep.subr.mxu0 0.0
    %3776 = vmatpush1.msra.mxu0 %v269
    %3777 = vmatprep.subr.mxu0 0.0
    %3778 = vmatpush1.msra.mxu0 %v268
    %3779 = vmatprep.subr.mxu0 0.0
    %3780 = vmatpush1.msra.mxu0 %v267
    %3781 = vmatprep.subr.mxu0 0.0
    %3782 = vmatpush1.msra.mxu0 %v266
    %3783 = vmatprep.subr.mxu0 0.0
    %3784 = vmatpush1.msra.mxu0 %v265
    %3785 = vmatprep.subr.mxu0 0.0
    %3786 = vmatpush1.msra.mxu0 %v264
    %3787 = vmatprep.subr.mxu0 0.0
    %3788 = vmatpush1.msra.mxu0 %v263
    %3789 = vmatprep.subr.mxu0 0.0
    %3790 = vmatpush1.msra.mxu0 %v262
    %3791 = vmatprep.subr.mxu0 0.0
    %3792 = vmatpush1.msra.mxu0 %v261
    %3793 = vmatprep.subr.mxu0 0.0
    %3794 = vmatpush1.msra.mxu0 %v260
    %3795 = vmatprep.subr.mxu0 0.0
    %3796 = vmatpush1.msra.mxu0 %v259
    %3797 = vmatprep.subr.mxu0 0.0
    %3798 = vmatpush1.msra.mxu0 %v258
    %3799 = vmatprep.subr.mxu0 0.0
    %3800 = vmatpush1.msra.mxu0 %v257
    %3801 = vmatprep.subr.mxu0 0.0
    %3802 = vmatpush1.msra.mxu0 %v256
    %3803 = vmatprep.subr.mxu0 0.0
    %3804 = vmatpush1.msra.mxu0 %v255
    %3805 = vmatprep.subr.mxu0 0.0
    %3806 = vmatpush2.msra.mxu0 %v286
    %3807 = vmatprep.subr.mxu0 0.0
    %3808 = vmatpush2.msra.mxu0 %v285
    %3809 = vmatprep.subr.mxu0 0.0
    %3810 = vmatpush2.msra.mxu0 %v284
    %3811 = vmatprep.subr.mxu0 0.0
    %3812 = vmatpush2.msra.mxu0 %v283
    %3813 = vmatprep.subr.mxu0 0.0
    %3814 = vmatpush2.msra.mxu0 %v282
    %3815 = vmatprep.subr.mxu0 0.0
    %3816 = vmatpush2.msra.mxu0 %v281
    %3817 = vmatprep.subr.mxu0 0.0
    %3818 = vmatpush2.msra.mxu0 %v280
    %3819 = vmatprep.subr.mxu0 0.0
    %3820 = vmatpush2.msra.mxu0 %v279
    %3821 = vmatprep.subr.mxu0 0.0
    %3822 = vmatpush2.msra.mxu0 %v278
    %3823 = vmatprep.subr.mxu0 0.0
    %3824 = vmatpush2.msra.mxu0 %v277
    %3825 = vmatprep.subr.mxu0 0.0
    %3826 = vmatpush2.msra.mxu0 %v276
    %3827 = vmatprep.subr.mxu0 0.0
    %3828 = vmatpush2.msra.mxu0 %v275
    %3829 = vmatprep.subr.mxu0 0.0
    %3830 = vmatpush2.msra.mxu0 %v274
    %3831 = vmatprep.subr.mxu0 0.0
    %3832 = vmatpush2.msra.mxu0 %v273
    %3833 = vmatprep.subr.mxu0 0.0
    %3834 = vmatpush2.msra.mxu0 %v272
    %3835 = vmatprep.subr.mxu0 0.0
    %3836 = vmatpush2.msra.mxu0 %v271
    %3837 = vmatprep.mubr.f32.mxu0 %v3770
    %3838 = vmatmul.mubr.f32.gmra.mxu0 %v3769
    %v3839 = vpop.f32.mrf.mxu0
    %v3840 = vadd.f32 0.0, %v3839
    %v3841 = vpop.f32.mrf.mxu0
    %3842 = vmatprep.mubr.f32.mxu0 %v3772
    %3843 = vmatmul.mubr.f32.gmra.mxu0 %v3771
    %v3844 = vpop.f32.mrf.mxu0
    %v3845 = vadd.f32 0.0, %v3844
    %v3846 = vpop.f32.mrf.mxu0
    %3847 = vdwg.mxu0
    %3850 = vrot.lane.b32.xlu0 %v3644, 96
    %v3851 = vpop.permute.xlu0 %3850
    %3852 = vrot.lane.b32.xlu0 %v3649, 96
    %v3853 = vpop.permute.xlu0 %3852
    %v3856 = vadd.f32 %v2236, %v3851
    %v3857 = vadd.f32 %v2241, %v3853
    %3860 = vrot.lane.b32.xlu0 %v3840, 96
    %v3861 = vpop.permute.xlu0 %3860
    %3862 = vrot.lane.b32.xlu0 %v3845, 96
    %v3863 = vpop.permute.xlu0 %3862
    %v3866 = vadd.f32 %v3856, %v3861
    %v3867 = vadd.f32 %v3857, %v3863
    %3870 = vrot.lane.b32.xlu0 %v3866, 112
    %v3871 = vpop.permute.xlu0 %3870
    %3872 = vrot.lane.b32.xlu0 %v3867, 112
    %v3873 = vpop.permute.xlu0 %3872
    %v3876 = vmax.f32 %v3866, %v3871
    %v3877 = vmax.f32 %v3867, %v3873
    %3880 = vrot.lane.b32.xlu0 %v3876, 32
    %v3881 = vpop.permute.xlu0 %3880
    %3882 = vrot.lane.b32.xlu0 %v3877, 32
    %v3883 = vpop.permute.xlu0 %3882
    %s3886 = scalar_lea.vmem [#allocation3], 32
    %3887 = vst.msk [vmem:[%s3886] sm:$0xff] %vm654, %v3881
    %3888 = vst.msk [vmem:[%s3886 + $0x8] sm:$0xff] %vm654, %v3883
    %v3889 = vadd.f32 %v2246, %v3861
    %v3890 = vadd.f32 %v2251, %v3863
    %3891 = vmatprep.subr.mxu0 0.0
    %3892 = vmatpush1.msra.mxu0 0.0
    %3893 = vmatprep.subr.mxu0 0.0
    %3894 = vmatpush1.msra.mxu0 0.0
    %3895 = vmatprep.subr.mxu0 0.0
    %3896 = vmatpush1.msra.mxu0 0.0
    %3897 = vmatprep.subr.mxu0 0.0
    %3898 = vmatpush1.msra.mxu0 0.0
    %3899 = vmatprep.subr.mxu0 0.0
    %3900 = vmatpush1.msra.mxu0 0.0
    %3901 = vmatprep.subr.mxu0 0.0
    %3902 = vmatpush1.msra.mxu0 0.0
    %3903 = vmatprep.subr.mxu0 0.0
    %3904 = vmatpush1.msra.mxu0 0.0
    %3905 = vmatprep.subr.mxu0 0.0
    %3906 = vmatpush1.msra.mxu0 0.0
    %3907 = vmatprep.subr.mxu0 0.0
    %3908 = vmatpush1.msra.mxu0 0.0
    %3909 = vmatprep.subr.mxu0 0.0
    %3910 = vmatpush1.msra.mxu0 0.0
    %3911 = vmatprep.subr.mxu0 0.0
    %3912 = vmatpush1.msra.mxu0 0.0
    %3913 = vmatprep.subr.mxu0 0.0
    %3914 = vmatpush1.msra.mxu0 0.0
    %3915 = vmatprep.subr.mxu0 0.0
    %3916 = vmatpush1.msra.mxu0 %v38
    %3917 = vmatprep.subr.mxu0 0.0
    %3918 = vmatpush1.msra.mxu0 %v37
    %3919 = vmatprep.subr.mxu0 0.0
    %3920 = vmatpush1.msra.mxu0 %v36
    %3921 = vmatprep.subr.mxu0 0.0
    %3922 = vmatpush1.msra.mxu0 %v35
    %3923 = vmatprep.subr.mxu0 0.0
    %3924 = vmatpush2.msra.mxu0 0.0
    %3925 = vmatprep.subr.mxu0 0.0
    %3926 = vmatpush2.msra.mxu0 0.0
    %3927 = vmatprep.subr.mxu0 0.0
    %3928 = vmatpush2.msra.mxu0 0.0
    %3929 = vmatprep.subr.mxu0 0.0
    %3930 = vmatpush2.msra.mxu0 0.0
    %3931 = vmatprep.subr.mxu0 0.0
    %3932 = vmatpush2.msra.mxu0 0.0
    %3933 = vmatprep.subr.mxu0 0.0
    %3934 = vmatpush2.msra.mxu0 0.0
    %3935 = vmatprep.subr.mxu0 0.0
    %3936 = vmatpush2.msra.mxu0 0.0
    %3937 = vmatprep.subr.mxu0 0.0
    %3938 = vmatpush2.msra.mxu0 0.0
    %3939 = vmatprep.subr.mxu0 0.0
    %3940 = vmatpush2.msra.mxu0 0.0
    %3941 = vmatprep.subr.mxu0 0.0
    %3942 = vmatpush2.msra.mxu0 0.0
    %3943 = vmatprep.subr.mxu0 0.0
    %3944 = vmatpush2.msra.mxu0 0.0
    %3945 = vmatprep.subr.mxu0 0.0
    %3946 = vmatpush2.msra.mxu0 0.0
    %3947 = vmatprep.subr.mxu0 0.0
    %3948 = vmatpush2.msra.mxu0 0.0
    %3949 = vmatprep.subr.mxu0 0.0
    %3950 = vmatpush2.msra.mxu0 0.0
    %3951 = vmatprep.subr.mxu0 0.0
    %3952 = vmatpush2.msra.mxu0 0.0
    %3953 = vmatprep.subr.mxu0 0.0
    %3954 = vmatpush2.msra.mxu0 0.0
    %3955 = vmatprep.mubr.f32.mxu0 0.0
    %3956 = vmatmul.mubr.f32.gmra.mxu0 %v3496
    %v3957 = vpop.f32.mrf.mxu0
    %v3958 = vadd.f32 %v2294, %v3957
    %v3959 = vpop.f32.mrf.mxu0
    %3960 = vmatprep.mubr.f32.mxu0 0.0
    %3961 = vmatmul.mubr.f32.gmra.mxu0 %v3498
    %v3962 = vpop.f32.mrf.mxu0
    %v3963 = vadd.f32 %v2294, %v3962
    %v3964 = vpop.f32.mrf.mxu0
    %3965 = vdwg.mxu0
    %v3966 = vadd.f32 %v3889, %v3958
    %v3967 = vadd.f32 %v3890, %v3963
    %v3968 = vxor.u32 %v3966, 2147483648
    %v3969 = vxor.u32 %v3967, 2147483648
    %v3970 = vmul.f32 %v3968, 1.442695
    %v3971 = vpow.pop %v3970
    %v3972 = vmul.f32 %v3969, 1.442695
    %v3973 = vpow.pop %v3972
    %v3974 = vadd.f32 %v3971, 1.0
    %v3975 = vadd.f32 %v3973, 1.0
    %v3976 = vrcp.pop %v3974
    %v3977 = vmul.f32 1.0, %v3976
    %v3978 = vrcp.pop %v3975
    %v3979 = vmul.f32 1.0, %v3978
    %3982 = vrot.lane.b32.xlu0 %v3958, 64
    %v3983 = vpop.permute.xlu0 %3982
    %3984 = vrot.lane.b32.xlu0 %v3963, 64
    %v3985 = vpop.permute.xlu0 %3984
    %v3988 = vmul.f32 %v3977, %v3983
    %v3989 = vmul.f32 %v3979, %v3985
    %3992 = vrot.lane.b32.xlu0 %v3988, 64
    %v3993 = vpop.permute.xlu0 %3992
    %3994 = vrot.lane.b32.xlu0 %v3989, 64
    %v3995 = vpop.permute.xlu0 %3994
    %v3998 = vadd.f32 %v3889, %v3993
    %v3999 = vadd.f32 %v3890, %v3995
    %v4000 = vtanh.pop %v3998
    %v4001 = vtanh.pop %v3999
    %v4002 = vsub.f32 1.0, %v3977
    %v4003 = vsub.f32 1.0, %v3979
    %4006 = vrot.lane.b32.xlu0 %v4000, 96
    %v4007 = vpop.permute.xlu0 %4006
    %4008 = vrot.lane.b32.xlu0 %v4001, 96
    %v4009 = vpop.permute.xlu0 %4008
    %v4012 = vmul.f32 %v4002, %v4007
    %v4013 = vmul.f32 %v4003, %v4009
    %v4014 = vmul.f32 %v3977, %v3488
    %v4015 = vmul.f32 %v3979, %v3489
    %v4016 = vadd.f32 %v4012, %v4014
    %v4017 = vadd.f32 %v4013, %v4015
    %4020 = vrot.lane.b32.xlu0 %v4016, 96
    %v4021 = vpop.permute.xlu0 %4020
    %4022 = vrot.lane.b32.xlu0 %v4017, 96
    %v4023 = vpop.permute.xlu0 %4022
    %v4024 = vsel %vm316, %v4021, 0
    %v4026 = vsel %vm316, %v4023, 0
    %4028 = vmatprep.subr.mxu0 0.0
    %4029 = vmatpush1.msra.mxu0 0.0
    %4030 = vmatprep.subr.mxu0 0.0
    %4031 = vmatpush1.msra.mxu0 0.0
    %4032 = vmatprep.subr.mxu0 0.0
    %4033 = vmatpush1.msra.mxu0 0.0
    %4034 = vmatprep.subr.mxu0 0.0
    %4035 = vmatpush1.msra.mxu0 0.0
    %4036 = vmatprep.subr.mxu0 0.0
    %4037 = vmatpush1.msra.mxu0 0.0
    %4038 = vmatprep.subr.mxu0 0.0
    %4039 = vmatpush1.msra.mxu0 0.0
    %4040 = vmatprep.subr.mxu0 0.0
    %4041 = vmatpush1.msra.mxu0 0.0
    %4042 = vmatprep.subr.mxu0 0.0
    %4043 = vmatpush1.msra.mxu0 0.0
    %4044 = vmatprep.subr.mxu0 0.0
    %4045 = vmatpush1.msra.mxu0 0.0
    %4046 = vmatprep.subr.mxu0 0.0
    %4047 = vmatpush1.msra.mxu0 0.0
    %4048 = vmatprep.subr.mxu0 0.0
    %4049 = vmatpush1.msra.mxu0 0.0
    %4050 = vmatprep.subr.mxu0 0.0
    %4051 = vmatpush1.msra.mxu0 0.0
    %4052 = vmatprep.subr.mxu0 %v49
    %4053 = vmatpush1.msra.mxu0 %v48
    %4054 = vmatprep.subr.mxu0 %v46
    %4055 = vmatpush1.msra.mxu0 %v45
    %4056 = vmatprep.subr.mxu0 %v43
    %4057 = vmatpush1.msra.mxu0 %v42
    %4058 = vmatprep.subr.mxu0 %v40
    %4059 = vmatpush1.msra.mxu0 %v39
    %4060 = vmatprep.subr.mxu0 0.0
    %4061 = vmatpush2.msra.mxu0 0.0
    %4062 = vmatprep.subr.mxu0 0.0
    %4063 = vmatpush2.msra.mxu0 0.0
    %4064 = vmatprep.subr.mxu0 0.0
    %4065 = vmatpush2.msra.mxu0 0.0
    %4066 = vmatprep.subr.mxu0 0.0
    %4067 = vmatpush2.msra.mxu0 0.0
    %4068 = vmatprep.subr.mxu0 0.0
    %4069 = vmatpush2.msra.mxu0 0.0
    %4070 = vmatprep.subr.mxu0 0.0
    %4071 = vmatpush2.msra.mxu0 0.0
    %4072 = vmatprep.subr.mxu0 0.0
    %4073 = vmatpush2.msra.mxu0 0.0
    %4074 = vmatprep.subr.mxu0 0.0
    %4075 = vmatpush2.msra.mxu0 0.0
    %4076 = vmatprep.subr.mxu0 0.0
    %4077 = vmatpush2.msra.mxu0 0.0
    %4078 = vmatprep.subr.mxu0 0.0
    %4079 = vmatpush2.msra.mxu0 0.0
    %4080 = vmatprep.subr.mxu0 0.0
    %4081 = vmatpush2.msra.mxu0 0.0
    %4082 = vmatprep.subr.mxu0 0.0
    %4083 = vmatpush2.msra.mxu0 0.0
    %4084 = vmatprep.subr.mxu0 0.0
    %4085 = vmatpush2.msra.mxu0 0.0
    %4086 = vmatprep.subr.mxu0 0.0
    %4087 = vmatpush2.msra.mxu0 0.0
    %4088 = vmatprep.subr.mxu0 0.0
    %4089 = vmatpush2.msra.mxu0 0.0
    %4090 = vmatprep.subr.mxu0 0.0
    %4091 = vmatpush2.msra.mxu0 0.0
    %4092 = vmatprep.mubr.f32.mxu0 0.0
    %4093 = vmatmul.mubr.f32.gmra.mxu0 %v4024
    %v4094 = vpop.f32.mrf.mxu0
    %v4095 = vadd.f32 0.0, %v4094
    %v4096 = vpop.f32.mrf.mxu0
    %v4097 = vadd.f32 0.0, %v4096
    %4098 = vmatprep.mubr.f32.mxu0 0.0
    %4099 = vmatmul.mubr.f32.gmra.mxu0 %v4026
    %v4100 = vpop.f32.mrf.mxu0
    %v4101 = vadd.f32 0.0, %v4100
    %v4102 = vpop.f32.mrf.mxu0
    %v4103 = vadd.f32 0.0, %v4102
    %4104 = vdwg.mxu0
    %4105 = vmatprep.subr.mxu0 0.0
    %4106 = vmatpush1.msra.mxu0 0.0
    %4107 = vmatprep.subr.mxu0 0.0
    %4108 = vmatpush1.msra.mxu0 0.0
    %4109 = vmatprep.subr.mxu0 0.0
    %4110 = vmatpush1.msra.mxu0 0.0
    %4111 = vmatprep.subr.mxu0 0.0
    %4112 = vmatpush1.msra.mxu0 0.0
    %4113 = vmatprep.subr.mxu0 0.0
    %4114 = vmatpush1.msra.mxu0 0.0
    %4115 = vmatprep.subr.mxu0 0.0
    %4116 = vmatpush1.msra.mxu0 0.0
    %4117 = vmatprep.subr.mxu0 0.0
    %4118 = vmatpush1.msra.mxu0 0.0
    %4119 = vmatprep.subr.mxu0 0.0
    %4120 = vmatpush1.msra.mxu0 0.0
    %4121 = vmatprep.subr.mxu0 0.0
    %4122 = vmatpush1.msra.mxu0 0.0
    %4123 = vmatprep.subr.mxu0 0.0
    %4124 = vmatpush1.msra.mxu0 0.0
    %4125 = vmatprep.subr.mxu0 0.0
    %4126 = vmatpush1.msra.mxu0 0.0
    %4127 = vmatprep.subr.mxu0 0.0
    %4128 = vmatpush1.msra.mxu0 0.0
    %4129 = vmatprep.subr.mxu0 0.0
    %4130 = vmatpush1.msra.mxu0 %v50
    %4131 = vmatprep.subr.mxu0 0.0
    %4132 = vmatpush1.msra.mxu0 %v47
    %4133 = vmatprep.subr.mxu0 0.0
    %4134 = vmatpush1.msra.mxu0 %v44
    %4135 = vmatprep.subr.mxu0 0.0
    %4136 = vmatpush1.msra.mxu0 %v41
    %4137 = vmatprep.subr.mxu0 0.0
    %4138 = vmatpush2.msra.mxu0 0.0
    %4139 = vmatprep.subr.mxu0 0.0
    %4140 = vmatpush2.msra.mxu0 0.0
    %4141 = vmatprep.subr.mxu0 0.0
    %4142 = vmatpush2.msra.mxu0 0.0
    %4143 = vmatprep.subr.mxu0 0.0
    %4144 = vmatpush2.msra.mxu0 0.0
    %4145 = vmatprep.subr.mxu0 0.0
    %4146 = vmatpush2.msra.mxu0 0.0
    %4147 = vmatprep.subr.mxu0 0.0
    %4148 = vmatpush2.msra.mxu0 0.0
    %4149 = vmatprep.subr.mxu0 0.0
    %4150 = vmatpush2.msra.mxu0 0.0
    %4151 = vmatprep.subr.mxu0 0.0
    %4152 = vmatpush2.msra.mxu0 0.0
    %4153 = vmatprep.subr.mxu0 0.0
    %4154 = vmatpush2.msra.mxu0 0.0
    %4155 = vmatprep.subr.mxu0 0.0
    %4156 = vmatpush2.msra.mxu0 0.0
    %4157 = vmatprep.subr.mxu0 0.0
    %4158 = vmatpush2.msra.mxu0 0.0
    %4159 = vmatprep.subr.mxu0 0.0
    %4160 = vmatpush2.msra.mxu0 0.0
    %4161 = vmatprep.subr.mxu0 0.0
    %4162 = vmatpush2.msra.mxu0 0.0
    %4163 = vmatprep.subr.mxu0 0.0
    %4164 = vmatpush2.msra.mxu0 0.0
    %4165 = vmatprep.subr.mxu0 0.0
    %4166 = vmatpush2.msra.mxu0 0.0
    %4167 = vmatprep.subr.mxu0 0.0
    %4168 = vmatpush2.msra.mxu0 0.0
    %4169 = vmatprep.mubr.f32.mxu0 0.0
    %4170 = vmatmul.mubr.f32.gmra.mxu0 %v4024
    %v4171 = vpop.f32.mrf.mxu0
    %v4172 = vadd.f32 0.0, %v4171
    %v4173 = vpop.f32.mrf.mxu0
    %4174 = vmatprep.mubr.f32.mxu0 0.0
    %4175 = vmatmul.mubr.f32.gmra.mxu0 %v4026
    %v4176 = vpop.f32.mrf.mxu0
    %v4177 = vadd.f32 0.0, %v4176
    %v4178 = vpop.f32.mrf.mxu0
    %4179 = vdwg.mxu0
    %v4180 = vadd.f32 %v2077, %v4095
    %v4181 = vadd.f32 %v2079, %v4097
    %v4182 = vadd.f32 %v2083, %v4101
    %v4183 = vadd.f32 %v2085, %v4103
    %v4184 = vtanh.pop %v4180
    %v4185 = vtanh.pop %v4181
    %v4186 = vtanh.pop %v4182
    %v4187 = vtanh.pop %v4183
    %4188 = vmatprep.subr.mxu0 %v222
    %4189 = vmatpush1.msra.mxu0 %v221
    %4190 = vmatprep.subr.mxu0 %v220
    %4191 = vmatpush1.msra.mxu0 %v219
    %4192 = vmatprep.subr.mxu0 %v218
    %4193 = vmatpush1.msra.mxu0 %v217
    %4194 = vmatprep.subr.mxu0 %v216
    %4195 = vmatpush1.msra.mxu0 %v215
    %4196 = vmatprep.subr.mxu0 %v214
    %4197 = vmatpush1.msra.mxu0 %v213
    %4198 = vmatprep.subr.mxu0 %v212
    %4199 = vmatpush1.msra.mxu0 %v211
    %4200 = vmatprep.subr.mxu0 %v210
    %4201 = vmatpush1.msra.mxu0 %v209
    %4202 = vmatprep.subr.mxu0 %v208
    %4203 = vmatpush1.msra.mxu0 %v207
    %4204 = vmatprep.subr.mxu0 %v206
    %4205 = vmatpush1.msra.mxu0 %v205
    %4206 = vmatprep.subr.mxu0 %v204
    %4207 = vmatpush1.msra.mxu0 %v203
    %4208 = vmatprep.subr.mxu0 %v202
    %4209 = vmatpush1.msra.mxu0 %v201
    %4210 = vmatprep.subr.mxu0 %v200
    %4211 = vmatpush1.msra.mxu0 %v199
    %4212 = vmatprep.subr.mxu0 %v198
    %4213 = vmatpush1.msra.mxu0 %v197
    %4214 = vmatprep.subr.mxu0 %v196
    %4215 = vmatpush1.msra.mxu0 %v195
    %4216 = vmatprep.subr.mxu0 %v194
    %4217 = vmatpush1.msra.mxu0 %v193
    %4218 = vmatprep.subr.mxu0 %v192
    %4219 = vmatpush1.msra.mxu0 %v191
    %4220 = vmatprep.subr.mxu0 %v254
    %4221 = vmatpush2.msra.mxu0 %v253
    %4222 = vmatprep.subr.mxu0 %v252
    %4223 = vmatpush2.msra.mxu0 %v251
    %4224 = vmatprep.subr.mxu0 %v250
    %4225 = vmatpush2.msra.mxu0 %v249
    %4226 = vmatprep.subr.mxu0 %v248
    %4227 = vmatpush2.msra.mxu0 %v247
    %4228 = vmatprep.subr.mxu0 %v246
    %4229 = vmatpush2.msra.mxu0 %v245
    %4230 = vmatprep.subr.mxu0 %v244
    %4231 = vmatpush2.msra.mxu0 %v243
    %4232 = vmatprep.subr.mxu0 %v242
    %4233 = vmatpush2.msra.mxu0 %v241
    %4234 = vmatprep.subr.mxu0 %v240
    %4235 = vmatpush2.msra.mxu0 %v239
    %4236 = vmatprep.subr.mxu0 %v238
    %4237 = vmatpush2.msra.mxu0 %v237
    %4238 = vmatprep.subr.mxu0 %v236
    %4239 = vmatpush2.msra.mxu0 %v235
    %4240 = vmatprep.subr.mxu0 %v234
    %4241 = vmatpush2.msra.mxu0 %v233
    %4242 = vmatprep.subr.mxu0 %v232
    %4243 = vmatpush2.msra.mxu0 %v231
    %4244 = vmatprep.subr.mxu0 %v230
    %4245 = vmatpush2.msra.mxu0 %v229
    %4246 = vmatprep.subr.mxu0 %v228
    %4247 = vmatpush2.msra.mxu0 %v227
    %4248 = vmatprep.subr.mxu0 %v226
    %4249 = vmatpush2.msra.mxu0 %v225
    %4250 = vmatprep.subr.mxu0 %v224
    %4251 = vmatpush2.msra.mxu0 %v223
    %4252 = vmatprep.mubr.f32.mxu0 %v4185
    %4253 = vmatmul.mubr.f32.gmra.mxu0 %v4184
    %v4254 = vpop.f32.mrf.mxu0
    %v4255 = vadd.f32 %v2284, %v4254
    %v4256 = vpop.f32.mrf.mxu0
    %v4257 = vadd.f32 %v2285, %v4256
    %4258 = vmatprep.mubr.f32.mxu0 %v4187
    %4259 = vmatmul.mubr.f32.gmra.mxu0 %v4186
    %v4260 = vpop.f32.mrf.mxu0
    %v4261 = vadd.f32 %v2286, %v4260
    %v4262 = vpop.f32.mrf.mxu0
    %v4263 = vadd.f32 %v2287, %v4262
    %4264 = vdwg.mxu0
    %v4265 = vmax.f32 %v4255, %v4257
    %4266 = vmax.xlane.f32.xlu0 %v4265
    %v4267 = vpop.xlane.xlu0 %4266
    %v4268 = vmax.f32 %v4261, %v4263
    %4269 = vmax.xlane.f32.xlu0 %v4268
    %v4270 = vpop.xlane.xlu0 %4269
    %v4271 = vsub.f32 %v4255, %v4267
    %v4272 = vsub.f32 %v4257, %v4267
    %v4273 = vsub.f32 %v4261, %v4270
    %v4274 = vsub.f32 %v4263, %v4270
    %v4275 = vmul.f32 %v4271, 1.442695
    %v4276 = vpow.pop %v4275
    %v4277 = vmul.f32 %v4272, 1.442695
    %v4278 = vpow.pop %v4277
    %v4279 = vmul.f32 %v4273, 1.442695
    %v4280 = vpow.pop %v4279
    %v4281 = vmul.f32 %v4274, 1.442695
    %v4282 = vpow.pop %v4281
    %v4283 = vadd.f32 %v4276, %v4278
    %4284 = vadd.xlane.f32.xlu0 %v4283
    %v4285 = vpop.xlane.xlu0 %4284
    %v4286 = vadd.f32 %v4280, %v4282
    %4287 = vadd.xlane.f32.xlu0 %v4286
    %v4288 = vpop.xlane.xlu0 %4287
    %v4289 = vrcp.pop %v4285
    %v4290 = vrcp.pop %v4288
    %v4291 = vmul.f32 %v4289, 32.0
    %v4292 = vmul.f32 %v4290, 32.0
    %v4293 = vmul.f32 %v4276, %v4291
    %v4294 = vmul.f32 %v4278, %v4291
    %v4295 = vmul.f32 %v4280, %v4292
    %v4296 = vmul.f32 %v4282, %v4292
    %v4297 = vmul.f32 %v4293, %v1904
    %v4298 = vmul.f32 %v4294, %v1905
    %v4299 = vmul.f32 %v4295, %v1906
    %v4300 = vmul.f32 %v4296, %v1907
    %4301 = vmatprep.subr.mxu0 0.0
    %4302 = vmatpush1.msra.mxu0 %v270
    %4303 = vmatprep.subr.mxu0 0.0
    %4304 = vmatpush1.msra.mxu0 %v269
    %4305 = vmatprep.subr.mxu0 0.0
    %4306 = vmatpush1.msra.mxu0 %v268
    %4307 = vmatprep.subr.mxu0 0.0
    %4308 = vmatpush1.msra.mxu0 %v267
    %4309 = vmatprep.subr.mxu0 0.0
    %4310 = vmatpush1.msra.mxu0 %v266
    %4311 = vmatprep.subr.mxu0 0.0
    %4312 = vmatpush1.msra.mxu0 %v265
    %4313 = vmatprep.subr.mxu0 0.0
    %4314 = vmatpush1.msra.mxu0 %v264
    %4315 = vmatprep.subr.mxu0 0.0
    %4316 = vmatpush1.msra.mxu0 %v263
    %4317 = vmatprep.subr.mxu0 0.0
    %4318 = vmatpush1.msra.mxu0 %v262
    %4319 = vmatprep.subr.mxu0 0.0
    %4320 = vmatpush1.msra.mxu0 %v261
    %4321 = vmatprep.subr.mxu0 0.0
    %4322 = vmatpush1.msra.mxu0 %v260
    %4323 = vmatprep.subr.mxu0 0.0
    %4324 = vmatpush1.msra.mxu0 %v259
    %4325 = vmatprep.subr.mxu0 0.0
    %4326 = vmatpush1.msra.mxu0 %v258
    %4327 = vmatprep.subr.mxu0 0.0
    %4328 = vmatpush1.msra.mxu0 %v257
    %4329 = vmatprep.subr.mxu0 0.0
    %4330 = vmatpush1.msra.mxu0 %v256
    %4331 = vmatprep.subr.mxu0 0.0
    %4332 = vmatpush1.msra.mxu0 %v255
    %4333 = vmatprep.subr.mxu0 0.0
    %4334 = vmatpush2.msra.mxu0 %v286
    %4335 = vmatprep.subr.mxu0 0.0
    %4336 = vmatpush2.msra.mxu0 %v285
    %4337 = vmatprep.subr.mxu0 0.0
    %4338 = vmatpush2.msra.mxu0 %v284
    %4339 = vmatprep.subr.mxu0 0.0
    %4340 = vmatpush2.msra.mxu0 %v283
    %4341 = vmatprep.subr.mxu0 0.0
    %4342 = vmatpush2.msra.mxu0 %v282
    %4343 = vmatprep.subr.mxu0 0.0
    %4344 = vmatpush2.msra.mxu0 %v281
    %4345 = vmatprep.subr.mxu0 0.0
    %4346 = vmatpush2.msra.mxu0 %v280
    %4347 = vmatprep.subr.mxu0 0.0
    %4348 = vmatpush2.msra.mxu0 %v279
    %4349 = vmatprep.subr.mxu0 0.0
    %4350 = vmatpush2.msra.mxu0 %v278
    %4351 = vmatprep.subr.mxu0 0.0
    %4352 = vmatpush2.msra.mxu0 %v277
    %4353 = vmatprep.subr.mxu0 0.0
    %4354 = vmatpush2.msra.mxu0 %v276
    %4355 = vmatprep.subr.mxu0 0.0
    %4356 = vmatpush2.msra.mxu0 %v275
    %4357 = vmatprep.subr.mxu0 0.0
    %4358 = vmatpush2.msra.mxu0 %v274
    %4359 = vmatprep.subr.mxu0 0.0
    %4360 = vmatpush2.msra.mxu0 %v273
    %4361 = vmatprep.subr.mxu0 0.0
    %4362 = vmatpush2.msra.mxu0 %v272
    %4363 = vmatprep.subr.mxu0 0.0
    %4364 = vmatpush2.msra.mxu0 %v271
    %4365 = vmatprep.mubr.f32.mxu0 %v4298
    %4366 = vmatmul.mubr.f32.gmra.mxu0 %v4297
    %v4367 = vpop.f32.mrf.mxu0
    %v4368 = vadd.f32 0.0, %v4367
    %v4369 = vpop.f32.mrf.mxu0
    %4370 = vmatprep.mubr.f32.mxu0 %v4300
    %4371 = vmatmul.mubr.f32.gmra.mxu0 %v4299
    %v4372 = vpop.f32.mrf.mxu0
    %v4373 = vadd.f32 0.0, %v4372
    %v4374 = vpop.f32.mrf.mxu0
    %4375 = vdwg.mxu0
    %4378 = vrot.lane.b32.xlu0 %v4172, 96
    %v4379 = vpop.permute.xlu0 %4378
    %4380 = vrot.lane.b32.xlu0 %v4177, 96
    %v4381 = vpop.permute.xlu0 %4380
    %v4384 = vadd.f32 %v2246, %v4379
    %v4385 = vadd.f32 %v2251, %v4381
    %4388 = vrot.lane.b32.xlu0 %v4368, 96
    %v4389 = vpop.permute.xlu0 %4388
    %4390 = vrot.lane.b32.xlu0 %v4373, 96
    %v4391 = vpop.permute.xlu0 %4390
    %v4394 = vadd.f32 %v4384, %v4389
    %v4395 = vadd.f32 %v4385, %v4391
    %4398 = vrot.lane.b32.xlu0 %v4394, 112
    %v4399 = vpop.permute.xlu0 %4398
    %4400 = vrot.lane.b32.xlu0 %v4395, 112
    %v4401 = vpop.permute.xlu0 %4400
    %v4404 = vmax.f32 %v4394, %v4399
    %v4405 = vmax.f32 %v4395, %v4401
    %4408 = vrot.lane.b32.xlu0 %v4404, 32
    %v4409 = vpop.permute.xlu0 %4408
    %4410 = vrot.lane.b32.xlu0 %v4405, 32
    %v4411 = vpop.permute.xlu0 %4410
    %s4414 = scalar_lea.vmem [#allocation3], 48
    %4415 = vst.msk [vmem:[%s4414] sm:$0xff] %vm654, %v4409
    %4416 = vst.msk [vmem:[%s4414 + $0x8] sm:$0xff] %vm654, %v4411
    %v4417 = vadd.f32 %v2256, %v4389
    %v4418 = vadd.f32 %v2261, %v4391
    %4419 = vmatprep.subr.mxu0 0.0
    %4420 = vmatpush1.msra.mxu0 0.0
    %4421 = vmatprep.subr.mxu0 0.0
    %4422 = vmatpush1.msra.mxu0 0.0
    %4423 = vmatprep.subr.mxu0 0.0
    %4424 = vmatpush1.msra.mxu0 0.0
    %4425 = vmatprep.subr.mxu0 0.0
    %4426 = vmatpush1.msra.mxu0 0.0
    %4427 = vmatprep.subr.mxu0 0.0
    %4428 = vmatpush1.msra.mxu0 0.0
    %4429 = vmatprep.subr.mxu0 0.0
    %4430 = vmatpush1.msra.mxu0 0.0
    %4431 = vmatprep.subr.mxu0 0.0
    %4432 = vmatpush1.msra.mxu0 0.0
    %4433 = vmatprep.subr.mxu0 0.0
    %4434 = vmatpush1.msra.mxu0 0.0
    %4435 = vmatprep.subr.mxu0 0.0
    %4436 = vmatpush1.msra.mxu0 0.0
    %4437 = vmatprep.subr.mxu0 0.0
    %4438 = vmatpush1.msra.mxu0 0.0
    %4439 = vmatprep.subr.mxu0 0.0
    %4440 = vmatpush1.msra.mxu0 0.0
    %4441 = vmatprep.subr.mxu0 0.0
    %4442 = vmatpush1.msra.mxu0 0.0
    %4443 = vmatprep.subr.mxu0 0.0
    %4444 = vmatpush1.msra.mxu0 %v38
    %4445 = vmatprep.subr.mxu0 0.0
    %4446 = vmatpush1.msra.mxu0 %v37
    %4447 = vmatprep.subr.mxu0 0.0
    %4448 = vmatpush1.msra.mxu0 %v36
    %4449 = vmatprep.subr.mxu0 0.0
    %4450 = vmatpush1.msra.mxu0 %v35
    %4451 = vmatprep.subr.mxu0 0.0
    %4452 = vmatpush2.msra.mxu0 0.0
    %4453 = vmatprep.subr.mxu0 0.0
    %4454 = vmatpush2.msra.mxu0 0.0
    %4455 = vmatprep.subr.mxu0 0.0
    %4456 = vmatpush2.msra.mxu0 0.0
    %4457 = vmatprep.subr.mxu0 0.0
    %4458 = vmatpush2.msra.mxu0 0.0
    %4459 = vmatprep.subr.mxu0 0.0
    %4460 = vmatpush2.msra.mxu0 0.0
    %4461 = vmatprep.subr.mxu0 0.0
    %4462 = vmatpush2.msra.mxu0 0.0
    %4463 = vmatprep.subr.mxu0 0.0
    %4464 = vmatpush2.msra.mxu0 0.0
    %4465 = vmatprep.subr.mxu0 0.0
    %4466 = vmatpush2.msra.mxu0 0.0
    %4467 = vmatprep.subr.mxu0 0.0
    %4468 = vmatpush2.msra.mxu0 0.0
    %4469 = vmatprep.subr.mxu0 0.0
    %4470 = vmatpush2.msra.mxu0 0.0
    %4471 = vmatprep.subr.mxu0 0.0
    %4472 = vmatpush2.msra.mxu0 0.0
    %4473 = vmatprep.subr.mxu0 0.0
    %4474 = vmatpush2.msra.mxu0 0.0
    %4475 = vmatprep.subr.mxu0 0.0
    %4476 = vmatpush2.msra.mxu0 0.0
    %4477 = vmatprep.subr.mxu0 0.0
    %4478 = vmatpush2.msra.mxu0 0.0
    %4479 = vmatprep.subr.mxu0 0.0
    %4480 = vmatpush2.msra.mxu0 0.0
    %4481 = vmatprep.subr.mxu0 0.0
    %4482 = vmatpush2.msra.mxu0 0.0
    %4483 = vmatprep.mubr.f32.mxu0 0.0
    %4484 = vmatmul.mubr.f32.gmra.mxu0 %v4024
    %v4485 = vpop.f32.mrf.mxu0
    %v4486 = vadd.f32 %v2294, %v4485
    %v4487 = vpop.f32.mrf.mxu0
    %4488 = vmatprep.mubr.f32.mxu0 0.0
    %4489 = vmatmul.mubr.f32.gmra.mxu0 %v4026
    %v4490 = vpop.f32.mrf.mxu0
    %v4491 = vadd.f32 %v2294, %v4490
    %v4492 = vpop.f32.mrf.mxu0
    %4493 = vdwg.mxu0
    %v4494 = vadd.f32 %v4417, %v4486
    %v4495 = vadd.f32 %v4418, %v4491
    %v4496 = vxor.u32 %v4494, 2147483648
    %v4497 = vxor.u32 %v4495, 2147483648
    %v4498 = vmul.f32 %v4496, 1.442695
    %v4499 = vpow.pop %v4498
    %v4500 = vmul.f32 %v4497, 1.442695
    %v4501 = vpow.pop %v4500
    %v4502 = vadd.f32 %v4499, 1.0
    %v4503 = vadd.f32 %v4501, 1.0
    %v4504 = vrcp.pop %v4502
    %v4505 = vmul.f32 1.0, %v4504
    %v4506 = vrcp.pop %v4503
    %v4507 = vmul.f32 1.0, %v4506
    %4510 = vrot.lane.b32.xlu0 %v4486, 64
    %v4511 = vpop.permute.xlu0 %4510
    %4512 = vrot.lane.b32.xlu0 %v4491, 64
    %v4513 = vpop.permute.xlu0 %4512
    %v4516 = vmul.f32 %v4505, %v4511
    %v4517 = vmul.f32 %v4507, %v4513
    %4520 = vrot.lane.b32.xlu0 %v4516, 64
    %v4521 = vpop.permute.xlu0 %4520
    %4522 = vrot.lane.b32.xlu0 %v4517, 64
    %v4523 = vpop.permute.xlu0 %4522
    %v4526 = vadd.f32 %v4417, %v4521
    %v4527 = vadd.f32 %v4418, %v4523
    %v4528 = vtanh.pop %v4526
    %v4529 = vtanh.pop %v4527
    %v4530 = vsub.f32 1.0, %v4505
    %v4531 = vsub.f32 1.0, %v4507
    %4534 = vrot.lane.b32.xlu0 %v4528, 96
    %v4535 = vpop.permute.xlu0 %4534
    %4536 = vrot.lane.b32.xlu0 %v4529, 96
    %v4537 = vpop.permute.xlu0 %4536
    %v4540 = vmul.f32 %v4530, %v4535
    %v4541 = vmul.f32 %v4531, %v4537
    %v4542 = vmul.f32 %v4505, %v4016
    %v4543 = vmul.f32 %v4507, %v4017
    %v4544 = vadd.f32 %v4540, %v4542
    %v4545 = vadd.f32 %v4541, %v4543
    %4548 = vrot.lane.b32.xlu0 %v4544, 96
    %v4549 = vpop.permute.xlu0 %4548
    %4550 = vrot.lane.b32.xlu0 %v4545, 96
    %v4551 = vpop.permute.xlu0 %4550
    %v4552 = vsel %vm316, %v4549, 0
    %v4554 = vsel %vm316, %v4551, 0
    %4556 = vmatprep.subr.mxu0 0.0
    %4557 = vmatpush1.msra.mxu0 0.0
    %4558 = vmatprep.subr.mxu0 0.0
    %4559 = vmatpush1.msra.mxu0 0.0
    %4560 = vmatprep.subr.mxu0 0.0
    %4561 = vmatpush1.msra.mxu0 0.0
    %4562 = vmatprep.subr.mxu0 0.0
    %4563 = vmatpush1.msra.mxu0 0.0
    %4564 = vmatprep.subr.mxu0 0.0
    %4565 = vmatpush1.msra.mxu0 0.0
    %4566 = vmatprep.subr.mxu0 0.0
    %4567 = vmatpush1.msra.mxu0 0.0
    %4568 = vmatprep.subr.mxu0 0.0
    %4569 = vmatpush1.msra.mxu0 0.0
    %4570 = vmatprep.subr.mxu0 0.0
    %4571 = vmatpush1.msra.mxu0 0.0
    %4572 = vmatprep.subr.mxu0 0.0
    %4573 = vmatpush1.msra.mxu0 0.0
    %4574 = vmatprep.subr.mxu0 0.0
    %4575 = vmatpush1.msra.mxu0 0.0
    %4576 = vmatprep.subr.mxu0 0.0
    %4577 = vmatpush1.msra.mxu0 0.0
    %4578 = vmatprep.subr.mxu0 0.0
    %4579 = vmatpush1.msra.mxu0 0.0
    %4580 = vmatprep.subr.mxu0 %v49
    %4581 = vmatpush1.msra.mxu0 %v48
    %4582 = vmatprep.subr.mxu0 %v46
    %4583 = vmatpush1.msra.mxu0 %v45
    %4584 = vmatprep.subr.mxu0 %v43
    %4585 = vmatpush1.msra.mxu0 %v42
    %4586 = vmatprep.subr.mxu0 %v40
    %4587 = vmatpush1.msra.mxu0 %v39
    %4588 = vmatprep.subr.mxu0 0.0
    %4589 = vmatpush2.msra.mxu0 0.0
    %4590 = vmatprep.subr.mxu0 0.0
    %4591 = vmatpush2.msra.mxu0 0.0
    %4592 = vmatprep.subr.mxu0 0.0
    %4593 = vmatpush2.msra.mxu0 0.0
    %4594 = vmatprep.subr.mxu0 0.0
    %4595 = vmatpush2.msra.mxu0 0.0
    %4596 = vmatprep.subr.mxu0 0.0
    %4597 = vmatpush2.msra.mxu0 0.0
    %4598 = vmatprep.subr.mxu0 0.0
    %4599 = vmatpush2.msra.mxu0 0.0
    %4600 = vmatprep.subr.mxu0 0.0
    %4601 = vmatpush2.msra.mxu0 0.0
    %4602 = vmatprep.subr.mxu0 0.0
    %4603 = vmatpush2.msra.mxu0 0.0
    %4604 = vmatprep.subr.mxu0 0.0
    %4605 = vmatpush2.msra.mxu0 0.0
    %4606 = vmatprep.subr.mxu0 0.0
    %4607 = vmatpush2.msra.mxu0 0.0
    %4608 = vmatprep.subr.mxu0 0.0
    %4609 = vmatpush2.msra.mxu0 0.0
    %4610 = vmatprep.subr.mxu0 0.0
    %4611 = vmatpush2.msra.mxu0 0.0
    %4612 = vmatprep.subr.mxu0 0.0
    %4613 = vmatpush2.msra.mxu0 0.0
    %4614 = vmatprep.subr.mxu0 0.0
    %4615 = vmatpush2.msra.mxu0 0.0
    %4616 = vmatprep.subr.mxu0 0.0
    %4617 = vmatpush2.msra.mxu0 0.0
    %4618 = vmatprep.subr.mxu0 0.0
    %4619 = vmatpush2.msra.mxu0 0.0
    %4620 = vmatprep.mubr.f32.mxu0 0.0
    %4621 = vmatmul.mubr.f32.gmra.mxu0 %v4552
    %v4622 = vpop.f32.mrf.mxu0
    %v4623 = vadd.f32 0.0, %v4622
    %v4624 = vpop.f32.mrf.mxu0
    %v4625 = vadd.f32 0.0, %v4624
    %4626 = vmatprep.mubr.f32.mxu0 0.0
    %4627 = vmatmul.mubr.f32.gmra.mxu0 %v4554
    %v4628 = vpop.f32.mrf.mxu0
    %v4629 = vadd.f32 0.0, %v4628
    %v4630 = vpop.f32.mrf.mxu0
    %v4631 = vadd.f32 0.0, %v4630
    %4632 = vdwg.mxu0
    %4633 = vmatprep.subr.mxu0 0.0
    %4634 = vmatpush1.msra.mxu0 0.0
    %4635 = vmatprep.subr.mxu0 0.0
    %4636 = vmatpush1.msra.mxu0 0.0
    %4637 = vmatprep.subr.mxu0 0.0
    %4638 = vmatpush1.msra.mxu0 0.0
    %4639 = vmatprep.subr.mxu0 0.0
    %4640 = vmatpush1.msra.mxu0 0.0
    %4641 = vmatprep.subr.mxu0 0.0
    %4642 = vmatpush1.msra.mxu0 0.0
    %4643 = vmatprep.subr.mxu0 0.0
    %4644 = vmatpush1.msra.mxu0 0.0
    %4645 = vmatprep.subr.mxu0 0.0
    %4646 = vmatpush1.msra.mxu0 0.0
    %4647 = vmatprep.subr.mxu0 0.0
    %4648 = vmatpush1.msra.mxu0 0.0
    %4649 = vmatprep.subr.mxu0 0.0
    %4650 = vmatpush1.msra.mxu0 0.0
    %4651 = vmatprep.subr.mxu0 0.0
    %4652 = vmatpush1.msra.mxu0 0.0
    %4653 = vmatprep.subr.mxu0 0.0
    %4654 = vmatpush1.msra.mxu0 0.0
    %4655 = vmatprep.subr.mxu0 0.0
    %4656 = vmatpush1.msra.mxu0 0.0
    %4657 = vmatprep.subr.mxu0 0.0
    %4658 = vmatpush1.msra.mxu0 %v50
    %4659 = vmatprep.subr.mxu0 0.0
    %4660 = vmatpush1.msra.mxu0 %v47
    %4661 = vmatprep.subr.mxu0 0.0
    %4662 = vmatpush1.msra.mxu0 %v44
    %4663 = vmatprep.subr.mxu0 0.0
    %4664 = vmatpush1.msra.mxu0 %v41
    %4665 = vmatprep.subr.mxu0 0.0
    %4666 = vmatpush2.msra.mxu0 0.0
    %4667 = vmatprep.subr.mxu0 0.0
    %4668 = vmatpush2.msra.mxu0 0.0
    %4669 = vmatprep.subr.mxu0 0.0
    %4670 = vmatpush2.msra.mxu0 0.0
    %4671 = vmatprep.subr.mxu0 0.0
    %4672 = vmatpush2.msra.mxu0 0.0
    %4673 = vmatprep.subr.mxu0 0.0
    %4674 = vmatpush2.msra.mxu0 0.0
    %4675 = vmatprep.subr.mxu0 0.0
    %4676 = vmatpush2.msra.mxu0 0.0
    %4677 = vmatprep.subr.mxu0 0.0
    %4678 = vmatpush2.msra.mxu0 0.0
    %4679 = vmatprep.subr.mxu0 0.0
    %4680 = vmatpush2.msra.mxu0 0.0
    %4681 = vmatprep.subr.mxu0 0.0
    %4682 = vmatpush2.msra.mxu0 0.0
    %4683 = vmatprep.subr.mxu0 0.0
    %4684 = vmatpush2.msra.mxu0 0.0
    %4685 = vmatprep.subr.mxu0 0.0
    %4686 = vmatpush2.msra.mxu0 0.0
    %4687 = vmatprep.subr.mxu0 0.0
    %4688 = vmatpush2.msra.mxu0 0.0
    %4689 = vmatprep.subr.mxu0 0.0
    %4690 = vmatpush2.msra.mxu0 0.0
    %4691 = vmatprep.subr.mxu0 0.0
    %4692 = vmatpush2.msra.mxu0 0.0
    %4693 = vmatprep.subr.mxu0 0.0
    %4694 = vmatpush2.msra.mxu0 0.0
    %4695 = vmatprep.subr.mxu0 0.0
    %4696 = vmatpush2.msra.mxu0 0.0
    %4697 = vmatprep.mubr.f32.mxu0 0.0
    %4698 = vmatmul.mubr.f32.gmra.mxu0 %v4552
    %v4699 = vpop.f32.mrf.mxu0
    %v4700 = vadd.f32 0.0, %v4699
    %v4701 = vpop.f32.mrf.mxu0
    %4702 = vmatprep.mubr.f32.mxu0 0.0
    %4703 = vmatmul.mubr.f32.gmra.mxu0 %v4554
    %v4704 = vpop.f32.mrf.mxu0
    %v4705 = vadd.f32 0.0, %v4704
    %v4706 = vpop.f32.mrf.mxu0
    %4707 = vdwg.mxu0
    %v4708 = vadd.f32 %v2077, %v4623
    %v4709 = vadd.f32 %v2079, %v4625
    %v4710 = vadd.f32 %v2083, %v4629
    %v4711 = vadd.f32 %v2085, %v4631
    %v4712 = vtanh.pop %v4708
    %v4713 = vtanh.pop %v4709
    %v4714 = vtanh.pop %v4710
    %v4715 = vtanh.pop %v4711
    %4716 = vmatprep.subr.mxu0 %v222
    %4717 = vmatpush1.msra.mxu0 %v221
    %4718 = vmatprep.subr.mxu0 %v220
    %4719 = vmatpush1.msra.mxu0 %v219
    %4720 = vmatprep.subr.mxu0 %v218
    %4721 = vmatpush1.msra.mxu0 %v217
    %4722 = vmatprep.subr.mxu0 %v216
    %4723 = vmatpush1.msra.mxu0 %v215
    %4724 = vmatprep.subr.mxu0 %v214
    %4725 = vmatpush1.msra.mxu0 %v213
    %4726 = vmatprep.subr.mxu0 %v212
    %4727 = vmatpush1.msra.mxu0 %v211
    %4728 = vmatprep.subr.mxu0 %v210
    %4729 = vmatpush1.msra.mxu0 %v209
    %4730 = vmatprep.subr.mxu0 %v208
    %4731 = vmatpush1.msra.mxu0 %v207
    %4732 = vmatprep.subr.mxu0 %v206
    %4733 = vmatpush1.msra.mxu0 %v205
    %4734 = vmatprep.subr.mxu0 %v204
    %4735 = vmatpush1.msra.mxu0 %v203
    %4736 = vmatprep.subr.mxu0 %v202
    %4737 = vmatpush1.msra.mxu0 %v201
    %4738 = vmatprep.subr.mxu0 %v200
    %4739 = vmatpush1.msra.mxu0 %v199
    %4740 = vmatprep.subr.mxu0 %v198
    %4741 = vmatpush1.msra.mxu0 %v197
    %4742 = vmatprep.subr.mxu0 %v196
    %4743 = vmatpush1.msra.mxu0 %v195
    %4744 = vmatprep.subr.mxu0 %v194
    %4745 = vmatpush1.msra.mxu0 %v193
    %4746 = vmatprep.subr.mxu0 %v192
    %4747 = vmatpush1.msra.mxu0 %v191
    %4748 = vmatprep.subr.mxu0 %v254
    %4749 = vmatpush2.msra.mxu0 %v253
    %4750 = vmatprep.subr.mxu0 %v252
    %4751 = vmatpush2.msra.mxu0 %v251
    %4752 = vmatprep.subr.mxu0 %v250
    %4753 = vmatpush2.msra.mxu0 %v249
    %4754 = vmatprep.subr.mxu0 %v248
    %4755 = vmatpush2.msra.mxu0 %v247
    %4756 = vmatprep.subr.mxu0 %v246
    %4757 = vmatpush2.msra.mxu0 %v245
    %4758 = vmatprep.subr.mxu0 %v244
    %4759 = vmatpush2.msra.mxu0 %v243
    %4760 = vmatprep.subr.mxu0 %v242
    %4761 = vmatpush2.msra.mxu0 %v241
    %4762 = vmatprep.subr.mxu0 %v240
    %4763 = vmatpush2.msra.mxu0 %v239
    %4764 = vmatprep.subr.mxu0 %v238
    %4765 = vmatpush2.msra.mxu0 %v237
    %4766 = vmatprep.subr.mxu0 %v236
    %4767 = vmatpush2.msra.mxu0 %v235
    %4768 = vmatprep.subr.mxu0 %v234
    %4769 = vmatpush2.msra.mxu0 %v233
    %4770 = vmatprep.subr.mxu0 %v232
    %4771 = vmatpush2.msra.mxu0 %v231
    %4772 = vmatprep.subr.mxu0 %v230
    %4773 = vmatpush2.msra.mxu0 %v229
    %4774 = vmatprep.subr.mxu0 %v228
    %4775 = vmatpush2.msra.mxu0 %v227
    %4776 = vmatprep.subr.mxu0 %v226
    %4777 = vmatpush2.msra.mxu0 %v225
    %4778 = vmatprep.subr.mxu0 %v224
    %4779 = vmatpush2.msra.mxu0 %v223
    %4780 = vmatprep.mubr.f32.mxu0 %v4713
    %4781 = vmatmul.mubr.f32.gmra.mxu0 %v4712
    %v4782 = vpop.f32.mrf.mxu0
    %v4783 = vadd.f32 %v2284, %v4782
    %v4784 = vpop.f32.mrf.mxu0
    %v4785 = vadd.f32 %v2285, %v4784
    %4786 = vmatprep.mubr.f32.mxu0 %v4715
    %4787 = vmatmul.mubr.f32.gmra.mxu0 %v4714
    %v4788 = vpop.f32.mrf.mxu0
    %v4789 = vadd.f32 %v2286, %v4788
    %v4790 = vpop.f32.mrf.mxu0
    %v4791 = vadd.f32 %v2287, %v4790
    %4792 = vdwg.mxu0
    %v4793 = vmax.f32 %v4783, %v4785
    %4794 = vmax.xlane.f32.xlu0 %v4793
    %v4795 = vpop.xlane.xlu0 %4794
    %v4796 = vmax.f32 %v4789, %v4791
    %4797 = vmax.xlane.f32.xlu0 %v4796
    %v4798 = vpop.xlane.xlu0 %4797
    %v4799 = vsub.f32 %v4783, %v4795
    %v4800 = vsub.f32 %v4785, %v4795
    %v4801 = vsub.f32 %v4789, %v4798
    %v4802 = vsub.f32 %v4791, %v4798
    %v4803 = vmul.f32 %v4799, 1.442695
    %v4804 = vpow.pop %v4803
    %v4805 = vmul.f32 %v4800, 1.442695
    %v4806 = vpow.pop %v4805
    %v4807 = vmul.f32 %v4801, 1.442695
    %v4808 = vpow.pop %v4807
    %v4809 = vmul.f32 %v4802, 1.442695
    %v4810 = vpow.pop %v4809
    %v4811 = vadd.f32 %v4804, %v4806
    %4812 = vadd.xlane.f32.xlu0 %v4811
    %v4813 = vpop.xlane.xlu0 %4812
    %v4814 = vadd.f32 %v4808, %v4810
    %4815 = vadd.xlane.f32.xlu0 %v4814
    %v4816 = vpop.xlane.xlu0 %4815
    %v4817 = vrcp.pop %v4813
    %v4818 = vrcp.pop %v4816
    %v4819 = vmul.f32 %v4817, 32.0
    %v4820 = vmul.f32 %v4818, 32.0
    %v4821 = vmul.f32 %v4804, %v4819
    %v4822 = vmul.f32 %v4806, %v4819
    %v4823 = vmul.f32 %v4808, %v4820
    %v4824 = vmul.f32 %v4810, %v4820
    %v4825 = vmul.f32 %v4821, %v1904
    %v4826 = vmul.f32 %v4822, %v1905
    %v4827 = vmul.f32 %v4823, %v1906
    %v4828 = vmul.f32 %v4824, %v1907
    %4829 = vmatprep.subr.mxu0 0.0
    %4830 = vmatpush1.msra.mxu0 %v270
    %4831 = vmatprep.subr.mxu0 0.0
    %4832 = vmatpush1.msra.mxu0 %v269
    %4833 = vmatprep.subr.mxu0 0.0
    %4834 = vmatpush1.msra.mxu0 %v268
    %4835 = vmatprep.subr.mxu0 0.0
    %4836 = vmatpush1.msra.mxu0 %v267
    %4837 = vmatprep.subr.mxu0 0.0
    %4838 = vmatpush1.msra.mxu0 %v266
    %4839 = vmatprep.subr.mxu0 0.0
    %4840 = vmatpush1.msra.mxu0 %v265
    %4841 = vmatprep.subr.mxu0 0.0
    %4842 = vmatpush1.msra.mxu0 %v264
    %4843 = vmatprep.subr.mxu0 0.0
    %4844 = vmatpush1.msra.mxu0 %v263
    %4845 = vmatprep.subr.mxu0 0.0
    %4846 = vmatpush1.msra.mxu0 %v262
    %4847 = vmatprep.subr.mxu0 0.0
    %4848 = vmatpush1.msra.mxu0 %v261
    %4849 = vmatprep.subr.mxu0 0.0
    %4850 = vmatpush1.msra.mxu0 %v260
    %4851 = vmatprep.subr.mxu0 0.0
    %4852 = vmatpush1.msra.mxu0 %v259
    %4853 = vmatprep.subr.mxu0 0.0
    %4854 = vmatpush1.msra.mxu0 %v258
    %4855 = vmatprep.subr.mxu0 0.0
    %4856 = vmatpush1.msra.mxu0 %v257
    %4857 = vmatprep.subr.mxu0 0.0
    %4858 = vmatpush1.msra.mxu0 %v256
    %4859 = vmatprep.subr.mxu0 0.0
    %4860 = vmatpush1.msra.mxu0 %v255
    %4861 = vmatprep.subr.mxu0 0.0
    %4862 = vmatpush2.msra.mxu0 %v286
    %4863 = vmatprep.subr.mxu0 0.0
    %4864 = vmatpush2.msra.mxu0 %v285
    %4865 = vmatprep.subr.mxu0 0.0
    %4866 = vmatpush2.msra.mxu0 %v284
    %4867 = vmatprep.subr.mxu0 0.0
    %4868 = vmatpush2.msra.mxu0 %v283
    %4869 = vmatprep.subr.mxu0 0.0
    %4870 = vmatpush2.msra.mxu0 %v282
    %4871 = vmatprep.subr.mxu0 0.0
    %4872 = vmatpush2.msra.mxu0 %v281
    %4873 = vmatprep.subr.mxu0 0.0
    %4874 = vmatpush2.msra.mxu0 %v280
    %4875 = vmatprep.subr.mxu0 0.0
    %4876 = vmatpush2.msra.mxu0 %v279
    %4877 = vmatprep.subr.mxu0 0.0
    %4878 = vmatpush2.msra.mxu0 %v278
    %4879 = vmatprep.subr.mxu0 0.0
    %4880 = vmatpush2.msra.mxu0 %v277
    %4881 = vmatprep.subr.mxu0 0.0
    %4882 = vmatpush2.msra.mxu0 %v276
    %4883 = vmatprep.subr.mxu0 0.0
    %4884 = vmatpush2.msra.mxu0 %v275
    %4885 = vmatprep.subr.mxu0 0.0
    %4886 = vmatpush2.msra.mxu0 %v274
    %4887 = vmatprep.subr.mxu0 0.0
    %4888 = vmatpush2.msra.mxu0 %v273
    %4889 = vmatprep.subr.mxu0 0.0
    %4890 = vmatpush2.msra.mxu0 %v272
    %4891 = vmatprep.subr.mxu0 0.0
    %4892 = vmatpush2.msra.mxu0 %v271
    %4893 = vmatprep.mubr.f32.mxu0 %v4826
    %4894 = vmatmul.mubr.f32.gmra.mxu0 %v4825
    %v4895 = vpop.f32.mrf.mxu0
    %v4896 = vadd.f32 0.0, %v4895
    %v4897 = vpop.f32.mrf.mxu0
    %4898 = vmatprep.mubr.f32.mxu0 %v4828
    %4899 = vmatmul.mubr.f32.gmra.mxu0 %v4827
    %v4900 = vpop.f32.mrf.mxu0
    %v4901 = vadd.f32 0.0, %v4900
    %v4902 = vpop.f32.mrf.mxu0
    %4903 = vdwg.mxu0
    %4906 = vrot.lane.b32.xlu0 %v4700, 96
    %v4907 = vpop.permute.xlu0 %4906
    %4908 = vrot.lane.b32.xlu0 %v4705, 96
    %v4909 = vpop.permute.xlu0 %4908
    %v4912 = vadd.f32 %v2256, %v4907
    %v4913 = vadd.f32 %v2261, %v4909
    %4916 = vrot.lane.b32.xlu0 %v4896, 96
    %v4917 = vpop.permute.xlu0 %4916
    %4918 = vrot.lane.b32.xlu0 %v4901, 96
    %v4919 = vpop.permute.xlu0 %4918
    %v4922 = vadd.f32 %v4912, %v4917
    %v4923 = vadd.f32 %v4913, %v4919
    %4926 = vrot.lane.b32.xlu0 %v4922, 112
    %v4927 = vpop.permute.xlu0 %4926
    %4928 = vrot.lane.b32.xlu0 %v4923, 112
    %v4929 = vpop.permute.xlu0 %4928
    %v4932 = vmax.f32 %v4922, %v4927
    %v4933 = vmax.f32 %v4923, %v4929
    %4936 = vrot.lane.b32.xlu0 %v4932, 32
    %v4937 = vpop.permute.xlu0 %4936
    %4938 = vrot.lane.b32.xlu0 %v4933, 32
    %v4939 = vpop.permute.xlu0 %4938
    %s4942 = scalar_lea.vmem [#allocation3], 64
    %4943 = vst.msk [vmem:[%s4942] sm:$0xff] %vm654, %v4937
    %4944 = vst.msk [vmem:[%s4942 + $0x8] sm:$0xff] %vm654, %v4939
    %v4945 = vadd.f32 %v2266, %v4917
    %v4946 = vadd.f32 %v2271, %v4919
    %4947 = vmatprep.subr.mxu0 0.0
    %4948 = vmatpush1.msra.mxu0 0.0
    %4949 = vmatprep.subr.mxu0 0.0
    %4950 = vmatpush1.msra.mxu0 0.0
    %4951 = vmatprep.subr.mxu0 0.0
    %4952 = vmatpush1.msra.mxu0 0.0
    %4953 = vmatprep.subr.mxu0 0.0
    %4954 = vmatpush1.msra.mxu0 0.0
    %4955 = vmatprep.subr.mxu0 0.0
    %4956 = vmatpush1.msra.mxu0 0.0
    %4957 = vmatprep.subr.mxu0 0.0
    %4958 = vmatpush1.msra.mxu0 0.0
    %4959 = vmatprep.subr.mxu0 0.0
    %4960 = vmatpush1.msra.mxu0 0.0
    %4961 = vmatprep.subr.mxu0 0.0
    %4962 = vmatpush1.msra.mxu0 0.0
    %4963 = vmatprep.subr.mxu0 0.0
    %4964 = vmatpush1.msra.mxu0 0.0
    %4965 = vmatprep.subr.mxu0 0.0
    %4966 = vmatpush1.msra.mxu0 0.0
    %4967 = vmatprep.subr.mxu0 0.0
    %4968 = vmatpush1.msra.mxu0 0.0
    %4969 = vmatprep.subr.mxu0 0.0
    %4970 = vmatpush1.msra.mxu0 0.0
    %4971 = vmatprep.subr.mxu0 0.0
    %4972 = vmatpush1.msra.mxu0 %v38
    %4973 = vmatprep.subr.mxu0 0.0
    %4974 = vmatpush1.msra.mxu0 %v37
    %4975 = vmatprep.subr.mxu0 0.0
    %4976 = vmatpush1.msra.mxu0 %v36
    %4977 = vmatprep.subr.mxu0 0.0
    %4978 = vmatpush1.msra.mxu0 %v35
    %4979 = vmatprep.subr.mxu0 0.0
    %4980 = vmatpush2.msra.mxu0 0.0
    %4981 = vmatprep.subr.mxu0 0.0
    %4982 = vmatpush2.msra.mxu0 0.0
    %4983 = vmatprep.subr.mxu0 0.0
    %4984 = vmatpush2.msra.mxu0 0.0
    %4985 = vmatprep.subr.mxu0 0.0
    %4986 = vmatpush2.msra.mxu0 0.0
    %4987 = vmatprep.subr.mxu0 0.0
    %4988 = vmatpush2.msra.mxu0 0.0
    %4989 = vmatprep.subr.mxu0 0.0
    %4990 = vmatpush2.msra.mxu0 0.0
    %4991 = vmatprep.subr.mxu0 0.0
    %4992 = vmatpush2.msra.mxu0 0.0
    %4993 = vmatprep.subr.mxu0 0.0
    %4994 = vmatpush2.msra.mxu0 0.0
    %4995 = vmatprep.subr.mxu0 0.0
    %4996 = vmatpush2.msra.mxu0 0.0
    %4997 = vmatprep.subr.mxu0 0.0
    %4998 = vmatpush2.msra.mxu0 0.0
    %4999 = vmatprep.subr.mxu0 0.0
    %5000 = vmatpush2.msra.mxu0 0.0
    %5001 = vmatprep.subr.mxu0 0.0
    %5002 = vmatpush2.msra.mxu0 0.0
    %5003 = vmatprep.subr.mxu0 0.0
    %5004 = vmatpush2.msra.mxu0 0.0
    %5005 = vmatprep.subr.mxu0 0.0
    %5006 = vmatpush2.msra.mxu0 0.0
    %5007 = vmatprep.subr.mxu0 0.0
    %5008 = vmatpush2.msra.mxu0 0.0
    %5009 = vmatprep.subr.mxu0 0.0
    %5010 = vmatpush2.msra.mxu0 0.0
    %5011 = vmatprep.mubr.f32.mxu0 0.0
    %5012 = vmatmul.mubr.f32.gmra.mxu0 %v4552
    %v5013 = vpop.f32.mrf.mxu0
    %v5014 = vadd.f32 %v2294, %v5013
    %v5015 = vpop.f32.mrf.mxu0
    %5016 = vmatprep.mubr.f32.mxu0 0.0
    %5017 = vmatmul.mubr.f32.gmra.mxu0 %v4554
    %v5018 = vpop.f32.mrf.mxu0
    %v5019 = vadd.f32 %v2294, %v5018
    %v5020 = vpop.f32.mrf.mxu0
    %5021 = vdwg.mxu0
    %v5022 = vadd.f32 %v4945, %v5014
    %v5023 = vadd.f32 %v4946, %v5019
    %v5024 = vxor.u32 %v5022, 2147483648
    %v5025 = vxor.u32 %v5023, 2147483648
    %v5026 = vmul.f32 %v5024, 1.442695
    %v5027 = vpow.pop %v5026
    %v5028 = vmul.f32 %v5025, 1.442695
    %v5029 = vpow.pop %v5028
    %v5030 = vadd.f32 %v5027, 1.0
    %v5031 = vadd.f32 %v5029, 1.0
    %v5032 = vrcp.pop %v5030
    %v5033 = vmul.f32 1.0, %v5032
    %v5034 = vrcp.pop %v5031
    %v5035 = vmul.f32 1.0, %v5034
    %5038 = vrot.lane.b32.xlu0 %v5014, 64
    %v5039 = vpop.permute.xlu0 %5038
    %5040 = vrot.lane.b32.xlu0 %v5019, 64
    %v5041 = vpop.permute.xlu0 %5040
    %v5044 = vmul.f32 %v5033, %v5039
    %v5045 = vmul.f32 %v5035, %v5041
    %5048 = vrot.lane.b32.xlu0 %v5044, 64
    %v5049 = vpop.permute.xlu0 %5048
    %5050 = vrot.lane.b32.xlu0 %v5045, 64
    %v5051 = vpop.permute.xlu0 %5050
    %v5054 = vadd.f32 %v4945, %v5049
    %v5055 = vadd.f32 %v4946, %v5051
    %v5056 = vtanh.pop %v5054
    %v5057 = vtanh.pop %v5055
    %v5058 = vsub.f32 1.0, %v5033
    %v5059 = vsub.f32 1.0, %v5035
    %5062 = vrot.lane.b32.xlu0 %v5056, 96
    %v5063 = vpop.permute.xlu0 %5062
    %5064 = vrot.lane.b32.xlu0 %v5057, 96
    %v5065 = vpop.permute.xlu0 %5064
    %v5068 = vmul.f32 %v5058, %v5063
    %v5069 = vmul.f32 %v5059, %v5065
    %v5070 = vmul.f32 %v5033, %v4544
    %v5071 = vmul.f32 %v5035, %v4545
    %v5072 = vadd.f32 %v5068, %v5070
    %v5073 = vadd.f32 %v5069, %v5071
    %5076 = vrot.lane.b32.xlu0 %v5072, 96
    %v5077 = vpop.permute.xlu0 %5076
    %5078 = vrot.lane.b32.xlu0 %v5073, 96
    %v5079 = vpop.permute.xlu0 %5078
    %v5080 = vsel %vm316, %v5077, 0
    %v5082 = vsel %vm316, %v5079, 0
    %5084 = vmatprep.subr.mxu0 0.0
    %5085 = vmatpush1.msra.mxu0 0.0
    %5086 = vmatprep.subr.mxu0 0.0
    %5087 = vmatpush1.msra.mxu0 0.0
    %5088 = vmatprep.subr.mxu0 0.0
    %5089 = vmatpush1.msra.mxu0 0.0
    %5090 = vmatprep.subr.mxu0 0.0
    %5091 = vmatpush1.msra.mxu0 0.0
    %5092 = vmatprep.subr.mxu0 0.0
    %5093 = vmatpush1.msra.mxu0 0.0
    %5094 = vmatprep.subr.mxu0 0.0
    %5095 = vmatpush1.msra.mxu0 0.0
    %5096 = vmatprep.subr.mxu0 0.0
    %5097 = vmatpush1.msra.mxu0 0.0
    %5098 = vmatprep.subr.mxu0 0.0
    %5099 = vmatpush1.msra.mxu0 0.0
    %5100 = vmatprep.subr.mxu0 0.0
    %5101 = vmatpush1.msra.mxu0 0.0
    %5102 = vmatprep.subr.mxu0 0.0
    %5103 = vmatpush1.msra.mxu0 0.0
    %5104 = vmatprep.subr.mxu0 0.0
    %5105 = vmatpush1.msra.mxu0 0.0
    %5106 = vmatprep.subr.mxu0 0.0
    %5107 = vmatpush1.msra.mxu0 0.0
    %5108 = vmatprep.subr.mxu0 %v49
    %5109 = vmatpush1.msra.mxu0 %v48
    %5110 = vmatprep.subr.mxu0 %v46
    %5111 = vmatpush1.msra.mxu0 %v45
    %5112 = vmatprep.subr.mxu0 %v43
    %5113 = vmatpush1.msra.mxu0 %v42
    %5114 = vmatprep.subr.mxu0 %v40
    %5115 = vmatpush1.msra.mxu0 %v39
    %5116 = vmatprep.subr.mxu0 0.0
    %5117 = vmatpush2.msra.mxu0 0.0
    %5118 = vmatprep.subr.mxu0 0.0
    %5119 = vmatpush2.msra.mxu0 0.0
    %5120 = vmatprep.subr.mxu0 0.0
    %5121 = vmatpush2.msra.mxu0 0.0
    %5122 = vmatprep.subr.mxu0 0.0
    %5123 = vmatpush2.msra.mxu0 0.0
    %5124 = vmatprep.subr.mxu0 0.0
    %5125 = vmatpush2.msra.mxu0 0.0
    %5126 = vmatprep.subr.mxu0 0.0
    %5127 = vmatpush2.msra.mxu0 0.0
    %5128 = vmatprep.subr.mxu0 0.0
    %5129 = vmatpush2.msra.mxu0 0.0
    %5130 = vmatprep.subr.mxu0 0.0
    %5131 = vmatpush2.msra.mxu0 0.0
    %5132 = vmatprep.subr.mxu0 0.0
    %5133 = vmatpush2.msra.mxu0 0.0
    %5134 = vmatprep.subr.mxu0 0.0
    %5135 = vmatpush2.msra.mxu0 0.0
    %5136 = vmatprep.subr.mxu0 0.0
    %5137 = vmatpush2.msra.mxu0 0.0
    %5138 = vmatprep.subr.mxu0 0.0
    %5139 = vmatpush2.msra.mxu0 0.0
    %5140 = vmatprep.subr.mxu0 0.0
    %5141 = vmatpush2.msra.mxu0 0.0
    %5142 = vmatprep.subr.mxu0 0.0
    %5143 = vmatpush2.msra.mxu0 0.0
    %5144 = vmatprep.subr.mxu0 0.0
    %5145 = vmatpush2.msra.mxu0 0.0
    %5146 = vmatprep.subr.mxu0 0.0
    %5147 = vmatpush2.msra.mxu0 0.0
    %5148 = vmatprep.mubr.f32.mxu0 0.0
    %5149 = vmatmul.mubr.f32.gmra.mxu0 %v5080
    %v5150 = vpop.f32.mrf.mxu0
    %v5151 = vadd.f32 0.0, %v5150
    %v5152 = vpop.f32.mrf.mxu0
    %v5153 = vadd.f32 0.0, %v5152
    %5154 = vmatprep.mubr.f32.mxu0 0.0
    %5155 = vmatmul.mubr.f32.gmra.mxu0 %v5082
    %v5156 = vpop.f32.mrf.mxu0
    %v5157 = vadd.f32 0.0, %v5156
    %v5158 = vpop.f32.mrf.mxu0
    %v5159 = vadd.f32 0.0, %v5158
    %5160 = vdwg.mxu0
    %5161 = vmatprep.subr.mxu0 0.0
    %5162 = vmatpush1.msra.mxu0 0.0
    %5163 = vmatprep.subr.mxu0 0.0
    %5164 = vmatpush1.msra.mxu0 0.0
    %5165 = vmatprep.subr.mxu0 0.0
    %5166 = vmatpush1.msra.mxu0 0.0
    %5167 = vmatprep.subr.mxu0 0.0
    %5168 = vmatpush1.msra.mxu0 0.0
    %5169 = vmatprep.subr.mxu0 0.0
    %5170 = vmatpush1.msra.mxu0 0.0
    %5171 = vmatprep.subr.mxu0 0.0
    %5172 = vmatpush1.msra.mxu0 0.0
    %5173 = vmatprep.subr.mxu0 0.0
    %5174 = vmatpush1.msra.mxu0 0.0
    %5175 = vmatprep.subr.mxu0 0.0
    %5176 = vmatpush1.msra.mxu0 0.0
    %5177 = vmatprep.subr.mxu0 0.0
    %5178 = vmatpush1.msra.mxu0 0.0
    %5179 = vmatprep.subr.mxu0 0.0
    %5180 = vmatpush1.msra.mxu0 0.0
    %5181 = vmatprep.subr.mxu0 0.0
    %5182 = vmatpush1.msra.mxu0 0.0
    %5183 = vmatprep.subr.mxu0 0.0
    %5184 = vmatpush1.msra.mxu0 0.0
    %5185 = vmatprep.subr.mxu0 0.0
    %5186 = vmatpush1.msra.mxu0 %v50
    %5187 = vmatprep.subr.mxu0 0.0
    %5188 = vmatpush1.msra.mxu0 %v47
    %5189 = vmatprep.subr.mxu0 0.0
    %5190 = vmatpush1.msra.mxu0 %v44
    %5191 = vmatprep.subr.mxu0 0.0
    %5192 = vmatpush1.msra.mxu0 %v41
    %5193 = vmatprep.subr.mxu0 0.0
    %5194 = vmatpush2.msra.mxu0 0.0
    %5195 = vmatprep.subr.mxu0 0.0
    %5196 = vmatpush2.msra.mxu0 0.0
    %5197 = vmatprep.subr.mxu0 0.0
    %5198 = vmatpush2.msra.mxu0 0.0
    %5199 = vmatprep.subr.mxu0 0.0
    %5200 = vmatpush2.msra.mxu0 0.0
    %5201 = vmatprep.subr.mxu0 0.0
    %5202 = vmatpush2.msra.mxu0 0.0
    %5203 = vmatprep.subr.mxu0 0.0
    %5204 = vmatpush2.msra.mxu0 0.0
    %5205 = vmatprep.subr.mxu0 0.0
    %5206 = vmatpush2.msra.mxu0 0.0
    %5207 = vmatprep.subr.mxu0 0.0
    %5208 = vmatpush2.msra.mxu0 0.0
    %5209 = vmatprep.subr.mxu0 0.0
    %5210 = vmatpush2.msra.mxu0 0.0
    %5211 = vmatprep.subr.mxu0 0.0
    %5212 = vmatpush2.msra.mxu0 0.0
    %5213 = vmatprep.subr.mxu0 0.0
    %5214 = vmatpush2.msra.mxu0 0.0
    %5215 = vmatprep.subr.mxu0 0.0
    %5216 = vmatpush2.msra.mxu0 0.0
    %5217 = vmatprep.subr.mxu0 0.0
    %5218 = vmatpush2.msra.mxu0 0.0
    %5219 = vmatprep.subr.mxu0 0.0
    %5220 = vmatpush2.msra.mxu0 0.0
    %5221 = vmatprep.subr.mxu0 0.0
    %5222 = vmatpush2.msra.mxu0 0.0
    %5223 = vmatprep.subr.mxu0 0.0
    %5224 = vmatpush2.msra.mxu0 0.0
    %5225 = vmatprep.mubr.f32.mxu0 0.0
    %5226 = vmatmul.mubr.f32.gmra.mxu0 %v5080
    %v5227 = vpop.f32.mrf.mxu0
    %v5228 = vadd.f32 0.0, %v5227
    %v5229 = vpop.f32.mrf.mxu0
    %5230 = vmatprep.mubr.f32.mxu0 0.0
    %5231 = vmatmul.mubr.f32.gmra.mxu0 %v5082
    %v5232 = vpop.f32.mrf.mxu0
    %v5233 = vadd.f32 0.0, %v5232
    %v5234 = vpop.f32.mrf.mxu0
    %5235 = vdwg.mxu0
    %v5236 = vadd.f32 %v2077, %v5151
    %v5237 = vadd.f32 %v2079, %v5153
    %v5238 = vadd.f32 %v2083, %v5157
    %v5239 = vadd.f32 %v2085, %v5159
    %v5240 = vtanh.pop %v5236
    %v5241 = vtanh.pop %v5237
    %v5242 = vtanh.pop %v5238
    %v5243 = vtanh.pop %v5239
    %5244 = vmatprep.subr.mxu0 %v222
    %5245 = vmatpush1.msra.mxu0 %v221
    %5246 = vmatprep.subr.mxu0 %v220
    %5247 = vmatpush1.msra.mxu0 %v219
    %5248 = vmatprep.subr.mxu0 %v218
    %5249 = vmatpush1.msra.mxu0 %v217
    %5250 = vmatprep.subr.mxu0 %v216
    %5251 = vmatpush1.msra.mxu0 %v215
    %5252 = vmatprep.subr.mxu0 %v214
    %5253 = vmatpush1.msra.mxu0 %v213
    %5254 = vmatprep.subr.mxu0 %v212
    %5255 = vmatpush1.msra.mxu0 %v211
    %5256 = vmatprep.subr.mxu0 %v210
    %5257 = vmatpush1.msra.mxu0 %v209
    %5258 = vmatprep.subr.mxu0 %v208
    %5259 = vmatpush1.msra.mxu0 %v207
    %5260 = vmatprep.subr.mxu0 %v206
    %5261 = vmatpush1.msra.mxu0 %v205
    %5262 = vmatprep.subr.mxu0 %v204
    %5263 = vmatpush1.msra.mxu0 %v203
    %5264 = vmatprep.subr.mxu0 %v202
    %5265 = vmatpush1.msra.mxu0 %v201
    %5266 = vmatprep.subr.mxu0 %v200
    %5267 = vmatpush1.msra.mxu0 %v199
    %5268 = vmatprep.subr.mxu0 %v198
    %5269 = vmatpush1.msra.mxu0 %v197
    %5270 = vmatprep.subr.mxu0 %v196
    %5271 = vmatpush1.msra.mxu0 %v195
    %5272 = vmatprep.subr.mxu0 %v194
    %5273 = vmatpush1.msra.mxu0 %v193
    %5274 = vmatprep.subr.mxu0 %v192
    %5275 = vmatpush1.msra.mxu0 %v191
    %5276 = vmatprep.subr.mxu0 %v254
    %5277 = vmatpush2.msra.mxu0 %v253
    %5278 = vmatprep.subr.mxu0 %v252
    %5279 = vmatpush2.msra.mxu0 %v251
    %5280 = vmatprep.subr.mxu0 %v250
    %5281 = vmatpush2.msra.mxu0 %v249
    %5282 = vmatprep.subr.mxu0 %v248
    %5283 = vmatpush2.msra.mxu0 %v247
    %5284 = vmatprep.subr.mxu0 %v246
    %5285 = vmatpush2.msra.mxu0 %v245
    %5286 = vmatprep.subr.mxu0 %v244
    %5287 = vmatpush2.msra.mxu0 %v243
    %5288 = vmatprep.subr.mxu0 %v242
    %5289 = vmatpush2.msra.mxu0 %v241
    %5290 = vmatprep.subr.mxu0 %v240
    %5291 = vmatpush2.msra.mxu0 %v239
    %5292 = vmatprep.subr.mxu0 %v238
    %5293 = vmatpush2.msra.mxu0 %v237
    %5294 = vmatprep.subr.mxu0 %v236
    %5295 = vmatpush2.msra.mxu0 %v235
    %5296 = vmatprep.subr.mxu0 %v234
    %5297 = vmatpush2.msra.mxu0 %v233
    %5298 = vmatprep.subr.mxu0 %v232
    %5299 = vmatpush2.msra.mxu0 %v231
    %5300 = vmatprep.subr.mxu0 %v230
    %5301 = vmatpush2.msra.mxu0 %v229
    %5302 = vmatprep.subr.mxu0 %v228
    %5303 = vmatpush2.msra.mxu0 %v227
    %5304 = vmatprep.subr.mxu0 %v226
    %5305 = vmatpush2.msra.mxu0 %v225
    %5306 = vmatprep.subr.mxu0 %v224
    %5307 = vmatpush2.msra.mxu0 %v223
    %5308 = vmatprep.mubr.f32.mxu0 %v5241
    %5309 = vmatmul.mubr.f32.gmra.mxu0 %v5240
    %v5310 = vpop.f32.mrf.mxu0
    %v5311 = vadd.f32 %v2284, %v5310
    %v5312 = vpop.f32.mrf.mxu0
    %v5313 = vadd.f32 %v2285, %v5312
    %5314 = vmatprep.mubr.f32.mxu0 %v5243
    %5315 = vmatmul.mubr.f32.gmra.mxu0 %v5242
    %v5316 = vpop.f32.mrf.mxu0
    %v5317 = vadd.f32 %v2286, %v5316
    %v5318 = vpop.f32.mrf.mxu0
    %v5319 = vadd.f32 %v2287, %v5318
    %5320 = vdwg.mxu0
    %v5321 = vmax.f32 %v5311, %v5313
    %5322 = vmax.xlane.f32.xlu0 %v5321
    %v5323 = vpop.xlane.xlu0 %5322
    %v5324 = vmax.f32 %v5317, %v5319
    %5325 = vmax.xlane.f32.xlu0 %v5324
    %v5326 = vpop.xlane.xlu0 %5325
    %v5327 = vsub.f32 %v5311, %v5323
    %v5328 = vsub.f32 %v5313, %v5323
    %v5329 = vsub.f32 %v5317, %v5326
    %v5330 = vsub.f32 %v5319, %v5326
    %v5331 = vmul.f32 %v5327, 1.442695
    %v5332 = vpow.pop %v5331
    %v5333 = vmul.f32 %v5328, 1.442695
    %v5334 = vpow.pop %v5333
    %v5335 = vmul.f32 %v5329, 1.442695
    %v5336 = vpow.pop %v5335
    %v5337 = vmul.f32 %v5330, 1.442695
    %v5338 = vpow.pop %v5337
    %v5339 = vadd.f32 %v5332, %v5334
    %5340 = vadd.xlane.f32.xlu0 %v5339
    %v5341 = vpop.xlane.xlu0 %5340
    %v5342 = vadd.f32 %v5336, %v5338
    %5343 = vadd.xlane.f32.xlu0 %v5342
    %v5344 = vpop.xlane.xlu0 %5343
    %v5345 = vrcp.pop %v5341
    %v5346 = vrcp.pop %v5344
    %v5347 = vmul.f32 %v5345, 32.0
    %v5348 = vmul.f32 %v5346, 32.0
    %v5349 = vmul.f32 %v5332, %v5347
    %v5350 = vmul.f32 %v5334, %v5347
    %v5351 = vmul.f32 %v5336, %v5348
    %v5352 = vmul.f32 %v5338, %v5348
    %v5353 = vmul.f32 %v5349, %v1904
    %v5354 = vmul.f32 %v5350, %v1905
    %v5355 = vmul.f32 %v5351, %v1906
    %v5356 = vmul.f32 %v5352, %v1907
    %5357 = vmatprep.subr.mxu0 0.0
    %5358 = vmatpush1.msra.mxu0 %v270
    %5359 = vmatprep.subr.mxu0 0.0
    %5360 = vmatpush1.msra.mxu0 %v269
    %5361 = vmatprep.subr.mxu0 0.0
    %5362 = vmatpush1.msra.mxu0 %v268
    %5363 = vmatprep.subr.mxu0 0.0
    %5364 = vmatpush1.msra.mxu0 %v267
    %5365 = vmatprep.subr.mxu0 0.0
    %5366 = vmatpush1.msra.mxu0 %v266
    %5367 = vmatprep.subr.mxu0 0.0
    %5368 = vmatpush1.msra.mxu0 %v265
    %5369 = vmatprep.subr.mxu0 0.0
    %5370 = vmatpush1.msra.mxu0 %v264
    %5371 = vmatprep.subr.mxu0 0.0
    %5372 = vmatpush1.msra.mxu0 %v263
    %5373 = vmatprep.subr.mxu0 0.0
    %5374 = vmatpush1.msra.mxu0 %v262
    %5375 = vmatprep.subr.mxu0 0.0
    %5376 = vmatpush1.msra.mxu0 %v261
    %5377 = vmatprep.subr.mxu0 0.0
    %5378 = vmatpush1.msra.mxu0 %v260
    %5379 = vmatprep.subr.mxu0 0.0
    %5380 = vmatpush1.msra.mxu0 %v259
    %5381 = vmatprep.subr.mxu0 0.0
    %5382 = vmatpush1.msra.mxu0 %v258
    %5383 = vmatprep.subr.mxu0 0.0
    %5384 = vmatpush1.msra.mxu0 %v257
    %5385 = vmatprep.subr.mxu0 0.0
    %5386 = vmatpush1.msra.mxu0 %v256
    %5387 = vmatprep.subr.mxu0 0.0
    %5388 = vmatpush1.msra.mxu0 %v255
    %5389 = vmatprep.subr.mxu0 0.0
    %5390 = vmatpush2.msra.mxu0 %v286
    %5391 = vmatprep.subr.mxu0 0.0
    %5392 = vmatpush2.msra.mxu0 %v285
    %5393 = vmatprep.subr.mxu0 0.0
    %5394 = vmatpush2.msra.mxu0 %v284
    %5395 = vmatprep.subr.mxu0 0.0
    %5396 = vmatpush2.msra.mxu0 %v283
    %5397 = vmatprep.subr.mxu0 0.0
    %5398 = vmatpush2.msra.mxu0 %v282
    %5399 = vmatprep.subr.mxu0 0.0
    %5400 = vmatpush2.msra.mxu0 %v281
    %5401 = vmatprep.subr.mxu0 0.0
    %5402 = vmatpush2.msra.mxu0 %v280
    %5403 = vmatprep.subr.mxu0 0.0
    %5404 = vmatpush2.msra.mxu0 %v279
    %5405 = vmatprep.subr.mxu0 0.0
    %5406 = vmatpush2.msra.mxu0 %v278
    %5407 = vmatprep.subr.mxu0 0.0
    %5408 = vmatpush2.msra.mxu0 %v277
    %5409 = vmatprep.subr.mxu0 0.0
    %5410 = vmatpush2.msra.mxu0 %v276
    %5411 = vmatprep.subr.mxu0 0.0
    %5412 = vmatpush2.msra.mxu0 %v275
    %5413 = vmatprep.subr.mxu0 0.0
    %5414 = vmatpush2.msra.mxu0 %v274
    %5415 = vmatprep.subr.mxu0 0.0
    %5416 = vmatpush2.msra.mxu0 %v273
    %5417 = vmatprep.subr.mxu0 0.0
    %5418 = vmatpush2.msra.mxu0 %v272
    %5419 = vmatprep.subr.mxu0 0.0
    %5420 = vmatpush2.msra.mxu0 %v271
    %5421 = vmatprep.mubr.f32.mxu0 %v5354
    %5422 = vmatmul.mubr.f32.gmra.mxu0 %v5353
    %v5423 = vpop.f32.mrf.mxu0
    %v5424 = vadd.f32 0.0, %v5423
    %v5425 = vpop.f32.mrf.mxu0
    %5426 = vmatprep.mubr.f32.mxu0 %v5356
    %5427 = vmatmul.mubr.f32.gmra.mxu0 %v5355
    %v5428 = vpop.f32.mrf.mxu0
    %v5429 = vadd.f32 0.0, %v5428
    %v5430 = vpop.f32.mrf.mxu0
    %5431 = vdwg.mxu0
    %5434 = vrot.lane.b32.xlu0 %v5228, 96
    %v5435 = vpop.permute.xlu0 %5434
    %5436 = vrot.lane.b32.xlu0 %v5233, 96
    %v5437 = vpop.permute.xlu0 %5436
    %v5440 = vadd.f32 %v2266, %v5435
    %v5441 = vadd.f32 %v2271, %v5437
    %5444 = vrot.lane.b32.xlu0 %v5424, 96
    %v5445 = vpop.permute.xlu0 %5444
    %5446 = vrot.lane.b32.xlu0 %v5429, 96
    %v5447 = vpop.permute.xlu0 %5446
    %v5450 = vadd.f32 %v5440, %v5445
    %v5451 = vadd.f32 %v5441, %v5447
    %5454 = vrot.lane.b32.xlu0 %v5450, 112
    %v5455 = vpop.permute.xlu0 %5454
    %5456 = vrot.lane.b32.xlu0 %v5451, 112
    %v5457 = vpop.permute.xlu0 %5456
    %v5460 = vmax.f32 %v5450, %v5455
    %v5461 = vmax.f32 %v5451, %v5457
    %5464 = vrot.lane.b32.xlu0 %v5460, 32
    %v5465 = vpop.permute.xlu0 %5464
    %5466 = vrot.lane.b32.xlu0 %v5461, 32
    %v5467 = vpop.permute.xlu0 %5466
    %s5470 = scalar_lea.vmem [#allocation3], 80
    %5471 = vst.msk [vmem:[%s5470] sm:$0xff] %vm654, %v5465
    %5472 = vst.msk [vmem:[%s5470 + $0x8] sm:$0xff] %vm654, %v5467
    %v5473 = vadd.f32 %v2276, %v5445
    %v5474 = vadd.f32 %v2281, %v5447
    %5475 = vmatprep.subr.mxu0 0.0
    %5476 = vmatpush1.msra.mxu0 0.0
    %5477 = vmatprep.subr.mxu0 0.0
    %5478 = vmatpush1.msra.mxu0 0.0
    %5479 = vmatprep.subr.mxu0 0.0
    %5480 = vmatpush1.msra.mxu0 0.0
    %5481 = vmatprep.subr.mxu0 0.0
    %5482 = vmatpush1.msra.mxu0 0.0
    %5483 = vmatprep.subr.mxu0 0.0
    %5484 = vmatpush1.msra.mxu0 0.0
    %5485 = vmatprep.subr.mxu0 0.0
    %5486 = vmatpush1.msra.mxu0 0.0
    %5487 = vmatprep.subr.mxu0 0.0
    %5488 = vmatpush1.msra.mxu0 0.0
    %5489 = vmatprep.subr.mxu0 0.0
    %5490 = vmatpush1.msra.mxu0 0.0
    %5491 = vmatprep.subr.mxu0 0.0
    %5492 = vmatpush1.msra.mxu0 0.0
    %5493 = vmatprep.subr.mxu0 0.0
    %5494 = vmatpush1.msra.mxu0 0.0
    %5495 = vmatprep.subr.mxu0 0.0
    %5496 = vmatpush1.msra.mxu0 0.0
    %5497 = vmatprep.subr.mxu0 0.0
    %5498 = vmatpush1.msra.mxu0 0.0
    %5499 = vmatprep.subr.mxu0 0.0
    %5500 = vmatpush1.msra.mxu0 %v38
    %5501 = vmatprep.subr.mxu0 0.0
    %5502 = vmatpush1.msra.mxu0 %v37
    %5503 = vmatprep.subr.mxu0 0.0
    %5504 = vmatpush1.msra.mxu0 %v36
    %5505 = vmatprep.subr.mxu0 0.0
    %5506 = vmatpush1.msra.mxu0 %v35
    %5507 = vmatprep.subr.mxu0 0.0
    %5508 = vmatpush2.msra.mxu0 0.0
    %5509 = vmatprep.subr.mxu0 0.0
    %5510 = vmatpush2.msra.mxu0 0.0
    %5511 = vmatprep.subr.mxu0 0.0
    %5512 = vmatpush2.msra.mxu0 0.0
    %5513 = vmatprep.subr.mxu0 0.0
    %5514 = vmatpush2.msra.mxu0 0.0
    %5515 = vmatprep.subr.mxu0 0.0
    %5516 = vmatpush2.msra.mxu0 0.0
    %5517 = vmatprep.subr.mxu0 0.0
    %5518 = vmatpush2.msra.mxu0 0.0
    %5519 = vmatprep.subr.mxu0 0.0
    %5520 = vmatpush2.msra.mxu0 0.0
    %5521 = vmatprep.subr.mxu0 0.0
    %5522 = vmatpush2.msra.mxu0 0.0
    %5523 = vmatprep.subr.mxu0 0.0
    %5524 = vmatpush2.msra.mxu0 0.0
    %5525 = vmatprep.subr.mxu0 0.0
    %5526 = vmatpush2.msra.mxu0 0.0
    %5527 = vmatprep.subr.mxu0 0.0
    %5528 = vmatpush2.msra.mxu0 0.0
    %5529 = vmatprep.subr.mxu0 0.0
    %5530 = vmatpush2.msra.mxu0 0.0
    %5531 = vmatprep.subr.mxu0 0.0
    %5532 = vmatpush2.msra.mxu0 0.0
    %5533 = vmatprep.subr.mxu0 0.0
    %5534 = vmatpush2.msra.mxu0 0.0
    %5535 = vmatprep.subr.mxu0 0.0
    %5536 = vmatpush2.msra.mxu0 0.0
    %5537 = vmatprep.subr.mxu0 0.0
    %5538 = vmatpush2.msra.mxu0 0.0
    %5539 = vmatprep.mubr.f32.mxu0 0.0
    %5540 = vmatmul.mubr.f32.gmra.mxu0 %v5080
    %v5541 = vpop.f32.mrf.mxu0
    %v5542 = vadd.f32 %v2294, %v5541
    %v5543 = vpop.f32.mrf.mxu0
    %5544 = vmatprep.mubr.f32.mxu0 0.0
    %5545 = vmatmul.mubr.f32.gmra.mxu0 %v5082
    %v5546 = vpop.f32.mrf.mxu0
    %v5547 = vadd.f32 %v2294, %v5546
    %v5548 = vpop.f32.mrf.mxu0
    %5549 = vdwg.mxu0
    %v5550 = vadd.f32 %v5473, %v5542
    %v5551 = vadd.f32 %v5474, %v5547
    %v5552 = vxor.u32 %v5550, 2147483648
    %v5553 = vxor.u32 %v5551, 2147483648
    %v5554 = vmul.f32 %v5552, 1.442695
    %v5555 = vpow.pop %v5554
    %v5556 = vmul.f32 %v5553, 1.442695
    %v5557 = vpow.pop %v5556
    %v5558 = vadd.f32 %v5555, 1.0
    %v5559 = vadd.f32 %v5557, 1.0
    %v5560 = vrcp.pop %v5558
    %v5561 = vmul.f32 1.0, %v5560
    %v5562 = vrcp.pop %v5559
    %v5563 = vmul.f32 1.0, %v5562
    %5566 = vrot.lane.b32.xlu0 %v5542, 64
    %v5567 = vpop.permute.xlu0 %5566
    %5568 = vrot.lane.b32.xlu0 %v5547, 64
    %v5569 = vpop.permute.xlu0 %5568
    %v5572 = vmul.f32 %v5561, %v5567
    %v5573 = vmul.f32 %v5563, %v5569
    %5576 = vrot.lane.b32.xlu0 %v5572, 64
    %v5577 = vpop.permute.xlu0 %5576
    %5578 = vrot.lane.b32.xlu0 %v5573, 64
    %v5579 = vpop.permute.xlu0 %5578
    %v5582 = vadd.f32 %v5473, %v5577
    %v5583 = vadd.f32 %v5474, %v5579
    %v5584 = vtanh.pop %v5582
    %v5585 = vtanh.pop %v5583
    %v5586 = vsub.f32 1.0, %v5561
    %v5587 = vsub.f32 1.0, %v5563
    %5590 = vrot.lane.b32.xlu0 %v5584, 96
    %v5591 = vpop.permute.xlu0 %5590
    %5592 = vrot.lane.b32.xlu0 %v5585, 96
    %v5593 = vpop.permute.xlu0 %5592
    %v5596 = vmul.f32 %v5586, %v5591
    %v5597 = vmul.f32 %v5587, %v5593
    %v5598 = vmul.f32 %v5561, %v5072
    %v5599 = vmul.f32 %v5563, %v5073
    %v5600 = vadd.f32 %v5596, %v5598
    %v5601 = vadd.f32 %v5597, %v5599
    %5604 = vrot.lane.b32.xlu0 %v5600, 96
    %v5605 = vpop.permute.xlu0 %5604
    %5606 = vrot.lane.b32.xlu0 %v5601, 96
    %v5607 = vpop.permute.xlu0 %5606
    %v5608 = vsel %vm316, %v5605, 0
    %v5610 = vsel %vm316, %v5607, 0
    %5612 = vmatprep.subr.mxu0 0.0
    %5613 = vmatpush1.msra.mxu0 0.0
    %5614 = vmatprep.subr.mxu0 0.0
    %5615 = vmatpush1.msra.mxu0 0.0
    %5616 = vmatprep.subr.mxu0 0.0
    %5617 = vmatpush1.msra.mxu0 0.0
    %5618 = vmatprep.subr.mxu0 0.0
    %5619 = vmatpush1.msra.mxu0 0.0
    %5620 = vmatprep.subr.mxu0 0.0
    %5621 = vmatpush1.msra.mxu0 0.0
    %5622 = vmatprep.subr.mxu0 0.0
    %5623 = vmatpush1.msra.mxu0 0.0
    %5624 = vmatprep.subr.mxu0 0.0
    %5625 = vmatpush1.msra.mxu0 0.0
    %5626 = vmatprep.subr.mxu0 0.0
    %5627 = vmatpush1.msra.mxu0 0.0
    %5628 = vmatprep.subr.mxu0 0.0
    %5629 = vmatpush1.msra.mxu0 0.0
    %5630 = vmatprep.subr.mxu0 0.0
    %5631 = vmatpush1.msra.mxu0 0.0
    %5632 = vmatprep.subr.mxu0 0.0
    %5633 = vmatpush1.msra.mxu0 0.0
    %5634 = vmatprep.subr.mxu0 0.0
    %5635 = vmatpush1.msra.mxu0 0.0
    %5636 = vmatprep.subr.mxu0 %v49
    %5637 = vmatpush1.msra.mxu0 %v48
    %5638 = vmatprep.subr.mxu0 %v46
    %5639 = vmatpush1.msra.mxu0 %v45
    %5640 = vmatprep.subr.mxu0 %v43
    %5641 = vmatpush1.msra.mxu0 %v42
    %5642 = vmatprep.subr.mxu0 %v40
    %5643 = vmatpush1.msra.mxu0 %v39
    %5644 = vmatprep.subr.mxu0 0.0
    %5645 = vmatpush2.msra.mxu0 0.0
    %5646 = vmatprep.subr.mxu0 0.0
    %5647 = vmatpush2.msra.mxu0 0.0
    %5648 = vmatprep.subr.mxu0 0.0
    %5649 = vmatpush2.msra.mxu0 0.0
    %5650 = vmatprep.subr.mxu0 0.0
    %5651 = vmatpush2.msra.mxu0 0.0
    %5652 = vmatprep.subr.mxu0 0.0
    %5653 = vmatpush2.msra.mxu0 0.0
    %5654 = vmatprep.subr.mxu0 0.0
    %5655 = vmatpush2.msra.mxu0 0.0
    %5656 = vmatprep.subr.mxu0 0.0
    %5657 = vmatpush2.msra.mxu0 0.0
    %5658 = vmatprep.subr.mxu0 0.0
    %5659 = vmatpush2.msra.mxu0 0.0
    %5660 = vmatprep.subr.mxu0 0.0
    %5661 = vmatpush2.msra.mxu0 0.0
    %5662 = vmatprep.subr.mxu0 0.0
    %5663 = vmatpush2.msra.mxu0 0.0
    %5664 = vmatprep.subr.mxu0 0.0
    %5665 = vmatpush2.msra.mxu0 0.0
    %5666 = vmatprep.subr.mxu0 0.0
    %5667 = vmatpush2.msra.mxu0 0.0
    %5668 = vmatprep.subr.mxu0 0.0
    %5669 = vmatpush2.msra.mxu0 0.0
    %5670 = vmatprep.subr.mxu0 0.0
    %5671 = vmatpush2.msra.mxu0 0.0
    %5672 = vmatprep.subr.mxu0 0.0
    %5673 = vmatpush2.msra.mxu0 0.0
    %5674 = vmatprep.subr.mxu0 0.0
    %5675 = vmatpush2.msra.mxu0 0.0
    %5676 = vmatprep.mubr.f32.mxu0 0.0
    %5677 = vmatmul.mubr.f32.gmra.mxu0 %v5608
    %v5678 = vpop.f32.mrf.mxu0
    %v5679 = vadd.f32 0.0, %v5678
    %v5680 = vpop.f32.mrf.mxu0
    %v5681 = vadd.f32 0.0, %v5680
    %5682 = vmatprep.mubr.f32.mxu0 0.0
    %5683 = vmatmul.mubr.f32.gmra.mxu0 %v5610
    %v5684 = vpop.f32.mrf.mxu0
    %v5685 = vadd.f32 0.0, %v5684
    %v5686 = vpop.f32.mrf.mxu0
    %v5687 = vadd.f32 0.0, %v5686
    %5688 = vdwg.mxu0
    %5689 = vmatprep.subr.mxu0 0.0
    %5690 = vmatpush1.msra.mxu0 0.0
    %5691 = vmatprep.subr.mxu0 0.0
    %5692 = vmatpush1.msra.mxu0 0.0
    %5693 = vmatprep.subr.mxu0 0.0
    %5694 = vmatpush1.msra.mxu0 0.0
    %5695 = vmatprep.subr.mxu0 0.0
    %5696 = vmatpush1.msra.mxu0 0.0
    %5697 = vmatprep.subr.mxu0 0.0
    %5698 = vmatpush1.msra.mxu0 0.0
    %5699 = vmatprep.subr.mxu0 0.0
    %5700 = vmatpush1.msra.mxu0 0.0
    %5701 = vmatprep.subr.mxu0 0.0
    %5702 = vmatpush1.msra.mxu0 0.0
    %5703 = vmatprep.subr.mxu0 0.0
    %5704 = vmatpush1.msra.mxu0 0.0
    %5705 = vmatprep.subr.mxu0 0.0
    %5706 = vmatpush1.msra.mxu0 0.0
    %5707 = vmatprep.subr.mxu0 0.0
    %5708 = vmatpush1.msra.mxu0 0.0
    %5709 = vmatprep.subr.mxu0 0.0
    %5710 = vmatpush1.msra.mxu0 0.0
    %5711 = vmatprep.subr.mxu0 0.0
    %5712 = vmatpush1.msra.mxu0 0.0
    %5713 = vmatprep.subr.mxu0 0.0
    %5714 = vmatpush1.msra.mxu0 %v50
    %5715 = vmatprep.subr.mxu0 0.0
    %5716 = vmatpush1.msra.mxu0 %v47
    %5717 = vmatprep.subr.mxu0 0.0
    %5718 = vmatpush1.msra.mxu0 %v44
    %5719 = vmatprep.subr.mxu0 0.0
    %5720 = vmatpush1.msra.mxu0 %v41
    %5721 = vmatprep.subr.mxu0 0.0
    %5722 = vmatpush2.msra.mxu0 0.0
    %5723 = vmatprep.subr.mxu0 0.0
    %5724 = vmatpush2.msra.mxu0 0.0
    %5725 = vmatprep.subr.mxu0 0.0
    %5726 = vmatpush2.msra.mxu0 0.0
    %5727 = vmatprep.subr.mxu0 0.0
    %5728 = vmatpush2.msra.mxu0 0.0
    %5729 = vmatprep.subr.mxu0 0.0
    %5730 = vmatpush2.msra.mxu0 0.0
    %5731 = vmatprep.subr.mxu0 0.0
    %5732 = vmatpush2.msra.mxu0 0.0
    %5733 = vmatprep.subr.mxu0 0.0
    %5734 = vmatpush2.msra.mxu0 0.0
    %5735 = vmatprep.subr.mxu0 0.0
    %5736 = vmatpush2.msra.mxu0 0.0
    %5737 = vmatprep.subr.mxu0 0.0
    %5738 = vmatpush2.msra.mxu0 0.0
    %5739 = vmatprep.subr.mxu0 0.0
    %5740 = vmatpush2.msra.mxu0 0.0
    %5741 = vmatprep.subr.mxu0 0.0
    %5742 = vmatpush2.msra.mxu0 0.0
    %5743 = vmatprep.subr.mxu0 0.0
    %5744 = vmatpush2.msra.mxu0 0.0
    %5745 = vmatprep.subr.mxu0 0.0
    %5746 = vmatpush2.msra.mxu0 0.0
    %5747 = vmatprep.subr.mxu0 0.0
    %5748 = vmatpush2.msra.mxu0 0.0
    %5749 = vmatprep.subr.mxu0 0.0
    %5750 = vmatpush2.msra.mxu0 0.0
    %5751 = vmatprep.subr.mxu0 0.0
    %5752 = vmatpush2.msra.mxu0 0.0
    %5753 = vmatprep.mubr.f32.mxu0 0.0
    %5754 = vmatmul.mubr.f32.gmra.mxu0 %v5608
    %v5755 = vpop.f32.mrf.mxu0
    %v5756 = vadd.f32 0.0, %v5755
    %v5757 = vpop.f32.mrf.mxu0
    %5758 = vmatprep.mubr.f32.mxu0 0.0
    %5759 = vmatmul.mubr.f32.gmra.mxu0 %v5610
    %v5760 = vpop.f32.mrf.mxu0
    %v5761 = vadd.f32 0.0, %v5760
    %v5762 = vpop.f32.mrf.mxu0
    %5763 = vdwg.mxu0
    %v5764 = vadd.f32 %v2077, %v5679
    %v5765 = vadd.f32 %v2079, %v5681
    %v5766 = vadd.f32 %v2083, %v5685
    %v5767 = vadd.f32 %v2085, %v5687
    %v5768 = vtanh.pop %v5764
    %v5769 = vtanh.pop %v5765
    %v5770 = vtanh.pop %v5766
    %v5771 = vtanh.pop %v5767
    %5772 = vmatprep.subr.mxu0 %v222
    %5773 = vmatpush1.msra.mxu0 %v221
    %5774 = vmatprep.subr.mxu0 %v220
    %5775 = vmatpush1.msra.mxu0 %v219
    %5776 = vmatprep.subr.mxu0 %v218
    %5777 = vmatpush1.msra.mxu0 %v217
    %5778 = vmatprep.subr.mxu0 %v216
    %5779 = vmatpush1.msra.mxu0 %v215
    %5780 = vmatprep.subr.mxu0 %v214
    %5781 = vmatpush1.msra.mxu0 %v213
    %5782 = vmatprep.subr.mxu0 %v212
    %5783 = vmatpush1.msra.mxu0 %v211
    %5784 = vmatprep.subr.mxu0 %v210
    %5785 = vmatpush1.msra.mxu0 %v209
    %5786 = vmatprep.subr.mxu0 %v208
    %5787 = vmatpush1.msra.mxu0 %v207
    %5788 = vmatprep.subr.mxu0 %v206
    %5789 = vmatpush1.msra.mxu0 %v205
    %5790 = vmatprep.subr.mxu0 %v204
    %5791 = vmatpush1.msra.mxu0 %v203
    %5792 = vmatprep.subr.mxu0 %v202
    %5793 = vmatpush1.msra.mxu0 %v201
    %5794 = vmatprep.subr.mxu0 %v200
    %5795 = vmatpush1.msra.mxu0 %v199
    %5796 = vmatprep.subr.mxu0 %v198
    %5797 = vmatpush1.msra.mxu0 %v197
    %5798 = vmatprep.subr.mxu0 %v196
    %5799 = vmatpush1.msra.mxu0 %v195
    %5800 = vmatprep.subr.mxu0 %v194
    %5801 = vmatpush1.msra.mxu0 %v193
    %5802 = vmatprep.subr.mxu0 %v192
    %5803 = vmatpush1.msra.mxu0 %v191
    %5804 = vmatprep.subr.mxu0 %v254
    %5805 = vmatpush2.msra.mxu0 %v253
    %5806 = vmatprep.subr.mxu0 %v252
    %5807 = vmatpush2.msra.mxu0 %v251
    %5808 = vmatprep.subr.mxu0 %v250
    %5809 = vmatpush2.msra.mxu0 %v249
    %5810 = vmatprep.subr.mxu0 %v248
    %5811 = vmatpush2.msra.mxu0 %v247
    %5812 = vmatprep.subr.mxu0 %v246
    %5813 = vmatpush2.msra.mxu0 %v245
    %5814 = vmatprep.subr.mxu0 %v244
    %5815 = vmatpush2.msra.mxu0 %v243
    %5816 = vmatprep.subr.mxu0 %v242
    %5817 = vmatpush2.msra.mxu0 %v241
    %5818 = vmatprep.subr.mxu0 %v240
    %5819 = vmatpush2.msra.mxu0 %v239
    %5820 = vmatprep.subr.mxu0 %v238
    %5821 = vmatpush2.msra.mxu0 %v237
    %5822 = vmatprep.subr.mxu0 %v236
    %5823 = vmatpush2.msra.mxu0 %v235
    %5824 = vmatprep.subr.mxu0 %v234
    %5825 = vmatpush2.msra.mxu0 %v233
    %5826 = vmatprep.subr.mxu0 %v232
    %5827 = vmatpush2.msra.mxu0 %v231
    %5828 = vmatprep.subr.mxu0 %v230
    %5829 = vmatpush2.msra.mxu0 %v229
    %5830 = vmatprep.subr.mxu0 %v228
    %5831 = vmatpush2.msra.mxu0 %v227
    %5832 = vmatprep.subr.mxu0 %v226
    %5833 = vmatpush2.msra.mxu0 %v225
    %5834 = vmatprep.subr.mxu0 %v224
    %5835 = vmatpush2.msra.mxu0 %v223
    %5836 = vmatprep.mubr.f32.mxu0 %v5769
    %5837 = vmatmul.mubr.f32.gmra.mxu0 %v5768
    %v5838 = vpop.f32.mrf.mxu0
    %v5839 = vadd.f32 %v2284, %v5838
    %v5840 = vpop.f32.mrf.mxu0
    %v5841 = vadd.f32 %v2285, %v5840
    %5842 = vmatprep.mubr.f32.mxu0 %v5771
    %5843 = vmatmul.mubr.f32.gmra.mxu0 %v5770
    %v5844 = vpop.f32.mrf.mxu0
    %v5845 = vadd.f32 %v2286, %v5844
    %v5846 = vpop.f32.mrf.mxu0
    %v5847 = vadd.f32 %v2287, %v5846
    %5848 = vdwg.mxu0
    %v5849 = vmax.f32 %v5839, %v5841
    %5850 = vmax.xlane.f32.xlu0 %v5849
    %v5851 = vpop.xlane.xlu0 %5850
    %v5852 = vmax.f32 %v5845, %v5847
    %5853 = vmax.xlane.f32.xlu0 %v5852
    %v5854 = vpop.xlane.xlu0 %5853
    %v5855 = vsub.f32 %v5839, %v5851
    %v5856 = vsub.f32 %v5841, %v5851
    %v5857 = vsub.f32 %v5845, %v5854
    %v5858 = vsub.f32 %v5847, %v5854
    %v5859 = vmul.f32 %v5855, 1.442695
    %v5860 = vpow.pop %v5859
    %v5861 = vmul.f32 %v5856, 1.442695
    %v5862 = vpow.pop %v5861
    %v5863 = vmul.f32 %v5857, 1.442695
    %v5864 = vpow.pop %v5863
    %v5865 = vmul.f32 %v5858, 1.442695
    %v5866 = vpow.pop %v5865
    %v5867 = vadd.f32 %v5860, %v5862
    %5868 = vadd.xlane.f32.xlu0 %v5867
    %v5869 = vpop.xlane.xlu0 %5868
    %v5870 = vadd.f32 %v5864, %v5866
    %5871 = vadd.xlane.f32.xlu0 %v5870
    %v5872 = vpop.xlane.xlu0 %5871
    %v5873 = vrcp.pop %v5869
    %v5874 = vrcp.pop %v5872
    %v5875 = vmul.f32 %v5873, 32.0
    %v5876 = vmul.f32 %v5874, 32.0
    %v5877 = vmul.f32 %v5860, %v5875
    %v5878 = vmul.f32 %v5862, %v5875
    %v5879 = vmul.f32 %v5864, %v5876
    %v5880 = vmul.f32 %v5866, %v5876
    %v5881 = vmul.f32 %v5877, %v1904
    %v5882 = vmul.f32 %v5878, %v1905
    %v5883 = vmul.f32 %v5879, %v1906
    %v5884 = vmul.f32 %v5880, %v1907
    %5885 = vmatprep.subr.mxu0 0.0
    %5886 = vmatpush1.msra.mxu0 %v270
    %5887 = vmatprep.subr.mxu0 0.0
    %5888 = vmatpush1.msra.mxu0 %v269
    %5889 = vmatprep.subr.mxu0 0.0
    %5890 = vmatpush1.msra.mxu0 %v268
    %5891 = vmatprep.subr.mxu0 0.0
    %5892 = vmatpush1.msra.mxu0 %v267
    %5893 = vmatprep.subr.mxu0 0.0
    %5894 = vmatpush1.msra.mxu0 %v266
    %5895 = vmatprep.subr.mxu0 0.0
    %5896 = vmatpush1.msra.mxu0 %v265
    %5897 = vmatprep.subr.mxu0 0.0
    %5898 = vmatpush1.msra.mxu0 %v264
    %5899 = vmatprep.subr.mxu0 0.0
    %5900 = vmatpush1.msra.mxu0 %v263
    %5901 = vmatprep.subr.mxu0 0.0
    %5902 = vmatpush1.msra.mxu0 %v262
    %5903 = vmatprep.subr.mxu0 0.0
    %5904 = vmatpush1.msra.mxu0 %v261
    %5905 = vmatprep.subr.mxu0 0.0
    %5906 = vmatpush1.msra.mxu0 %v260
    %5907 = vmatprep.subr.mxu0 0.0
    %5908 = vmatpush1.msra.mxu0 %v259
    %5909 = vmatprep.subr.mxu0 0.0
    %5910 = vmatpush1.msra.mxu0 %v258
    %5911 = vmatprep.subr.mxu0 0.0
    %5912 = vmatpush1.msra.mxu0 %v257
    %5913 = vmatprep.subr.mxu0 0.0
    %5914 = vmatpush1.msra.mxu0 %v256
    %5915 = vmatprep.subr.mxu0 0.0
    %5916 = vmatpush1.msra.mxu0 %v255
    %5917 = vmatprep.subr.mxu0 0.0
    %5918 = vmatpush2.msra.mxu0 %v286
    %5919 = vmatprep.subr.mxu0 0.0
    %5920 = vmatpush2.msra.mxu0 %v285
    %5921 = vmatprep.subr.mxu0 0.0
    %5922 = vmatpush2.msra.mxu0 %v284
    %5923 = vmatprep.subr.mxu0 0.0
    %5924 = vmatpush2.msra.mxu0 %v283
    %5925 = vmatprep.subr.mxu0 0.0
    %5926 = vmatpush2.msra.mxu0 %v282
    %5927 = vmatprep.subr.mxu0 0.0
    %5928 = vmatpush2.msra.mxu0 %v281
    %5929 = vmatprep.subr.mxu0 0.0
    %5930 = vmatpush2.msra.mxu0 %v280
    %5931 = vmatprep.subr.mxu0 0.0
    %5932 = vmatpush2.msra.mxu0 %v279
    %5933 = vmatprep.subr.mxu0 0.0
    %5934 = vmatpush2.msra.mxu0 %v278
    %5935 = vmatprep.subr.mxu0 0.0
    %5936 = vmatpush2.msra.mxu0 %v277
    %5937 = vmatprep.subr.mxu0 0.0
    %5938 = vmatpush2.msra.mxu0 %v276
    %5939 = vmatprep.subr.mxu0 0.0
    %5940 = vmatpush2.msra.mxu0 %v275
    %5941 = vmatprep.subr.mxu0 0.0
    %5942 = vmatpush2.msra.mxu0 %v274
    %5943 = vmatprep.subr.mxu0 0.0
    %5944 = vmatpush2.msra.mxu0 %v273
    %5945 = vmatprep.subr.mxu0 0.0
    %5946 = vmatpush2.msra.mxu0 %v272
    %5947 = vmatprep.subr.mxu0 0.0
    %5948 = vmatpush2.msra.mxu0 %v271
    %5949 = vmatprep.mubr.f32.mxu0 %v5882
    %5950 = vmatmul.mubr.f32.gmra.mxu0 %v5881
    %v5951 = vpop.f32.mrf.mxu0
    %v5952 = vadd.f32 0.0, %v5951
    %v5953 = vpop.f32.mrf.mxu0
    %5954 = vmatprep.mubr.f32.mxu0 %v5884
    %5955 = vmatmul.mubr.f32.gmra.mxu0 %v5883
    %v5956 = vpop.f32.mrf.mxu0
    %v5957 = vadd.f32 0.0, %v5956
    %v5958 = vpop.f32.mrf.mxu0
    %5959 = vdwg.mxu0
    %5962 = vrot.lane.b32.xlu0 %v5756, 96
    %v5963 = vpop.permute.xlu0 %5962
    %5964 = vrot.lane.b32.xlu0 %v5761, 96
    %v5965 = vpop.permute.xlu0 %5964
    %v5968 = vadd.f32 %v2276, %v5963
    %v5969 = vadd.f32 %v2281, %v5965
    %5972 = vrot.lane.b32.xlu0 %v5952, 96
    %v5973 = vpop.permute.xlu0 %5972
    %5974 = vrot.lane.b32.xlu0 %v5957, 96
    %v5975 = vpop.permute.xlu0 %5974
    %v5978 = vadd.f32 %v5968, %v5973
    %v5979 = vadd.f32 %v5969, %v5975
    %5982 = vrot.lane.b32.xlu0 %v5978, 112
    %v5983 = vpop.permute.xlu0 %5982
    %5984 = vrot.lane.b32.xlu0 %v5979, 112
    %v5985 = vpop.permute.xlu0 %5984
    %v5988 = vmax.f32 %v5978, %v5983
    %v5989 = vmax.f32 %v5979, %v5985
    %5992 = vrot.lane.b32.xlu0 %v5988, 32
    %v5993 = vpop.permute.xlu0 %5992
    %5994 = vrot.lane.b32.xlu0 %v5989, 32
    %v5995 = vpop.permute.xlu0 %5994
    %s5998 = scalar_lea.vmem [#allocation3], 96
    %5999 = vst.msk [vmem:[%s5998] sm:$0xff] %vm654, %v5993
    %6000 = vst.msk [vmem:[%s5998 + $0x8] sm:$0xff] %vm654, %v5995
    // Predicated region
    $region30: #{nmt_forward.1} parent=1 // pred_check
      _
    $region31: #{nmt_forward.1} parent=1 // pred_check_branch
      %6002 = sbr.rel (0) target = $region33
    $region32: #{nmt_forward.1} parent=1 // pred_region
      %s6004 = ssub.s32 1792, 1792
      %6005 = vsyncadd [#allocation4], %s6004
      %s6006 = sshll.u32 [#allocation3], 4
      %s6007 = int_to_ptr.vmem [resolvable:$true] %s6006
      %6012 = dma.vmem_to_hbm [thread:$0]  %s6007, 1792, %s7, [#allocation4], 128, 128, 8
    $region33: #{nmt_forward.1} parent=1 // pred_fallthru
      _
    // Predicated region
    $region34: #{nmt_forward.1} parent=1 // pred_check
      _
    $region35: #{nmt_forward.1} parent=1 // pred_check_branch
      %6014 = sbr.rel (0) target = $region37
    $region36: #{nmt_forward.1} parent=1 // pred_region
      %6015 = dma.done [#allocation4], 1792
    $region37: #{nmt_forward.1} parent=1 // pred_fallthru
      _
    %6016 = vsyncpa [#allocation4], 1

</llo_original>
